<compile_context>
chip_gen: v5e
topology: v5e:2x2
jax: 0.10.0
libtpu: 0.0.40
codegen_flags: <defaults>
</compile_context>

<pallas_src>
import jax
import jax.numpy as jnp
from jax.experimental import pallas as pl
from jax.experimental.pallas import tpu as pltpu

M_EMBED = 512
HIDDEN = 4 * M_EMBED
H_CHUNK = 512  # hidden-dim chunk for the fused matmul loop (multiple of 128)


def _ffn_kernel(x_ref, w1_ref, b1_ref, w2_ref, b2_ref, o_ref):
    # x_ref : (tm, C)  bf16
    # w1_ref: (C, 4C)  bf16   b1_ref: (1, 4C) f32
    # w2_ref: (4C, C)  bf16   b2_ref: (1, C)  f32
    # o_ref : (tm, C)  f32
    x = x_ref[...]
    hidden = w1_ref.shape[1]
    n_chunks = hidden // H_CHUNK

    acc = jnp.zeros(o_ref.shape, jnp.float32)
    # Fused Linear1 -> ReLU -> Linear2 over hidden-dim chunks: never builds the
    # full (tm, 4C) intermediate.  Static slices => zero-cost ref views.
    for c in range(n_chunks):
        lo = c * H_CHUNK
        h = jnp.dot(x, w1_ref[:, lo:lo + H_CHUNK],
                    preferred_element_type=jnp.float32)
        h = jnp.maximum(h + b1_ref[:, lo:lo + H_CHUNK], jnp.float32(0.0))
        acc = acc + jnp.dot(h.astype(w2_ref.dtype),
                            w2_ref[lo:lo + H_CHUNK, :],
                            preferred_element_type=jnp.float32)

    # Dropout: identity in eval mode.
    o_ref[...] = (acc + b2_ref[...]).astype(o_ref.dtype)


def _choose_tm(m):
    """Row tile: multiple of 8, >=2 grid steps when possible (v7x megacore)."""
    if m >= 1024:
        return 512
    half = pl.cdiv(m, 2)
    return max(8, ((half + 7) // 8) * 8)


def feedforward_forward(x, w1, b1, w2, b2):
    """x: (B, T, C) f32; w1: (C, 4C); b1: (4C,); w2: (4C, C); b2: (C,).

    Weights are the transposed nn.Linear weights (in, out) so the kernel
    computes x @ W directly.  Returns (B, T, C) f32 (eval-mode forward).
    """
    B, T, C = x.shape
    H = w1.shape[1]
    M = B * T

    # Flatten to one lane-dense (M, C) slab; bf16 MXU operands, f32 biases.
    x_bf = x.reshape(M, C).astype(jnp.bfloat16)
    w1_bf = w1.astype(jnp.bfloat16)
    w2_bf = w2.astype(jnp.bfloat16)
    b1_2d = b1.reshape(1, H).astype(jnp.float32)
    b2_2d = b2.reshape(1, C).astype(jnp.float32)

    tm = _choose_tm(M)
    n_blocks = pl.cdiv(M, tm)
    m_pad = n_blocks * tm
    if m_pad != M:
        x_bf = jnp.pad(x_bf, ((0, m_pad - M), (0, 0)))

    cost = pl.CostEstimate(
        flops=4 * m_pad * C * H,          # two matmuls, 2*M*C*H flops each
        transcendentals=0,
        bytes_accessed=(x_bf.size * 2 + m_pad * C * 4
                        + w1_bf.size * 2 + w2_bf.size * 2
                        + b1_2d.size * 4 + b2_2d.size * 4),
    )

    resident = pl.Buffered(1)  # constant index_map: single-buffer, stays resident

    out2d = pl.pallas_call(
        _ffn_kernel,
        out_shape=jax.ShapeDtypeStruct((m_pad, C), jnp.float32),
        grid_spec=pltpu.PrefetchScalarGridSpec(
            num_scalar_prefetch=0,
            grid=(n_blocks,),
            in_specs=[
                pl.BlockSpec((tm, C), lambda i: (i, 0)),          # x rows
                pl.BlockSpec((C, H), lambda i: (0, 0),
                             pipeline_mode=resident),             # W1
                pl.BlockSpec((1, H), lambda i: (0, 0),
                             pipeline_mode=resident),             # b1
                pl.BlockSpec((H, C), lambda i: (0, 0),
                             pipeline_mode=resident),             # W2
                pl.BlockSpec((1, C), lambda i: (0, 0),
                             pipeline_mode=resident),             # b2
            ],
            out_specs=pl.BlockSpec((tm, C), lambda i: (i, 0)),
        ),
        compiler_params=pltpu.CompilerParams(
            dimension_semantics=("parallel",),
            vmem_limit_bytes=48 * 1024 * 1024,
        ),
        cost_estimate=cost,
    )(x_bf, w1_bf, b1_2d, w2_bf, b2_2d)

    if m_pad != M:
        out2d = out2d[:M]
    return out2d.reshape(B, T, C)


def feedforward_reference_f32(x, w1, b1, w2, b2):
    """Full-precision reference mirroring the PyTorch forward (eval mode)."""
    h = jnp.maximum(x @ w1 + b1, 0.0)
    return h @ w2 + b2


def feedforward_reference_bf16(x, w1, b1, w2, b2):
    """Reference with the same bf16 operand casts the kernel uses."""
    xb = x.astype(jnp.bfloat16)
    h = jnp.dot(xb, w1.astype(jnp.bfloat16),
                preferred_element_type=jnp.float32) + b1
    h = jnp.maximum(h, 0.0)
    y = jnp.dot(h.astype(jnp.bfloat16), w2.astype(jnp.bfloat16),
                preferred_element_type=jnp.float32) + b2
    return y


if __name__ == "__main__":
    key = jax.random.PRNGKey(0)
    B, T, C = 2, 32, M_EMBED
    Hd = HIDDEN

    kx, k1, kb1, k2, kb2 = jax.random.split(key, 5)
    x = jax.random.normal(kx, (B, T, C), dtype=jnp.float32)

    # nn.Linear(in, out) weight is (out, in); we store transposes (in, out) so
    # the kernel computes x @ W.  Init matches PyTorch U(-1/sqrt(in), 1/sqrt(in)).
    bound1 = 1.0 / (C ** 0.5)
    w1 = jax.random.uniform(k1, (C, Hd), jnp.float32, -bound1, bound1)
    b1 = jax.random.uniform(kb1, (Hd,), jnp.float32, -bound1, bound1)
    bound2 = 1.0 / (Hd ** 0.5)
    w2 = jax.random.uniform(k2, (Hd, C), jnp.float32, -bound2, bound2)
    b2 = jax.random.uniform(kb2, (C,), jnp.float32, -bound2, bound2)

    out = feedforward_forward(x, w1, b1, w2, b2)
    out = jax.block_until_ready(out)
    assert out.shape == (B, T, C)

    # Tight check vs. a reference using the same bf16 operand casts.
    ref_bf16 = feedforward_reference_bf16(x, w1, b1, w2, b2)
    assert jnp.allclose(out, ref_bf16, atol=1e-2, rtol=1e-2), \
        "mismatch vs bf16-cast reference"

    # Loose check vs. the full-precision f32 reference (bf16 quantization error).
    ref_f32 = feedforward_reference_f32(x, w1, b1, w2, b2)
    assert jnp.allclose(out, ref_f32, atol=6e-2, rtol=6e-2), \
        "mismatch vs f32 reference"

    print("KERNEL_OK")
</pallas_src>

<mosaic_0001>
module attributes {stable_mosaic.version = 11 : i64} {
  func.func @_ffn_kernel(%arg0: i32, %arg1: memref<32x512xbf16, #tpu.memory_space<vmem>>, %arg2: memref<512x2048xbf16, #tpu.memory_space<vmem>>, %arg3: memref<1x2048xf32, #tpu.memory_space<vmem>>, %arg4: memref<2048x512xbf16, #tpu.memory_space<vmem>>, %arg5: memref<1x512xf32, #tpu.memory_space<vmem>>, %arg6: memref<32x512xf32, #tpu.memory_space<vmem>>) attributes {dimension_semantics = [#tpu.dimension_semantics<parallel>], iteration_bounds = array<i64: 2>, scalar_prefetch = 0 : i64, scratch_operands = 0 : i64, tpu.core_type = #tpu.core_type<tc>, window_params = [{transform_indices = @transform_0, window_bounds = array<i64: 32, 512>}, {pipeline_mode = #tpu.pipeline_mode<synchronous>, transform_indices = @transform_1, window_bounds = array<i64: 512, 2048>}, {pipeline_mode = #tpu.pipeline_mode<synchronous>, transform_indices = @transform_2, window_bounds = array<i64: 1, 2048>}, {pipeline_mode = #tpu.pipeline_mode<synchronous>, transform_indices = @transform_3, window_bounds = array<i64: 2048, 512>}, {pipeline_mode = #tpu.pipeline_mode<synchronous>, transform_indices = @transform_4, window_bounds = array<i64: 1, 512>}, {transform_indices = @transform_5, window_bounds = array<i64: 32, 512>}]} {
    %c0 = arith.constant 0 : index
    %c0_0 = arith.constant 0 : index
    %0 = vector.load %arg1[%c0, %c0_0] : memref<32x512xbf16, #tpu.memory_space<vmem>>, vector<32x512xbf16>
    %cst = arith.constant 0.000000e+00 : f32
    %1 = vector.broadcast %cst : f32 to vector<32x512xf32>
    %c0_1 = arith.constant 0 : index
    %c0_2 = arith.constant 0 : index
    %2 = vector.load %arg2[%c0_1, %c0_2] : memref<512x2048xbf16, #tpu.memory_space<vmem>>, vector<512x512xbf16>
    %cst_3 = arith.constant dense<0.000000e+00> : vector<32x512xf32>
    %3 = tpu.matmul %0, %2, %cst_3 {dimension_numbers = #tpu.dot_dimension_numbers<[1], [0], [0], [1], [0, 0, 1, 1], [], []>} : vector<32x512xbf16>, vector<512x512xbf16>, vector<32x512xf32> -> vector<32x512xf32>
    %c0_4 = arith.constant 0 : index
    %c0_5 = arith.constant 0 : index
    %4 = vector.load %arg3[%c0_4, %c0_5] : memref<1x2048xf32, #tpu.memory_space<vmem>>, vector<1x512xf32>
    %5 = vector.broadcast %4 : vector<1x512xf32> to vector<32x512xf32>
    %6 = arith.addf %3, %5 : vector<32x512xf32>
    %cst_6 = arith.constant 0.000000e+00 : f32
    %7 = vector.broadcast %cst_6 : f32 to vector<32x512xf32>
    %8 = arith.maximumf %6, %7 : vector<32x512xf32>
    %9 = arith.truncf %8 : vector<32x512xf32> to vector<32x512xbf16>
    %c0_7 = arith.constant 0 : index
    %c0_8 = arith.constant 0 : index
    %10 = vector.load %arg4[%c0_7, %c0_8] : memref<2048x512xbf16, #tpu.memory_space<vmem>>, vector<512x512xbf16>
    %cst_9 = arith.constant dense<0.000000e+00> : vector<32x512xf32>
    %11 = tpu.matmul %9, %10, %cst_9 {dimension_numbers = #tpu.dot_dimension_numbers<[1], [0], [0], [1], [0, 0, 1, 1], [], []>} : vector<32x512xbf16>, vector<512x512xbf16>, vector<32x512xf32> -> vector<32x512xf32>
    %12 = arith.addf %1, %11 : vector<32x512xf32>
    %c0_10 = arith.constant 0 : index
    %c512 = arith.constant 512 : index
    %13 = vector.load %arg2[%c0_10, %c512] : memref<512x2048xbf16, #tpu.memory_space<vmem>>, vector<512x512xbf16>
    %cst_11 = arith.constant dense<0.000000e+00> : vector<32x512xf32>
    %14 = tpu.matmul %0, %13, %cst_11 {dimension_numbers = #tpu.dot_dimension_numbers<[1], [0], [0], [1], [0, 0, 1, 1], [], []>} : vector<32x512xbf16>, vector<512x512xbf16>, vector<32x512xf32> -> vector<32x512xf32>
    %c0_12 = arith.constant 0 : index
    %c512_13 = arith.constant 512 : index
    %15 = vector.load %arg3[%c0_12, %c512_13] : memref<1x2048xf32, #tpu.memory_space<vmem>>, vector<1x512xf32>
    %16 = vector.broadcast %15 : vector<1x512xf32> to vector<32x512xf32>
    %17 = arith.addf %14, %16 : vector<32x512xf32>
    %cst_14 = arith.constant 0.000000e+00 : f32
    %18 = vector.broadcast %cst_14 : f32 to vector<32x512xf32>
    %19 = arith.maximumf %17, %18 : vector<32x512xf32>
    %20 = arith.truncf %19 : vector<32x512xf32> to vector<32x512xbf16>
    %c512_15 = arith.constant 512 : index
    %c0_16 = arith.constant 0 : index
    %21 = vector.load %arg4[%c512_15, %c0_16] : memref<2048x512xbf16, #tpu.memory_space<vmem>>, vector<512x512xbf16>
    %cst_17 = arith.constant dense<0.000000e+00> : vector<32x512xf32>
    %22 = tpu.matmul %20, %21, %cst_17 {dimension_numbers = #tpu.dot_dimension_numbers<[1], [0], [0], [1], [0, 0, 1, 1], [], []>} : vector<32x512xbf16>, vector<512x512xbf16>, vector<32x512xf32> -> vector<32x512xf32>
    %23 = arith.addf %12, %22 : vector<32x512xf32>
    %c0_18 = arith.constant 0 : index
    %c1024 = arith.constant 1024 : index
    %24 = vector.load %arg2[%c0_18, %c1024] : memref<512x2048xbf16, #tpu.memory_space<vmem>>, vector<512x512xbf16>
    %cst_19 = arith.constant dense<0.000000e+00> : vector<32x512xf32>
    %25 = tpu.matmul %0, %24, %cst_19 {dimension_numbers = #tpu.dot_dimension_numbers<[1], [0], [0], [1], [0, 0, 1, 1], [], []>} : vector<32x512xbf16>, vector<512x512xbf16>, vector<32x512xf32> -> vector<32x512xf32>
    %c0_20 = arith.constant 0 : index
    %c1024_21 = arith.constant 1024 : index
    %26 = vector.load %arg3[%c0_20, %c1024_21] : memref<1x2048xf32, #tpu.memory_space<vmem>>, vector<1x512xf32>
    %27 = vector.broadcast %26 : vector<1x512xf32> to vector<32x512xf32>
    %28 = arith.addf %25, %27 : vector<32x512xf32>
    %cst_22 = arith.constant 0.000000e+00 : f32
    %29 = vector.broadcast %cst_22 : f32 to vector<32x512xf32>
    %30 = arith.maximumf %28, %29 : vector<32x512xf32>
    %31 = arith.truncf %30 : vector<32x512xf32> to vector<32x512xbf16>
    %c1024_23 = arith.constant 1024 : index
    %c0_24 = arith.constant 0 : index
    %32 = vector.load %arg4[%c1024_23, %c0_24] : memref<2048x512xbf16, #tpu.memory_space<vmem>>, vector<512x512xbf16>
    %cst_25 = arith.constant dense<0.000000e+00> : vector<32x512xf32>
    %33 = tpu.matmul %31, %32, %cst_25 {dimension_numbers = #tpu.dot_dimension_numbers<[1], [0], [0], [1], [0, 0, 1, 1], [], []>} : vector<32x512xbf16>, vector<512x512xbf16>, vector<32x512xf32> -> vector<32x512xf32>
    %34 = arith.addf %23, %33 : vector<32x512xf32>
    %c0_26 = arith.constant 0 : index
    %c1536 = arith.constant 1536 : index
    %35 = vector.load %arg2[%c0_26, %c1536] : memref<512x2048xbf16, #tpu.memory_space<vmem>>, vector<512x512xbf16>
    %cst_27 = arith.constant dense<0.000000e+00> : vector<32x512xf32>
    %36 = tpu.matmul %0, %35, %cst_27 {dimension_numbers = #tpu.dot_dimension_numbers<[1], [0], [0], [1], [0, 0, 1, 1], [], []>} : vector<32x512xbf16>, vector<512x512xbf16>, vector<32x512xf32> -> vector<32x512xf32>
    %c0_28 = arith.constant 0 : index
    %c1536_29 = arith.constant 1536 : index
    %37 = vector.load %arg3[%c0_28, %c1536_29] : memref<1x2048xf32, #tpu.memory_space<vmem>>, vector<1x512xf32>
    %38 = vector.broadcast %37 : vector<1x512xf32> to vector<32x512xf32>
    %39 = arith.addf %36, %38 : vector<32x512xf32>
    %cst_30 = arith.constant 0.000000e+00 : f32
    %40 = vector.broadcast %cst_30 : f32 to vector<32x512xf32>
    %41 = arith.maximumf %39, %40 : vector<32x512xf32>
    %42 = arith.truncf %41 : vector<32x512xf32> to vector<32x512xbf16>
    %c1536_31 = arith.constant 1536 : index
    %c0_32 = arith.constant 0 : index
    %43 = vector.load %arg4[%c1536_31, %c0_32] : memref<2048x512xbf16, #tpu.memory_space<vmem>>, vector<512x512xbf16>
    %cst_33 = arith.constant dense<0.000000e+00> : vector<32x512xf32>
    %44 = tpu.matmul %42, %43, %cst_33 {dimension_numbers = #tpu.dot_dimension_numbers<[1], [0], [0], [1], [0, 0, 1, 1], [], []>} : vector<32x512xbf16>, vector<512x512xbf16>, vector<32x512xf32> -> vector<32x512xf32>
    %45 = arith.addf %34, %44 : vector<32x512xf32>
    %c0_34 = arith.constant 0 : index
    %c0_35 = arith.constant 0 : index
    %46 = vector.load %arg5[%c0_34, %c0_35] : memref<1x512xf32, #tpu.memory_space<vmem>>, vector<1x512xf32>
    %47 = vector.broadcast %46 : vector<1x512xf32> to vector<32x512xf32>
    %48 = arith.addf %45, %47 : vector<32x512xf32>
    %c0_36 = arith.constant 0 : index
    %c0_37 = arith.constant 0 : index
    %49 = vector.load %arg6[%c0_36, %c0_37] : memref<32x512xf32, #tpu.memory_space<vmem>>, vector<32x512xf32>
    tpu.vector_store %arg6[%c0_36, %c0_37], %48 {strides = array<i32>} : memref<32x512xf32, #tpu.memory_space<vmem>>, vector<32x512xf32>,
    return
  }
  func.func @transform_0(%arg0: i32) -> (i32, i32) {
    %c0_i32 = arith.constant 0 : i32
    %c0_i32_0 = arith.constant 0 : i32
    return %arg0, %c0_i32 : i32, i32
  }
  func.func @transform_1(%arg0: i32) -> (i32, i32) {
    %c0_i32 = arith.constant 0 : i32
    %c0_i32_0 = arith.constant 0 : i32
    %c0_i32_1 = arith.constant 0 : i32
    return %c0_i32, %c0_i32_0 : i32, i32
  }
  func.func @transform_2(%arg0: i32) -> (i32, i32) {
    %c0_i32 = arith.constant 0 : i32
    %c0_i32_0 = arith.constant 0 : i32
    %c0_i32_1 = arith.constant 0 : i32
    return %c0_i32, %c0_i32_0 : i32, i32
  }
  func.func @transform_3(%arg0: i32) -> (i32, i32) {
    %c0_i32 = arith.constant 0 : i32
    %c0_i32_0 = arith.constant 0 : i32
    %c0_i32_1 = arith.constant 0 : i32
    return %c0_i32, %c0_i32_0 : i32, i32
  }
  func.func @transform_4(%arg0: i32) -> (i32, i32) {
    %c0_i32 = arith.constant 0 : i32
    %c0_i32_0 = arith.constant 0 : i32
    %c0_i32_1 = arith.constant 0 : i32
    return %c0_i32, %c0_i32_0 : i32, i32
  }
  func.func @transform_5(%arg0: i32) -> (i32, i32) {
    %c0_i32 = arith.constant 0 : i32
    %c0_i32_0 = arith.constant 0 : i32
    return %arg0, %c0_i32 : i32, i32
  }
}

</mosaic_0001>

<llo_original>
// kernel: tpu_custom_call.1
$region0: #{tpu_custom_call.1}
  #allocation0 [shape = 'u32[]', space=smem, size = 0x4, offset = 0x4, fixed_abs, tag = 'smem constant byte address 0x4 - core index']
  #allocation1 [shape = 'u32[72,128]{1,0:T(1,128)}', space=vmem, size = 0x9000, scoped, tag = 'internal scratch']
  %s0 = inlined_call_operand.hbm [shape: bf16[64,512], index: 0, kind: input, shape index: {}]
  %s1 = inlined_call_operand.hbm [shape: bf16[512,2048], index: 1, kind: input, shape index: {}]
  %s2 = inlined_call_operand.hbm [shape: f32[1,2048], index: 2, kind: input, shape index: {}]
  %s3 = inlined_call_operand.hbm [shape: bf16[2048,512], index: 3, kind: input, shape index: {}]
  %s4 = inlined_call_operand.hbm [shape: f32[1,512], index: 4, kind: input, shape index: {}]
  %s5 = inlined_call_operand.hbm [shape: f32[64,512], index: 5, kind: output, shape index: {}]
  %s6 = sld [smem:[#allocation0]]
  $region73: #{tpu_custom_call.1} parent=0
    _
  %s8 = ssub.s32 1, %s6
  %s9 = scalar_select 0, %s8, %s6
  $region1: #{tpu_custom_call.1} parent=0
    #allocation2 [shape = 'u8[65536]{0}', space=vmem, size = 0x10000, scoped, tag = 'input window, operand 0']
    #allocation3 [shape = 's32[2]{0}', space=sflag, size = 0x8, scoped, tag = 'scoped memory for tpu_custom_call.1']
    #allocation4 [shape = 's32[2]{0}', space=sflag, size = 0x8, scoped, tag = 'scoped memory for tpu_custom_call.1']
    #allocation5 [shape = 'u8[2097152]{0}', space=vmem, size = 0x200000, scoped, tag = 'input window, operand 1, single buffered']
    #allocation6 [shape = 's32[1]{0}', space=sflag, size = 0x4, scoped, tag = 'scoped memory for tpu_custom_call.1']
    #allocation7 [shape = 'u8[8192]{0}', space=vmem, size = 0x2000, scoped, tag = 'input window, operand 2, single buffered']
    #allocation8 [shape = 'u8[2097152]{0}', space=vmem, size = 0x200000, scoped, tag = 'input window, operand 3, single buffered']
    #allocation9 [shape = 's32[1]{0}', space=sflag, size = 0x4, scoped, tag = 'scoped memory for tpu_custom_call.1']
    #allocation10 [shape = 'u8[2048]{0}', space=vmem, size = 0x800, scoped, tag = 'input window, operand 4, single buffered']
    #allocation11 [shape = 'u8[131072]{0}', space=vmem, size = 0x20000, scoped, tag = 'output window, operand 0']
    %10 = vsyncpa [#allocation3], 0
    %s11 = scalar_lea.sflag [#allocation3], 1
    %12 = vsyncpa %s11, 0
    %13 = vsyncpa [#allocation6], 0
    %14 = vsyncpa [#allocation9], 0
    %15 = vsyncpa [#allocation4], 0
    %s16 = scalar_lea.sflag [#allocation4], 1
    %17 = vsyncpa %s16, 0
    loop: start=0, step=1, limit=4
    $region2: #{tpu_custom_call.1} parent=1 // loop_pre_header
      _
    $region3: #{tpu_custom_call.1} parent=1 // loop_header
      %s19 = sphi 0, %s23
      %p20 = scmp.ge.s32.totalorder %s19, 4
      %s29 = sphi 0, %s31
      %s32 = sphi 0, %s29
      %s33 = sphi 0, %s32
      %s49 = sphi 0, %s33
      %s53 = sphi 0, %s53
      %s55 = sphi 0, %s53
      %s56 = sphi 0, %s55
      %s70 = sphi 0, %s56
      %s74 = sphi 0, %s74
      %s76 = sphi 0, %s74
      %s77 = sphi 0, %s76
      %s91 = sphi 0, %s77
      %s95 = sphi 0, %s95
      %s97 = sphi 0, %s95
      %s98 = sphi 0, %s97
      %s112 = sphi 0, %s98
      %s116 = sphi 0, %s116
      %s118 = sphi 0, %s116
      %s119 = sphi 0, %s118
      %s133 = sphi 0, %s119
      %s139 = sphi 0, %s141
      %s142 = sphi 0, %s139
      %s143 = sphi 0, %s142
      %s159 = sphi 0, %s143
    $region4: #{tpu_custom_call.1} parent=1 // loop_header_branch
      %22 = sbr.rel (%p20) target = $region8
    $region5: #{tpu_custom_call.1} parent=1 // loop_body
      %s24 = ssub.s32 %s19, 1
      %s25 = ssub.s32 %s19, 2
      %s26 = sadd.s32 %s19, 1
      %s27 = ssub.s32 %s19, %s26
      %p28 = scmp.eq.s32.totalorder %s27, 0
      %s30 = sadd.s32 %s29, 1
      %s31 = scalar_select %p28, %s29, %s30
      %p34 = pneg %p28
      %p35 = scmp.eq.s32.totalorder %s19, 1
      %p36 = por %p34, %p35
      %p37 = scmp.ne.s32.totalorder %s29, %s32
      %p38 = scmp.eq.s32.totalorder %s19, 0
      %p39 = por %p37, %p38
      %p40 = scmp.ne.s32.totalorder %s29, %s32
      %p41 = scmp.eq.s32.totalorder %s24, 1
      %p42 = por %p40, %p41
      %p43 = scmp.ne.s32.totalorder %s32, %s33
      %p44 = scmp.eq.s32.totalorder %s24, 0
      %p45 = por %p43, %p44
      %p46 = scmp.ne.s32.totalorder %s32, %s33
      %p47 = scmp.eq.s32.totalorder %s25, 1
      %p48 = por %p46, %p47
      %p50 = scmp.ne.s32.totalorder %s33, %s49
      %p51 = scmp.eq.s32.totalorder %s25, 0
      %p52 = por %p50, %p51
      %s54 = sadd.s32 %s53, 1
      %p57 = scmp.eq.s32.totalorder %s19, 1
      %p58 = scmp.ne.s32.totalorder %s53, %s55
      %p59 = scmp.eq.s32.totalorder %s19, 0
      %p60 = por %p58, %p59
      %p61 = scmp.ne.s32.totalorder %s53, %s55
      %p62 = scmp.eq.s32.totalorder %s24, 1
      %p63 = por %p61, %p62
      %p64 = scmp.ne.s32.totalorder %s55, %s56
      %p65 = scmp.eq.s32.totalorder %s24, 0
      %p66 = por %p64, %p65
      %p67 = scmp.ne.s32.totalorder %s55, %s56
      %p68 = scmp.eq.s32.totalorder %s25, 1
      %p69 = por %p67, %p68
      %p71 = scmp.ne.s32.totalorder %s56, %s70
      %p72 = scmp.eq.s32.totalorder %s25, 0
      %p73 = por %p71, %p72
      %s75 = sadd.s32 %s74, 1
      %p78 = scmp.eq.s32.totalorder %s19, 1
      %p79 = scmp.ne.s32.totalorder %s74, %s76
      %p80 = scmp.eq.s32.totalorder %s19, 0
      %p81 = por %p79, %p80
      %p82 = scmp.ne.s32.totalorder %s74, %s76
      %p83 = scmp.eq.s32.totalorder %s24, 1
      %p84 = por %p82, %p83
      %p85 = scmp.ne.s32.totalorder %s76, %s77
      %p86 = scmp.eq.s32.totalorder %s24, 0
      %p87 = por %p85, %p86
      %p88 = scmp.ne.s32.totalorder %s76, %s77
      %p89 = scmp.eq.s32.totalorder %s25, 1
      %p90 = por %p88, %p89
      %p92 = scmp.ne.s32.totalorder %s77, %s91
      %p93 = scmp.eq.s32.totalorder %s25, 0
      %p94 = por %p92, %p93
      %s96 = sadd.s32 %s95, 1
      %p99 = scmp.eq.s32.totalorder %s19, 1
      %p100 = scmp.ne.s32.totalorder %s95, %s97
      %p101 = scmp.eq.s32.totalorder %s19, 0
      %p102 = por %p100, %p101
      %p103 = scmp.ne.s32.totalorder %s95, %s97
      %p104 = scmp.eq.s32.totalorder %s24, 1
      %p105 = por %p103, %p104
      %p106 = scmp.ne.s32.totalorder %s97, %s98
      %p107 = scmp.eq.s32.totalorder %s24, 0
      %p108 = por %p106, %p107
      %p109 = scmp.ne.s32.totalorder %s97, %s98
      %p110 = scmp.eq.s32.totalorder %s25, 1
      %p111 = por %p109, %p110
      %p113 = scmp.ne.s32.totalorder %s98, %s112
      %p114 = scmp.eq.s32.totalorder %s25, 0
      %p115 = por %p113, %p114
      %s117 = sadd.s32 %s116, 1
      %p120 = scmp.eq.s32.totalorder %s19, 1
      %p121 = scmp.ne.s32.totalorder %s116, %s118
      %p122 = scmp.eq.s32.totalorder %s19, 0
      %p123 = por %p121, %p122
      %p124 = scmp.ne.s32.totalorder %s116, %s118
      %p125 = scmp.eq.s32.totalorder %s24, 1
      %p126 = por %p124, %p125
      %p127 = scmp.ne.s32.totalorder %s118, %s119
      %p128 = scmp.eq.s32.totalorder %s24, 0
      %p129 = por %p127, %p128
      %p130 = scmp.ne.s32.totalorder %s118, %s119
      %p131 = scmp.eq.s32.totalorder %s25, 1
      %p132 = por %p130, %p131
      %p134 = scmp.ne.s32.totalorder %s119, %s133
      %p135 = scmp.eq.s32.totalorder %s25, 0
      %p136 = por %p134, %p135
      %s137 = ssub.s32 %s19, %s26
      %p138 = scmp.eq.s32.totalorder %s137, 0
      %s140 = sadd.s32 %s139, 1
      %s141 = scalar_select %p138, %s139, %s140
      %p144 = pneg %p138
      %p145 = scmp.eq.s32.totalorder %s19, 1
      %p146 = por %p144, %p145
      %p147 = scmp.ne.s32.totalorder %s139, %s142
      %p148 = scmp.eq.s32.totalorder %s19, 0
      %p149 = por %p147, %p148
      %p150 = scmp.ne.s32.totalorder %s139, %s142
      %p151 = scmp.eq.s32.totalorder %s24, 1
      %p152 = por %p150, %p151
      %p153 = scmp.ne.s32.totalorder %s142, %s143
      %p154 = scmp.eq.s32.totalorder %s24, 0
      %p155 = por %p153, %p154
      %p156 = scmp.ne.s32.totalorder %s142, %s143
      %p157 = scmp.eq.s32.totalorder %s25, 1
      %p158 = por %p156, %p157
      %p160 = scmp.ne.s32.totalorder %s143, %s159
      %p161 = scmp.eq.s32.totalorder %s25, 0
      %p162 = por %p160, %p161
      %p163 = scmp.le.s32.totalorder 1, %s19
      %p164 = scmp.lt.s32.totalorder %s19, 3
      %p165 = pnand %p163, %p164
      %p166 = pneg %p165
      // Predicated region
      $region9: #{tpu_custom_call.1} parent=5 // pred_check
        _
      $region10: #{tpu_custom_call.1} parent=5 // pred_check_branch
        %168 = sbr.rel (%p165) target = $region12
      $region11: #{tpu_custom_call.1} parent=5 // pred_region
        %s169 = ssub.s32 %s19, 1
        // Predicated region
        $region13: #{tpu_custom_call.1} parent=11 // pred_check
          %p170 = pneg %p66
        $region14: #{tpu_custom_call.1} parent=11 // pred_check_branch
          %172 = sbr.rel (%p170) target = $region16
        $region15: #{tpu_custom_call.1} parent=11 // pred_region
          %174 = vsyncadd [#allocation6], 0
          %s175 = sshll.u32 %s1, 4
          %s176 = int_to_ptr.hbm [resolvable:$true] %s175
          %s177 = sshll.u32 [#allocation5], 4
          %s178 = int_to_ptr.vmem [resolvable:$true] %s177
          %183 = dma.hbm_to_vmem [thread:$0]  %s176, 65536, %s178, [#allocation6], 1024, 1024, 64
        $region16: #{tpu_custom_call.1} parent=11 // pred_fallthru
          _
        // Predicated region
        $region17: #{tpu_custom_call.1} parent=11 // pred_check
          %p184 = pneg %p87
        $region18: #{tpu_custom_call.1} parent=11 // pred_check_branch
          %186 = sbr.rel (%p184) target = $region20
        $region19: #{tpu_custom_call.1} parent=11 // pred_region
          %188 = vsyncadd [#allocation6], 0
          %s190 = sshll.u32 %s2, 4
          %s191 = int_to_ptr.hbm [resolvable:$true] %s190
          %s192 = sshll.u32 [#allocation7], 4
          %s193 = int_to_ptr.vmem [resolvable:$true] %s192
          %195 = dma.hbm_to_vmem [thread:$0]  %s191, 256, %s193, [#allocation6]
        $region20: #{tpu_custom_call.1} parent=11 // pred_fallthru
          _
        // Predicated region
        $region21: #{tpu_custom_call.1} parent=11 // pred_check
          %p196 = pneg %p108
        $region22: #{tpu_custom_call.1} parent=11 // pred_check_branch
          %198 = sbr.rel (%p196) target = $region24
        $region23: #{tpu_custom_call.1} parent=11 // pred_region
          %200 = vsyncadd [#allocation9], 0
          %s201 = sshll.u32 %s3, 4
          %s202 = int_to_ptr.hbm [resolvable:$true] %s201
          %s203 = sshll.u32 [#allocation8], 4
          %s204 = int_to_ptr.vmem [resolvable:$true] %s203
          %209 = dma.hbm_to_vmem [thread:$0]  %s202, 65536, %s204, [#allocation9], 256, 256, 16
        $region24: #{tpu_custom_call.1} parent=11 // pred_fallthru
          _
        // Predicated region
        $region25: #{tpu_custom_call.1} parent=11 // pred_check
          %p210 = pneg %p129
        $region26: #{tpu_custom_call.1} parent=11 // pred_check_branch
          %212 = sbr.rel (%p210) target = $region28
        $region27: #{tpu_custom_call.1} parent=11 // pred_region
          %214 = vsyncadd [#allocation9], 0
          %s216 = sshll.u32 %s4, 4
          %s217 = int_to_ptr.hbm [resolvable:$true] %s216
          %s218 = sshll.u32 [#allocation10], 4
          %s219 = int_to_ptr.vmem [resolvable:$true] %s218
          %221 = dma.hbm_to_vmem [thread:$0]  %s217, 64, %s219, [#allocation9]
        $region28: #{tpu_custom_call.1} parent=11 // pred_fallthru
          _
      $region12: #{tpu_custom_call.1} parent=5 // pred_fallthru
        _
      %p222 = scmp.lt.s32.totalorder %s19, 2
      // Predicated region
      $region29: #{tpu_custom_call.1} parent=5 // pred_check
        %p223 = pneg %p222
      $region30: #{tpu_custom_call.1} parent=5 // pred_check_branch
        %225 = sbr.rel (%p223) target = $region32
      $region31: #{tpu_custom_call.1} parent=5 // pred_region
        // Predicated region
        $region33: #{tpu_custom_call.1} parent=31 // pred_check
          %p226 = pneg %p39
        $region34: #{tpu_custom_call.1} parent=31 // pred_check_branch
          %228 = sbr.rel (%p226) target = $region36
        $region35: #{tpu_custom_call.1} parent=31 // pred_region
          %s229 = sand.u32 %s29, 1
          %s230 = scalar_lea.sflag [#allocation3], %s229
          %s231 = sand.u32 %s29, 1
          %s232 = smul.addr %s231, 64
          %s233 = scalar_lea.vmem [#allocation2], %s232
          %s234 = smul.u32 4, %s19
          %236 = vsyncadd %s230, 0
          %s237 = smul.addr %s234, 4
          %s238 = smul.addr %s237, 4
          %s239 = scalar_lea.hbm %s0, %s238
          %s240 = sshll.u32 %s239, 4
          %s241 = int_to_ptr.hbm [resolvable:$true] %s240
          %s242 = sshll.u32 %s233, 4
          %s243 = int_to_ptr.vmem [resolvable:$true] %s242
          %248 = dma.hbm_to_vmem [thread:$0]  %s241, 1024, %s243, %s230, 256, 256, 16
        $region36: #{tpu_custom_call.1} parent=31 // pred_fallthru
          _
      $region32: #{tpu_custom_call.1} parent=5 // pred_fallthru
        _
      %p249 = scmp.le.s32.totalorder 1, %s19
      %p250 = scmp.lt.s32.totalorder %s19, 3
      %p251 = pnand %p249, %p250
      %p252 = pneg %p251
      // Predicated region
      $region37: #{tpu_custom_call.1} parent=5 // pred_check
        _
      $region38: #{tpu_custom_call.1} parent=5 // pred_check_branch
        %254 = sbr.rel (%p251) target = $region40
      $region39: #{tpu_custom_call.1} parent=5 // pred_region
        %s255 = ssub.s32 %s19, 1
        %s256 = sand.u32 %s32, 1
        %s257 = scalar_lea.sflag [#allocation3], %s256
        %s258 = sand.u32 %s32, 1
        %s259 = smul.addr %s258, 64
        %s260 = scalar_lea.vmem [#allocation2], %s259
        // Predicated region
        $region41: #{tpu_custom_call.1} parent=39 // pred_check
          %p261 = pneg %p45
        $region42: #{tpu_custom_call.1} parent=39 // pred_check_branch
          %263 = sbr.rel (%p261) target = $region44
        $region43: #{tpu_custom_call.1} parent=39 // pred_region
          %265 = dma.done %s257, 1024
        $region44: #{tpu_custom_call.1} parent=39 // pred_fallthru
          _
        // Predicated region
        $region45: #{tpu_custom_call.1} parent=39 // pred_check
          %p266 = pneg %p66
        $region46: #{tpu_custom_call.1} parent=39 // pred_check_branch
          %268 = sbr.rel (%p266) target = $region48
        $region47: #{tpu_custom_call.1} parent=39 // pred_region
          %270 = dma.done [#allocation6], 65536
        $region48: #{tpu_custom_call.1} parent=39 // pred_fallthru
          _
        // Predicated region
        $region49: #{tpu_custom_call.1} parent=39 // pred_check
          %p271 = pneg %p87
        $region50: #{tpu_custom_call.1} parent=39 // pred_check_branch
          %273 = sbr.rel (%p271) target = $region52
        $region51: #{tpu_custom_call.1} parent=39 // pred_region
          %275 = dma.done [#allocation6], 256
        $region52: #{tpu_custom_call.1} parent=39 // pred_fallthru
          _
        // Predicated region
        $region53: #{tpu_custom_call.1} parent=39 // pred_check
          %p276 = pneg %p108
        $region54: #{tpu_custom_call.1} parent=39 // pred_check_branch
          %278 = sbr.rel (%p276) target = $region56
        $region55: #{tpu_custom_call.1} parent=39 // pred_region
          %280 = dma.done [#allocation9], 65536
        $region56: #{tpu_custom_call.1} parent=39 // pred_fallthru
          _
        // Predicated region
        $region57: #{tpu_custom_call.1} parent=39 // pred_check
          %p281 = pneg %p129
        $region58: #{tpu_custom_call.1} parent=39 // pred_check_branch
          %283 = sbr.rel (%p281) target = $region60
        $region59: #{tpu_custom_call.1} parent=39 // pred_region
          %285 = dma.done [#allocation9], 64
        $region60: #{tpu_custom_call.1} parent=39 // pred_fallthru
          _
        %s286 = sand.u32 %s32, 1
        %s287 = scalar_lea.sflag [#allocation3], %s286
        %s288 = sand.u32 %s32, 1
        %s289 = smul.addr %s288, 64
        %s290 = scalar_lea.vmem [#allocation2], %s289
        %p291 = pneg %p45
        %p292 = pneg %p42
        %p293 = pneg %p66
        %p294 = pneg %p63
        %p295 = pneg %p87
        %p296 = pneg %p84
        %p297 = pneg %p108
        %p298 = pneg %p105
        %p299 = pneg %p129
        %p300 = pneg %p126
        %p301 = pneg %p155
        %p302 = pneg %p152
        %s303 = sand.u32 %s142, 1
        %s304 = scalar_lea.sflag [#allocation4], %s303
        %s305 = sand.u32 %s142, 1
        %s306 = smul.addr %s305, 128
        %s307 = scalar_lea.vmem [#allocation11], %s306
        %s308 = smul.u32 4, %s24
        %s309 = smul.u32 4, %s24
        %v310 = vld [vmem:[%s260] sm:$0xff]
        %v311 = vld [vmem:[%s260 + $0x8] sm:$0xff]
        %v312 = vld [vmem:[%s260 + $0x10] sm:$0xff]
        %v313 = vld [vmem:[%s260 + $0x18] sm:$0xff]
        %v314 = vld [vmem:[%s260 + $0x20] sm:$0xff]
        %v315 = vld [vmem:[%s260 + $0x28] sm:$0xff]
        %v316 = vld [vmem:[%s260 + $0x30] sm:$0xff]
        %v317 = vld [vmem:[%s260 + $0x38] sm:$0xff]
        %v318 = vld [vmem:[#allocation5] sm:$0xff]
        %v319 = vld [vmem:[#allocation5 + $0x8] sm:$0xff]
        %v320 = vld [vmem:[#allocation5 + $0x40] sm:$0xff]
        %v321 = vld [vmem:[#allocation5 + $0x48] sm:$0xff]
        %v322 = vld [vmem:[#allocation5 + $0x80] sm:$0xff]
        %v323 = vld [vmem:[#allocation5 + $0x88] sm:$0xff]
        %v324 = vld [vmem:[#allocation5 + $0xc0] sm:$0xff]
        %v325 = vld [vmem:[#allocation5 + $0xc8] sm:$0xff]
        %v326 = vld [vmem:[#allocation5 + $0x100] sm:$0xff]
        %v327 = vld [vmem:[#allocation5 + $0x108] sm:$0xff]
        %v328 = vld [vmem:[#allocation5 + $0x140] sm:$0xff]
        %v329 = vld [vmem:[#allocation5 + $0x148] sm:$0xff]
        %v330 = vld [vmem:[#allocation5 + $0x180] sm:$0xff]
        %v331 = vld [vmem:[#allocation5 + $0x188] sm:$0xff]
        %v332 = vld [vmem:[#allocation5 + $0x1c0] sm:$0xff]
        %v333 = vld [vmem:[#allocation5 + $0x1c8] sm:$0xff]
        %v334 = vld [vmem:[#allocation5 + $0x200] sm:$0xff]
        %v335 = vld [vmem:[#allocation5 + $0x208] sm:$0xff]
        %v336 = vld [vmem:[#allocation5 + $0x240] sm:$0xff]
        %v337 = vld [vmem:[#allocation5 + $0x248] sm:$0xff]
        %v338 = vld [vmem:[#allocation5 + $0x280] sm:$0xff]
        %v339 = vld [vmem:[#allocation5 + $0x288] sm:$0xff]
        %v340 = vld [vmem:[#allocation5 + $0x2c0] sm:$0xff]
        %v341 = vld [vmem:[#allocation5 + $0x2c8] sm:$0xff]
        %v342 = vld [vmem:[#allocation5 + $0x300] sm:$0xff]
        %v343 = vld [vmem:[#allocation5 + $0x308] sm:$0xff]
        %v344 = vld [vmem:[#allocation5 + $0x340] sm:$0xff]
        %v345 = vld [vmem:[#allocation5 + $0x348] sm:$0xff]
        %v346 = vld [vmem:[#allocation5 + $0x380] sm:$0xff]
        %v347 = vld [vmem:[#allocation5 + $0x388] sm:$0xff]
        %v348 = vld [vmem:[#allocation5 + $0x3c0] sm:$0xff]
        %v349 = vld [vmem:[#allocation5 + $0x3c8] sm:$0xff]
        %v350 = vld [vmem:[#allocation5 + $0x400] sm:$0xff]
        %v351 = vld [vmem:[#allocation5 + $0x408] sm:$0xff]
        %v352 = vld [vmem:[#allocation5 + $0x440] sm:$0xff]
        %v353 = vld [vmem:[#allocation5 + $0x448] sm:$0xff]
        %v354 = vld [vmem:[#allocation5 + $0x480] sm:$0xff]
        %v355 = vld [vmem:[#allocation5 + $0x488] sm:$0xff]
        %v356 = vld [vmem:[#allocation5 + $0x4c0] sm:$0xff]
        %v357 = vld [vmem:[#allocation5 + $0x4c8] sm:$0xff]
        %v358 = vld [vmem:[#allocation5 + $0x500] sm:$0xff]
        %v359 = vld [vmem:[#allocation5 + $0x508] sm:$0xff]
        %v360 = vld [vmem:[#allocation5 + $0x540] sm:$0xff]
        %v361 = vld [vmem:[#allocation5 + $0x548] sm:$0xff]
        %v362 = vld [vmem:[#allocation5 + $0x580] sm:$0xff]
        %v363 = vld [vmem:[#allocation5 + $0x588] sm:$0xff]
        %v364 = vld [vmem:[#allocation5 + $0x5c0] sm:$0xff]
        %v365 = vld [vmem:[#allocation5 + $0x5c8] sm:$0xff]
        %v366 = vld [vmem:[#allocation5 + $0x600] sm:$0xff]
        %v367 = vld [vmem:[#allocation5 + $0x608] sm:$0xff]
        %v368 = vld [vmem:[#allocation5 + $0x640] sm:$0xff]
        %v369 = vld [vmem:[#allocation5 + $0x648] sm:$0xff]
        %v370 = vld [vmem:[#allocation5 + $0x680] sm:$0xff]
        %v371 = vld [vmem:[#allocation5 + $0x688] sm:$0xff]
        %v372 = vld [vmem:[#allocation5 + $0x6c0] sm:$0xff]
        %v373 = vld [vmem:[#allocation5 + $0x6c8] sm:$0xff]
        %v374 = vld [vmem:[#allocation5 + $0x700] sm:$0xff]
        %v375 = vld [vmem:[#allocation5 + $0x708] sm:$0xff]
        %v376 = vld [vmem:[#allocation5 + $0x740] sm:$0xff]
        %v377 = vld [vmem:[#allocation5 + $0x748] sm:$0xff]
        %v378 = vld [vmem:[#allocation5 + $0x780] sm:$0xff]
        %v379 = vld [vmem:[#allocation5 + $0x788] sm:$0xff]
        %v380 = vld [vmem:[#allocation5 + $0x7c0] sm:$0xff]
        %v381 = vld [vmem:[#allocation5 + $0x7c8] sm:$0xff]
        %v382 = vld [vmem:[#allocation5 + $0x800] sm:$0xff]
        %v383 = vld [vmem:[#allocation5 + $0x808] sm:$0xff]
        %v384 = vld [vmem:[#allocation5 + $0x840] sm:$0xff]
        %v385 = vld [vmem:[#allocation5 + $0x848] sm:$0xff]
        %v386 = vld [vmem:[#allocation5 + $0x880] sm:$0xff]
        %v387 = vld [vmem:[#allocation5 + $0x888] sm:$0xff]
        %v388 = vld [vmem:[#allocation5 + $0x8c0] sm:$0xff]
        %v389 = vld [vmem:[#allocation5 + $0x8c8] sm:$0xff]
        %v390 = vld [vmem:[#allocation5 + $0x900] sm:$0xff]
        %v391 = vld [vmem:[#allocation5 + $0x908] sm:$0xff]
        %v392 = vld [vmem:[#allocation5 + $0x940] sm:$0xff]
        %v393 = vld [vmem:[#allocation5 + $0x948] sm:$0xff]
        %v394 = vld [vmem:[#allocation5 + $0x980] sm:$0xff]
        %v395 = vld [vmem:[#allocation5 + $0x988] sm:$0xff]
        %v396 = vld [vmem:[#allocation5 + $0x9c0] sm:$0xff]
        %v397 = vld [vmem:[#allocation5 + $0x9c8] sm:$0xff]
        %v398 = vld [vmem:[#allocation5 + $0xa00] sm:$0xff]
        %v399 = vld [vmem:[#allocation5 + $0xa08] sm:$0xff]
        %v400 = vld [vmem:[#allocation5 + $0xa40] sm:$0xff]
        %v401 = vld [vmem:[#allocation5 + $0xa48] sm:$0xff]
        %v402 = vld [vmem:[#allocation5 + $0xa80] sm:$0xff]
        %v403 = vld [vmem:[#allocation5 + $0xa88] sm:$0xff]
        %v404 = vld [vmem:[#allocation5 + $0xac0] sm:$0xff]
        %v405 = vld [vmem:[#allocation5 + $0xac8] sm:$0xff]
        %v406 = vld [vmem:[#allocation5 + $0xb00] sm:$0xff]
        %v407 = vld [vmem:[#allocation5 + $0xb08] sm:$0xff]
        %v408 = vld [vmem:[#allocation5 + $0xb40] sm:$0xff]
        %v409 = vld [vmem:[#allocation5 + $0xb48] sm:$0xff]
        %v410 = vld [vmem:[#allocation5 + $0xb80] sm:$0xff]
        %v411 = vld [vmem:[#allocation5 + $0xb88] sm:$0xff]
        %v412 = vld [vmem:[#allocation5 + $0xbc0] sm:$0xff]
        %v413 = vld [vmem:[#allocation5 + $0xbc8] sm:$0xff]
        %v414 = vld [vmem:[#allocation5 + $0xc00] sm:$0xff]
        %v415 = vld [vmem:[#allocation5 + $0xc08] sm:$0xff]
        %v416 = vld [vmem:[#allocation5 + $0xc40] sm:$0xff]
        %v417 = vld [vmem:[#allocation5 + $0xc48] sm:$0xff]
        %v418 = vld [vmem:[#allocation5 + $0xc80] sm:$0xff]
        %v419 = vld [vmem:[#allocation5 + $0xc88] sm:$0xff]
        %v420 = vld [vmem:[#allocation5 + $0xcc0] sm:$0xff]
        %v421 = vld [vmem:[#allocation5 + $0xcc8] sm:$0xff]
        %v422 = vld [vmem:[#allocation5 + $0xd00] sm:$0xff]
        %v423 = vld [vmem:[#allocation5 + $0xd08] sm:$0xff]
        %v424 = vld [vmem:[#allocation5 + $0xd40] sm:$0xff]
        %v425 = vld [vmem:[#allocation5 + $0xd48] sm:$0xff]
        %v426 = vld [vmem:[#allocation5 + $0xd80] sm:$0xff]
        %v427 = vld [vmem:[#allocation5 + $0xd88] sm:$0xff]
        %v428 = vld [vmem:[#allocation5 + $0xdc0] sm:$0xff]
        %v429 = vld [vmem:[#allocation5 + $0xdc8] sm:$0xff]
        %v430 = vld [vmem:[#allocation5 + $0xe00] sm:$0xff]
        %v431 = vld [vmem:[#allocation5 + $0xe08] sm:$0xff]
        %v432 = vld [vmem:[#allocation5 + $0xe40] sm:$0xff]
        %v433 = vld [vmem:[#allocation5 + $0xe48] sm:$0xff]
        %v434 = vld [vmem:[#allocation5 + $0xe80] sm:$0xff]
        %v435 = vld [vmem:[#allocation5 + $0xe88] sm:$0xff]
        %v436 = vld [vmem:[#allocation5 + $0xec0] sm:$0xff]
        %v437 = vld [vmem:[#allocation5 + $0xec8] sm:$0xff]
        %v438 = vld [vmem:[#allocation5 + $0xf00] sm:$0xff]
        %v439 = vld [vmem:[#allocation5 + $0xf08] sm:$0xff]
        %v440 = vld [vmem:[#allocation5 + $0xf40] sm:$0xff]
        %v441 = vld [vmem:[#allocation5 + $0xf48] sm:$0xff]
        %v442 = vld [vmem:[#allocation5 + $0xf80] sm:$0xff]
        %v443 = vld [vmem:[#allocation5 + $0xf88] sm:$0xff]
        %v444 = vld [vmem:[#allocation5 + $0xfc0] sm:$0xff]
        %v445 = vld [vmem:[#allocation5 + $0xfc8] sm:$0xff]
        %v446 = vld [vmem:[#allocation7] sm:$0xf]
        %v448 = vperm.slane %v446, 0
        %v449 = vperm.slane %v446, 1
        %v450 = vperm.slane %v446, 2
        %v451 = vperm.slane %v446, 3
        %v464 = vunpack.c.l.b16 %v310
        %v465 = vunpack.c.h.b16 %v310
        %v466 = vunpack.c.l.b16 %v311
        %v467 = vunpack.c.h.b16 %v311
        %v468 = vunpack.c.l.b16 %v312
        %v469 = vunpack.c.h.b16 %v312
        %v470 = vunpack.c.l.b16 %v313
        %v471 = vunpack.c.h.b16 %v313
        %v472 = vunpack.c.l.b16 %v314
        %v473 = vunpack.c.h.b16 %v314
        %v474 = vunpack.c.l.b16 %v315
        %v475 = vunpack.c.h.b16 %v315
        %v476 = vunpack.c.l.b16 %v316
        %v477 = vunpack.c.h.b16 %v316
        %v478 = vunpack.c.l.b16 %v317
        %v479 = vunpack.c.h.b16 %v317
        %v480 = vpack.c.b16 %v468, %v464
        %v481 = vpack.c.b16 %v469, %v465
        %v482 = vpack.c.b16 %v470, %v466
        %v483 = vpack.c.b16 %v471, %v467
        %v484 = vpack.c.b16 %v476, %v472
        %v485 = vpack.c.b16 %v477, %v473
        %v486 = vpack.c.b16 %v478, %v474
        %v487 = vpack.c.b16 %v479, %v475
        %v624 = vunpack.c.l.b16 %v318
        %v625 = vunpack.c.h.b16 %v318
        %v626 = vunpack.c.l.b16 %v319
        %v627 = vunpack.c.h.b16 %v319
        %v628 = vunpack.c.l.b16 %v320
        %v629 = vunpack.c.h.b16 %v320
        %v630 = vunpack.c.l.b16 %v321
        %v631 = vunpack.c.h.b16 %v321
        %v632 = vunpack.c.l.b16 %v322
        %v633 = vunpack.c.h.b16 %v322
        %v634 = vunpack.c.l.b16 %v323
        %v635 = vunpack.c.h.b16 %v323
        %v636 = vunpack.c.l.b16 %v324
        %v637 = vunpack.c.h.b16 %v324
        %v638 = vunpack.c.l.b16 %v325
        %v639 = vunpack.c.h.b16 %v325
        %v640 = vunpack.c.l.b16 %v326
        %v641 = vunpack.c.h.b16 %v326
        %v642 = vunpack.c.l.b16 %v327
        %v643 = vunpack.c.h.b16 %v327
        %v644 = vunpack.c.l.b16 %v328
        %v645 = vunpack.c.h.b16 %v328
        %v646 = vunpack.c.l.b16 %v329
        %v647 = vunpack.c.h.b16 %v329
        %v648 = vunpack.c.l.b16 %v330
        %v649 = vunpack.c.h.b16 %v330
        %v650 = vunpack.c.l.b16 %v331
        %v651 = vunpack.c.h.b16 %v331
        %v652 = vunpack.c.l.b16 %v332
        %v653 = vunpack.c.h.b16 %v332
        %v654 = vunpack.c.l.b16 %v333
        %v655 = vunpack.c.h.b16 %v333
        %v656 = vunpack.c.l.b16 %v334
        %v657 = vunpack.c.h.b16 %v334
        %v658 = vunpack.c.l.b16 %v335
        %v659 = vunpack.c.h.b16 %v335
        %v660 = vunpack.c.l.b16 %v336
        %v661 = vunpack.c.h.b16 %v336
        %v662 = vunpack.c.l.b16 %v337
        %v663 = vunpack.c.h.b16 %v337
        %v664 = vunpack.c.l.b16 %v338
        %v665 = vunpack.c.h.b16 %v338
        %v666 = vunpack.c.l.b16 %v339
        %v667 = vunpack.c.h.b16 %v339
        %v668 = vunpack.c.l.b16 %v340
        %v669 = vunpack.c.h.b16 %v340
        %v670 = vunpack.c.l.b16 %v341
        %v671 = vunpack.c.h.b16 %v341
        %v672 = vunpack.c.l.b16 %v342
        %v673 = vunpack.c.h.b16 %v342
        %v674 = vunpack.c.l.b16 %v343
        %v675 = vunpack.c.h.b16 %v343
        %v676 = vunpack.c.l.b16 %v344
        %v677 = vunpack.c.h.b16 %v344
        %v678 = vunpack.c.l.b16 %v345
        %v679 = vunpack.c.h.b16 %v345
        %v680 = vunpack.c.l.b16 %v346
        %v681 = vunpack.c.h.b16 %v346
        %v682 = vunpack.c.l.b16 %v347
        %v683 = vunpack.c.h.b16 %v347
        %v684 = vunpack.c.l.b16 %v348
        %v685 = vunpack.c.h.b16 %v348
        %v686 = vunpack.c.l.b16 %v349
        %v687 = vunpack.c.h.b16 %v349
        %v688 = vunpack.c.l.b16 %v350
        %v689 = vunpack.c.h.b16 %v350
        %v690 = vunpack.c.l.b16 %v351
        %v691 = vunpack.c.h.b16 %v351
        %v692 = vunpack.c.l.b16 %v352
        %v693 = vunpack.c.h.b16 %v352
        %v694 = vunpack.c.l.b16 %v353
        %v695 = vunpack.c.h.b16 %v353
        %v696 = vunpack.c.l.b16 %v354
        %v697 = vunpack.c.h.b16 %v354
        %v698 = vunpack.c.l.b16 %v355
        %v699 = vunpack.c.h.b16 %v355
        %v700 = vunpack.c.l.b16 %v356
        %v701 = vunpack.c.h.b16 %v356
        %v702 = vunpack.c.l.b16 %v357
        %v703 = vunpack.c.h.b16 %v357
        %v704 = vunpack.c.l.b16 %v358
        %v705 = vunpack.c.h.b16 %v358
        %v706 = vunpack.c.l.b16 %v359
        %v707 = vunpack.c.h.b16 %v359
        %v708 = vunpack.c.l.b16 %v360
        %v709 = vunpack.c.h.b16 %v360
        %v710 = vunpack.c.l.b16 %v361
        %v711 = vunpack.c.h.b16 %v361
        %v712 = vunpack.c.l.b16 %v362
        %v713 = vunpack.c.h.b16 %v362
        %v714 = vunpack.c.l.b16 %v363
        %v715 = vunpack.c.h.b16 %v363
        %v716 = vunpack.c.l.b16 %v364
        %v717 = vunpack.c.h.b16 %v364
        %v718 = vunpack.c.l.b16 %v365
        %v719 = vunpack.c.h.b16 %v365
        %v720 = vunpack.c.l.b16 %v366
        %v721 = vunpack.c.h.b16 %v366
        %v722 = vunpack.c.l.b16 %v367
        %v723 = vunpack.c.h.b16 %v367
        %v724 = vunpack.c.l.b16 %v368
        %v725 = vunpack.c.h.b16 %v368
        %v726 = vunpack.c.l.b16 %v369
        %v727 = vunpack.c.h.b16 %v369
        %v728 = vunpack.c.l.b16 %v370
        %v729 = vunpack.c.h.b16 %v370
        %v730 = vunpack.c.l.b16 %v371
        %v731 = vunpack.c.h.b16 %v371
        %v732 = vunpack.c.l.b16 %v372
        %v733 = vunpack.c.h.b16 %v372
        %v734 = vunpack.c.l.b16 %v373
        %v735 = vunpack.c.h.b16 %v373
        %v736 = vunpack.c.l.b16 %v374
        %v737 = vunpack.c.h.b16 %v374
        %v738 = vunpack.c.l.b16 %v375
        %v739 = vunpack.c.h.b16 %v375
        %v740 = vunpack.c.l.b16 %v376
        %v741 = vunpack.c.h.b16 %v376
        %v742 = vunpack.c.l.b16 %v377
        %v743 = vunpack.c.h.b16 %v377
        %v744 = vunpack.c.l.b16 %v378
        %v745 = vunpack.c.h.b16 %v378
        %v746 = vunpack.c.l.b16 %v379
        %v747 = vunpack.c.h.b16 %v379
        %v748 = vunpack.c.l.b16 %v380
        %v749 = vunpack.c.h.b16 %v380
        %v750 = vunpack.c.l.b16 %v381
        %v751 = vunpack.c.h.b16 %v381
        %v752 = vunpack.c.l.b16 %v382
        %v753 = vunpack.c.h.b16 %v382
        %v754 = vunpack.c.l.b16 %v383
        %v755 = vunpack.c.h.b16 %v383
        %v756 = vunpack.c.l.b16 %v384
        %v757 = vunpack.c.h.b16 %v384
        %v758 = vunpack.c.l.b16 %v385
        %v759 = vunpack.c.h.b16 %v385
        %v760 = vunpack.c.l.b16 %v386
        %v761 = vunpack.c.h.b16 %v386
        %v762 = vunpack.c.l.b16 %v387
        %v763 = vunpack.c.h.b16 %v387
        %v764 = vunpack.c.l.b16 %v388
        %v765 = vunpack.c.h.b16 %v388
        %v766 = vunpack.c.l.b16 %v389
        %v767 = vunpack.c.h.b16 %v389
        %v768 = vunpack.c.l.b16 %v390
        %v769 = vunpack.c.h.b16 %v390
        %v770 = vunpack.c.l.b16 %v391
        %v771 = vunpack.c.h.b16 %v391
        %v772 = vunpack.c.l.b16 %v392
        %v773 = vunpack.c.h.b16 %v392
        %v774 = vunpack.c.l.b16 %v393
        %v775 = vunpack.c.h.b16 %v393
        %v776 = vunpack.c.l.b16 %v394
        %v777 = vunpack.c.h.b16 %v394
        %v778 = vunpack.c.l.b16 %v395
        %v779 = vunpack.c.h.b16 %v395
        %v780 = vunpack.c.l.b16 %v396
        %v781 = vunpack.c.h.b16 %v396
        %v782 = vunpack.c.l.b16 %v397
        %v783 = vunpack.c.h.b16 %v397
        %v784 = vunpack.c.l.b16 %v398
        %v785 = vunpack.c.h.b16 %v398
        %v786 = vunpack.c.l.b16 %v399
        %v787 = vunpack.c.h.b16 %v399
        %v788 = vunpack.c.l.b16 %v400
        %v789 = vunpack.c.h.b16 %v400
        %v790 = vunpack.c.l.b16 %v401
        %v791 = vunpack.c.h.b16 %v401
        %v792 = vunpack.c.l.b16 %v402
        %v793 = vunpack.c.h.b16 %v402
        %v794 = vunpack.c.l.b16 %v403
        %v795 = vunpack.c.h.b16 %v403
        %v796 = vunpack.c.l.b16 %v404
        %v797 = vunpack.c.h.b16 %v404
        %v798 = vunpack.c.l.b16 %v405
        %v799 = vunpack.c.h.b16 %v405
        %v800 = vunpack.c.l.b16 %v406
        %v801 = vunpack.c.h.b16 %v406
        %v802 = vunpack.c.l.b16 %v407
        %v803 = vunpack.c.h.b16 %v407
        %v804 = vunpack.c.l.b16 %v408
        %v805 = vunpack.c.h.b16 %v408
        %v806 = vunpack.c.l.b16 %v409
        %v807 = vunpack.c.h.b16 %v409
        %v808 = vunpack.c.l.b16 %v410
        %v809 = vunpack.c.h.b16 %v410
        %v810 = vunpack.c.l.b16 %v411
        %v811 = vunpack.c.h.b16 %v411
        %v812 = vunpack.c.l.b16 %v412
        %v813 = vunpack.c.h.b16 %v412
        %v814 = vunpack.c.l.b16 %v413
        %v815 = vunpack.c.h.b16 %v413
        %v816 = vunpack.c.l.b16 %v414
        %v817 = vunpack.c.h.b16 %v414
        %v818 = vunpack.c.l.b16 %v415
        %v819 = vunpack.c.h.b16 %v415
        %v820 = vunpack.c.l.b16 %v416
        %v821 = vunpack.c.h.b16 %v416
        %v822 = vunpack.c.l.b16 %v417
        %v823 = vunpack.c.h.b16 %v417
        %v824 = vunpack.c.l.b16 %v418
        %v825 = vunpack.c.h.b16 %v418
        %v826 = vunpack.c.l.b16 %v419
        %v827 = vunpack.c.h.b16 %v419
        %v828 = vunpack.c.l.b16 %v420
        %v829 = vunpack.c.h.b16 %v420
        %v830 = vunpack.c.l.b16 %v421
        %v831 = vunpack.c.h.b16 %v421
        %v832 = vunpack.c.l.b16 %v422
        %v833 = vunpack.c.h.b16 %v422
        %v834 = vunpack.c.l.b16 %v423
        %v835 = vunpack.c.h.b16 %v423
        %v836 = vunpack.c.l.b16 %v424
        %v837 = vunpack.c.h.b16 %v424
        %v838 = vunpack.c.l.b16 %v425
        %v839 = vunpack.c.h.b16 %v425
        %v840 = vunpack.c.l.b16 %v426
        %v841 = vunpack.c.h.b16 %v426
        %v842 = vunpack.c.l.b16 %v427
        %v843 = vunpack.c.h.b16 %v427
        %v844 = vunpack.c.l.b16 %v428
        %v845 = vunpack.c.h.b16 %v428
        %v846 = vunpack.c.l.b16 %v429
        %v847 = vunpack.c.h.b16 %v429
        %v848 = vunpack.c.l.b16 %v430
        %v849 = vunpack.c.h.b16 %v430
        %v850 = vunpack.c.l.b16 %v431
        %v851 = vunpack.c.h.b16 %v431
        %v852 = vunpack.c.l.b16 %v432
        %v853 = vunpack.c.h.b16 %v432
        %v854 = vunpack.c.l.b16 %v433
        %v855 = vunpack.c.h.b16 %v433
        %v856 = vunpack.c.l.b16 %v434
        %v857 = vunpack.c.h.b16 %v434
        %v858 = vunpack.c.l.b16 %v435
        %v859 = vunpack.c.h.b16 %v435
        %v860 = vunpack.c.l.b16 %v436
        %v861 = vunpack.c.h.b16 %v436
        %v862 = vunpack.c.l.b16 %v437
        %v863 = vunpack.c.h.b16 %v437
        %v864 = vunpack.c.l.b16 %v438
        %v865 = vunpack.c.h.b16 %v438
        %v866 = vunpack.c.l.b16 %v439
        %v867 = vunpack.c.h.b16 %v439
        %v868 = vunpack.c.l.b16 %v440
        %v869 = vunpack.c.h.b16 %v440
        %v870 = vunpack.c.l.b16 %v441
        %v871 = vunpack.c.h.b16 %v441
        %v872 = vunpack.c.l.b16 %v442
        %v873 = vunpack.c.h.b16 %v442
        %v874 = vunpack.c.l.b16 %v443
        %v875 = vunpack.c.h.b16 %v443
        %v876 = vunpack.c.l.b16 %v444
        %v877 = vunpack.c.h.b16 %v444
        %v878 = vunpack.c.l.b16 %v445
        %v879 = vunpack.c.h.b16 %v445
        %v880 = vpack.c.b16 %v628, %v624
        %v881 = vpack.c.b16 %v629, %v625
        %v882 = vpack.c.b16 %v630, %v626
        %v883 = vpack.c.b16 %v631, %v627
        %v884 = vpack.c.b16 %v636, %v632
        %v885 = vpack.c.b16 %v637, %v633
        %v886 = vpack.c.b16 %v638, %v634
        %v887 = vpack.c.b16 %v639, %v635
        %v888 = vpack.c.b16 %v644, %v640
        %v889 = vpack.c.b16 %v645, %v641
        %v890 = vpack.c.b16 %v646, %v642
        %v891 = vpack.c.b16 %v647, %v643
        %v892 = vpack.c.b16 %v652, %v648
        %v893 = vpack.c.b16 %v653, %v649
        %v894 = vpack.c.b16 %v654, %v650
        %v895 = vpack.c.b16 %v655, %v651
        %v896 = vpack.c.b16 %v660, %v656
        %v897 = vpack.c.b16 %v661, %v657
        %v898 = vpack.c.b16 %v662, %v658
        %v899 = vpack.c.b16 %v663, %v659
        %v900 = vpack.c.b16 %v668, %v664
        %v901 = vpack.c.b16 %v669, %v665
        %v902 = vpack.c.b16 %v670, %v666
        %v903 = vpack.c.b16 %v671, %v667
        %v904 = vpack.c.b16 %v676, %v672
        %v905 = vpack.c.b16 %v677, %v673
        %v906 = vpack.c.b16 %v678, %v674
        %v907 = vpack.c.b16 %v679, %v675
        %v908 = vpack.c.b16 %v684, %v680
        %v909 = vpack.c.b16 %v685, %v681
        %v910 = vpack.c.b16 %v686, %v682
        %v911 = vpack.c.b16 %v687, %v683
        %v912 = vpack.c.b16 %v692, %v688
        %v913 = vpack.c.b16 %v693, %v689
        %v914 = vpack.c.b16 %v694, %v690
        %v915 = vpack.c.b16 %v695, %v691
        %v916 = vpack.c.b16 %v700, %v696
        %v917 = vpack.c.b16 %v701, %v697
        %v918 = vpack.c.b16 %v702, %v698
        %v919 = vpack.c.b16 %v703, %v699
        %v920 = vpack.c.b16 %v708, %v704
        %v921 = vpack.c.b16 %v709, %v705
        %v922 = vpack.c.b16 %v710, %v706
        %v923 = vpack.c.b16 %v711, %v707
        %v924 = vpack.c.b16 %v716, %v712
        %v925 = vpack.c.b16 %v717, %v713
        %v926 = vpack.c.b16 %v718, %v714
        %v927 = vpack.c.b16 %v719, %v715
        %v928 = vpack.c.b16 %v724, %v720
        %v929 = vpack.c.b16 %v725, %v721
        %v930 = vpack.c.b16 %v726, %v722
        %v931 = vpack.c.b16 %v727, %v723
        %v932 = vpack.c.b16 %v732, %v728
        %v933 = vpack.c.b16 %v733, %v729
        %v934 = vpack.c.b16 %v734, %v730
        %v935 = vpack.c.b16 %v735, %v731
        %v936 = vpack.c.b16 %v740, %v736
        %v937 = vpack.c.b16 %v741, %v737
        %v938 = vpack.c.b16 %v742, %v738
        %v939 = vpack.c.b16 %v743, %v739
        %v940 = vpack.c.b16 %v748, %v744
        %v941 = vpack.c.b16 %v749, %v745
        %v942 = vpack.c.b16 %v750, %v746
        %v943 = vpack.c.b16 %v751, %v747
        %v944 = vpack.c.b16 %v756, %v752
        %v945 = vpack.c.b16 %v757, %v753
        %v946 = vpack.c.b16 %v758, %v754
        %v947 = vpack.c.b16 %v759, %v755
        %v948 = vpack.c.b16 %v764, %v760
        %v949 = vpack.c.b16 %v765, %v761
        %v950 = vpack.c.b16 %v766, %v762
        %v951 = vpack.c.b16 %v767, %v763
        %v952 = vpack.c.b16 %v772, %v768
        %v953 = vpack.c.b16 %v773, %v769
        %v954 = vpack.c.b16 %v774, %v770
        %v955 = vpack.c.b16 %v775, %v771
        %v956 = vpack.c.b16 %v780, %v776
        %v957 = vpack.c.b16 %v781, %v777
        %v958 = vpack.c.b16 %v782, %v778
        %v959 = vpack.c.b16 %v783, %v779
        %v960 = vpack.c.b16 %v788, %v784
        %v961 = vpack.c.b16 %v789, %v785
        %v962 = vpack.c.b16 %v790, %v786
        %v963 = vpack.c.b16 %v791, %v787
        %v964 = vpack.c.b16 %v796, %v792
        %v965 = vpack.c.b16 %v797, %v793
        %v966 = vpack.c.b16 %v798, %v794
        %v967 = vpack.c.b16 %v799, %v795
        %v968 = vpack.c.b16 %v804, %v800
        %v969 = vpack.c.b16 %v805, %v801
        %v970 = vpack.c.b16 %v806, %v802
        %v971 = vpack.c.b16 %v807, %v803
        %v972 = vpack.c.b16 %v812, %v808
        %v973 = vpack.c.b16 %v813, %v809
        %v974 = vpack.c.b16 %v814, %v810
        %v975 = vpack.c.b16 %v815, %v811
        %v976 = vpack.c.b16 %v820, %v816
        %v977 = vpack.c.b16 %v821, %v817
        %v978 = vpack.c.b16 %v822, %v818
        %v979 = vpack.c.b16 %v823, %v819
        %v980 = vpack.c.b16 %v828, %v824
        %v981 = vpack.c.b16 %v829, %v825
        %v982 = vpack.c.b16 %v830, %v826
        %v983 = vpack.c.b16 %v831, %v827
        %v984 = vpack.c.b16 %v836, %v832
        %v985 = vpack.c.b16 %v837, %v833
        %v986 = vpack.c.b16 %v838, %v834
        %v987 = vpack.c.b16 %v839, %v835
        %v988 = vpack.c.b16 %v844, %v840
        %v989 = vpack.c.b16 %v845, %v841
        %v990 = vpack.c.b16 %v846, %v842
        %v991 = vpack.c.b16 %v847, %v843
        %v992 = vpack.c.b16 %v852, %v848
        %v993 = vpack.c.b16 %v853, %v849
        %v994 = vpack.c.b16 %v854, %v850
        %v995 = vpack.c.b16 %v855, %v851
        %v996 = vpack.c.b16 %v860, %v856
        %v997 = vpack.c.b16 %v861, %v857
        %v998 = vpack.c.b16 %v862, %v858
        %v999 = vpack.c.b16 %v863, %v859
        %v1000 = vpack.c.b16 %v868, %v864
        %v1001 = vpack.c.b16 %v869, %v865
        %v1002 = vpack.c.b16 %v870, %v866
        %v1003 = vpack.c.b16 %v871, %v867
        %v1004 = vpack.c.b16 %v876, %v872
        %v1005 = vpack.c.b16 %v877, %v873
        %v1006 = vpack.c.b16 %v878, %v874
        %v1007 = vpack.c.b16 %v879, %v875
        %1136 = vmatpush.bf16.msra.mxu0 %v908
        %1137 = vmatpush.bf16.msra.mxu0 %v904
        %1138 = vmatpush.bf16.msra.mxu0 %v900
        %1139 = vmatpush.bf16.msra.mxu0 %v896
        %1140 = vmatpush.bf16.msra.mxu0 %v892
        %1141 = vmatpush.bf16.msra.mxu0 %v888
        %1142 = vmatpush.bf16.msra.mxu0 %v884
        %1143 = vmatpush.bf16.msra.mxu0 %v880
        %1144 = vmatmul.bf16.gmra.mxu0 %v480
        %v1145 = vpop.f32.mrf.mxu0
        %v1146 = vadd.f32 %v448, %v1145
        %v1147 = vpop.f32.mrf.mxu0
        %v1148 = vadd.f32 %v448, %v1147
        %1149 = vmatmul.bf16.gmra.mxu0 %v484
        %v1150 = vpop.f32.mrf.mxu0
        %v1151 = vadd.f32 %v448, %v1150
        %v1152 = vpop.f32.mrf.mxu0
        %v1153 = vadd.f32 %v448, %v1152
        %1154 = vdwg.mxu0
        %1155 = vmatpush.bf16.msra.mxu0 %v940
        %1156 = vmatpush.bf16.msra.mxu0 %v936
        %1157 = vmatpush.bf16.msra.mxu0 %v932
        %1158 = vmatpush.bf16.msra.mxu0 %v928
        %1159 = vmatpush.bf16.msra.mxu0 %v924
        %1160 = vmatpush.bf16.msra.mxu0 %v920
        %1161 = vmatpush.bf16.msra.mxu0 %v916
        %1162 = vmatpush.bf16.msra.mxu0 %v912
        %1163 = vmatmul.bf16.gmra.mxu0 %v481
        %v1164 = vpop.f32.mrf.mxu0
        %v1165 = vadd.f32 %v1146, %v1164
        %v1166 = vpop.f32.mrf.mxu0
        %v1167 = vadd.f32 %v1148, %v1166
        %1168 = vmatmul.bf16.gmra.mxu0 %v485
        %v1169 = vpop.f32.mrf.mxu0
        %v1170 = vadd.f32 %v1151, %v1169
        %v1171 = vpop.f32.mrf.mxu0
        %v1172 = vadd.f32 %v1153, %v1171
        %1173 = vdwg.mxu0
        %1174 = vmatpush.bf16.msra.mxu0 %v972
        %1175 = vmatpush.bf16.msra.mxu0 %v968
        %1176 = vmatpush.bf16.msra.mxu0 %v964
        %1177 = vmatpush.bf16.msra.mxu0 %v960
        %1178 = vmatpush.bf16.msra.mxu0 %v956
        %1179 = vmatpush.bf16.msra.mxu0 %v952
        %1180 = vmatpush.bf16.msra.mxu0 %v948
        %1181 = vmatpush.bf16.msra.mxu0 %v944
        %1182 = vmatmul.bf16.gmra.mxu0 %v482
        %v1183 = vpop.f32.mrf.mxu0
        %v1184 = vadd.f32 %v1165, %v1183
        %v1185 = vpop.f32.mrf.mxu0
        %v1186 = vadd.f32 %v1167, %v1185
        %1187 = vmatmul.bf16.gmra.mxu0 %v486
        %v1188 = vpop.f32.mrf.mxu0
        %v1189 = vadd.f32 %v1170, %v1188
        %v1190 = vpop.f32.mrf.mxu0
        %v1191 = vadd.f32 %v1172, %v1190
        %1192 = vdwg.mxu0
        %1193 = vmatpush.bf16.msra.mxu0 %v1004
        %1194 = vmatpush.bf16.msra.mxu0 %v1000
        %1195 = vmatpush.bf16.msra.mxu0 %v996
        %1196 = vmatpush.bf16.msra.mxu0 %v992
        %1197 = vmatpush.bf16.msra.mxu0 %v988
        %1198 = vmatpush.bf16.msra.mxu0 %v984
        %1199 = vmatpush.bf16.msra.mxu0 %v980
        %1200 = vmatpush.bf16.msra.mxu0 %v976
        %1201 = vmatmul.bf16.gmra.mxu0 %v483
        %v1202 = vpop.f32.mrf.mxu0
        %v1203 = vadd.f32 %v1184, %v1202
        %v1204 = vpop.f32.mrf.mxu0
        %v1205 = vadd.f32 %v1186, %v1204
        %1206 = vmatmul.bf16.gmra.mxu0 %v487
        %v1207 = vpop.f32.mrf.mxu0
        %v1208 = vadd.f32 %v1189, %v1207
        %v1209 = vpop.f32.mrf.mxu0
        %v1210 = vadd.f32 %v1191, %v1209
        %1211 = vdwg.mxu0
        %1212 = vmatpush.bf16.msra.mxu0 %v909
        %1213 = vmatpush.bf16.msra.mxu0 %v905
        %1214 = vmatpush.bf16.msra.mxu0 %v901
        %1215 = vmatpush.bf16.msra.mxu0 %v897
        %1216 = vmatpush.bf16.msra.mxu0 %v893
        %1217 = vmatpush.bf16.msra.mxu0 %v889
        %1218 = vmatpush.bf16.msra.mxu0 %v885
        %1219 = vmatpush.bf16.msra.mxu0 %v881
        %1220 = vmatmul.bf16.gmra.mxu0 %v480
        %v1221 = vpop.f32.mrf.mxu0
        %v1222 = vadd.f32 %v449, %v1221
        %v1223 = vpop.f32.mrf.mxu0
        %v1224 = vadd.f32 %v449, %v1223
        %1225 = vmatmul.bf16.gmra.mxu0 %v484
        %v1226 = vpop.f32.mrf.mxu0
        %v1227 = vadd.f32 %v449, %v1226
        %v1228 = vpop.f32.mrf.mxu0
        %v1229 = vadd.f32 %v449, %v1228
        %1230 = vdwg.mxu0
        %1231 = vmatpush.bf16.msra.mxu0 %v941
        %1232 = vmatpush.bf16.msra.mxu0 %v937
        %1233 = vmatpush.bf16.msra.mxu0 %v933
        %1234 = vmatpush.bf16.msra.mxu0 %v929
        %1235 = vmatpush.bf16.msra.mxu0 %v925
        %1236 = vmatpush.bf16.msra.mxu0 %v921
        %1237 = vmatpush.bf16.msra.mxu0 %v917
        %1238 = vmatpush.bf16.msra.mxu0 %v913
        %1239 = vmatmul.bf16.gmra.mxu0 %v481
        %v1240 = vpop.f32.mrf.mxu0
        %v1241 = vadd.f32 %v1222, %v1240
        %v1242 = vpop.f32.mrf.mxu0
        %v1243 = vadd.f32 %v1224, %v1242
        %1244 = vmatmul.bf16.gmra.mxu0 %v485
        %v1245 = vpop.f32.mrf.mxu0
        %v1246 = vadd.f32 %v1227, %v1245
        %v1247 = vpop.f32.mrf.mxu0
        %v1248 = vadd.f32 %v1229, %v1247
        %1249 = vdwg.mxu0
        %1250 = vmatpush.bf16.msra.mxu0 %v973
        %1251 = vmatpush.bf16.msra.mxu0 %v969
        %1252 = vmatpush.bf16.msra.mxu0 %v965
        %1253 = vmatpush.bf16.msra.mxu0 %v961
        %1254 = vmatpush.bf16.msra.mxu0 %v957
        %1255 = vmatpush.bf16.msra.mxu0 %v953
        %1256 = vmatpush.bf16.msra.mxu0 %v949
        %1257 = vmatpush.bf16.msra.mxu0 %v945
        %1258 = vmatmul.bf16.gmra.mxu0 %v482
        %v1259 = vpop.f32.mrf.mxu0
        %v1260 = vadd.f32 %v1241, %v1259
        %v1261 = vpop.f32.mrf.mxu0
        %v1262 = vadd.f32 %v1243, %v1261
        %1263 = vmatmul.bf16.gmra.mxu0 %v486
        %v1264 = vpop.f32.mrf.mxu0
        %v1265 = vadd.f32 %v1246, %v1264
        %v1266 = vpop.f32.mrf.mxu0
        %v1267 = vadd.f32 %v1248, %v1266
        %1268 = vdwg.mxu0
        %1269 = vmatpush.bf16.msra.mxu0 %v1005
        %1270 = vmatpush.bf16.msra.mxu0 %v1001
        %1271 = vmatpush.bf16.msra.mxu0 %v997
        %1272 = vmatpush.bf16.msra.mxu0 %v993
        %1273 = vmatpush.bf16.msra.mxu0 %v989
        %1274 = vmatpush.bf16.msra.mxu0 %v985
        %1275 = vmatpush.bf16.msra.mxu0 %v981
        %1276 = vmatpush.bf16.msra.mxu0 %v977
        %1277 = vmatmul.bf16.gmra.mxu0 %v483
        %v1278 = vpop.f32.mrf.mxu0
        %v1279 = vadd.f32 %v1260, %v1278
        %v1280 = vpop.f32.mrf.mxu0
        %v1281 = vadd.f32 %v1262, %v1280
        %1282 = vmatmul.bf16.gmra.mxu0 %v487
        %v1283 = vpop.f32.mrf.mxu0
        %v1284 = vadd.f32 %v1265, %v1283
        %v1285 = vpop.f32.mrf.mxu0
        %v1286 = vadd.f32 %v1267, %v1285
        %1287 = vdwg.mxu0
        %1288 = vmatpush.bf16.msra.mxu0 %v910
        %1289 = vmatpush.bf16.msra.mxu0 %v906
        %1290 = vmatpush.bf16.msra.mxu0 %v902
        %1291 = vmatpush.bf16.msra.mxu0 %v898
        %1292 = vmatpush.bf16.msra.mxu0 %v894
        %1293 = vmatpush.bf16.msra.mxu0 %v890
        %1294 = vmatpush.bf16.msra.mxu0 %v886
        %1295 = vmatpush.bf16.msra.mxu0 %v882
        %1296 = vmatmul.bf16.gmra.mxu0 %v480
        %v1297 = vpop.f32.mrf.mxu0
        %v1298 = vadd.f32 %v450, %v1297
        %v1299 = vpop.f32.mrf.mxu0
        %v1300 = vadd.f32 %v450, %v1299
        %1301 = vmatmul.bf16.gmra.mxu0 %v484
        %v1302 = vpop.f32.mrf.mxu0
        %v1303 = vadd.f32 %v450, %v1302
        %v1304 = vpop.f32.mrf.mxu0
        %v1305 = vadd.f32 %v450, %v1304
        %1306 = vdwg.mxu0
        %1307 = vmatpush.bf16.msra.mxu0 %v942
        %1308 = vmatpush.bf16.msra.mxu0 %v938
        %1309 = vmatpush.bf16.msra.mxu0 %v934
        %1310 = vmatpush.bf16.msra.mxu0 %v930
        %1311 = vmatpush.bf16.msra.mxu0 %v926
        %1312 = vmatpush.bf16.msra.mxu0 %v922
        %1313 = vmatpush.bf16.msra.mxu0 %v918
        %1314 = vmatpush.bf16.msra.mxu0 %v914
        %1315 = vmatmul.bf16.gmra.mxu0 %v481
        %v1316 = vpop.f32.mrf.mxu0
        %v1317 = vadd.f32 %v1298, %v1316
        %v1318 = vpop.f32.mrf.mxu0
        %v1319 = vadd.f32 %v1300, %v1318
        %1320 = vmatmul.bf16.gmra.mxu0 %v485
        %v1321 = vpop.f32.mrf.mxu0
        %v1322 = vadd.f32 %v1303, %v1321
        %v1323 = vpop.f32.mrf.mxu0
        %v1324 = vadd.f32 %v1305, %v1323
        %1325 = vdwg.mxu0
        %1326 = vmatpush.bf16.msra.mxu0 %v974
        %1327 = vmatpush.bf16.msra.mxu0 %v970
        %1328 = vmatpush.bf16.msra.mxu0 %v966
        %1329 = vmatpush.bf16.msra.mxu0 %v962
        %1330 = vmatpush.bf16.msra.mxu0 %v958
        %1331 = vmatpush.bf16.msra.mxu0 %v954
        %1332 = vmatpush.bf16.msra.mxu0 %v950
        %1333 = vmatpush.bf16.msra.mxu0 %v946
        %1334 = vmatmul.bf16.gmra.mxu0 %v482
        %v1335 = vpop.f32.mrf.mxu0
        %v1336 = vadd.f32 %v1317, %v1335
        %v1337 = vpop.f32.mrf.mxu0
        %v1338 = vadd.f32 %v1319, %v1337
        %1339 = vmatmul.bf16.gmra.mxu0 %v486
        %v1340 = vpop.f32.mrf.mxu0
        %v1341 = vadd.f32 %v1322, %v1340
        %v1342 = vpop.f32.mrf.mxu0
        %v1343 = vadd.f32 %v1324, %v1342
        %1344 = vdwg.mxu0
        %1345 = vmatpush.bf16.msra.mxu0 %v1006
        %1346 = vmatpush.bf16.msra.mxu0 %v1002
        %1347 = vmatpush.bf16.msra.mxu0 %v998
        %1348 = vmatpush.bf16.msra.mxu0 %v994
        %1349 = vmatpush.bf16.msra.mxu0 %v990
        %1350 = vmatpush.bf16.msra.mxu0 %v986
        %1351 = vmatpush.bf16.msra.mxu0 %v982
        %1352 = vmatpush.bf16.msra.mxu0 %v978
        %1353 = vmatmul.bf16.gmra.mxu0 %v483
        %v1354 = vpop.f32.mrf.mxu0
        %v1355 = vadd.f32 %v1336, %v1354
        %v1356 = vpop.f32.mrf.mxu0
        %v1357 = vadd.f32 %v1338, %v1356
        %1358 = vmatmul.bf16.gmra.mxu0 %v487
        %v1359 = vpop.f32.mrf.mxu0
        %v1360 = vadd.f32 %v1341, %v1359
        %v1361 = vpop.f32.mrf.mxu0
        %v1362 = vadd.f32 %v1343, %v1361
        %1363 = vdwg.mxu0
        %1364 = vmatpush.bf16.msra.mxu0 %v911
        %1365 = vmatpush.bf16.msra.mxu0 %v907
        %1366 = vmatpush.bf16.msra.mxu0 %v903
        %1367 = vmatpush.bf16.msra.mxu0 %v899
        %1368 = vmatpush.bf16.msra.mxu0 %v895
        %1369 = vmatpush.bf16.msra.mxu0 %v891
        %1370 = vmatpush.bf16.msra.mxu0 %v887
        %1371 = vmatpush.bf16.msra.mxu0 %v883
        %1372 = vmatmul.bf16.gmra.mxu0 %v480
        %v1373 = vpop.f32.mrf.mxu0
        %v1374 = vadd.f32 %v451, %v1373
        %v1375 = vpop.f32.mrf.mxu0
        %v1376 = vadd.f32 %v451, %v1375
        %1377 = vmatmul.bf16.gmra.mxu0 %v484
        %v1378 = vpop.f32.mrf.mxu0
        %v1379 = vadd.f32 %v451, %v1378
        %v1380 = vpop.f32.mrf.mxu0
        %v1381 = vadd.f32 %v451, %v1380
        %1382 = vdwg.mxu0
        %1383 = vmatpush.bf16.msra.mxu0 %v943
        %1384 = vmatpush.bf16.msra.mxu0 %v939
        %1385 = vmatpush.bf16.msra.mxu0 %v935
        %1386 = vmatpush.bf16.msra.mxu0 %v931
        %1387 = vmatpush.bf16.msra.mxu0 %v927
        %1388 = vmatpush.bf16.msra.mxu0 %v923
        %1389 = vmatpush.bf16.msra.mxu0 %v919
        %1390 = vmatpush.bf16.msra.mxu0 %v915
        %1391 = vmatmul.bf16.gmra.mxu0 %v481
        %v1392 = vpop.f32.mrf.mxu0
        %v1393 = vadd.f32 %v1374, %v1392
        %v1394 = vpop.f32.mrf.mxu0
        %v1395 = vadd.f32 %v1376, %v1394
        %1396 = vmatmul.bf16.gmra.mxu0 %v485
        %v1397 = vpop.f32.mrf.mxu0
        %v1398 = vadd.f32 %v1379, %v1397
        %v1399 = vpop.f32.mrf.mxu0
        %v1400 = vadd.f32 %v1381, %v1399
        %1401 = vdwg.mxu0
        %1402 = vmatpush.bf16.msra.mxu0 %v975
        %1403 = vmatpush.bf16.msra.mxu0 %v971
        %1404 = vmatpush.bf16.msra.mxu0 %v967
        %1405 = vmatpush.bf16.msra.mxu0 %v963
        %1406 = vmatpush.bf16.msra.mxu0 %v959
        %1407 = vmatpush.bf16.msra.mxu0 %v955
        %1408 = vmatpush.bf16.msra.mxu0 %v951
        %1409 = vmatpush.bf16.msra.mxu0 %v947
        %1410 = vmatmul.bf16.gmra.mxu0 %v482
        %v1411 = vpop.f32.mrf.mxu0
        %v1412 = vadd.f32 %v1393, %v1411
        %v1413 = vpop.f32.mrf.mxu0
        %v1414 = vadd.f32 %v1395, %v1413
        %1415 = vmatmul.bf16.gmra.mxu0 %v486
        %v1416 = vpop.f32.mrf.mxu0
        %v1417 = vadd.f32 %v1398, %v1416
        %v1418 = vpop.f32.mrf.mxu0
        %v1419 = vadd.f32 %v1400, %v1418
        %1420 = vdwg.mxu0
        %1421 = vmatpush.bf16.msra.mxu0 %v1007
        %1422 = vmatpush.bf16.msra.mxu0 %v1003
        %1423 = vmatpush.bf16.msra.mxu0 %v999
        %1424 = vmatpush.bf16.msra.mxu0 %v995
        %1425 = vmatpush.bf16.msra.mxu0 %v991
        %1426 = vmatpush.bf16.msra.mxu0 %v987
        %1427 = vmatpush.bf16.msra.mxu0 %v983
        %1428 = vmatpush.bf16.msra.mxu0 %v979
        %1429 = vmatmul.bf16.gmra.mxu0 %v483
        %v1430 = vpop.f32.mrf.mxu0
        %v1431 = vadd.f32 %v1412, %v1430
        %v1432 = vpop.f32.mrf.mxu0
        %v1433 = vadd.f32 %v1414, %v1432
        %1434 = vmatmul.bf16.gmra.mxu0 %v487
        %v1435 = vpop.f32.mrf.mxu0
        %v1436 = vadd.f32 %v1417, %v1435
        %v1437 = vpop.f32.mrf.mxu0
        %v1438 = vadd.f32 %v1419, %v1437
        %1439 = vdwg.mxu0
        %v1440 = vmax.f32 %v1203, 0.0
        %v1441 = vmax.f32 %v1279, 0.0
        %v1442 = vmax.f32 %v1355, 0.0
        %v1443 = vmax.f32 %v1431, 0.0
        %v1444 = vmax.f32 %v1205, 0.0
        %v1445 = vmax.f32 %v1281, 0.0
        %v1446 = vmax.f32 %v1357, 0.0
        %v1447 = vmax.f32 %v1433, 0.0
        %v1448 = vmax.f32 %v1208, 0.0
        %v1449 = vmax.f32 %v1284, 0.0
        %v1450 = vmax.f32 %v1360, 0.0
        %v1451 = vmax.f32 %v1436, 0.0
        %v1452 = vmax.f32 %v1210, 0.0
        %v1453 = vmax.f32 %v1286, 0.0
        %v1454 = vmax.f32 %v1362, 0.0
        %v1455 = vmax.f32 %v1438, 0.0
        %v1456 = vpack.c.bf16 %v1444, %v1440
        %v1457 = vpack.c.bf16 %v1445, %v1441
        %v1458 = vpack.c.bf16 %v1446, %v1442
        %v1459 = vpack.c.bf16 %v1447, %v1443
        %v1460 = vpack.c.bf16 %v1452, %v1448
        %v1461 = vpack.c.bf16 %v1453, %v1449
        %v1462 = vpack.c.bf16 %v1454, %v1450
        %v1463 = vpack.c.bf16 %v1455, %v1451
        %v1464 = vld [vmem:[#allocation8] sm:$0xff]
        %v1465 = vld [vmem:[#allocation8 + $0x8] sm:$0xff]
        %v1466 = vld [vmem:[#allocation8 + $0x10] sm:$0xff]
        %v1467 = vld [vmem:[#allocation8 + $0x18] sm:$0xff]
        %v1468 = vld [vmem:[#allocation8 + $0x20] sm:$0xff]
        %v1469 = vld [vmem:[#allocation8 + $0x28] sm:$0xff]
        %v1470 = vld [vmem:[#allocation8 + $0x30] sm:$0xff]
        %v1471 = vld [vmem:[#allocation8 + $0x38] sm:$0xff]
        %v1472 = vld [vmem:[#allocation8 + $0x40] sm:$0xff]
        %v1473 = vld [vmem:[#allocation8 + $0x48] sm:$0xff]
        %v1474 = vld [vmem:[#allocation8 + $0x50] sm:$0xff]
        %v1475 = vld [vmem:[#allocation8 + $0x58] sm:$0xff]
        %v1476 = vld [vmem:[#allocation8 + $0x60] sm:$0xff]
        %v1477 = vld [vmem:[#allocation8 + $0x68] sm:$0xff]
        %v1478 = vld [vmem:[#allocation8 + $0x70] sm:$0xff]
        %v1479 = vld [vmem:[#allocation8 + $0x78] sm:$0xff]
        %v1480 = vld [vmem:[#allocation8 + $0x80] sm:$0xff]
        %v1481 = vld [vmem:[#allocation8 + $0x88] sm:$0xff]
        %v1482 = vld [vmem:[#allocation8 + $0x90] sm:$0xff]
        %v1483 = vld [vmem:[#allocation8 + $0x98] sm:$0xff]
        %v1484 = vld [vmem:[#allocation8 + $0xa0] sm:$0xff]
        %v1485 = vld [vmem:[#allocation8 + $0xa8] sm:$0xff]
        %v1486 = vld [vmem:[#allocation8 + $0xb0] sm:$0xff]
        %v1487 = vld [vmem:[#allocation8 + $0xb8] sm:$0xff]
        %v1488 = vld [vmem:[#allocation8 + $0xc0] sm:$0xff]
        %v1489 = vld [vmem:[#allocation8 + $0xc8] sm:$0xff]
        %v1490 = vld [vmem:[#allocation8 + $0xd0] sm:$0xff]
        %v1491 = vld [vmem:[#allocation8 + $0xd8] sm:$0xff]
        %v1492 = vld [vmem:[#allocation8 + $0xe0] sm:$0xff]
        %v1493 = vld [vmem:[#allocation8 + $0xe8] sm:$0xff]
        %v1494 = vld [vmem:[#allocation8 + $0xf0] sm:$0xff]
        %v1495 = vld [vmem:[#allocation8 + $0xf8] sm:$0xff]
        %v1496 = vld [vmem:[#allocation8 + $0x100] sm:$0xff]
        %v1497 = vld [vmem:[#allocation8 + $0x108] sm:$0xff]
        %v1498 = vld [vmem:[#allocation8 + $0x110] sm:$0xff]
        %v1499 = vld [vmem:[#allocation8 + $0x118] sm:$0xff]
        %v1500 = vld [vmem:[#allocation8 + $0x120] sm:$0xff]
        %v1501 = vld [vmem:[#allocation8 + $0x128] sm:$0xff]
        %v1502 = vld [vmem:[#allocation8 + $0x130] sm:$0xff]
        %v1503 = vld [vmem:[#allocation8 + $0x138] sm:$0xff]
        %v1504 = vld [vmem:[#allocation8 + $0x140] sm:$0xff]
        %v1505 = vld [vmem:[#allocation8 + $0x148] sm:$0xff]
        %v1506 = vld [vmem:[#allocation8 + $0x150] sm:$0xff]
        %v1507 = vld [vmem:[#allocation8 + $0x158] sm:$0xff]
        %v1508 = vld [vmem:[#allocation8 + $0x160] sm:$0xff]
        %v1509 = vld [vmem:[#allocation8 + $0x168] sm:$0xff]
        %v1510 = vld [vmem:[#allocation8 + $0x170] sm:$0xff]
        %v1511 = vld [vmem:[#allocation8 + $0x178] sm:$0xff]
        %v1512 = vld [vmem:[#allocation8 + $0x180] sm:$0xff]
        %v1513 = vld [vmem:[#allocation8 + $0x188] sm:$0xff]
        %v1514 = vld [vmem:[#allocation8 + $0x190] sm:$0xff]
        %v1515 = vld [vmem:[#allocation8 + $0x198] sm:$0xff]
        %v1516 = vld [vmem:[#allocation8 + $0x1a0] sm:$0xff]
        %v1517 = vld [vmem:[#allocation8 + $0x1a8] sm:$0xff]
        %v1518 = vld [vmem:[#allocation8 + $0x1b0] sm:$0xff]
        %v1519 = vld [vmem:[#allocation8 + $0x1b8] sm:$0xff]
        %v1520 = vld [vmem:[#allocation8 + $0x1c0] sm:$0xff]
        %v1521 = vld [vmem:[#allocation8 + $0x1c8] sm:$0xff]
        %v1522 = vld [vmem:[#allocation8 + $0x1d0] sm:$0xff]
        %v1523 = vld [vmem:[#allocation8 + $0x1d8] sm:$0xff]
        %v1524 = vld [vmem:[#allocation8 + $0x1e0] sm:$0xff]
        %v1525 = vld [vmem:[#allocation8 + $0x1e8] sm:$0xff]
        %v1526 = vld [vmem:[#allocation8 + $0x1f0] sm:$0xff]
        %v1527 = vld [vmem:[#allocation8 + $0x1f8] sm:$0xff]
        %v1528 = vld [vmem:[#allocation8 + $0x200] sm:$0xff]
        %v1529 = vld [vmem:[#allocation8 + $0x208] sm:$0xff]
        %v1530 = vld [vmem:[#allocation8 + $0x210] sm:$0xff]
        %v1531 = vld [vmem:[#allocation8 + $0x218] sm:$0xff]
        %v1532 = vld [vmem:[#allocation8 + $0x220] sm:$0xff]
        %v1533 = vld [vmem:[#allocation8 + $0x228] sm:$0xff]
        %v1534 = vld [vmem:[#allocation8 + $0x230] sm:$0xff]
        %v1535 = vld [vmem:[#allocation8 + $0x238] sm:$0xff]
        %v1536 = vld [vmem:[#allocation8 + $0x240] sm:$0xff]
        %v1537 = vld [vmem:[#allocation8 + $0x248] sm:$0xff]
        %v1538 = vld [vmem:[#allocation8 + $0x250] sm:$0xff]
        %v1539 = vld [vmem:[#allocation8 + $0x258] sm:$0xff]
        %v1540 = vld [vmem:[#allocation8 + $0x260] sm:$0xff]
        %v1541 = vld [vmem:[#allocation8 + $0x268] sm:$0xff]
        %v1542 = vld [vmem:[#allocation8 + $0x270] sm:$0xff]
        %v1543 = vld [vmem:[#allocation8 + $0x278] sm:$0xff]
        %v1544 = vld [vmem:[#allocation8 + $0x280] sm:$0xff]
        %v1545 = vld [vmem:[#allocation8 + $0x288] sm:$0xff]
        %v1546 = vld [vmem:[#allocation8 + $0x290] sm:$0xff]
        %v1547 = vld [vmem:[#allocation8 + $0x298] sm:$0xff]
        %v1548 = vld [vmem:[#allocation8 + $0x2a0] sm:$0xff]
        %v1549 = vld [vmem:[#allocation8 + $0x2a8] sm:$0xff]
        %v1550 = vld [vmem:[#allocation8 + $0x2b0] sm:$0xff]
        %v1551 = vld [vmem:[#allocation8 + $0x2b8] sm:$0xff]
        %v1552 = vld [vmem:[#allocation8 + $0x2c0] sm:$0xff]
        %v1553 = vld [vmem:[#allocation8 + $0x2c8] sm:$0xff]
        %v1554 = vld [vmem:[#allocation8 + $0x2d0] sm:$0xff]
        %v1555 = vld [vmem:[#allocation8 + $0x2d8] sm:$0xff]
        %v1556 = vld [vmem:[#allocation8 + $0x2e0] sm:$0xff]
        %v1557 = vld [vmem:[#allocation8 + $0x2e8] sm:$0xff]
        %v1558 = vld [vmem:[#allocation8 + $0x2f0] sm:$0xff]
        %v1559 = vld [vmem:[#allocation8 + $0x2f8] sm:$0xff]
        %v1560 = vld [vmem:[#allocation8 + $0x300] sm:$0xff]
        %v1561 = vld [vmem:[#allocation8 + $0x308] sm:$0xff]
        %v1562 = vld [vmem:[#allocation8 + $0x310] sm:$0xff]
        %v1563 = vld [vmem:[#allocation8 + $0x318] sm:$0xff]
        %v1564 = vld [vmem:[#allocation8 + $0x320] sm:$0xff]
        %v1565 = vld [vmem:[#allocation8 + $0x328] sm:$0xff]
        %v1566 = vld [vmem:[#allocation8 + $0x330] sm:$0xff]
        %v1567 = vld [vmem:[#allocation8 + $0x338] sm:$0xff]
        %v1568 = vld [vmem:[#allocation8 + $0x340] sm:$0xff]
        %v1569 = vld [vmem:[#allocation8 + $0x348] sm:$0xff]
        %v1570 = vld [vmem:[#allocation8 + $0x350] sm:$0xff]
        %v1571 = vld [vmem:[#allocation8 + $0x358] sm:$0xff]
        %v1572 = vld [vmem:[#allocation8 + $0x360] sm:$0xff]
        %v1573 = vld [vmem:[#allocation8 + $0x368] sm:$0xff]
        %v1574 = vld [vmem:[#allocation8 + $0x370] sm:$0xff]
        %v1575 = vld [vmem:[#allocation8 + $0x378] sm:$0xff]
        %v1576 = vld [vmem:[#allocation8 + $0x380] sm:$0xff]
        %v1577 = vld [vmem:[#allocation8 + $0x388] sm:$0xff]
        %v1578 = vld [vmem:[#allocation8 + $0x390] sm:$0xff]
        %v1579 = vld [vmem:[#allocation8 + $0x398] sm:$0xff]
        %v1580 = vld [vmem:[#allocation8 + $0x3a0] sm:$0xff]
        %v1581 = vld [vmem:[#allocation8 + $0x3a8] sm:$0xff]
        %v1582 = vld [vmem:[#allocation8 + $0x3b0] sm:$0xff]
        %v1583 = vld [vmem:[#allocation8 + $0x3b8] sm:$0xff]
        %v1584 = vld [vmem:[#allocation8 + $0x3c0] sm:$0xff]
        %v1585 = vld [vmem:[#allocation8 + $0x3c8] sm:$0xff]
        %v1586 = vld [vmem:[#allocation8 + $0x3d0] sm:$0xff]
        %v1587 = vld [vmem:[#allocation8 + $0x3d8] sm:$0xff]
        %v1588 = vld [vmem:[#allocation8 + $0x3e0] sm:$0xff]
        %v1589 = vld [vmem:[#allocation8 + $0x3e8] sm:$0xff]
        %v1590 = vld [vmem:[#allocation8 + $0x3f0] sm:$0xff]
        %v1591 = vld [vmem:[#allocation8 + $0x3f8] sm:$0xff]
        %v1592 = vld [vmem:[#allocation5 + $0x10] sm:$0xff]
        %v1593 = vld [vmem:[#allocation5 + $0x18] sm:$0xff]
        %v1594 = vld [vmem:[#allocation5 + $0x50] sm:$0xff]
        %v1595 = vld [vmem:[#allocation5 + $0x58] sm:$0xff]
        %v1596 = vld [vmem:[#allocation5 + $0x90] sm:$0xff]
        %v1597 = vld [vmem:[#allocation5 + $0x98] sm:$0xff]
        %v1598 = vld [vmem:[#allocation5 + $0xd0] sm:$0xff]
        %v1599 = vld [vmem:[#allocation5 + $0xd8] sm:$0xff]
        %v1600 = vld [vmem:[#allocation5 + $0x110] sm:$0xff]
        %v1601 = vld [vmem:[#allocation5 + $0x118] sm:$0xff]
        %v1602 = vld [vmem:[#allocation5 + $0x150] sm:$0xff]
        %v1603 = vld [vmem:[#allocation5 + $0x158] sm:$0xff]
        %v1604 = vld [vmem:[#allocation5 + $0x190] sm:$0xff]
        %v1605 = vld [vmem:[#allocation5 + $0x198] sm:$0xff]
        %v1606 = vld [vmem:[#allocation5 + $0x1d0] sm:$0xff]
        %v1607 = vld [vmem:[#allocation5 + $0x1d8] sm:$0xff]
        %v1608 = vld [vmem:[#allocation5 + $0x210] sm:$0xff]
        %v1609 = vld [vmem:[#allocation5 + $0x218] sm:$0xff]
        %v1610 = vld [vmem:[#allocation5 + $0x250] sm:$0xff]
        %v1611 = vld [vmem:[#allocation5 + $0x258] sm:$0xff]
        %v1612 = vld [vmem:[#allocation5 + $0x290] sm:$0xff]
        %v1613 = vld [vmem:[#allocation5 + $0x298] sm:$0xff]
        %v1614 = vld [vmem:[#allocation5 + $0x2d0] sm:$0xff]
        %v1615 = vld [vmem:[#allocation5 + $0x2d8] sm:$0xff]
        %v1616 = vld [vmem:[#allocation5 + $0x310] sm:$0xff]
        %v1617 = vld [vmem:[#allocation5 + $0x318] sm:$0xff]
        %v1618 = vld [vmem:[#allocation5 + $0x350] sm:$0xff]
        %v1619 = vld [vmem:[#allocation5 + $0x358] sm:$0xff]
        %v1620 = vld [vmem:[#allocation5 + $0x390] sm:$0xff]
        %v1621 = vld [vmem:[#allocation5 + $0x398] sm:$0xff]
        %v1622 = vld [vmem:[#allocation5 + $0x3d0] sm:$0xff]
        %v1623 = vld [vmem:[#allocation5 + $0x3d8] sm:$0xff]
        %v1624 = vld [vmem:[#allocation5 + $0x410] sm:$0xff]
        %v1625 = vld [vmem:[#allocation5 + $0x418] sm:$0xff]
        %v1626 = vld [vmem:[#allocation5 + $0x450] sm:$0xff]
        %v1627 = vld [vmem:[#allocation5 + $0x458] sm:$0xff]
        %v1628 = vld [vmem:[#allocation5 + $0x490] sm:$0xff]
        %v1629 = vld [vmem:[#allocation5 + $0x498] sm:$0xff]
        %v1630 = vld [vmem:[#allocation5 + $0x4d0] sm:$0xff]
        %v1631 = vld [vmem:[#allocation5 + $0x4d8] sm:$0xff]
        %v1632 = vld [vmem:[#allocation5 + $0x510] sm:$0xff]
        %v1633 = vld [vmem:[#allocation5 + $0x518] sm:$0xff]
        %v1634 = vld [vmem:[#allocation5 + $0x550] sm:$0xff]
        %v1635 = vld [vmem:[#allocation5 + $0x558] sm:$0xff]
        %v1636 = vld [vmem:[#allocation5 + $0x590] sm:$0xff]
        %v1637 = vld [vmem:[#allocation5 + $0x598] sm:$0xff]
        %v1638 = vld [vmem:[#allocation5 + $0x5d0] sm:$0xff]
        %v1639 = vld [vmem:[#allocation5 + $0x5d8] sm:$0xff]
        %v1640 = vld [vmem:[#allocation5 + $0x610] sm:$0xff]
        %v1641 = vld [vmem:[#allocation5 + $0x618] sm:$0xff]
        %v1642 = vld [vmem:[#allocation5 + $0x650] sm:$0xff]
        %v1643 = vld [vmem:[#allocation5 + $0x658] sm:$0xff]
        %v1644 = vld [vmem:[#allocation5 + $0x690] sm:$0xff]
        %v1645 = vld [vmem:[#allocation5 + $0x698] sm:$0xff]
        %v1646 = vld [vmem:[#allocation5 + $0x6d0] sm:$0xff]
        %v1647 = vld [vmem:[#allocation5 + $0x6d8] sm:$0xff]
        %v1648 = vld [vmem:[#allocation5 + $0x710] sm:$0xff]
        %v1649 = vld [vmem:[#allocation5 + $0x718] sm:$0xff]
        %v1650 = vld [vmem:[#allocation5 + $0x750] sm:$0xff]
        %v1651 = vld [vmem:[#allocation5 + $0x758] sm:$0xff]
        %v1652 = vld [vmem:[#allocation5 + $0x790] sm:$0xff]
        %v1653 = vld [vmem:[#allocation5 + $0x798] sm:$0xff]
        %v1654 = vld [vmem:[#allocation5 + $0x7d0] sm:$0xff]
        %v1655 = vld [vmem:[#allocation5 + $0x7d8] sm:$0xff]
        %v1656 = vld [vmem:[#allocation5 + $0x810] sm:$0xff]
        %v1657 = vld [vmem:[#allocation5 + $0x818] sm:$0xff]
        %v1658 = vld [vmem:[#allocation5 + $0x850] sm:$0xff]
        %v1659 = vld [vmem:[#allocation5 + $0x858] sm:$0xff]
        %v1660 = vld [vmem:[#allocation5 + $0x890] sm:$0xff]
        %v1661 = vld [vmem:[#allocation5 + $0x898] sm:$0xff]
        %v1662 = vld [vmem:[#allocation5 + $0x8d0] sm:$0xff]
        %v1663 = vld [vmem:[#allocation5 + $0x8d8] sm:$0xff]
        %v1664 = vld [vmem:[#allocation5 + $0x910] sm:$0xff]
        %v1665 = vld [vmem:[#allocation5 + $0x918] sm:$0xff]
        %v1666 = vld [vmem:[#allocation5 + $0x950] sm:$0xff]
        %v1667 = vld [vmem:[#allocation5 + $0x958] sm:$0xff]
        %v1668 = vld [vmem:[#allocation5 + $0x990] sm:$0xff]
        %v1669 = vld [vmem:[#allocation5 + $0x998] sm:$0xff]
        %v1670 = vld [vmem:[#allocation5 + $0x9d0] sm:$0xff]
        %v1671 = vld [vmem:[#allocation5 + $0x9d8] sm:$0xff]
        %v1672 = vld [vmem:[#allocation5 + $0xa10] sm:$0xff]
        %v1673 = vld [vmem:[#allocation5 + $0xa18] sm:$0xff]
        %v1674 = vld [vmem:[#allocation5 + $0xa50] sm:$0xff]
        %v1675 = vld [vmem:[#allocation5 + $0xa58] sm:$0xff]
        %v1676 = vld [vmem:[#allocation5 + $0xa90] sm:$0xff]
        %v1677 = vld [vmem:[#allocation5 + $0xa98] sm:$0xff]
        %v1678 = vld [vmem:[#allocation5 + $0xad0] sm:$0xff]
        %v1679 = vld [vmem:[#allocation5 + $0xad8] sm:$0xff]
        %v1680 = vld [vmem:[#allocation5 + $0xb10] sm:$0xff]
        %v1681 = vld [vmem:[#allocation5 + $0xb18] sm:$0xff]
        %v1682 = vld [vmem:[#allocation5 + $0xb50] sm:$0xff]
        %v1683 = vld [vmem:[#allocation5 + $0xb58] sm:$0xff]
        %v1684 = vld [vmem:[#allocation5 + $0xb90] sm:$0xff]
        %v1685 = vld [vmem:[#allocation5 + $0xb98] sm:$0xff]
        %v1686 = vld [vmem:[#allocation5 + $0xbd0] sm:$0xff]
        %v1687 = vld [vmem:[#allocation5 + $0xbd8] sm:$0xff]
        %v1688 = vld [vmem:[#allocation5 + $0xc10] sm:$0xff]
        %v1689 = vld [vmem:[#allocation5 + $0xc18] sm:$0xff]
        %v1690 = vld [vmem:[#allocation5 + $0xc50] sm:$0xff]
        %v1691 = vld [vmem:[#allocation5 + $0xc58] sm:$0xff]
        %v1692 = vld [vmem:[#allocation5 + $0xc90] sm:$0xff]
        %v1693 = vld [vmem:[#allocation5 + $0xc98] sm:$0xff]
        %v1694 = vld [vmem:[#allocation5 + $0xcd0] sm:$0xff]
        %v1695 = vld [vmem:[#allocation5 + $0xcd8] sm:$0xff]
        %v1696 = vld [vmem:[#allocation5 + $0xd10] sm:$0xff]
        %v1697 = vld [vmem:[#allocation5 + $0xd18] sm:$0xff]
        %v1698 = vld [vmem:[#allocation5 + $0xd50] sm:$0xff]
        %v1699 = vld [vmem:[#allocation5 + $0xd58] sm:$0xff]
        %v1700 = vld [vmem:[#allocation5 + $0xd90] sm:$0xff]
        %v1701 = vld [vmem:[#allocation5 + $0xd98] sm:$0xff]
        %v1702 = vld [vmem:[#allocation5 + $0xdd0] sm:$0xff]
        %v1703 = vld [vmem:[#allocation5 + $0xdd8] sm:$0xff]
        %v1704 = vld [vmem:[#allocation5 + $0xe10] sm:$0xff]
        %v1705 = vld [vmem:[#allocation5 + $0xe18] sm:$0xff]
        %v1706 = vld [vmem:[#allocation5 + $0xe50] sm:$0xff]
        %v1707 = vld [vmem:[#allocation5 + $0xe58] sm:$0xff]
        %v1708 = vld [vmem:[#allocation5 + $0xe90] sm:$0xff]
        %v1709 = vld [vmem:[#allocation5 + $0xe98] sm:$0xff]
        %v1710 = vld [vmem:[#allocation5 + $0xed0] sm:$0xff]
        %v1711 = vld [vmem:[#allocation5 + $0xed8] sm:$0xff]
        %v1712 = vld [vmem:[#allocation5 + $0xf10] sm:$0xff]
        %v1713 = vld [vmem:[#allocation5 + $0xf18] sm:$0xff]
        %v1714 = vld [vmem:[#allocation5 + $0xf50] sm:$0xff]
        %v1715 = vld [vmem:[#allocation5 + $0xf58] sm:$0xff]
        %v1716 = vld [vmem:[#allocation5 + $0xf90] sm:$0xff]
        %v1717 = vld [vmem:[#allocation5 + $0xf98] sm:$0xff]
        %v1718 = vld [vmem:[#allocation5 + $0xfd0] sm:$0xff]
        %v1719 = vld [vmem:[#allocation5 + $0xfd8] sm:$0xff]
        %v1720 = vld [vmem:[#allocation7 + $0x4] sm:$0xf]
        %v1722 = vperm.slane %v1720, 0
        %v1723 = vperm.slane %v1720, 1
        %v1724 = vperm.slane %v1720, 2
        %v1725 = vperm.slane %v1720, 3
        %v1858 = vunpack.c.l.b16 %v1592
        %v1859 = vunpack.c.h.b16 %v1592
        %v1860 = vunpack.c.l.b16 %v1593
        %v1861 = vunpack.c.h.b16 %v1593
        %v1862 = vunpack.c.l.b16 %v1594
        %v1863 = vunpack.c.h.b16 %v1594
        %v1864 = vunpack.c.l.b16 %v1595
        %v1865 = vunpack.c.h.b16 %v1595
        %v1866 = vunpack.c.l.b16 %v1596
        %v1867 = vunpack.c.h.b16 %v1596
        %v1868 = vunpack.c.l.b16 %v1597
        %v1869 = vunpack.c.h.b16 %v1597
        %v1870 = vunpack.c.l.b16 %v1598
        %v1871 = vunpack.c.h.b16 %v1598
        %v1872 = vunpack.c.l.b16 %v1599
        %v1873 = vunpack.c.h.b16 %v1599
        %v1874 = vunpack.c.l.b16 %v1600
        %v1875 = vunpack.c.h.b16 %v1600
        %v1876 = vunpack.c.l.b16 %v1601
        %v1877 = vunpack.c.h.b16 %v1601
        %v1878 = vunpack.c.l.b16 %v1602
        %v1879 = vunpack.c.h.b16 %v1602
        %v1880 = vunpack.c.l.b16 %v1603
        %v1881 = vunpack.c.h.b16 %v1603
        %v1882 = vunpack.c.l.b16 %v1604
        %v1883 = vunpack.c.h.b16 %v1604
        %v1884 = vunpack.c.l.b16 %v1605
        %v1885 = vunpack.c.h.b16 %v1605
        %v1886 = vunpack.c.l.b16 %v1606
        %v1887 = vunpack.c.h.b16 %v1606
        %v1888 = vunpack.c.l.b16 %v1607
        %v1889 = vunpack.c.h.b16 %v1607
        %v1890 = vunpack.c.l.b16 %v1608
        %v1891 = vunpack.c.h.b16 %v1608
        %v1892 = vunpack.c.l.b16 %v1609
        %v1893 = vunpack.c.h.b16 %v1609
        %v1894 = vunpack.c.l.b16 %v1610
        %v1895 = vunpack.c.h.b16 %v1610
        %v1896 = vunpack.c.l.b16 %v1611
        %v1897 = vunpack.c.h.b16 %v1611
        %v1898 = vunpack.c.l.b16 %v1612
        %v1899 = vunpack.c.h.b16 %v1612
        %v1900 = vunpack.c.l.b16 %v1613
        %v1901 = vunpack.c.h.b16 %v1613
        %v1902 = vunpack.c.l.b16 %v1614
        %v1903 = vunpack.c.h.b16 %v1614
        %v1904 = vunpack.c.l.b16 %v1615
        %v1905 = vunpack.c.h.b16 %v1615
        %v1906 = vunpack.c.l.b16 %v1616
        %v1907 = vunpack.c.h.b16 %v1616
        %v1908 = vunpack.c.l.b16 %v1617
        %v1909 = vunpack.c.h.b16 %v1617
        %v1910 = vunpack.c.l.b16 %v1618
        %v1911 = vunpack.c.h.b16 %v1618
        %v1912 = vunpack.c.l.b16 %v1619
        %v1913 = vunpack.c.h.b16 %v1619
        %v1914 = vunpack.c.l.b16 %v1620
        %v1915 = vunpack.c.h.b16 %v1620
        %v1916 = vunpack.c.l.b16 %v1621
        %v1917 = vunpack.c.h.b16 %v1621
        %v1918 = vunpack.c.l.b16 %v1622
        %v1919 = vunpack.c.h.b16 %v1622
        %v1920 = vunpack.c.l.b16 %v1623
        %v1921 = vunpack.c.h.b16 %v1623
        %v1922 = vunpack.c.l.b16 %v1624
        %v1923 = vunpack.c.h.b16 %v1624
        %v1924 = vunpack.c.l.b16 %v1625
        %v1925 = vunpack.c.h.b16 %v1625
        %v1926 = vunpack.c.l.b16 %v1626
        %v1927 = vunpack.c.h.b16 %v1626
        %v1928 = vunpack.c.l.b16 %v1627
        %v1929 = vunpack.c.h.b16 %v1627
        %v1930 = vunpack.c.l.b16 %v1628
        %v1931 = vunpack.c.h.b16 %v1628
        %v1932 = vunpack.c.l.b16 %v1629
        %v1933 = vunpack.c.h.b16 %v1629
        %v1934 = vunpack.c.l.b16 %v1630
        %v1935 = vunpack.c.h.b16 %v1630
        %v1936 = vunpack.c.l.b16 %v1631
        %v1937 = vunpack.c.h.b16 %v1631
        %v1938 = vunpack.c.l.b16 %v1632
        %v1939 = vunpack.c.h.b16 %v1632
        %v1940 = vunpack.c.l.b16 %v1633
        %v1941 = vunpack.c.h.b16 %v1633
        %v1942 = vunpack.c.l.b16 %v1634
        %v1943 = vunpack.c.h.b16 %v1634
        %v1944 = vunpack.c.l.b16 %v1635
        %v1945 = vunpack.c.h.b16 %v1635
        %v1946 = vunpack.c.l.b16 %v1636
        %v1947 = vunpack.c.h.b16 %v1636
        %v1948 = vunpack.c.l.b16 %v1637
        %v1949 = vunpack.c.h.b16 %v1637
        %v1950 = vunpack.c.l.b16 %v1638
        %v1951 = vunpack.c.h.b16 %v1638
        %v1952 = vunpack.c.l.b16 %v1639
        %v1953 = vunpack.c.h.b16 %v1639
        %v1954 = vunpack.c.l.b16 %v1640
        %v1955 = vunpack.c.h.b16 %v1640
        %v1956 = vunpack.c.l.b16 %v1641
        %v1957 = vunpack.c.h.b16 %v1641
        %v1958 = vunpack.c.l.b16 %v1642
        %v1959 = vunpack.c.h.b16 %v1642
        %v1960 = vunpack.c.l.b16 %v1643
        %v1961 = vunpack.c.h.b16 %v1643
        %v1962 = vunpack.c.l.b16 %v1644
        %v1963 = vunpack.c.h.b16 %v1644
        %v1964 = vunpack.c.l.b16 %v1645
        %v1965 = vunpack.c.h.b16 %v1645
        %v1966 = vunpack.c.l.b16 %v1646
        %v1967 = vunpack.c.h.b16 %v1646
        %v1968 = vunpack.c.l.b16 %v1647
        %v1969 = vunpack.c.h.b16 %v1647
        %v1970 = vunpack.c.l.b16 %v1648
        %v1971 = vunpack.c.h.b16 %v1648
        %v1972 = vunpack.c.l.b16 %v1649
        %v1973 = vunpack.c.h.b16 %v1649
        %v1974 = vunpack.c.l.b16 %v1650
        %v1975 = vunpack.c.h.b16 %v1650
        %v1976 = vunpack.c.l.b16 %v1651
        %v1977 = vunpack.c.h.b16 %v1651
        %v1978 = vunpack.c.l.b16 %v1652
        %v1979 = vunpack.c.h.b16 %v1652
        %v1980 = vunpack.c.l.b16 %v1653
        %v1981 = vunpack.c.h.b16 %v1653
        %v1982 = vunpack.c.l.b16 %v1654
        %v1983 = vunpack.c.h.b16 %v1654
        %v1984 = vunpack.c.l.b16 %v1655
        %v1985 = vunpack.c.h.b16 %v1655
        %v1986 = vunpack.c.l.b16 %v1656
        %v1987 = vunpack.c.h.b16 %v1656
        %v1988 = vunpack.c.l.b16 %v1657
        %v1989 = vunpack.c.h.b16 %v1657
        %v1990 = vunpack.c.l.b16 %v1658
        %v1991 = vunpack.c.h.b16 %v1658
        %v1992 = vunpack.c.l.b16 %v1659
        %v1993 = vunpack.c.h.b16 %v1659
        %v1994 = vunpack.c.l.b16 %v1660
        %v1995 = vunpack.c.h.b16 %v1660
        %v1996 = vunpack.c.l.b16 %v1661
        %v1997 = vunpack.c.h.b16 %v1661
        %v1998 = vunpack.c.l.b16 %v1662
        %v1999 = vunpack.c.h.b16 %v1662
        %v2000 = vunpack.c.l.b16 %v1663
        %v2001 = vunpack.c.h.b16 %v1663
        %v2002 = vunpack.c.l.b16 %v1664
        %v2003 = vunpack.c.h.b16 %v1664
        %v2004 = vunpack.c.l.b16 %v1665
        %v2005 = vunpack.c.h.b16 %v1665
        %v2006 = vunpack.c.l.b16 %v1666
        %v2007 = vunpack.c.h.b16 %v1666
        %v2008 = vunpack.c.l.b16 %v1667
        %v2009 = vunpack.c.h.b16 %v1667
        %v2010 = vunpack.c.l.b16 %v1668
        %v2011 = vunpack.c.h.b16 %v1668
        %v2012 = vunpack.c.l.b16 %v1669
        %v2013 = vunpack.c.h.b16 %v1669
        %v2014 = vunpack.c.l.b16 %v1670
        %v2015 = vunpack.c.h.b16 %v1670
        %v2016 = vunpack.c.l.b16 %v1671
        %v2017 = vunpack.c.h.b16 %v1671
        %v2018 = vunpack.c.l.b16 %v1672
        %v2019 = vunpack.c.h.b16 %v1672
        %v2020 = vunpack.c.l.b16 %v1673
        %v2021 = vunpack.c.h.b16 %v1673
        %v2022 = vunpack.c.l.b16 %v1674
        %v2023 = vunpack.c.h.b16 %v1674
        %v2024 = vunpack.c.l.b16 %v1675
        %v2025 = vunpack.c.h.b16 %v1675
        %v2026 = vunpack.c.l.b16 %v1676
        %v2027 = vunpack.c.h.b16 %v1676
        %v2028 = vunpack.c.l.b16 %v1677
        %v2029 = vunpack.c.h.b16 %v1677
        %v2030 = vunpack.c.l.b16 %v1678
        %v2031 = vunpack.c.h.b16 %v1678
        %v2032 = vunpack.c.l.b16 %v1679
        %v2033 = vunpack.c.h.b16 %v1679
        %v2034 = vunpack.c.l.b16 %v1680
        %v2035 = vunpack.c.h.b16 %v1680
        %v2036 = vunpack.c.l.b16 %v1681
        %v2037 = vunpack.c.h.b16 %v1681
        %v2038 = vunpack.c.l.b16 %v1682
        %v2039 = vunpack.c.h.b16 %v1682
        %v2040 = vunpack.c.l.b16 %v1683
        %v2041 = vunpack.c.h.b16 %v1683
        %v2042 = vunpack.c.l.b16 %v1684
        %v2043 = vunpack.c.h.b16 %v1684
        %v2044 = vunpack.c.l.b16 %v1685
        %v2045 = vunpack.c.h.b16 %v1685
        %v2046 = vunpack.c.l.b16 %v1686
        %v2047 = vunpack.c.h.b16 %v1686
        %v2048 = vunpack.c.l.b16 %v1687
        %v2049 = vunpack.c.h.b16 %v1687
        %v2050 = vunpack.c.l.b16 %v1688
        %v2051 = vunpack.c.h.b16 %v1688
        %v2052 = vunpack.c.l.b16 %v1689
        %v2053 = vunpack.c.h.b16 %v1689
        %v2054 = vunpack.c.l.b16 %v1690
        %v2055 = vunpack.c.h.b16 %v1690
        %v2056 = vunpack.c.l.b16 %v1691
        %v2057 = vunpack.c.h.b16 %v1691
        %v2058 = vunpack.c.l.b16 %v1692
        %v2059 = vunpack.c.h.b16 %v1692
        %v2060 = vunpack.c.l.b16 %v1693
        %v2061 = vunpack.c.h.b16 %v1693
        %v2062 = vunpack.c.l.b16 %v1694
        %v2063 = vunpack.c.h.b16 %v1694
        %v2064 = vunpack.c.l.b16 %v1695
        %v2065 = vunpack.c.h.b16 %v1695
        %v2066 = vunpack.c.l.b16 %v1696
        %v2067 = vunpack.c.h.b16 %v1696
        %v2068 = vunpack.c.l.b16 %v1697
        %v2069 = vunpack.c.h.b16 %v1697
        %v2070 = vunpack.c.l.b16 %v1698
        %v2071 = vunpack.c.h.b16 %v1698
        %v2072 = vunpack.c.l.b16 %v1699
        %v2073 = vunpack.c.h.b16 %v1699
        %v2074 = vunpack.c.l.b16 %v1700
        %v2075 = vunpack.c.h.b16 %v1700
        %v2076 = vunpack.c.l.b16 %v1701
        %v2077 = vunpack.c.h.b16 %v1701
        %v2078 = vunpack.c.l.b16 %v1702
        %v2079 = vunpack.c.h.b16 %v1702
        %v2080 = vunpack.c.l.b16 %v1703
        %v2081 = vunpack.c.h.b16 %v1703
        %v2082 = vunpack.c.l.b16 %v1704
        %v2083 = vunpack.c.h.b16 %v1704
        %v2084 = vunpack.c.l.b16 %v1705
        %v2085 = vunpack.c.h.b16 %v1705
        %v2086 = vunpack.c.l.b16 %v1706
        %v2087 = vunpack.c.h.b16 %v1706
        %v2088 = vunpack.c.l.b16 %v1707
        %v2089 = vunpack.c.h.b16 %v1707
        %v2090 = vunpack.c.l.b16 %v1708
        %v2091 = vunpack.c.h.b16 %v1708
        %v2092 = vunpack.c.l.b16 %v1709
        %v2093 = vunpack.c.h.b16 %v1709
        %v2094 = vunpack.c.l.b16 %v1710
        %v2095 = vunpack.c.h.b16 %v1710
        %v2096 = vunpack.c.l.b16 %v1711
        %v2097 = vunpack.c.h.b16 %v1711
        %v2098 = vunpack.c.l.b16 %v1712
        %v2099 = vunpack.c.h.b16 %v1712
        %v2100 = vunpack.c.l.b16 %v1713
        %v2101 = vunpack.c.h.b16 %v1713
        %v2102 = vunpack.c.l.b16 %v1714
        %v2103 = vunpack.c.h.b16 %v1714
        %v2104 = vunpack.c.l.b16 %v1715
        %v2105 = vunpack.c.h.b16 %v1715
        %v2106 = vunpack.c.l.b16 %v1716
        %v2107 = vunpack.c.h.b16 %v1716
        %v2108 = vunpack.c.l.b16 %v1717
        %v2109 = vunpack.c.h.b16 %v1717
        %v2110 = vunpack.c.l.b16 %v1718
        %v2111 = vunpack.c.h.b16 %v1718
        %v2112 = vunpack.c.l.b16 %v1719
        %v2113 = vunpack.c.h.b16 %v1719
        %v2114 = vpack.c.b16 %v1862, %v1858
        %v2115 = vpack.c.b16 %v1863, %v1859
        %v2116 = vpack.c.b16 %v1864, %v1860
        %v2117 = vpack.c.b16 %v1865, %v1861
        %v2118 = vpack.c.b16 %v1870, %v1866
        %v2119 = vpack.c.b16 %v1871, %v1867
        %v2120 = vpack.c.b16 %v1872, %v1868
        %v2121 = vpack.c.b16 %v1873, %v1869
        %v2122 = vpack.c.b16 %v1878, %v1874
        %v2123 = vpack.c.b16 %v1879, %v1875
        %v2124 = vpack.c.b16 %v1880, %v1876
        %v2125 = vpack.c.b16 %v1881, %v1877
        %v2126 = vpack.c.b16 %v1886, %v1882
        %v2127 = vpack.c.b16 %v1887, %v1883
        %v2128 = vpack.c.b16 %v1888, %v1884
        %v2129 = vpack.c.b16 %v1889, %v1885
        %v2130 = vpack.c.b16 %v1894, %v1890
        %v2131 = vpack.c.b16 %v1895, %v1891
        %v2132 = vpack.c.b16 %v1896, %v1892
        %v2133 = vpack.c.b16 %v1897, %v1893
        %v2134 = vpack.c.b16 %v1902, %v1898
        %v2135 = vpack.c.b16 %v1903, %v1899
        %v2136 = vpack.c.b16 %v1904, %v1900
        %v2137 = vpack.c.b16 %v1905, %v1901
        %v2138 = vpack.c.b16 %v1910, %v1906
        %v2139 = vpack.c.b16 %v1911, %v1907
        %v2140 = vpack.c.b16 %v1912, %v1908
        %v2141 = vpack.c.b16 %v1913, %v1909
        %v2142 = vpack.c.b16 %v1918, %v1914
        %v2143 = vpack.c.b16 %v1919, %v1915
        %v2144 = vpack.c.b16 %v1920, %v1916
        %v2145 = vpack.c.b16 %v1921, %v1917
        %v2146 = vpack.c.b16 %v1926, %v1922
        %v2147 = vpack.c.b16 %v1927, %v1923
        %v2148 = vpack.c.b16 %v1928, %v1924
        %v2149 = vpack.c.b16 %v1929, %v1925
        %v2150 = vpack.c.b16 %v1934, %v1930
        %v2151 = vpack.c.b16 %v1935, %v1931
        %v2152 = vpack.c.b16 %v1936, %v1932
        %v2153 = vpack.c.b16 %v1937, %v1933
        %v2154 = vpack.c.b16 %v1942, %v1938
        %v2155 = vpack.c.b16 %v1943, %v1939
        %v2156 = vpack.c.b16 %v1944, %v1940
        %v2157 = vpack.c.b16 %v1945, %v1941
        %v2158 = vpack.c.b16 %v1950, %v1946
        %v2159 = vpack.c.b16 %v1951, %v1947
        %v2160 = vpack.c.b16 %v1952, %v1948
        %v2161 = vpack.c.b16 %v1953, %v1949
        %v2162 = vpack.c.b16 %v1958, %v1954
        %v2163 = vpack.c.b16 %v1959, %v1955
        %v2164 = vpack.c.b16 %v1960, %v1956
        %v2165 = vpack.c.b16 %v1961, %v1957
        %v2166 = vpack.c.b16 %v1966, %v1962
        %v2167 = vpack.c.b16 %v1967, %v1963
        %v2168 = vpack.c.b16 %v1968, %v1964
        %v2169 = vpack.c.b16 %v1969, %v1965
        %v2170 = vpack.c.b16 %v1974, %v1970
        %v2171 = vpack.c.b16 %v1975, %v1971
        %v2172 = vpack.c.b16 %v1976, %v1972
        %v2173 = vpack.c.b16 %v1977, %v1973
        %v2174 = vpack.c.b16 %v1982, %v1978
        %v2175 = vpack.c.b16 %v1983, %v1979
        %v2176 = vpack.c.b16 %v1984, %v1980
        %v2177 = vpack.c.b16 %v1985, %v1981
        %v2178 = vpack.c.b16 %v1990, %v1986
        %v2179 = vpack.c.b16 %v1991, %v1987
        %v2180 = vpack.c.b16 %v1992, %v1988
        %v2181 = vpack.c.b16 %v1993, %v1989
        %v2182 = vpack.c.b16 %v1998, %v1994
        %v2183 = vpack.c.b16 %v1999, %v1995
        %v2184 = vpack.c.b16 %v2000, %v1996
        %v2185 = vpack.c.b16 %v2001, %v1997
        %v2186 = vpack.c.b16 %v2006, %v2002
        %v2187 = vpack.c.b16 %v2007, %v2003
        %v2188 = vpack.c.b16 %v2008, %v2004
        %v2189 = vpack.c.b16 %v2009, %v2005
        %v2190 = vpack.c.b16 %v2014, %v2010
        %v2191 = vpack.c.b16 %v2015, %v2011
        %v2192 = vpack.c.b16 %v2016, %v2012
        %v2193 = vpack.c.b16 %v2017, %v2013
        %v2194 = vpack.c.b16 %v2022, %v2018
        %v2195 = vpack.c.b16 %v2023, %v2019
        %v2196 = vpack.c.b16 %v2024, %v2020
        %v2197 = vpack.c.b16 %v2025, %v2021
        %v2198 = vpack.c.b16 %v2030, %v2026
        %v2199 = vpack.c.b16 %v2031, %v2027
        %v2200 = vpack.c.b16 %v2032, %v2028
        %v2201 = vpack.c.b16 %v2033, %v2029
        %v2202 = vpack.c.b16 %v2038, %v2034
        %v2203 = vpack.c.b16 %v2039, %v2035
        %v2204 = vpack.c.b16 %v2040, %v2036
        %v2205 = vpack.c.b16 %v2041, %v2037
        %v2206 = vpack.c.b16 %v2046, %v2042
        %v2207 = vpack.c.b16 %v2047, %v2043
        %v2208 = vpack.c.b16 %v2048, %v2044
        %v2209 = vpack.c.b16 %v2049, %v2045
        %v2210 = vpack.c.b16 %v2054, %v2050
        %v2211 = vpack.c.b16 %v2055, %v2051
        %v2212 = vpack.c.b16 %v2056, %v2052
        %v2213 = vpack.c.b16 %v2057, %v2053
        %v2214 = vpack.c.b16 %v2062, %v2058
        %v2215 = vpack.c.b16 %v2063, %v2059
        %v2216 = vpack.c.b16 %v2064, %v2060
        %v2217 = vpack.c.b16 %v2065, %v2061
        %v2218 = vpack.c.b16 %v2070, %v2066
        %v2219 = vpack.c.b16 %v2071, %v2067
        %v2220 = vpack.c.b16 %v2072, %v2068
        %v2221 = vpack.c.b16 %v2073, %v2069
        %v2222 = vpack.c.b16 %v2078, %v2074
        %v2223 = vpack.c.b16 %v2079, %v2075
        %v2224 = vpack.c.b16 %v2080, %v2076
        %v2225 = vpack.c.b16 %v2081, %v2077
        %v2226 = vpack.c.b16 %v2086, %v2082
        %v2227 = vpack.c.b16 %v2087, %v2083
        %v2228 = vpack.c.b16 %v2088, %v2084
        %v2229 = vpack.c.b16 %v2089, %v2085
        %v2230 = vpack.c.b16 %v2094, %v2090
        %v2231 = vpack.c.b16 %v2095, %v2091
        %v2232 = vpack.c.b16 %v2096, %v2092
        %v2233 = vpack.c.b16 %v2097, %v2093
        %v2234 = vpack.c.b16 %v2102, %v2098
        %v2235 = vpack.c.b16 %v2103, %v2099
        %v2236 = vpack.c.b16 %v2104, %v2100
        %v2237 = vpack.c.b16 %v2105, %v2101
        %v2238 = vpack.c.b16 %v2110, %v2106
        %v2239 = vpack.c.b16 %v2111, %v2107
        %v2240 = vpack.c.b16 %v2112, %v2108
        %v2241 = vpack.c.b16 %v2113, %v2109
        %2370 = vmatpush.bf16.msra.mxu0 %v2142
        %2371 = vmatpush.bf16.msra.mxu0 %v2138
        %2372 = vmatpush.bf16.msra.mxu0 %v2134
        %2373 = vmatpush.bf16.msra.mxu0 %v2130
        %2374 = vmatpush.bf16.msra.mxu0 %v2126
        %2375 = vmatpush.bf16.msra.mxu0 %v2122
        %2376 = vmatpush.bf16.msra.mxu0 %v2118
        %2377 = vmatpush.bf16.msra.mxu0 %v2114
        %2378 = vmatmul.bf16.gmra.mxu0 %v480
        %v2379 = vpop.f32.mrf.mxu0
        %v2380 = vadd.f32 %v1722, %v2379
        %v2381 = vpop.f32.mrf.mxu0
        %v2382 = vadd.f32 %v1722, %v2381
        %2383 = vmatmul.bf16.gmra.mxu0 %v484
        %v2384 = vpop.f32.mrf.mxu0
        %v2385 = vadd.f32 %v1722, %v2384
        %v2386 = vpop.f32.mrf.mxu0
        %v2387 = vadd.f32 %v1722, %v2386
        %2388 = vdwg.mxu0
        %2389 = vmatpush.bf16.msra.mxu0 %v2174
        %2390 = vmatpush.bf16.msra.mxu0 %v2170
        %2391 = vmatpush.bf16.msra.mxu0 %v2166
        %2392 = vmatpush.bf16.msra.mxu0 %v2162
        %2393 = vmatpush.bf16.msra.mxu0 %v2158
        %2394 = vmatpush.bf16.msra.mxu0 %v2154
        %2395 = vmatpush.bf16.msra.mxu0 %v2150
        %2396 = vmatpush.bf16.msra.mxu0 %v2146
        %2397 = vmatmul.bf16.gmra.mxu0 %v481
        %v2398 = vpop.f32.mrf.mxu0
        %v2399 = vadd.f32 %v2380, %v2398
        %v2400 = vpop.f32.mrf.mxu0
        %v2401 = vadd.f32 %v2382, %v2400
        %2402 = vmatmul.bf16.gmra.mxu0 %v485
        %v2403 = vpop.f32.mrf.mxu0
        %v2404 = vadd.f32 %v2385, %v2403
        %v2405 = vpop.f32.mrf.mxu0
        %v2406 = vadd.f32 %v2387, %v2405
        %2407 = vdwg.mxu0
        %2408 = vmatpush.bf16.msra.mxu0 %v2206
        %2409 = vmatpush.bf16.msra.mxu0 %v2202
        %2410 = vmatpush.bf16.msra.mxu0 %v2198
        %2411 = vmatpush.bf16.msra.mxu0 %v2194
        %2412 = vmatpush.bf16.msra.mxu0 %v2190
        %2413 = vmatpush.bf16.msra.mxu0 %v2186
        %2414 = vmatpush.bf16.msra.mxu0 %v2182
        %2415 = vmatpush.bf16.msra.mxu0 %v2178
        %2416 = vmatmul.bf16.gmra.mxu0 %v482
        %v2417 = vpop.f32.mrf.mxu0
        %v2418 = vadd.f32 %v2399, %v2417
        %v2419 = vpop.f32.mrf.mxu0
        %v2420 = vadd.f32 %v2401, %v2419
        %2421 = vmatmul.bf16.gmra.mxu0 %v486
        %v2422 = vpop.f32.mrf.mxu0
        %v2423 = vadd.f32 %v2404, %v2422
        %v2424 = vpop.f32.mrf.mxu0
        %v2425 = vadd.f32 %v2406, %v2424
        %2426 = vdwg.mxu0
        %2427 = vmatpush.bf16.msra.mxu0 %v2238
        %2428 = vmatpush.bf16.msra.mxu0 %v2234
        %2429 = vmatpush.bf16.msra.mxu0 %v2230
        %2430 = vmatpush.bf16.msra.mxu0 %v2226
        %2431 = vmatpush.bf16.msra.mxu0 %v2222
        %2432 = vmatpush.bf16.msra.mxu0 %v2218
        %2433 = vmatpush.bf16.msra.mxu0 %v2214
        %2434 = vmatpush.bf16.msra.mxu0 %v2210
        %2435 = vmatmul.bf16.gmra.mxu0 %v483
        %v2436 = vpop.f32.mrf.mxu0
        %v2437 = vadd.f32 %v2418, %v2436
        %v2438 = vpop.f32.mrf.mxu0
        %v2439 = vadd.f32 %v2420, %v2438
        %2440 = vmatmul.bf16.gmra.mxu0 %v487
        %v2441 = vpop.f32.mrf.mxu0
        %v2442 = vadd.f32 %v2423, %v2441
        %v2443 = vpop.f32.mrf.mxu0
        %v2444 = vadd.f32 %v2425, %v2443
        %2445 = vdwg.mxu0
        %2446 = vmatpush.bf16.msra.mxu0 %v2143
        %2447 = vmatpush.bf16.msra.mxu0 %v2139
        %2448 = vmatpush.bf16.msra.mxu0 %v2135
        %2449 = vmatpush.bf16.msra.mxu0 %v2131
        %2450 = vmatpush.bf16.msra.mxu0 %v2127
        %2451 = vmatpush.bf16.msra.mxu0 %v2123
        %2452 = vmatpush.bf16.msra.mxu0 %v2119
        %2453 = vmatpush.bf16.msra.mxu0 %v2115
        %2454 = vmatmul.bf16.gmra.mxu0 %v480
        %v2455 = vpop.f32.mrf.mxu0
        %v2456 = vadd.f32 %v1723, %v2455
        %v2457 = vpop.f32.mrf.mxu0
        %v2458 = vadd.f32 %v1723, %v2457
        %2459 = vmatmul.bf16.gmra.mxu0 %v484
        %v2460 = vpop.f32.mrf.mxu0
        %v2461 = vadd.f32 %v1723, %v2460
        %v2462 = vpop.f32.mrf.mxu0
        %v2463 = vadd.f32 %v1723, %v2462
        %2464 = vdwg.mxu0
        %2465 = vmatpush.bf16.msra.mxu0 %v2175
        %2466 = vmatpush.bf16.msra.mxu0 %v2171
        %2467 = vmatpush.bf16.msra.mxu0 %v2167
        %2468 = vmatpush.bf16.msra.mxu0 %v2163
        %2469 = vmatpush.bf16.msra.mxu0 %v2159
        %2470 = vmatpush.bf16.msra.mxu0 %v2155
        %2471 = vmatpush.bf16.msra.mxu0 %v2151
        %2472 = vmatpush.bf16.msra.mxu0 %v2147
        %2473 = vmatmul.bf16.gmra.mxu0 %v481
        %v2474 = vpop.f32.mrf.mxu0
        %v2475 = vadd.f32 %v2456, %v2474
        %v2476 = vpop.f32.mrf.mxu0
        %v2477 = vadd.f32 %v2458, %v2476
        %2478 = vmatmul.bf16.gmra.mxu0 %v485
        %v2479 = vpop.f32.mrf.mxu0
        %v2480 = vadd.f32 %v2461, %v2479
        %v2481 = vpop.f32.mrf.mxu0
        %v2482 = vadd.f32 %v2463, %v2481
        %2483 = vdwg.mxu0
        %2484 = vmatpush.bf16.msra.mxu0 %v2207
        %2485 = vmatpush.bf16.msra.mxu0 %v2203
        %2486 = vmatpush.bf16.msra.mxu0 %v2199
        %2487 = vmatpush.bf16.msra.mxu0 %v2195
        %2488 = vmatpush.bf16.msra.mxu0 %v2191
        %2489 = vmatpush.bf16.msra.mxu0 %v2187
        %2490 = vmatpush.bf16.msra.mxu0 %v2183
        %2491 = vmatpush.bf16.msra.mxu0 %v2179
        %2492 = vmatmul.bf16.gmra.mxu0 %v482
        %v2493 = vpop.f32.mrf.mxu0
        %v2494 = vadd.f32 %v2475, %v2493
        %v2495 = vpop.f32.mrf.mxu0
        %v2496 = vadd.f32 %v2477, %v2495
        %2497 = vmatmul.bf16.gmra.mxu0 %v486
        %v2498 = vpop.f32.mrf.mxu0
        %v2499 = vadd.f32 %v2480, %v2498
        %v2500 = vpop.f32.mrf.mxu0
        %v2501 = vadd.f32 %v2482, %v2500
        %2502 = vdwg.mxu0
        %2503 = vmatpush.bf16.msra.mxu0 %v2239
        %2504 = vmatpush.bf16.msra.mxu0 %v2235
        %2505 = vmatpush.bf16.msra.mxu0 %v2231
        %2506 = vmatpush.bf16.msra.mxu0 %v2227
        %2507 = vmatpush.bf16.msra.mxu0 %v2223
        %2508 = vmatpush.bf16.msra.mxu0 %v2219
        %2509 = vmatpush.bf16.msra.mxu0 %v2215
        %2510 = vmatpush.bf16.msra.mxu0 %v2211
        %2511 = vmatmul.bf16.gmra.mxu0 %v483
        %v2512 = vpop.f32.mrf.mxu0
        %v2513 = vadd.f32 %v2494, %v2512
        %v2514 = vpop.f32.mrf.mxu0
        %v2515 = vadd.f32 %v2496, %v2514
        %2516 = vmatmul.bf16.gmra.mxu0 %v487
        %v2517 = vpop.f32.mrf.mxu0
        %v2518 = vadd.f32 %v2499, %v2517
        %v2519 = vpop.f32.mrf.mxu0
        %v2520 = vadd.f32 %v2501, %v2519
        %2521 = vdwg.mxu0
        %2522 = vmatpush.bf16.msra.mxu0 %v2144
        %2523 = vmatpush.bf16.msra.mxu0 %v2140
        %2524 = vmatpush.bf16.msra.mxu0 %v2136
        %2525 = vmatpush.bf16.msra.mxu0 %v2132
        %2526 = vmatpush.bf16.msra.mxu0 %v2128
        %2527 = vmatpush.bf16.msra.mxu0 %v2124
        %2528 = vmatpush.bf16.msra.mxu0 %v2120
        %2529 = vmatpush.bf16.msra.mxu0 %v2116
        %2530 = vmatmul.bf16.gmra.mxu0 %v480
        %v2531 = vpop.f32.mrf.mxu0
        %v2532 = vadd.f32 %v1724, %v2531
        %v2533 = vpop.f32.mrf.mxu0
        %v2534 = vadd.f32 %v1724, %v2533
        %2535 = vmatmul.bf16.gmra.mxu0 %v484
        %v2536 = vpop.f32.mrf.mxu0
        %v2537 = vadd.f32 %v1724, %v2536
        %v2538 = vpop.f32.mrf.mxu0
        %v2539 = vadd.f32 %v1724, %v2538
        %2540 = vdwg.mxu0
        %2541 = vmatpush.bf16.msra.mxu0 %v2176
        %2542 = vmatpush.bf16.msra.mxu0 %v2172
        %2543 = vmatpush.bf16.msra.mxu0 %v2168
        %2544 = vmatpush.bf16.msra.mxu0 %v2164
        %2545 = vmatpush.bf16.msra.mxu0 %v2160
        %2546 = vmatpush.bf16.msra.mxu0 %v2156
        %2547 = vmatpush.bf16.msra.mxu0 %v2152
        %2548 = vmatpush.bf16.msra.mxu0 %v2148
        %2549 = vmatmul.bf16.gmra.mxu0 %v481
        %v2550 = vpop.f32.mrf.mxu0
        %v2551 = vadd.f32 %v2532, %v2550
        %v2552 = vpop.f32.mrf.mxu0
        %v2553 = vadd.f32 %v2534, %v2552
        %2554 = vmatmul.bf16.gmra.mxu0 %v485
        %v2555 = vpop.f32.mrf.mxu0
        %v2556 = vadd.f32 %v2537, %v2555
        %v2557 = vpop.f32.mrf.mxu0
        %v2558 = vadd.f32 %v2539, %v2557
        %2559 = vdwg.mxu0
        %2560 = vmatpush.bf16.msra.mxu0 %v2208
        %2561 = vmatpush.bf16.msra.mxu0 %v2204
        %2562 = vmatpush.bf16.msra.mxu0 %v2200
        %2563 = vmatpush.bf16.msra.mxu0 %v2196
        %2564 = vmatpush.bf16.msra.mxu0 %v2192
        %2565 = vmatpush.bf16.msra.mxu0 %v2188
        %2566 = vmatpush.bf16.msra.mxu0 %v2184
        %2567 = vmatpush.bf16.msra.mxu0 %v2180
        %2568 = vmatmul.bf16.gmra.mxu0 %v482
        %v2569 = vpop.f32.mrf.mxu0
        %v2570 = vadd.f32 %v2551, %v2569
        %v2571 = vpop.f32.mrf.mxu0
        %v2572 = vadd.f32 %v2553, %v2571
        %2573 = vmatmul.bf16.gmra.mxu0 %v486
        %v2574 = vpop.f32.mrf.mxu0
        %v2575 = vadd.f32 %v2556, %v2574
        %v2576 = vpop.f32.mrf.mxu0
        %v2577 = vadd.f32 %v2558, %v2576
        %2578 = vdwg.mxu0
        %2579 = vmatpush.bf16.msra.mxu0 %v2240
        %2580 = vmatpush.bf16.msra.mxu0 %v2236
        %2581 = vmatpush.bf16.msra.mxu0 %v2232
        %2582 = vmatpush.bf16.msra.mxu0 %v2228
        %2583 = vmatpush.bf16.msra.mxu0 %v2224
        %2584 = vmatpush.bf16.msra.mxu0 %v2220
        %2585 = vmatpush.bf16.msra.mxu0 %v2216
        %2586 = vmatpush.bf16.msra.mxu0 %v2212
        %2587 = vmatmul.bf16.gmra.mxu0 %v483
        %v2588 = vpop.f32.mrf.mxu0
        %v2589 = vadd.f32 %v2570, %v2588
        %v2590 = vpop.f32.mrf.mxu0
        %v2591 = vadd.f32 %v2572, %v2590
        %2592 = vmatmul.bf16.gmra.mxu0 %v487
        %v2593 = vpop.f32.mrf.mxu0
        %v2594 = vadd.f32 %v2575, %v2593
        %v2595 = vpop.f32.mrf.mxu0
        %v2596 = vadd.f32 %v2577, %v2595
        %2597 = vdwg.mxu0
        %2598 = vmatpush.bf16.msra.mxu0 %v2145
        %2599 = vmatpush.bf16.msra.mxu0 %v2141
        %2600 = vmatpush.bf16.msra.mxu0 %v2137
        %2601 = vmatpush.bf16.msra.mxu0 %v2133
        %2602 = vmatpush.bf16.msra.mxu0 %v2129
        %2603 = vmatpush.bf16.msra.mxu0 %v2125
        %2604 = vmatpush.bf16.msra.mxu0 %v2121
        %2605 = vmatpush.bf16.msra.mxu0 %v2117
        %2606 = vmatmul.bf16.gmra.mxu0 %v480
        %v2607 = vpop.f32.mrf.mxu0
        %v2608 = vadd.f32 %v1725, %v2607
        %v2609 = vpop.f32.mrf.mxu0
        %v2610 = vadd.f32 %v1725, %v2609
        %2611 = vmatmul.bf16.gmra.mxu0 %v484
        %v2612 = vpop.f32.mrf.mxu0
        %v2613 = vadd.f32 %v1725, %v2612
        %v2614 = vpop.f32.mrf.mxu0
        %v2615 = vadd.f32 %v1725, %v2614
        %2616 = vdwg.mxu0
        %2617 = vmatpush.bf16.msra.mxu0 %v2177
        %2618 = vmatpush.bf16.msra.mxu0 %v2173
        %2619 = vmatpush.bf16.msra.mxu0 %v2169
        %2620 = vmatpush.bf16.msra.mxu0 %v2165
        %2621 = vmatpush.bf16.msra.mxu0 %v2161
        %2622 = vmatpush.bf16.msra.mxu0 %v2157
        %2623 = vmatpush.bf16.msra.mxu0 %v2153
        %2624 = vmatpush.bf16.msra.mxu0 %v2149
        %2625 = vmatmul.bf16.gmra.mxu0 %v481
        %v2626 = vpop.f32.mrf.mxu0
        %v2627 = vadd.f32 %v2608, %v2626
        %v2628 = vpop.f32.mrf.mxu0
        %v2629 = vadd.f32 %v2610, %v2628
        %2630 = vmatmul.bf16.gmra.mxu0 %v485
        %v2631 = vpop.f32.mrf.mxu0
        %v2632 = vadd.f32 %v2613, %v2631
        %v2633 = vpop.f32.mrf.mxu0
        %v2634 = vadd.f32 %v2615, %v2633
        %2635 = vdwg.mxu0
        %2636 = vmatpush.bf16.msra.mxu0 %v2209
        %2637 = vmatpush.bf16.msra.mxu0 %v2205
        %2638 = vmatpush.bf16.msra.mxu0 %v2201
        %2639 = vmatpush.bf16.msra.mxu0 %v2197
        %2640 = vmatpush.bf16.msra.mxu0 %v2193
        %2641 = vmatpush.bf16.msra.mxu0 %v2189
        %2642 = vmatpush.bf16.msra.mxu0 %v2185
        %2643 = vmatpush.bf16.msra.mxu0 %v2181
        %2644 = vmatmul.bf16.gmra.mxu0 %v482
        %v2645 = vpop.f32.mrf.mxu0
        %v2646 = vadd.f32 %v2627, %v2645
        %v2647 = vpop.f32.mrf.mxu0
        %v2648 = vadd.f32 %v2629, %v2647
        %2649 = vmatmul.bf16.gmra.mxu0 %v486
        %v2650 = vpop.f32.mrf.mxu0
        %v2651 = vadd.f32 %v2632, %v2650
        %v2652 = vpop.f32.mrf.mxu0
        %v2653 = vadd.f32 %v2634, %v2652
        %2654 = vdwg.mxu0
        %2655 = vmatpush.bf16.msra.mxu0 %v2241
        %2656 = vmatpush.bf16.msra.mxu0 %v2237
        %2657 = vmatpush.bf16.msra.mxu0 %v2233
        %2658 = vmatpush.bf16.msra.mxu0 %v2229
        %2659 = vmatpush.bf16.msra.mxu0 %v2225
        %2660 = vmatpush.bf16.msra.mxu0 %v2221
        %2661 = vmatpush.bf16.msra.mxu0 %v2217
        %2662 = vmatpush.bf16.msra.mxu0 %v2213
        %2663 = vmatmul.bf16.gmra.mxu0 %v483
        %v2664 = vpop.f32.mrf.mxu0
        %v2665 = vadd.f32 %v2646, %v2664
        %v2666 = vpop.f32.mrf.mxu0
        %v2667 = vadd.f32 %v2648, %v2666
        %2668 = vmatmul.bf16.gmra.mxu0 %v487
        %v2669 = vpop.f32.mrf.mxu0
        %v2670 = vadd.f32 %v2651, %v2669
        %v2671 = vpop.f32.mrf.mxu0
        %v2672 = vadd.f32 %v2653, %v2671
        %2673 = vdwg.mxu0
        %v2674 = vmax.f32 %v2437, 0.0
        %v2675 = vmax.f32 %v2513, 0.0
        %v2676 = vmax.f32 %v2589, 0.0
        %v2677 = vmax.f32 %v2665, 0.0
        %v2678 = vmax.f32 %v2439, 0.0
        %v2679 = vmax.f32 %v2515, 0.0
        %v2680 = vmax.f32 %v2591, 0.0
        %v2681 = vmax.f32 %v2667, 0.0
        %v2682 = vmax.f32 %v2442, 0.0
        %v2683 = vmax.f32 %v2518, 0.0
        %v2684 = vmax.f32 %v2594, 0.0
        %v2685 = vmax.f32 %v2670, 0.0
        %v2686 = vmax.f32 %v2444, 0.0
        %v2687 = vmax.f32 %v2520, 0.0
        %v2688 = vmax.f32 %v2596, 0.0
        %v2689 = vmax.f32 %v2672, 0.0
        %v2690 = vpack.c.bf16 %v2678, %v2674
        %v2691 = vpack.c.bf16 %v2679, %v2675
        %v2692 = vpack.c.bf16 %v2680, %v2676
        %v2693 = vpack.c.bf16 %v2681, %v2677
        %v2694 = vpack.c.bf16 %v2686, %v2682
        %v2695 = vpack.c.bf16 %v2687, %v2683
        %v2696 = vpack.c.bf16 %v2688, %v2684
        %v2697 = vpack.c.bf16 %v2689, %v2685
        %v2698 = vld [vmem:[#allocation8 + $0x400] sm:$0xff]
        %v2699 = vld [vmem:[#allocation8 + $0x408] sm:$0xff]
        %v2700 = vld [vmem:[#allocation8 + $0x410] sm:$0xff]
        %v2701 = vld [vmem:[#allocation8 + $0x418] sm:$0xff]
        %v2702 = vld [vmem:[#allocation8 + $0x420] sm:$0xff]
        %v2703 = vld [vmem:[#allocation8 + $0x428] sm:$0xff]
        %v2704 = vld [vmem:[#allocation8 + $0x430] sm:$0xff]
        %v2705 = vld [vmem:[#allocation8 + $0x438] sm:$0xff]
        %v2706 = vld [vmem:[#allocation8 + $0x440] sm:$0xff]
        %v2707 = vld [vmem:[#allocation8 + $0x448] sm:$0xff]
        %v2708 = vld [vmem:[#allocation8 + $0x450] sm:$0xff]
        %v2709 = vld [vmem:[#allocation8 + $0x458] sm:$0xff]
        %v2710 = vld [vmem:[#allocation8 + $0x460] sm:$0xff]
        %v2711 = vld [vmem:[#allocation8 + $0x468] sm:$0xff]
        %v2712 = vld [vmem:[#allocation8 + $0x470] sm:$0xff]
        %v2713 = vld [vmem:[#allocation8 + $0x478] sm:$0xff]
        %v2714 = vld [vmem:[#allocation8 + $0x480] sm:$0xff]
        %v2715 = vld [vmem:[#allocation8 + $0x488] sm:$0xff]
        %v2716 = vld [vmem:[#allocation8 + $0x490] sm:$0xff]
        %v2717 = vld [vmem:[#allocation8 + $0x498] sm:$0xff]
        %v2718 = vld [vmem:[#allocation8 + $0x4a0] sm:$0xff]
        %v2719 = vld [vmem:[#allocation8 + $0x4a8] sm:$0xff]
        %v2720 = vld [vmem:[#allocation8 + $0x4b0] sm:$0xff]
        %v2721 = vld [vmem:[#allocation8 + $0x4b8] sm:$0xff]
        %v2722 = vld [vmem:[#allocation8 + $0x4c0] sm:$0xff]
        %v2723 = vld [vmem:[#allocation8 + $0x4c8] sm:$0xff]
        %v2724 = vld [vmem:[#allocation8 + $0x4d0] sm:$0xff]
        %v2725 = vld [vmem:[#allocation8 + $0x4d8] sm:$0xff]
        %v2726 = vld [vmem:[#allocation8 + $0x4e0] sm:$0xff]
        %v2727 = vld [vmem:[#allocation8 + $0x4e8] sm:$0xff]
        %v2728 = vld [vmem:[#allocation8 + $0x4f0] sm:$0xff]
        %v2729 = vld [vmem:[#allocation8 + $0x4f8] sm:$0xff]
        %v2730 = vld [vmem:[#allocation8 + $0x500] sm:$0xff]
        %v2731 = vld [vmem:[#allocation8 + $0x508] sm:$0xff]
        %v2732 = vld [vmem:[#allocation8 + $0x510] sm:$0xff]
        %v2733 = vld [vmem:[#allocation8 + $0x518] sm:$0xff]
        %v2734 = vld [vmem:[#allocation8 + $0x520] sm:$0xff]
        %v2735 = vld [vmem:[#allocation8 + $0x528] sm:$0xff]
        %v2736 = vld [vmem:[#allocation8 + $0x530] sm:$0xff]
        %v2737 = vld [vmem:[#allocation8 + $0x538] sm:$0xff]
        %v2738 = vld [vmem:[#allocation8 + $0x540] sm:$0xff]
        %v2739 = vld [vmem:[#allocation8 + $0x548] sm:$0xff]
        %v2740 = vld [vmem:[#allocation8 + $0x550] sm:$0xff]
        %v2741 = vld [vmem:[#allocation8 + $0x558] sm:$0xff]
        %v2742 = vld [vmem:[#allocation8 + $0x560] sm:$0xff]
        %v2743 = vld [vmem:[#allocation8 + $0x568] sm:$0xff]
        %v2744 = vld [vmem:[#allocation8 + $0x570] sm:$0xff]
        %v2745 = vld [vmem:[#allocation8 + $0x578] sm:$0xff]
        %v2746 = vld [vmem:[#allocation8 + $0x580] sm:$0xff]
        %v2747 = vld [vmem:[#allocation8 + $0x588] sm:$0xff]
        %v2748 = vld [vmem:[#allocation8 + $0x590] sm:$0xff]
        %v2749 = vld [vmem:[#allocation8 + $0x598] sm:$0xff]
        %v2750 = vld [vmem:[#allocation8 + $0x5a0] sm:$0xff]
        %v2751 = vld [vmem:[#allocation8 + $0x5a8] sm:$0xff]
        %v2752 = vld [vmem:[#allocation8 + $0x5b0] sm:$0xff]
        %v2753 = vld [vmem:[#allocation8 + $0x5b8] sm:$0xff]
        %v2754 = vld [vmem:[#allocation8 + $0x5c0] sm:$0xff]
        %v2755 = vld [vmem:[#allocation8 + $0x5c8] sm:$0xff]
        %v2756 = vld [vmem:[#allocation8 + $0x5d0] sm:$0xff]
        %v2757 = vld [vmem:[#allocation8 + $0x5d8] sm:$0xff]
        %v2758 = vld [vmem:[#allocation8 + $0x5e0] sm:$0xff]
        %v2759 = vld [vmem:[#allocation8 + $0x5e8] sm:$0xff]
        %v2760 = vld [vmem:[#allocation8 + $0x5f0] sm:$0xff]
        %v2761 = vld [vmem:[#allocation8 + $0x5f8] sm:$0xff]
        %v2762 = vld [vmem:[#allocation8 + $0x600] sm:$0xff]
        %v2763 = vld [vmem:[#allocation8 + $0x608] sm:$0xff]
        %v2764 = vld [vmem:[#allocation8 + $0x610] sm:$0xff]
        %v2765 = vld [vmem:[#allocation8 + $0x618] sm:$0xff]
        %v2766 = vld [vmem:[#allocation8 + $0x620] sm:$0xff]
        %v2767 = vld [vmem:[#allocation8 + $0x628] sm:$0xff]
        %v2768 = vld [vmem:[#allocation8 + $0x630] sm:$0xff]
        %v2769 = vld [vmem:[#allocation8 + $0x638] sm:$0xff]
        %v2770 = vld [vmem:[#allocation8 + $0x640] sm:$0xff]
        %v2771 = vld [vmem:[#allocation8 + $0x648] sm:$0xff]
        %v2772 = vld [vmem:[#allocation8 + $0x650] sm:$0xff]
        %v2773 = vld [vmem:[#allocation8 + $0x658] sm:$0xff]
        %v2774 = vld [vmem:[#allocation8 + $0x660] sm:$0xff]
        %v2775 = vld [vmem:[#allocation8 + $0x668] sm:$0xff]
        %v2776 = vld [vmem:[#allocation8 + $0x670] sm:$0xff]
        %v2777 = vld [vmem:[#allocation8 + $0x678] sm:$0xff]
        %v2778 = vld [vmem:[#allocation8 + $0x680] sm:$0xff]
        %v2779 = vld [vmem:[#allocation8 + $0x688] sm:$0xff]
        %v2780 = vld [vmem:[#allocation8 + $0x690] sm:$0xff]
        %v2781 = vld [vmem:[#allocation8 + $0x698] sm:$0xff]
        %v2782 = vld [vmem:[#allocation8 + $0x6a0] sm:$0xff]
        %v2783 = vld [vmem:[#allocation8 + $0x6a8] sm:$0xff]
        %v2784 = vld [vmem:[#allocation8 + $0x6b0] sm:$0xff]
        %v2785 = vld [vmem:[#allocation8 + $0x6b8] sm:$0xff]
        %v2786 = vld [vmem:[#allocation8 + $0x6c0] sm:$0xff]
        %v2787 = vld [vmem:[#allocation8 + $0x6c8] sm:$0xff]
        %v2788 = vld [vmem:[#allocation8 + $0x6d0] sm:$0xff]
        %v2789 = vld [vmem:[#allocation8 + $0x6d8] sm:$0xff]
        %v2790 = vld [vmem:[#allocation8 + $0x6e0] sm:$0xff]
        %v2791 = vld [vmem:[#allocation8 + $0x6e8] sm:$0xff]
        %v2792 = vld [vmem:[#allocation8 + $0x6f0] sm:$0xff]
        %v2793 = vld [vmem:[#allocation8 + $0x6f8] sm:$0xff]
        %v2794 = vld [vmem:[#allocation8 + $0x700] sm:$0xff]
        %v2795 = vld [vmem:[#allocation8 + $0x708] sm:$0xff]
        %v2796 = vld [vmem:[#allocation8 + $0x710] sm:$0xff]
        %v2797 = vld [vmem:[#allocation8 + $0x718] sm:$0xff]
        %v2798 = vld [vmem:[#allocation8 + $0x720] sm:$0xff]
        %v2799 = vld [vmem:[#allocation8 + $0x728] sm:$0xff]
        %v2800 = vld [vmem:[#allocation8 + $0x730] sm:$0xff]
        %v2801 = vld [vmem:[#allocation8 + $0x738] sm:$0xff]
        %v2802 = vld [vmem:[#allocation8 + $0x740] sm:$0xff]
        %v2803 = vld [vmem:[#allocation8 + $0x748] sm:$0xff]
        %v2804 = vld [vmem:[#allocation8 + $0x750] sm:$0xff]
        %v2805 = vld [vmem:[#allocation8 + $0x758] sm:$0xff]
        %v2806 = vld [vmem:[#allocation8 + $0x760] sm:$0xff]
        %v2807 = vld [vmem:[#allocation8 + $0x768] sm:$0xff]
        %v2808 = vld [vmem:[#allocation8 + $0x770] sm:$0xff]
        %v2809 = vld [vmem:[#allocation8 + $0x778] sm:$0xff]
        %v2810 = vld [vmem:[#allocation8 + $0x780] sm:$0xff]
        %v2811 = vld [vmem:[#allocation8 + $0x788] sm:$0xff]
        %v2812 = vld [vmem:[#allocation8 + $0x790] sm:$0xff]
        %v2813 = vld [vmem:[#allocation8 + $0x798] sm:$0xff]
        %v2814 = vld [vmem:[#allocation8 + $0x7a0] sm:$0xff]
        %v2815 = vld [vmem:[#allocation8 + $0x7a8] sm:$0xff]
        %v2816 = vld [vmem:[#allocation8 + $0x7b0] sm:$0xff]
        %v2817 = vld [vmem:[#allocation8 + $0x7b8] sm:$0xff]
        %v2818 = vld [vmem:[#allocation8 + $0x7c0] sm:$0xff]
        %v2819 = vld [vmem:[#allocation8 + $0x7c8] sm:$0xff]
        %v2820 = vld [vmem:[#allocation8 + $0x7d0] sm:$0xff]
        %v2821 = vld [vmem:[#allocation8 + $0x7d8] sm:$0xff]
        %v2822 = vld [vmem:[#allocation8 + $0x7e0] sm:$0xff]
        %v2823 = vld [vmem:[#allocation8 + $0x7e8] sm:$0xff]
        %v2824 = vld [vmem:[#allocation8 + $0x7f0] sm:$0xff]
        %v2825 = vld [vmem:[#allocation8 + $0x7f8] sm:$0xff]
        %v2954 = vunpack.c.l.b16 %v2698
        %v2955 = vunpack.c.h.b16 %v2698
        %v2956 = vunpack.c.l.b16 %v2699
        %v2957 = vunpack.c.h.b16 %v2699
        %v2958 = vunpack.c.l.b16 %v2700
        %v2959 = vunpack.c.h.b16 %v2700
        %v2960 = vunpack.c.l.b16 %v2701
        %v2961 = vunpack.c.h.b16 %v2701
        %v2962 = vunpack.c.l.b16 %v2702
        %v2963 = vunpack.c.h.b16 %v2702
        %v2964 = vunpack.c.l.b16 %v2703
        %v2965 = vunpack.c.h.b16 %v2703
        %v2966 = vunpack.c.l.b16 %v2704
        %v2967 = vunpack.c.h.b16 %v2704
        %v2968 = vunpack.c.l.b16 %v2705
        %v2969 = vunpack.c.h.b16 %v2705
        %v2970 = vunpack.c.l.b16 %v2706
        %v2971 = vunpack.c.h.b16 %v2706
        %v2972 = vunpack.c.l.b16 %v2707
        %v2973 = vunpack.c.h.b16 %v2707
        %v2974 = vunpack.c.l.b16 %v2708
        %v2975 = vunpack.c.h.b16 %v2708
        %v2976 = vunpack.c.l.b16 %v2709
        %v2977 = vunpack.c.h.b16 %v2709
        %v2978 = vunpack.c.l.b16 %v2710
        %v2979 = vunpack.c.h.b16 %v2710
        %v2980 = vunpack.c.l.b16 %v2711
        %v2981 = vunpack.c.h.b16 %v2711
        %v2982 = vunpack.c.l.b16 %v2712
        %v2983 = vunpack.c.h.b16 %v2712
        %v2984 = vunpack.c.l.b16 %v2713
        %v2985 = vunpack.c.h.b16 %v2713
        %v2986 = vunpack.c.l.b16 %v2714
        %v2987 = vunpack.c.h.b16 %v2714
        %v2988 = vunpack.c.l.b16 %v2715
        %v2989 = vunpack.c.h.b16 %v2715
        %v2990 = vunpack.c.l.b16 %v2716
        %v2991 = vunpack.c.h.b16 %v2716
        %v2992 = vunpack.c.l.b16 %v2717
        %v2993 = vunpack.c.h.b16 %v2717
        %v2994 = vunpack.c.l.b16 %v2718
        %v2995 = vunpack.c.h.b16 %v2718
        %v2996 = vunpack.c.l.b16 %v2719
        %v2997 = vunpack.c.h.b16 %v2719
        %v2998 = vunpack.c.l.b16 %v2720
        %v2999 = vunpack.c.h.b16 %v2720
        %v3000 = vunpack.c.l.b16 %v2721
        %v3001 = vunpack.c.h.b16 %v2721
        %v3002 = vunpack.c.l.b16 %v2722
        %v3003 = vunpack.c.h.b16 %v2722
        %v3004 = vunpack.c.l.b16 %v2723
        %v3005 = vunpack.c.h.b16 %v2723
        %v3006 = vunpack.c.l.b16 %v2724
        %v3007 = vunpack.c.h.b16 %v2724
        %v3008 = vunpack.c.l.b16 %v2725
        %v3009 = vunpack.c.h.b16 %v2725
        %v3010 = vunpack.c.l.b16 %v2726
        %v3011 = vunpack.c.h.b16 %v2726
        %v3012 = vunpack.c.l.b16 %v2727
        %v3013 = vunpack.c.h.b16 %v2727
        %v3014 = vunpack.c.l.b16 %v2728
        %v3015 = vunpack.c.h.b16 %v2728
        %v3016 = vunpack.c.l.b16 %v2729
        %v3017 = vunpack.c.h.b16 %v2729
        %v3018 = vunpack.c.l.b16 %v2730
        %v3019 = vunpack.c.h.b16 %v2730
        %v3020 = vunpack.c.l.b16 %v2731
        %v3021 = vunpack.c.h.b16 %v2731
        %v3022 = vunpack.c.l.b16 %v2732
        %v3023 = vunpack.c.h.b16 %v2732
        %v3024 = vunpack.c.l.b16 %v2733
        %v3025 = vunpack.c.h.b16 %v2733
        %v3026 = vunpack.c.l.b16 %v2734
        %v3027 = vunpack.c.h.b16 %v2734
        %v3028 = vunpack.c.l.b16 %v2735
        %v3029 = vunpack.c.h.b16 %v2735
        %v3030 = vunpack.c.l.b16 %v2736
        %v3031 = vunpack.c.h.b16 %v2736
        %v3032 = vunpack.c.l.b16 %v2737
        %v3033 = vunpack.c.h.b16 %v2737
        %v3034 = vunpack.c.l.b16 %v2738
        %v3035 = vunpack.c.h.b16 %v2738
        %v3036 = vunpack.c.l.b16 %v2739
        %v3037 = vunpack.c.h.b16 %v2739
        %v3038 = vunpack.c.l.b16 %v2740
        %v3039 = vunpack.c.h.b16 %v2740
        %v3040 = vunpack.c.l.b16 %v2741
        %v3041 = vunpack.c.h.b16 %v2741
        %v3042 = vunpack.c.l.b16 %v2742
        %v3043 = vunpack.c.h.b16 %v2742
        %v3044 = vunpack.c.l.b16 %v2743
        %v3045 = vunpack.c.h.b16 %v2743
        %v3046 = vunpack.c.l.b16 %v2744
        %v3047 = vunpack.c.h.b16 %v2744
        %v3048 = vunpack.c.l.b16 %v2745
        %v3049 = vunpack.c.h.b16 %v2745
        %v3050 = vunpack.c.l.b16 %v2746
        %v3051 = vunpack.c.h.b16 %v2746
        %v3052 = vunpack.c.l.b16 %v2747
        %v3053 = vunpack.c.h.b16 %v2747
        %v3054 = vunpack.c.l.b16 %v2748
        %v3055 = vunpack.c.h.b16 %v2748
        %v3056 = vunpack.c.l.b16 %v2749
        %v3057 = vunpack.c.h.b16 %v2749
        %v3058 = vunpack.c.l.b16 %v2750
        %v3059 = vunpack.c.h.b16 %v2750
        %v3060 = vunpack.c.l.b16 %v2751
        %v3061 = vunpack.c.h.b16 %v2751
        %v3062 = vunpack.c.l.b16 %v2752
        %v3063 = vunpack.c.h.b16 %v2752
        %v3064 = vunpack.c.l.b16 %v2753
        %v3065 = vunpack.c.h.b16 %v2753
        %v3066 = vunpack.c.l.b16 %v2754
        %v3067 = vunpack.c.h.b16 %v2754
        %v3068 = vunpack.c.l.b16 %v2755
        %v3069 = vunpack.c.h.b16 %v2755
        %v3070 = vunpack.c.l.b16 %v2756
        %v3071 = vunpack.c.h.b16 %v2756
        %v3072 = vunpack.c.l.b16 %v2757
        %v3073 = vunpack.c.h.b16 %v2757
        %v3074 = vunpack.c.l.b16 %v2758
        %v3075 = vunpack.c.h.b16 %v2758
        %v3076 = vunpack.c.l.b16 %v2759
        %v3077 = vunpack.c.h.b16 %v2759
        %v3078 = vunpack.c.l.b16 %v2760
        %v3079 = vunpack.c.h.b16 %v2760
        %v3080 = vunpack.c.l.b16 %v2761
        %v3081 = vunpack.c.h.b16 %v2761
        %v3082 = vunpack.c.l.b16 %v2762
        %v3083 = vunpack.c.h.b16 %v2762
        %v3084 = vunpack.c.l.b16 %v2763
        %v3085 = vunpack.c.h.b16 %v2763
        %v3086 = vunpack.c.l.b16 %v2764
        %v3087 = vunpack.c.h.b16 %v2764
        %v3088 = vunpack.c.l.b16 %v2765
        %v3089 = vunpack.c.h.b16 %v2765
        %v3090 = vunpack.c.l.b16 %v2766
        %v3091 = vunpack.c.h.b16 %v2766
        %v3092 = vunpack.c.l.b16 %v2767
        %v3093 = vunpack.c.h.b16 %v2767
        %v3094 = vunpack.c.l.b16 %v2768
        %v3095 = vunpack.c.h.b16 %v2768
        %v3096 = vunpack.c.l.b16 %v2769
        %v3097 = vunpack.c.h.b16 %v2769
        %v3098 = vunpack.c.l.b16 %v2770
        %v3099 = vunpack.c.h.b16 %v2770
        %v3100 = vunpack.c.l.b16 %v2771
        %v3101 = vunpack.c.h.b16 %v2771
        %v3102 = vunpack.c.l.b16 %v2772
        %v3103 = vunpack.c.h.b16 %v2772
        %v3104 = vunpack.c.l.b16 %v2773
        %v3105 = vunpack.c.h.b16 %v2773
        %v3106 = vunpack.c.l.b16 %v2774
        %v3107 = vunpack.c.h.b16 %v2774
        %v3108 = vunpack.c.l.b16 %v2775
        %v3109 = vunpack.c.h.b16 %v2775
        %v3110 = vunpack.c.l.b16 %v2776
        %v3111 = vunpack.c.h.b16 %v2776
        %v3112 = vunpack.c.l.b16 %v2777
        %v3113 = vunpack.c.h.b16 %v2777
        %v3114 = vunpack.c.l.b16 %v2778
        %v3115 = vunpack.c.h.b16 %v2778
        %v3116 = vunpack.c.l.b16 %v2779
        %v3117 = vunpack.c.h.b16 %v2779
        %v3118 = vunpack.c.l.b16 %v2780
        %v3119 = vunpack.c.h.b16 %v2780
        %v3120 = vunpack.c.l.b16 %v2781
        %v3121 = vunpack.c.h.b16 %v2781
        %v3122 = vunpack.c.l.b16 %v2782
        %v3123 = vunpack.c.h.b16 %v2782
        %v3124 = vunpack.c.l.b16 %v2783
        %v3125 = vunpack.c.h.b16 %v2783
        %v3126 = vunpack.c.l.b16 %v2784
        %v3127 = vunpack.c.h.b16 %v2784
        %v3128 = vunpack.c.l.b16 %v2785
        %v3129 = vunpack.c.h.b16 %v2785
        %v3130 = vunpack.c.l.b16 %v2786
        %v3131 = vunpack.c.h.b16 %v2786
        %v3132 = vunpack.c.l.b16 %v2787
        %v3133 = vunpack.c.h.b16 %v2787
        %v3134 = vunpack.c.l.b16 %v2788
        %v3135 = vunpack.c.h.b16 %v2788
        %v3136 = vunpack.c.l.b16 %v2789
        %v3137 = vunpack.c.h.b16 %v2789
        %v3138 = vunpack.c.l.b16 %v2790
        %v3139 = vunpack.c.h.b16 %v2790
        %v3140 = vunpack.c.l.b16 %v2791
        %v3141 = vunpack.c.h.b16 %v2791
        %v3142 = vunpack.c.l.b16 %v2792
        %v3143 = vunpack.c.h.b16 %v2792
        %v3144 = vunpack.c.l.b16 %v2793
        %v3145 = vunpack.c.h.b16 %v2793
        %v3146 = vunpack.c.l.b16 %v2794
        %v3147 = vunpack.c.h.b16 %v2794
        %v3148 = vunpack.c.l.b16 %v2795
        %v3149 = vunpack.c.h.b16 %v2795
        %v3150 = vunpack.c.l.b16 %v2796
        %v3151 = vunpack.c.h.b16 %v2796
        %v3152 = vunpack.c.l.b16 %v2797
        %v3153 = vunpack.c.h.b16 %v2797
        %v3154 = vunpack.c.l.b16 %v2798
        %v3155 = vunpack.c.h.b16 %v2798
        %v3156 = vunpack.c.l.b16 %v2799
        %v3157 = vunpack.c.h.b16 %v2799
        %v3158 = vunpack.c.l.b16 %v2800
        %v3159 = vunpack.c.h.b16 %v2800
        %v3160 = vunpack.c.l.b16 %v2801
        %v3161 = vunpack.c.h.b16 %v2801
        %v3162 = vunpack.c.l.b16 %v2802
        %v3163 = vunpack.c.h.b16 %v2802
        %v3164 = vunpack.c.l.b16 %v2803
        %v3165 = vunpack.c.h.b16 %v2803
        %v3166 = vunpack.c.l.b16 %v2804
        %v3167 = vunpack.c.h.b16 %v2804
        %v3168 = vunpack.c.l.b16 %v2805
        %v3169 = vunpack.c.h.b16 %v2805
        %v3170 = vunpack.c.l.b16 %v2806
        %v3171 = vunpack.c.h.b16 %v2806
        %v3172 = vunpack.c.l.b16 %v2807
        %v3173 = vunpack.c.h.b16 %v2807
        %v3174 = vunpack.c.l.b16 %v2808
        %v3175 = vunpack.c.h.b16 %v2808
        %v3176 = vunpack.c.l.b16 %v2809
        %v3177 = vunpack.c.h.b16 %v2809
        %v3178 = vunpack.c.l.b16 %v2810
        %v3179 = vunpack.c.h.b16 %v2810
        %v3180 = vunpack.c.l.b16 %v2811
        %v3181 = vunpack.c.h.b16 %v2811
        %v3182 = vunpack.c.l.b16 %v2812
        %v3183 = vunpack.c.h.b16 %v2812
        %v3184 = vunpack.c.l.b16 %v2813
        %v3185 = vunpack.c.h.b16 %v2813
        %v3186 = vunpack.c.l.b16 %v2814
        %v3187 = vunpack.c.h.b16 %v2814
        %v3188 = vunpack.c.l.b16 %v2815
        %v3189 = vunpack.c.h.b16 %v2815
        %v3190 = vunpack.c.l.b16 %v2816
        %v3191 = vunpack.c.h.b16 %v2816
        %v3192 = vunpack.c.l.b16 %v2817
        %v3193 = vunpack.c.h.b16 %v2817
        %v3194 = vunpack.c.l.b16 %v2818
        %v3195 = vunpack.c.h.b16 %v2818
        %v3196 = vunpack.c.l.b16 %v2819
        %v3197 = vunpack.c.h.b16 %v2819
        %v3198 = vunpack.c.l.b16 %v2820
        %v3199 = vunpack.c.h.b16 %v2820
        %v3200 = vunpack.c.l.b16 %v2821
        %v3201 = vunpack.c.h.b16 %v2821
        %v3202 = vunpack.c.l.b16 %v2822
        %v3203 = vunpack.c.h.b16 %v2822
        %v3204 = vunpack.c.l.b16 %v2823
        %v3205 = vunpack.c.h.b16 %v2823
        %v3206 = vunpack.c.l.b16 %v2824
        %v3207 = vunpack.c.h.b16 %v2824
        %v3208 = vunpack.c.l.b16 %v2825
        %v3209 = vunpack.c.h.b16 %v2825
        %v3210 = vpack.c.b16 %v2958, %v2954
        %v3211 = vpack.c.b16 %v2959, %v2955
        %v3212 = vpack.c.b16 %v2960, %v2956
        %v3213 = vpack.c.b16 %v2961, %v2957
        %v3214 = vpack.c.b16 %v2966, %v2962
        %v3215 = vpack.c.b16 %v2967, %v2963
        %v3216 = vpack.c.b16 %v2968, %v2964
        %v3217 = vpack.c.b16 %v2969, %v2965
        %v3218 = vpack.c.b16 %v2974, %v2970
        %v3219 = vpack.c.b16 %v2975, %v2971
        %v3220 = vpack.c.b16 %v2976, %v2972
        %v3221 = vpack.c.b16 %v2977, %v2973
        %v3222 = vpack.c.b16 %v2982, %v2978
        %v3223 = vpack.c.b16 %v2983, %v2979
        %v3224 = vpack.c.b16 %v2984, %v2980
        %v3225 = vpack.c.b16 %v2985, %v2981
        %v3226 = vpack.c.b16 %v2990, %v2986
        %v3227 = vpack.c.b16 %v2991, %v2987
        %v3228 = vpack.c.b16 %v2992, %v2988
        %v3229 = vpack.c.b16 %v2993, %v2989
        %v3230 = vpack.c.b16 %v2998, %v2994
        %v3231 = vpack.c.b16 %v2999, %v2995
        %v3232 = vpack.c.b16 %v3000, %v2996
        %v3233 = vpack.c.b16 %v3001, %v2997
        %v3234 = vpack.c.b16 %v3006, %v3002
        %v3235 = vpack.c.b16 %v3007, %v3003
        %v3236 = vpack.c.b16 %v3008, %v3004
        %v3237 = vpack.c.b16 %v3009, %v3005
        %v3238 = vpack.c.b16 %v3014, %v3010
        %v3239 = vpack.c.b16 %v3015, %v3011
        %v3240 = vpack.c.b16 %v3016, %v3012
        %v3241 = vpack.c.b16 %v3017, %v3013
        %v3242 = vpack.c.b16 %v3022, %v3018
        %v3243 = vpack.c.b16 %v3023, %v3019
        %v3244 = vpack.c.b16 %v3024, %v3020
        %v3245 = vpack.c.b16 %v3025, %v3021
        %v3246 = vpack.c.b16 %v3030, %v3026
        %v3247 = vpack.c.b16 %v3031, %v3027
        %v3248 = vpack.c.b16 %v3032, %v3028
        %v3249 = vpack.c.b16 %v3033, %v3029
        %v3250 = vpack.c.b16 %v3038, %v3034
        %v3251 = vpack.c.b16 %v3039, %v3035
        %v3252 = vpack.c.b16 %v3040, %v3036
        %v3253 = vpack.c.b16 %v3041, %v3037
        %v3254 = vpack.c.b16 %v3046, %v3042
        %v3255 = vpack.c.b16 %v3047, %v3043
        %v3256 = vpack.c.b16 %v3048, %v3044
        %v3257 = vpack.c.b16 %v3049, %v3045
        %v3258 = vpack.c.b16 %v3054, %v3050
        %v3259 = vpack.c.b16 %v3055, %v3051
        %v3260 = vpack.c.b16 %v3056, %v3052
        %v3261 = vpack.c.b16 %v3057, %v3053
        %v3262 = vpack.c.b16 %v3062, %v3058
        %v3263 = vpack.c.b16 %v3063, %v3059
        %v3264 = vpack.c.b16 %v3064, %v3060
        %v3265 = vpack.c.b16 %v3065, %v3061
        %v3266 = vpack.c.b16 %v3070, %v3066
        %v3267 = vpack.c.b16 %v3071, %v3067
        %v3268 = vpack.c.b16 %v3072, %v3068
        %v3269 = vpack.c.b16 %v3073, %v3069
        %v3270 = vpack.c.b16 %v3078, %v3074
        %v3271 = vpack.c.b16 %v3079, %v3075
        %v3272 = vpack.c.b16 %v3080, %v3076
        %v3273 = vpack.c.b16 %v3081, %v3077
        %v3274 = vpack.c.b16 %v3086, %v3082
        %v3275 = vpack.c.b16 %v3087, %v3083
        %v3276 = vpack.c.b16 %v3088, %v3084
        %v3277 = vpack.c.b16 %v3089, %v3085
        %v3278 = vpack.c.b16 %v3094, %v3090
        %v3279 = vpack.c.b16 %v3095, %v3091
        %v3280 = vpack.c.b16 %v3096, %v3092
        %v3281 = vpack.c.b16 %v3097, %v3093
        %v3282 = vpack.c.b16 %v3102, %v3098
        %v3283 = vpack.c.b16 %v3103, %v3099
        %v3284 = vpack.c.b16 %v3104, %v3100
        %v3285 = vpack.c.b16 %v3105, %v3101
        %v3286 = vpack.c.b16 %v3110, %v3106
        %v3287 = vpack.c.b16 %v3111, %v3107
        %v3288 = vpack.c.b16 %v3112, %v3108
        %v3289 = vpack.c.b16 %v3113, %v3109
        %v3290 = vpack.c.b16 %v3118, %v3114
        %v3291 = vpack.c.b16 %v3119, %v3115
        %v3292 = vpack.c.b16 %v3120, %v3116
        %v3293 = vpack.c.b16 %v3121, %v3117
        %v3294 = vpack.c.b16 %v3126, %v3122
        %v3295 = vpack.c.b16 %v3127, %v3123
        %v3296 = vpack.c.b16 %v3128, %v3124
        %v3297 = vpack.c.b16 %v3129, %v3125
        %v3298 = vpack.c.b16 %v3134, %v3130
        %v3299 = vpack.c.b16 %v3135, %v3131
        %v3300 = vpack.c.b16 %v3136, %v3132
        %v3301 = vpack.c.b16 %v3137, %v3133
        %v3302 = vpack.c.b16 %v3142, %v3138
        %v3303 = vpack.c.b16 %v3143, %v3139
        %v3304 = vpack.c.b16 %v3144, %v3140
        %v3305 = vpack.c.b16 %v3145, %v3141
        %v3306 = vpack.c.b16 %v3150, %v3146
        %v3307 = vpack.c.b16 %v3151, %v3147
        %v3308 = vpack.c.b16 %v3152, %v3148
        %v3309 = vpack.c.b16 %v3153, %v3149
        %v3310 = vpack.c.b16 %v3158, %v3154
        %v3311 = vpack.c.b16 %v3159, %v3155
        %v3312 = vpack.c.b16 %v3160, %v3156
        %v3313 = vpack.c.b16 %v3161, %v3157
        %v3314 = vpack.c.b16 %v3166, %v3162
        %v3315 = vpack.c.b16 %v3167, %v3163
        %v3316 = vpack.c.b16 %v3168, %v3164
        %v3317 = vpack.c.b16 %v3169, %v3165
        %v3318 = vpack.c.b16 %v3174, %v3170
        %v3319 = vpack.c.b16 %v3175, %v3171
        %v3320 = vpack.c.b16 %v3176, %v3172
        %v3321 = vpack.c.b16 %v3177, %v3173
        %v3322 = vpack.c.b16 %v3182, %v3178
        %v3323 = vpack.c.b16 %v3183, %v3179
        %v3324 = vpack.c.b16 %v3184, %v3180
        %v3325 = vpack.c.b16 %v3185, %v3181
        %v3326 = vpack.c.b16 %v3190, %v3186
        %v3327 = vpack.c.b16 %v3191, %v3187
        %v3328 = vpack.c.b16 %v3192, %v3188
        %v3329 = vpack.c.b16 %v3193, %v3189
        %v3330 = vpack.c.b16 %v3198, %v3194
        %v3331 = vpack.c.b16 %v3199, %v3195
        %v3332 = vpack.c.b16 %v3200, %v3196
        %v3333 = vpack.c.b16 %v3201, %v3197
        %v3334 = vpack.c.b16 %v3206, %v3202
        %v3335 = vpack.c.b16 %v3207, %v3203
        %v3336 = vpack.c.b16 %v3208, %v3204
        %v3337 = vpack.c.b16 %v3209, %v3205
        %3466 = vmatpush.bf16.msra.mxu0 %v3238
        %3467 = vmatpush.bf16.msra.mxu0 %v3234
        %3468 = vmatpush.bf16.msra.mxu0 %v3230
        %3469 = vmatpush.bf16.msra.mxu0 %v3226
        %3470 = vmatpush.bf16.msra.mxu0 %v3222
        %3471 = vmatpush.bf16.msra.mxu0 %v3218
        %3472 = vmatpush.bf16.msra.mxu0 %v3214
        %3473 = vmatpush.bf16.msra.mxu0 %v3210
        %3474 = vmatmul.bf16.gmra.mxu0 %v2690
        %v3475 = vpop.f32.mrf.mxu0
        %v3476 = vadd.f32 0.0, %v3475
        %v3477 = vpop.f32.mrf.mxu0
        %v3478 = vadd.f32 0.0, %v3477
        %3479 = vmatmul.bf16.gmra.mxu0 %v2694
        %v3480 = vpop.f32.mrf.mxu0
        %v3481 = vadd.f32 0.0, %v3480
        %v3482 = vpop.f32.mrf.mxu0
        %v3483 = vadd.f32 0.0, %v3482
        %3484 = vdwg.mxu0
        %3485 = vmatpush.bf16.msra.mxu0 %v3270
        %3486 = vmatpush.bf16.msra.mxu0 %v3266
        %3487 = vmatpush.bf16.msra.mxu0 %v3262
        %3488 = vmatpush.bf16.msra.mxu0 %v3258
        %3489 = vmatpush.bf16.msra.mxu0 %v3254
        %3490 = vmatpush.bf16.msra.mxu0 %v3250
        %3491 = vmatpush.bf16.msra.mxu0 %v3246
        %3492 = vmatpush.bf16.msra.mxu0 %v3242
        %3493 = vmatmul.bf16.gmra.mxu0 %v2691
        %v3494 = vpop.f32.mrf.mxu0
        %v3495 = vadd.f32 %v3476, %v3494
        %v3496 = vpop.f32.mrf.mxu0
        %v3497 = vadd.f32 %v3478, %v3496
        %3498 = vmatmul.bf16.gmra.mxu0 %v2695
        %v3499 = vpop.f32.mrf.mxu0
        %v3500 = vadd.f32 %v3481, %v3499
        %v3501 = vpop.f32.mrf.mxu0
        %v3502 = vadd.f32 %v3483, %v3501
        %3503 = vdwg.mxu0
        %3504 = vmatpush.bf16.msra.mxu0 %v3302
        %3505 = vmatpush.bf16.msra.mxu0 %v3298
        %3506 = vmatpush.bf16.msra.mxu0 %v3294
        %3507 = vmatpush.bf16.msra.mxu0 %v3290
        %3508 = vmatpush.bf16.msra.mxu0 %v3286
        %3509 = vmatpush.bf16.msra.mxu0 %v3282
        %3510 = vmatpush.bf16.msra.mxu0 %v3278
        %3511 = vmatpush.bf16.msra.mxu0 %v3274
        %3512 = vmatmul.bf16.gmra.mxu0 %v2692
        %v3513 = vpop.f32.mrf.mxu0
        %v3514 = vadd.f32 %v3495, %v3513
        %v3515 = vpop.f32.mrf.mxu0
        %v3516 = vadd.f32 %v3497, %v3515
        %3517 = vmatmul.bf16.gmra.mxu0 %v2696
        %v3518 = vpop.f32.mrf.mxu0
        %v3519 = vadd.f32 %v3500, %v3518
        %v3520 = vpop.f32.mrf.mxu0
        %v3521 = vadd.f32 %v3502, %v3520
        %3522 = vdwg.mxu0
        %3523 = vmatpush.bf16.msra.mxu0 %v3334
        %3524 = vmatpush.bf16.msra.mxu0 %v3330
        %3525 = vmatpush.bf16.msra.mxu0 %v3326
        %3526 = vmatpush.bf16.msra.mxu0 %v3322
        %3527 = vmatpush.bf16.msra.mxu0 %v3318
        %3528 = vmatpush.bf16.msra.mxu0 %v3314
        %3529 = vmatpush.bf16.msra.mxu0 %v3310
        %3530 = vmatpush.bf16.msra.mxu0 %v3306
        %3531 = vmatmul.bf16.gmra.mxu0 %v2693
        %v3532 = vpop.f32.mrf.mxu0
        %v3533 = vadd.f32 %v3514, %v3532
        %v3534 = vpop.f32.mrf.mxu0
        %v3535 = vadd.f32 %v3516, %v3534
        %3536 = vmatmul.bf16.gmra.mxu0 %v2697
        %v3537 = vpop.f32.mrf.mxu0
        %v3538 = vadd.f32 %v3519, %v3537
        %v3539 = vpop.f32.mrf.mxu0
        %v3540 = vadd.f32 %v3521, %v3539
        %3541 = vdwg.mxu0
        %3542 = vmatpush.bf16.msra.mxu0 %v3239
        %3543 = vmatpush.bf16.msra.mxu0 %v3235
        %3544 = vmatpush.bf16.msra.mxu0 %v3231
        %3545 = vmatpush.bf16.msra.mxu0 %v3227
        %3546 = vmatpush.bf16.msra.mxu0 %v3223
        %3547 = vmatpush.bf16.msra.mxu0 %v3219
        %3548 = vmatpush.bf16.msra.mxu0 %v3215
        %3549 = vmatpush.bf16.msra.mxu0 %v3211
        %3550 = vmatmul.bf16.gmra.mxu0 %v2690
        %v3551 = vpop.f32.mrf.mxu0
        %v3552 = vadd.f32 0.0, %v3551
        %v3553 = vpop.f32.mrf.mxu0
        %v3554 = vadd.f32 0.0, %v3553
        %3555 = vmatmul.bf16.gmra.mxu0 %v2694
        %v3556 = vpop.f32.mrf.mxu0
        %v3557 = vadd.f32 0.0, %v3556
        %v3558 = vpop.f32.mrf.mxu0
        %v3559 = vadd.f32 0.0, %v3558
        %3560 = vdwg.mxu0
        %3561 = vmatpush.bf16.msra.mxu0 %v3271
        %3562 = vmatpush.bf16.msra.mxu0 %v3267
        %3563 = vmatpush.bf16.msra.mxu0 %v3263
        %3564 = vmatpush.bf16.msra.mxu0 %v3259
        %3565 = vmatpush.bf16.msra.mxu0 %v3255
        %3566 = vmatpush.bf16.msra.mxu0 %v3251
        %3567 = vmatpush.bf16.msra.mxu0 %v3247
        %3568 = vmatpush.bf16.msra.mxu0 %v3243
        %3569 = vmatmul.bf16.gmra.mxu0 %v2691
        %v3570 = vpop.f32.mrf.mxu0
        %v3571 = vadd.f32 %v3552, %v3570
        %v3572 = vpop.f32.mrf.mxu0
        %v3573 = vadd.f32 %v3554, %v3572
        %3574 = vmatmul.bf16.gmra.mxu0 %v2695
        %v3575 = vpop.f32.mrf.mxu0
        %v3576 = vadd.f32 %v3557, %v3575
        %v3577 = vpop.f32.mrf.mxu0
        %v3578 = vadd.f32 %v3559, %v3577
        %3579 = vdwg.mxu0
        %3580 = vmatpush.bf16.msra.mxu0 %v3303
        %3581 = vmatpush.bf16.msra.mxu0 %v3299
        %3582 = vmatpush.bf16.msra.mxu0 %v3295
        %3583 = vmatpush.bf16.msra.mxu0 %v3291
        %3584 = vmatpush.bf16.msra.mxu0 %v3287
        %3585 = vmatpush.bf16.msra.mxu0 %v3283
        %3586 = vmatpush.bf16.msra.mxu0 %v3279
        %3587 = vmatpush.bf16.msra.mxu0 %v3275
        %3588 = vmatmul.bf16.gmra.mxu0 %v2692
        %v3589 = vpop.f32.mrf.mxu0
        %v3590 = vadd.f32 %v3571, %v3589
        %v3591 = vpop.f32.mrf.mxu0
        %v3592 = vadd.f32 %v3573, %v3591
        %3593 = vmatmul.bf16.gmra.mxu0 %v2696
        %v3594 = vpop.f32.mrf.mxu0
        %v3595 = vadd.f32 %v3576, %v3594
        %v3596 = vpop.f32.mrf.mxu0
        %v3597 = vadd.f32 %v3578, %v3596
        %3598 = vdwg.mxu0
        %3599 = vmatpush.bf16.msra.mxu0 %v3335
        %3600 = vmatpush.bf16.msra.mxu0 %v3331
        %3601 = vmatpush.bf16.msra.mxu0 %v3327
        %3602 = vmatpush.bf16.msra.mxu0 %v3323
        %3603 = vmatpush.bf16.msra.mxu0 %v3319
        %3604 = vmatpush.bf16.msra.mxu0 %v3315
        %3605 = vmatpush.bf16.msra.mxu0 %v3311
        %3606 = vmatpush.bf16.msra.mxu0 %v3307
        %3607 = vmatmul.bf16.gmra.mxu0 %v2693
        %v3608 = vpop.f32.mrf.mxu0
        %v3609 = vadd.f32 %v3590, %v3608
        %v3610 = vpop.f32.mrf.mxu0
        %v3611 = vadd.f32 %v3592, %v3610
        %3612 = vmatmul.bf16.gmra.mxu0 %v2697
        %v3613 = vpop.f32.mrf.mxu0
        %v3614 = vadd.f32 %v3595, %v3613
        %v3615 = vpop.f32.mrf.mxu0
        %v3616 = vadd.f32 %v3597, %v3615
        %3617 = vdwg.mxu0
        %3618 = vmatpush.bf16.msra.mxu0 %v3240
        %3619 = vmatpush.bf16.msra.mxu0 %v3236
        %3620 = vmatpush.bf16.msra.mxu0 %v3232
        %3621 = vmatpush.bf16.msra.mxu0 %v3228
        %3622 = vmatpush.bf16.msra.mxu0 %v3224
        %3623 = vmatpush.bf16.msra.mxu0 %v3220
        %3624 = vmatpush.bf16.msra.mxu0 %v3216
        %3625 = vmatpush.bf16.msra.mxu0 %v3212
        %3626 = vmatmul.bf16.gmra.mxu0 %v2690
        %v3627 = vpop.f32.mrf.mxu0
        %v3628 = vadd.f32 0.0, %v3627
        %v3629 = vpop.f32.mrf.mxu0
        %v3630 = vadd.f32 0.0, %v3629
        %3631 = vmatmul.bf16.gmra.mxu0 %v2694
        %v3632 = vpop.f32.mrf.mxu0
        %v3633 = vadd.f32 0.0, %v3632
        %v3634 = vpop.f32.mrf.mxu0
        %v3635 = vadd.f32 0.0, %v3634
        %3636 = vdwg.mxu0
        %3637 = vmatpush.bf16.msra.mxu0 %v3272
        %3638 = vmatpush.bf16.msra.mxu0 %v3268
        %3639 = vmatpush.bf16.msra.mxu0 %v3264
        %3640 = vmatpush.bf16.msra.mxu0 %v3260
        %3641 = vmatpush.bf16.msra.mxu0 %v3256
        %3642 = vmatpush.bf16.msra.mxu0 %v3252
        %3643 = vmatpush.bf16.msra.mxu0 %v3248
        %3644 = vmatpush.bf16.msra.mxu0 %v3244
        %3645 = vmatmul.bf16.gmra.mxu0 %v2691
        %v3646 = vpop.f32.mrf.mxu0
        %v3647 = vadd.f32 %v3628, %v3646
        %v3648 = vpop.f32.mrf.mxu0
        %v3649 = vadd.f32 %v3630, %v3648
        %3650 = vmatmul.bf16.gmra.mxu0 %v2695
        %v3651 = vpop.f32.mrf.mxu0
        %v3652 = vadd.f32 %v3633, %v3651
        %v3653 = vpop.f32.mrf.mxu0
        %v3654 = vadd.f32 %v3635, %v3653
        %3655 = vdwg.mxu0
        %3656 = vmatpush.bf16.msra.mxu0 %v3304
        %3657 = vmatpush.bf16.msra.mxu0 %v3300
        %3658 = vmatpush.bf16.msra.mxu0 %v3296
        %3659 = vmatpush.bf16.msra.mxu0 %v3292
        %3660 = vmatpush.bf16.msra.mxu0 %v3288
        %3661 = vmatpush.bf16.msra.mxu0 %v3284
        %3662 = vmatpush.bf16.msra.mxu0 %v3280
        %3663 = vmatpush.bf16.msra.mxu0 %v3276
        %3664 = vmatmul.bf16.gmra.mxu0 %v2692
        %v3665 = vpop.f32.mrf.mxu0
        %v3666 = vadd.f32 %v3647, %v3665
        %v3667 = vpop.f32.mrf.mxu0
        %v3668 = vadd.f32 %v3649, %v3667
        %3669 = vmatmul.bf16.gmra.mxu0 %v2696
        %v3670 = vpop.f32.mrf.mxu0
        %v3671 = vadd.f32 %v3652, %v3670
        %v3672 = vpop.f32.mrf.mxu0
        %v3673 = vadd.f32 %v3654, %v3672
        %3674 = vdwg.mxu0
        %3675 = vmatpush.bf16.msra.mxu0 %v3336
        %3676 = vmatpush.bf16.msra.mxu0 %v3332
        %3677 = vmatpush.bf16.msra.mxu0 %v3328
        %3678 = vmatpush.bf16.msra.mxu0 %v3324
        %3679 = vmatpush.bf16.msra.mxu0 %v3320
        %3680 = vmatpush.bf16.msra.mxu0 %v3316
        %3681 = vmatpush.bf16.msra.mxu0 %v3312
        %3682 = vmatpush.bf16.msra.mxu0 %v3308
        %3683 = vmatmul.bf16.gmra.mxu0 %v2693
        %v3684 = vpop.f32.mrf.mxu0
        %v3685 = vadd.f32 %v3666, %v3684
        %v3686 = vpop.f32.mrf.mxu0
        %v3687 = vadd.f32 %v3668, %v3686
        %3688 = vmatmul.bf16.gmra.mxu0 %v2697
        %v3689 = vpop.f32.mrf.mxu0
        %v3690 = vadd.f32 %v3671, %v3689
        %v3691 = vpop.f32.mrf.mxu0
        %v3692 = vadd.f32 %v3673, %v3691
        %3693 = vdwg.mxu0
        %3694 = vmatpush.bf16.msra.mxu0 %v3241
        %3695 = vmatpush.bf16.msra.mxu0 %v3237
        %3696 = vmatpush.bf16.msra.mxu0 %v3233
        %3697 = vmatpush.bf16.msra.mxu0 %v3229
        %3698 = vmatpush.bf16.msra.mxu0 %v3225
        %3699 = vmatpush.bf16.msra.mxu0 %v3221
        %3700 = vmatpush.bf16.msra.mxu0 %v3217
        %3701 = vmatpush.bf16.msra.mxu0 %v3213
        %3702 = vmatmul.bf16.gmra.mxu0 %v2690
        %v3703 = vpop.f32.mrf.mxu0
        %v3704 = vadd.f32 0.0, %v3703
        %v3705 = vpop.f32.mrf.mxu0
        %v3706 = vadd.f32 0.0, %v3705
        %3707 = vmatmul.bf16.gmra.mxu0 %v2694
        %v3708 = vpop.f32.mrf.mxu0
        %v3709 = vadd.f32 0.0, %v3708
        %v3710 = vpop.f32.mrf.mxu0
        %v3711 = vadd.f32 0.0, %v3710
        %3712 = vdwg.mxu0
        %3713 = vmatpush.bf16.msra.mxu0 %v3273
        %3714 = vmatpush.bf16.msra.mxu0 %v3269
        %3715 = vmatpush.bf16.msra.mxu0 %v3265
        %3716 = vmatpush.bf16.msra.mxu0 %v3261
        %3717 = vmatpush.bf16.msra.mxu0 %v3257
        %3718 = vmatpush.bf16.msra.mxu0 %v3253
        %3719 = vmatpush.bf16.msra.mxu0 %v3249
        %3720 = vmatpush.bf16.msra.mxu0 %v3245
        %3721 = vmatmul.bf16.gmra.mxu0 %v2691
        %v3722 = vpop.f32.mrf.mxu0
        %v3723 = vadd.f32 %v3704, %v3722
        %v3724 = vpop.f32.mrf.mxu0
        %v3725 = vadd.f32 %v3706, %v3724
        %3726 = vmatmul.bf16.gmra.mxu0 %v2695
        %v3727 = vpop.f32.mrf.mxu0
        %v3728 = vadd.f32 %v3709, %v3727
        %v3729 = vpop.f32.mrf.mxu0
        %v3730 = vadd.f32 %v3711, %v3729
        %3731 = vdwg.mxu0
        %3732 = vmatpush.bf16.msra.mxu0 %v3305
        %3733 = vmatpush.bf16.msra.mxu0 %v3301
        %3734 = vmatpush.bf16.msra.mxu0 %v3297
        %3735 = vmatpush.bf16.msra.mxu0 %v3293
        %3736 = vmatpush.bf16.msra.mxu0 %v3289
        %3737 = vmatpush.bf16.msra.mxu0 %v3285
        %3738 = vmatpush.bf16.msra.mxu0 %v3281
        %3739 = vmatpush.bf16.msra.mxu0 %v3277
        %3740 = vmatmul.bf16.gmra.mxu0 %v2692
        %v3741 = vpop.f32.mrf.mxu0
        %v3742 = vadd.f32 %v3723, %v3741
        %v3743 = vpop.f32.mrf.mxu0
        %v3744 = vadd.f32 %v3725, %v3743
        %3745 = vmatmul.bf16.gmra.mxu0 %v2696
        %v3746 = vpop.f32.mrf.mxu0
        %v3747 = vadd.f32 %v3728, %v3746
        %v3748 = vpop.f32.mrf.mxu0
        %v3749 = vadd.f32 %v3730, %v3748
        %3750 = vdwg.mxu0
        %3751 = vmatpush.bf16.msra.mxu0 %v3337
        %3752 = vmatpush.bf16.msra.mxu0 %v3333
        %3753 = vmatpush.bf16.msra.mxu0 %v3329
        %3754 = vmatpush.bf16.msra.mxu0 %v3325
        %3755 = vmatpush.bf16.msra.mxu0 %v3321
        %3756 = vmatpush.bf16.msra.mxu0 %v3317
        %3757 = vmatpush.bf16.msra.mxu0 %v3313
        %3758 = vmatpush.bf16.msra.mxu0 %v3309
        %3759 = vmatmul.bf16.gmra.mxu0 %v2693
        %v3760 = vpop.f32.mrf.mxu0
        %v3761 = vadd.f32 %v3742, %v3760
        %v3762 = vpop.f32.mrf.mxu0
        %v3763 = vadd.f32 %v3744, %v3762
        %3764 = vmatmul.bf16.gmra.mxu0 %v2697
        %v3765 = vpop.f32.mrf.mxu0
        %v3766 = vadd.f32 %v3747, %v3765
        %v3767 = vpop.f32.mrf.mxu0
        %v3768 = vadd.f32 %v3749, %v3767
        %3769 = vdwg.mxu0
        %v3898 = vunpack.c.l.b16 %v1464
        %v3899 = vunpack.c.h.b16 %v1464
        %v3900 = vunpack.c.l.b16 %v1465
        %v3901 = vunpack.c.h.b16 %v1465
        %v3902 = vunpack.c.l.b16 %v1466
        %v3903 = vunpack.c.h.b16 %v1466
        %v3904 = vunpack.c.l.b16 %v1467
        %v3905 = vunpack.c.h.b16 %v1467
        %v3906 = vunpack.c.l.b16 %v1468
        %v3907 = vunpack.c.h.b16 %v1468
        %v3908 = vunpack.c.l.b16 %v1469
        %v3909 = vunpack.c.h.b16 %v1469
        %v3910 = vunpack.c.l.b16 %v1470
        %v3911 = vunpack.c.h.b16 %v1470
        %v3912 = vunpack.c.l.b16 %v1471
        %v3913 = vunpack.c.h.b16 %v1471
        %v3914 = vunpack.c.l.b16 %v1472
        %v3915 = vunpack.c.h.b16 %v1472
        %v3916 = vunpack.c.l.b16 %v1473
        %v3917 = vunpack.c.h.b16 %v1473
        %v3918 = vunpack.c.l.b16 %v1474
        %v3919 = vunpack.c.h.b16 %v1474
        %v3920 = vunpack.c.l.b16 %v1475
        %v3921 = vunpack.c.h.b16 %v1475
        %v3922 = vunpack.c.l.b16 %v1476
        %v3923 = vunpack.c.h.b16 %v1476
        %v3924 = vunpack.c.l.b16 %v1477
        %v3925 = vunpack.c.h.b16 %v1477
        %v3926 = vunpack.c.l.b16 %v1478
        %v3927 = vunpack.c.h.b16 %v1478
        %v3928 = vunpack.c.l.b16 %v1479
        %v3929 = vunpack.c.h.b16 %v1479
        %v3930 = vunpack.c.l.b16 %v1480
        %v3931 = vunpack.c.h.b16 %v1480
        %v3932 = vunpack.c.l.b16 %v1481
        %v3933 = vunpack.c.h.b16 %v1481
        %v3934 = vunpack.c.l.b16 %v1482
        %v3935 = vunpack.c.h.b16 %v1482
        %v3936 = vunpack.c.l.b16 %v1483
        %v3937 = vunpack.c.h.b16 %v1483
        %v3938 = vunpack.c.l.b16 %v1484
        %v3939 = vunpack.c.h.b16 %v1484
        %v3940 = vunpack.c.l.b16 %v1485
        %v3941 = vunpack.c.h.b16 %v1485
        %v3942 = vunpack.c.l.b16 %v1486
        %v3943 = vunpack.c.h.b16 %v1486
        %v3944 = vunpack.c.l.b16 %v1487
        %v3945 = vunpack.c.h.b16 %v1487
        %v3946 = vunpack.c.l.b16 %v1488
        %v3947 = vunpack.c.h.b16 %v1488
        %v3948 = vunpack.c.l.b16 %v1489
        %v3949 = vunpack.c.h.b16 %v1489
        %v3950 = vunpack.c.l.b16 %v1490
        %v3951 = vunpack.c.h.b16 %v1490
        %v3952 = vunpack.c.l.b16 %v1491
        %v3953 = vunpack.c.h.b16 %v1491
        %v3954 = vunpack.c.l.b16 %v1492
        %v3955 = vunpack.c.h.b16 %v1492
        %v3956 = vunpack.c.l.b16 %v1493
        %v3957 = vunpack.c.h.b16 %v1493
        %v3958 = vunpack.c.l.b16 %v1494
        %v3959 = vunpack.c.h.b16 %v1494
        %v3960 = vunpack.c.l.b16 %v1495
        %v3961 = vunpack.c.h.b16 %v1495
        %v3962 = vunpack.c.l.b16 %v1496
        %v3963 = vunpack.c.h.b16 %v1496
        %v3964 = vunpack.c.l.b16 %v1497
        %v3965 = vunpack.c.h.b16 %v1497
        %v3966 = vunpack.c.l.b16 %v1498
        %v3967 = vunpack.c.h.b16 %v1498
        %v3968 = vunpack.c.l.b16 %v1499
        %v3969 = vunpack.c.h.b16 %v1499
        %v3970 = vunpack.c.l.b16 %v1500
        %v3971 = vunpack.c.h.b16 %v1500
        %v3972 = vunpack.c.l.b16 %v1501
        %v3973 = vunpack.c.h.b16 %v1501
        %v3974 = vunpack.c.l.b16 %v1502
        %v3975 = vunpack.c.h.b16 %v1502
        %v3976 = vunpack.c.l.b16 %v1503
        %v3977 = vunpack.c.h.b16 %v1503
        %v3978 = vunpack.c.l.b16 %v1504
        %v3979 = vunpack.c.h.b16 %v1504
        %v3980 = vunpack.c.l.b16 %v1505
        %v3981 = vunpack.c.h.b16 %v1505
        %v3982 = vunpack.c.l.b16 %v1506
        %v3983 = vunpack.c.h.b16 %v1506
        %v3984 = vunpack.c.l.b16 %v1507
        %v3985 = vunpack.c.h.b16 %v1507
        %v3986 = vunpack.c.l.b16 %v1508
        %v3987 = vunpack.c.h.b16 %v1508
        %v3988 = vunpack.c.l.b16 %v1509
        %v3989 = vunpack.c.h.b16 %v1509
        %v3990 = vunpack.c.l.b16 %v1510
        %v3991 = vunpack.c.h.b16 %v1510
        %v3992 = vunpack.c.l.b16 %v1511
        %v3993 = vunpack.c.h.b16 %v1511
        %v3994 = vunpack.c.l.b16 %v1512
        %v3995 = vunpack.c.h.b16 %v1512
        %v3996 = vunpack.c.l.b16 %v1513
        %v3997 = vunpack.c.h.b16 %v1513
        %v3998 = vunpack.c.l.b16 %v1514
        %v3999 = vunpack.c.h.b16 %v1514
        %v4000 = vunpack.c.l.b16 %v1515
        %v4001 = vunpack.c.h.b16 %v1515
        %v4002 = vunpack.c.l.b16 %v1516
        %v4003 = vunpack.c.h.b16 %v1516
        %v4004 = vunpack.c.l.b16 %v1517
        %v4005 = vunpack.c.h.b16 %v1517
        %v4006 = vunpack.c.l.b16 %v1518
        %v4007 = vunpack.c.h.b16 %v1518
        %v4008 = vunpack.c.l.b16 %v1519
        %v4009 = vunpack.c.h.b16 %v1519
        %v4010 = vunpack.c.l.b16 %v1520
        %v4011 = vunpack.c.h.b16 %v1520
        %v4012 = vunpack.c.l.b16 %v1521
        %v4013 = vunpack.c.h.b16 %v1521
        %v4014 = vunpack.c.l.b16 %v1522
        %v4015 = vunpack.c.h.b16 %v1522
        %v4016 = vunpack.c.l.b16 %v1523
        %v4017 = vunpack.c.h.b16 %v1523
        %v4018 = vunpack.c.l.b16 %v1524
        %v4019 = vunpack.c.h.b16 %v1524
        %v4020 = vunpack.c.l.b16 %v1525
        %v4021 = vunpack.c.h.b16 %v1525
        %v4022 = vunpack.c.l.b16 %v1526
        %v4023 = vunpack.c.h.b16 %v1526
        %v4024 = vunpack.c.l.b16 %v1527
        %v4025 = vunpack.c.h.b16 %v1527
        %v4026 = vunpack.c.l.b16 %v1528
        %v4027 = vunpack.c.h.b16 %v1528
        %v4028 = vunpack.c.l.b16 %v1529
        %v4029 = vunpack.c.h.b16 %v1529
        %v4030 = vunpack.c.l.b16 %v1530
        %v4031 = vunpack.c.h.b16 %v1530
        %v4032 = vunpack.c.l.b16 %v1531
        %v4033 = vunpack.c.h.b16 %v1531
        %v4034 = vunpack.c.l.b16 %v1532
        %v4035 = vunpack.c.h.b16 %v1532
        %v4036 = vunpack.c.l.b16 %v1533
        %v4037 = vunpack.c.h.b16 %v1533
        %v4038 = vunpack.c.l.b16 %v1534
        %v4039 = vunpack.c.h.b16 %v1534
        %v4040 = vunpack.c.l.b16 %v1535
        %v4041 = vunpack.c.h.b16 %v1535
        %v4042 = vunpack.c.l.b16 %v1536
        %v4043 = vunpack.c.h.b16 %v1536
        %v4044 = vunpack.c.l.b16 %v1537
        %v4045 = vunpack.c.h.b16 %v1537
        %v4046 = vunpack.c.l.b16 %v1538
        %v4047 = vunpack.c.h.b16 %v1538
        %v4048 = vunpack.c.l.b16 %v1539
        %v4049 = vunpack.c.h.b16 %v1539
        %v4050 = vunpack.c.l.b16 %v1540
        %v4051 = vunpack.c.h.b16 %v1540
        %v4052 = vunpack.c.l.b16 %v1541
        %v4053 = vunpack.c.h.b16 %v1541
        %v4054 = vunpack.c.l.b16 %v1542
        %v4055 = vunpack.c.h.b16 %v1542
        %v4056 = vunpack.c.l.b16 %v1543
        %v4057 = vunpack.c.h.b16 %v1543
        %v4058 = vunpack.c.l.b16 %v1544
        %v4059 = vunpack.c.h.b16 %v1544
        %v4060 = vunpack.c.l.b16 %v1545
        %v4061 = vunpack.c.h.b16 %v1545
        %v4062 = vunpack.c.l.b16 %v1546
        %v4063 = vunpack.c.h.b16 %v1546
        %v4064 = vunpack.c.l.b16 %v1547
        %v4065 = vunpack.c.h.b16 %v1547
        %v4066 = vunpack.c.l.b16 %v1548
        %v4067 = vunpack.c.h.b16 %v1548
        %v4068 = vunpack.c.l.b16 %v1549
        %v4069 = vunpack.c.h.b16 %v1549
        %v4070 = vunpack.c.l.b16 %v1550
        %v4071 = vunpack.c.h.b16 %v1550
        %v4072 = vunpack.c.l.b16 %v1551
        %v4073 = vunpack.c.h.b16 %v1551
        %v4074 = vunpack.c.l.b16 %v1552
        %v4075 = vunpack.c.h.b16 %v1552
        %v4076 = vunpack.c.l.b16 %v1553
        %v4077 = vunpack.c.h.b16 %v1553
        %v4078 = vunpack.c.l.b16 %v1554
        %v4079 = vunpack.c.h.b16 %v1554
        %v4080 = vunpack.c.l.b16 %v1555
        %v4081 = vunpack.c.h.b16 %v1555
        %v4082 = vunpack.c.l.b16 %v1556
        %v4083 = vunpack.c.h.b16 %v1556
        %v4084 = vunpack.c.l.b16 %v1557
        %v4085 = vunpack.c.h.b16 %v1557
        %v4086 = vunpack.c.l.b16 %v1558
        %v4087 = vunpack.c.h.b16 %v1558
        %v4088 = vunpack.c.l.b16 %v1559
        %v4089 = vunpack.c.h.b16 %v1559
        %v4090 = vunpack.c.l.b16 %v1560
        %v4091 = vunpack.c.h.b16 %v1560
        %v4092 = vunpack.c.l.b16 %v1561
        %v4093 = vunpack.c.h.b16 %v1561
        %v4094 = vunpack.c.l.b16 %v1562
        %v4095 = vunpack.c.h.b16 %v1562
        %v4096 = vunpack.c.l.b16 %v1563
        %v4097 = vunpack.c.h.b16 %v1563
        %v4098 = vunpack.c.l.b16 %v1564
        %v4099 = vunpack.c.h.b16 %v1564
        %v4100 = vunpack.c.l.b16 %v1565
        %v4101 = vunpack.c.h.b16 %v1565
        %v4102 = vunpack.c.l.b16 %v1566
        %v4103 = vunpack.c.h.b16 %v1566
        %v4104 = vunpack.c.l.b16 %v1567
        %v4105 = vunpack.c.h.b16 %v1567
        %v4106 = vunpack.c.l.b16 %v1568
        %v4107 = vunpack.c.h.b16 %v1568
        %v4108 = vunpack.c.l.b16 %v1569
        %v4109 = vunpack.c.h.b16 %v1569
        %v4110 = vunpack.c.l.b16 %v1570
        %v4111 = vunpack.c.h.b16 %v1570
        %v4112 = vunpack.c.l.b16 %v1571
        %v4113 = vunpack.c.h.b16 %v1571
        %v4114 = vunpack.c.l.b16 %v1572
        %v4115 = vunpack.c.h.b16 %v1572
        %v4116 = vunpack.c.l.b16 %v1573
        %v4117 = vunpack.c.h.b16 %v1573
        %v4118 = vunpack.c.l.b16 %v1574
        %v4119 = vunpack.c.h.b16 %v1574
        %v4120 = vunpack.c.l.b16 %v1575
        %v4121 = vunpack.c.h.b16 %v1575
        %v4122 = vunpack.c.l.b16 %v1576
        %v4123 = vunpack.c.h.b16 %v1576
        %v4124 = vunpack.c.l.b16 %v1577
        %v4125 = vunpack.c.h.b16 %v1577
        %v4126 = vunpack.c.l.b16 %v1578
        %v4127 = vunpack.c.h.b16 %v1578
        %v4128 = vunpack.c.l.b16 %v1579
        %v4129 = vunpack.c.h.b16 %v1579
        %v4130 = vunpack.c.l.b16 %v1580
        %v4131 = vunpack.c.h.b16 %v1580
        %v4132 = vunpack.c.l.b16 %v1581
        %v4133 = vunpack.c.h.b16 %v1581
        %v4134 = vunpack.c.l.b16 %v1582
        %v4135 = vunpack.c.h.b16 %v1582
        %v4136 = vunpack.c.l.b16 %v1583
        %v4137 = vunpack.c.h.b16 %v1583
        %v4138 = vunpack.c.l.b16 %v1584
        %v4139 = vunpack.c.h.b16 %v1584
        %v4140 = vunpack.c.l.b16 %v1585
        %v4141 = vunpack.c.h.b16 %v1585
        %v4142 = vunpack.c.l.b16 %v1586
        %v4143 = vunpack.c.h.b16 %v1586
        %v4144 = vunpack.c.l.b16 %v1587
        %v4145 = vunpack.c.h.b16 %v1587
        %v4146 = vunpack.c.l.b16 %v1588
        %v4147 = vunpack.c.h.b16 %v1588
        %v4148 = vunpack.c.l.b16 %v1589
        %v4149 = vunpack.c.h.b16 %v1589
        %v4150 = vunpack.c.l.b16 %v1590
        %v4151 = vunpack.c.h.b16 %v1590
        %v4152 = vunpack.c.l.b16 %v1591
        %v4153 = vunpack.c.h.b16 %v1591
        %v4154 = vpack.c.b16 %v3902, %v3898
        %v4155 = vpack.c.b16 %v3903, %v3899
        %v4156 = vpack.c.b16 %v3904, %v3900
        %v4157 = vpack.c.b16 %v3905, %v3901
        %v4158 = vpack.c.b16 %v3910, %v3906
        %v4159 = vpack.c.b16 %v3911, %v3907
        %v4160 = vpack.c.b16 %v3912, %v3908
        %v4161 = vpack.c.b16 %v3913, %v3909
        %v4162 = vpack.c.b16 %v3918, %v3914
        %v4163 = vpack.c.b16 %v3919, %v3915
        %v4164 = vpack.c.b16 %v3920, %v3916
        %v4165 = vpack.c.b16 %v3921, %v3917
        %v4166 = vpack.c.b16 %v3926, %v3922
        %v4167 = vpack.c.b16 %v3927, %v3923
        %v4168 = vpack.c.b16 %v3928, %v3924
        %v4169 = vpack.c.b16 %v3929, %v3925
        %v4170 = vpack.c.b16 %v3934, %v3930
        %v4171 = vpack.c.b16 %v3935, %v3931
        %v4172 = vpack.c.b16 %v3936, %v3932
        %v4173 = vpack.c.b16 %v3937, %v3933
        %v4174 = vpack.c.b16 %v3942, %v3938
        %v4175 = vpack.c.b16 %v3943, %v3939
        %v4176 = vpack.c.b16 %v3944, %v3940
        %v4177 = vpack.c.b16 %v3945, %v3941
        %v4178 = vpack.c.b16 %v3950, %v3946
        %v4179 = vpack.c.b16 %v3951, %v3947
        %v4180 = vpack.c.b16 %v3952, %v3948
        %v4181 = vpack.c.b16 %v3953, %v3949
        %v4182 = vpack.c.b16 %v3958, %v3954
        %v4183 = vpack.c.b16 %v3959, %v3955
        %v4184 = vpack.c.b16 %v3960, %v3956
        %v4185 = vpack.c.b16 %v3961, %v3957
        %v4186 = vpack.c.b16 %v3966, %v3962
        %v4187 = vpack.c.b16 %v3967, %v3963
        %v4188 = vpack.c.b16 %v3968, %v3964
        %v4189 = vpack.c.b16 %v3969, %v3965
        %v4190 = vpack.c.b16 %v3974, %v3970
        %v4191 = vpack.c.b16 %v3975, %v3971
        %v4192 = vpack.c.b16 %v3976, %v3972
        %v4193 = vpack.c.b16 %v3977, %v3973
        %v4194 = vpack.c.b16 %v3982, %v3978
        %v4195 = vpack.c.b16 %v3983, %v3979
        %v4196 = vpack.c.b16 %v3984, %v3980
        %v4197 = vpack.c.b16 %v3985, %v3981
        %v4198 = vpack.c.b16 %v3990, %v3986
        %v4199 = vpack.c.b16 %v3991, %v3987
        %v4200 = vpack.c.b16 %v3992, %v3988
        %v4201 = vpack.c.b16 %v3993, %v3989
        %v4202 = vpack.c.b16 %v3998, %v3994
        %v4203 = vpack.c.b16 %v3999, %v3995
        %v4204 = vpack.c.b16 %v4000, %v3996
        %v4205 = vpack.c.b16 %v4001, %v3997
        %v4206 = vpack.c.b16 %v4006, %v4002
        %v4207 = vpack.c.b16 %v4007, %v4003
        %v4208 = vpack.c.b16 %v4008, %v4004
        %v4209 = vpack.c.b16 %v4009, %v4005
        %v4210 = vpack.c.b16 %v4014, %v4010
        %v4211 = vpack.c.b16 %v4015, %v4011
        %v4212 = vpack.c.b16 %v4016, %v4012
        %v4213 = vpack.c.b16 %v4017, %v4013
        %v4214 = vpack.c.b16 %v4022, %v4018
        %v4215 = vpack.c.b16 %v4023, %v4019
        %v4216 = vpack.c.b16 %v4024, %v4020
        %v4217 = vpack.c.b16 %v4025, %v4021
        %v4218 = vpack.c.b16 %v4030, %v4026
        %v4219 = vpack.c.b16 %v4031, %v4027
        %v4220 = vpack.c.b16 %v4032, %v4028
        %v4221 = vpack.c.b16 %v4033, %v4029
        %v4222 = vpack.c.b16 %v4038, %v4034
        %v4223 = vpack.c.b16 %v4039, %v4035
        %v4224 = vpack.c.b16 %v4040, %v4036
        %v4225 = vpack.c.b16 %v4041, %v4037
        %v4226 = vpack.c.b16 %v4046, %v4042
        %v4227 = vpack.c.b16 %v4047, %v4043
        %v4228 = vpack.c.b16 %v4048, %v4044
        %v4229 = vpack.c.b16 %v4049, %v4045
        %v4230 = vpack.c.b16 %v4054, %v4050
        %v4231 = vpack.c.b16 %v4055, %v4051
        %v4232 = vpack.c.b16 %v4056, %v4052
        %v4233 = vpack.c.b16 %v4057, %v4053
        %v4234 = vpack.c.b16 %v4062, %v4058
        %v4235 = vpack.c.b16 %v4063, %v4059
        %v4236 = vpack.c.b16 %v4064, %v4060
        %v4237 = vpack.c.b16 %v4065, %v4061
        %v4238 = vpack.c.b16 %v4070, %v4066
        %v4239 = vpack.c.b16 %v4071, %v4067
        %v4240 = vpack.c.b16 %v4072, %v4068
        %v4241 = vpack.c.b16 %v4073, %v4069
        %v4242 = vpack.c.b16 %v4078, %v4074
        %v4243 = vpack.c.b16 %v4079, %v4075
        %v4244 = vpack.c.b16 %v4080, %v4076
        %v4245 = vpack.c.b16 %v4081, %v4077
        %v4246 = vpack.c.b16 %v4086, %v4082
        %v4247 = vpack.c.b16 %v4087, %v4083
        %v4248 = vpack.c.b16 %v4088, %v4084
        %v4249 = vpack.c.b16 %v4089, %v4085
        %v4250 = vpack.c.b16 %v4094, %v4090
        %v4251 = vpack.c.b16 %v4095, %v4091
        %v4252 = vpack.c.b16 %v4096, %v4092
        %v4253 = vpack.c.b16 %v4097, %v4093
        %v4254 = vpack.c.b16 %v4102, %v4098
        %v4255 = vpack.c.b16 %v4103, %v4099
        %v4256 = vpack.c.b16 %v4104, %v4100
        %v4257 = vpack.c.b16 %v4105, %v4101
        %v4258 = vpack.c.b16 %v4110, %v4106
        %v4259 = vpack.c.b16 %v4111, %v4107
        %v4260 = vpack.c.b16 %v4112, %v4108
        %v4261 = vpack.c.b16 %v4113, %v4109
        %v4262 = vpack.c.b16 %v4118, %v4114
        %v4263 = vpack.c.b16 %v4119, %v4115
        %v4264 = vpack.c.b16 %v4120, %v4116
        %v4265 = vpack.c.b16 %v4121, %v4117
        %v4266 = vpack.c.b16 %v4126, %v4122
        %v4267 = vpack.c.b16 %v4127, %v4123
        %v4268 = vpack.c.b16 %v4128, %v4124
        %v4269 = vpack.c.b16 %v4129, %v4125
        %v4270 = vpack.c.b16 %v4134, %v4130
        %v4271 = vpack.c.b16 %v4135, %v4131
        %v4272 = vpack.c.b16 %v4136, %v4132
        %v4273 = vpack.c.b16 %v4137, %v4133
        %v4274 = vpack.c.b16 %v4142, %v4138
        %v4275 = vpack.c.b16 %v4143, %v4139
        %v4276 = vpack.c.b16 %v4144, %v4140
        %v4277 = vpack.c.b16 %v4145, %v4141
        %v4278 = vpack.c.b16 %v4150, %v4146
        %v4279 = vpack.c.b16 %v4151, %v4147
        %v4280 = vpack.c.b16 %v4152, %v4148
        %v4281 = vpack.c.b16 %v4153, %v4149
        %4410 = vmatpush.bf16.msra.mxu0 %v4182
        %4411 = vmatpush.bf16.msra.mxu0 %v4178
        %4412 = vmatpush.bf16.msra.mxu0 %v4174
        %4413 = vmatpush.bf16.msra.mxu0 %v4170
        %4414 = vmatpush.bf16.msra.mxu0 %v4166
        %4415 = vmatpush.bf16.msra.mxu0 %v4162
        %4416 = vmatpush.bf16.msra.mxu0 %v4158
        %4417 = vmatpush.bf16.msra.mxu0 %v4154
        %4418 = vmatmul.bf16.gmra.mxu0 %v1456
        %v4419 = vpop.f32.mrf.mxu0
        %v4420 = vadd.f32 %v3533, %v4419
        %v4421 = vpop.f32.mrf.mxu0
        %v4422 = vadd.f32 %v3535, %v4421
        %4423 = vmatmul.bf16.gmra.mxu0 %v1460
        %v4424 = vpop.f32.mrf.mxu0
        %v4425 = vadd.f32 %v3538, %v4424
        %v4426 = vpop.f32.mrf.mxu0
        %v4427 = vadd.f32 %v3540, %v4426
        %4428 = vdwg.mxu0
        %4429 = vmatpush.bf16.msra.mxu0 %v4214
        %4430 = vmatpush.bf16.msra.mxu0 %v4210
        %4431 = vmatpush.bf16.msra.mxu0 %v4206
        %4432 = vmatpush.bf16.msra.mxu0 %v4202
        %4433 = vmatpush.bf16.msra.mxu0 %v4198
        %4434 = vmatpush.bf16.msra.mxu0 %v4194
        %4435 = vmatpush.bf16.msra.mxu0 %v4190
        %4436 = vmatpush.bf16.msra.mxu0 %v4186
        %4437 = vmatmul.bf16.gmra.mxu0 %v1457
        %v4438 = vpop.f32.mrf.mxu0
        %v4439 = vadd.f32 %v4420, %v4438
        %v4440 = vpop.f32.mrf.mxu0
        %v4441 = vadd.f32 %v4422, %v4440
        %4442 = vmatmul.bf16.gmra.mxu0 %v1461
        %v4443 = vpop.f32.mrf.mxu0
        %v4444 = vadd.f32 %v4425, %v4443
        %v4445 = vpop.f32.mrf.mxu0
        %v4446 = vadd.f32 %v4427, %v4445
        %4447 = vdwg.mxu0
        %4448 = vmatpush.bf16.msra.mxu0 %v4246
        %4449 = vmatpush.bf16.msra.mxu0 %v4242
        %4450 = vmatpush.bf16.msra.mxu0 %v4238
        %4451 = vmatpush.bf16.msra.mxu0 %v4234
        %4452 = vmatpush.bf16.msra.mxu0 %v4230
        %4453 = vmatpush.bf16.msra.mxu0 %v4226
        %4454 = vmatpush.bf16.msra.mxu0 %v4222
        %4455 = vmatpush.bf16.msra.mxu0 %v4218
        %4456 = vmatmul.bf16.gmra.mxu0 %v1458
        %v4457 = vpop.f32.mrf.mxu0
        %v4458 = vadd.f32 %v4439, %v4457
        %v4459 = vpop.f32.mrf.mxu0
        %v4460 = vadd.f32 %v4441, %v4459
        %4461 = vmatmul.bf16.gmra.mxu0 %v1462
        %v4462 = vpop.f32.mrf.mxu0
        %v4463 = vadd.f32 %v4444, %v4462
        %v4464 = vpop.f32.mrf.mxu0
        %v4465 = vadd.f32 %v4446, %v4464
        %4466 = vdwg.mxu0
        %4467 = vmatpush.bf16.msra.mxu0 %v4278
        %4468 = vmatpush.bf16.msra.mxu0 %v4274
        %4469 = vmatpush.bf16.msra.mxu0 %v4270
        %4470 = vmatpush.bf16.msra.mxu0 %v4266
        %4471 = vmatpush.bf16.msra.mxu0 %v4262
        %4472 = vmatpush.bf16.msra.mxu0 %v4258
        %4473 = vmatpush.bf16.msra.mxu0 %v4254
        %4474 = vmatpush.bf16.msra.mxu0 %v4250
        %4475 = vmatmul.bf16.gmra.mxu0 %v1459
        %v4476 = vpop.f32.mrf.mxu0
        %v4477 = vadd.f32 %v4458, %v4476
        %v4478 = vpop.f32.mrf.mxu0
        %v4479 = vadd.f32 %v4460, %v4478
        %4480 = vmatmul.bf16.gmra.mxu0 %v1463
        %v4481 = vpop.f32.mrf.mxu0
        %v4482 = vadd.f32 %v4463, %v4481
        %v4483 = vpop.f32.mrf.mxu0
        %v4484 = vadd.f32 %v4465, %v4483
        %4485 = vdwg.mxu0
        %4486 = vmatpush.bf16.msra.mxu0 %v4183
        %4487 = vmatpush.bf16.msra.mxu0 %v4179
        %4488 = vmatpush.bf16.msra.mxu0 %v4175
        %4489 = vmatpush.bf16.msra.mxu0 %v4171
        %4490 = vmatpush.bf16.msra.mxu0 %v4167
        %4491 = vmatpush.bf16.msra.mxu0 %v4163
        %4492 = vmatpush.bf16.msra.mxu0 %v4159
        %4493 = vmatpush.bf16.msra.mxu0 %v4155
        %4494 = vmatmul.bf16.gmra.mxu0 %v1456
        %v4495 = vpop.f32.mrf.mxu0
        %v4496 = vadd.f32 %v3609, %v4495
        %v4497 = vpop.f32.mrf.mxu0
        %v4498 = vadd.f32 %v3611, %v4497
        %4499 = vmatmul.bf16.gmra.mxu0 %v1460
        %v4500 = vpop.f32.mrf.mxu0
        %v4501 = vadd.f32 %v3614, %v4500
        %v4502 = vpop.f32.mrf.mxu0
        %v4503 = vadd.f32 %v3616, %v4502
        %4504 = vdwg.mxu0
        %4505 = vmatpush.bf16.msra.mxu0 %v4215
        %4506 = vmatpush.bf16.msra.mxu0 %v4211
        %4507 = vmatpush.bf16.msra.mxu0 %v4207
        %4508 = vmatpush.bf16.msra.mxu0 %v4203
        %4509 = vmatpush.bf16.msra.mxu0 %v4199
        %4510 = vmatpush.bf16.msra.mxu0 %v4195
        %4511 = vmatpush.bf16.msra.mxu0 %v4191
        %4512 = vmatpush.bf16.msra.mxu0 %v4187
        %4513 = vmatmul.bf16.gmra.mxu0 %v1457
        %v4514 = vpop.f32.mrf.mxu0
        %v4515 = vadd.f32 %v4496, %v4514
        %v4516 = vpop.f32.mrf.mxu0
        %v4517 = vadd.f32 %v4498, %v4516
        %4518 = vmatmul.bf16.gmra.mxu0 %v1461
        %v4519 = vpop.f32.mrf.mxu0
        %v4520 = vadd.f32 %v4501, %v4519
        %v4521 = vpop.f32.mrf.mxu0
        %v4522 = vadd.f32 %v4503, %v4521
        %4523 = vdwg.mxu0
        %4524 = vmatpush.bf16.msra.mxu0 %v4247
        %4525 = vmatpush.bf16.msra.mxu0 %v4243
        %4526 = vmatpush.bf16.msra.mxu0 %v4239
        %4527 = vmatpush.bf16.msra.mxu0 %v4235
        %4528 = vmatpush.bf16.msra.mxu0 %v4231
        %4529 = vmatpush.bf16.msra.mxu0 %v4227
        %4530 = vmatpush.bf16.msra.mxu0 %v4223
        %4531 = vmatpush.bf16.msra.mxu0 %v4219
        %4532 = vmatmul.bf16.gmra.mxu0 %v1458
        %v4533 = vpop.f32.mrf.mxu0
        %v4534 = vadd.f32 %v4515, %v4533
        %v4535 = vpop.f32.mrf.mxu0
        %v4536 = vadd.f32 %v4517, %v4535
        %4537 = vmatmul.bf16.gmra.mxu0 %v1462
        %v4538 = vpop.f32.mrf.mxu0
        %v4539 = vadd.f32 %v4520, %v4538
        %v4540 = vpop.f32.mrf.mxu0
        %v4541 = vadd.f32 %v4522, %v4540
        %4542 = vdwg.mxu0
        %4543 = vmatpush.bf16.msra.mxu0 %v4279
        %4544 = vmatpush.bf16.msra.mxu0 %v4275
        %4545 = vmatpush.bf16.msra.mxu0 %v4271
        %4546 = vmatpush.bf16.msra.mxu0 %v4267
        %4547 = vmatpush.bf16.msra.mxu0 %v4263
        %4548 = vmatpush.bf16.msra.mxu0 %v4259
        %4549 = vmatpush.bf16.msra.mxu0 %v4255
        %4550 = vmatpush.bf16.msra.mxu0 %v4251
        %4551 = vmatmul.bf16.gmra.mxu0 %v1459
        %v4552 = vpop.f32.mrf.mxu0
        %v4553 = vadd.f32 %v4534, %v4552
        %v4554 = vpop.f32.mrf.mxu0
        %v4555 = vadd.f32 %v4536, %v4554
        %4556 = vmatmul.bf16.gmra.mxu0 %v1463
        %v4557 = vpop.f32.mrf.mxu0
        %v4558 = vadd.f32 %v4539, %v4557
        %v4559 = vpop.f32.mrf.mxu0
        %v4560 = vadd.f32 %v4541, %v4559
        %4561 = vdwg.mxu0
        %4562 = vmatpush.bf16.msra.mxu0 %v4184
        %4563 = vmatpush.bf16.msra.mxu0 %v4180
        %4564 = vmatpush.bf16.msra.mxu0 %v4176
        %4565 = vmatpush.bf16.msra.mxu0 %v4172
        %4566 = vmatpush.bf16.msra.mxu0 %v4168
        %4567 = vmatpush.bf16.msra.mxu0 %v4164
        %4568 = vmatpush.bf16.msra.mxu0 %v4160
        %4569 = vmatpush.bf16.msra.mxu0 %v4156
        %4570 = vmatmul.bf16.gmra.mxu0 %v1456
        %v4571 = vpop.f32.mrf.mxu0
        %v4572 = vadd.f32 %v3685, %v4571
        %v4573 = vpop.f32.mrf.mxu0
        %v4574 = vadd.f32 %v3687, %v4573
        %4575 = vmatmul.bf16.gmra.mxu0 %v1460
        %v4576 = vpop.f32.mrf.mxu0
        %v4577 = vadd.f32 %v3690, %v4576
        %v4578 = vpop.f32.mrf.mxu0
        %v4579 = vadd.f32 %v3692, %v4578
        %4580 = vdwg.mxu0
        %4581 = vmatpush.bf16.msra.mxu0 %v4216
        %4582 = vmatpush.bf16.msra.mxu0 %v4212
        %4583 = vmatpush.bf16.msra.mxu0 %v4208
        %4584 = vmatpush.bf16.msra.mxu0 %v4204
        %4585 = vmatpush.bf16.msra.mxu0 %v4200
        %4586 = vmatpush.bf16.msra.mxu0 %v4196
        %4587 = vmatpush.bf16.msra.mxu0 %v4192
        %4588 = vmatpush.bf16.msra.mxu0 %v4188
        %4589 = vmatmul.bf16.gmra.mxu0 %v1457
        %v4590 = vpop.f32.mrf.mxu0
        %v4591 = vadd.f32 %v4572, %v4590
        %v4592 = vpop.f32.mrf.mxu0
        %v4593 = vadd.f32 %v4574, %v4592
        %4594 = vmatmul.bf16.gmra.mxu0 %v1461
        %v4595 = vpop.f32.mrf.mxu0
        %v4596 = vadd.f32 %v4577, %v4595
        %v4597 = vpop.f32.mrf.mxu0
        %v4598 = vadd.f32 %v4579, %v4597
        %4599 = vdwg.mxu0
        %4600 = vmatpush.bf16.msra.mxu0 %v4248
        %4601 = vmatpush.bf16.msra.mxu0 %v4244
        %4602 = vmatpush.bf16.msra.mxu0 %v4240
        %4603 = vmatpush.bf16.msra.mxu0 %v4236
        %4604 = vmatpush.bf16.msra.mxu0 %v4232
        %4605 = vmatpush.bf16.msra.mxu0 %v4228
        %4606 = vmatpush.bf16.msra.mxu0 %v4224
        %4607 = vmatpush.bf16.msra.mxu0 %v4220
        %4608 = vmatmul.bf16.gmra.mxu0 %v1458
        %v4609 = vpop.f32.mrf.mxu0
        %v4610 = vadd.f32 %v4591, %v4609
        %v4611 = vpop.f32.mrf.mxu0
        %v4612 = vadd.f32 %v4593, %v4611
        %4613 = vmatmul.bf16.gmra.mxu0 %v1462
        %v4614 = vpop.f32.mrf.mxu0
        %v4615 = vadd.f32 %v4596, %v4614
        %v4616 = vpop.f32.mrf.mxu0
        %v4617 = vadd.f32 %v4598, %v4616
        %4618 = vdwg.mxu0
        %4619 = vmatpush.bf16.msra.mxu0 %v4280
        %4620 = vmatpush.bf16.msra.mxu0 %v4276
        %4621 = vmatpush.bf16.msra.mxu0 %v4272
        %4622 = vmatpush.bf16.msra.mxu0 %v4268
        %4623 = vmatpush.bf16.msra.mxu0 %v4264
        %4624 = vmatpush.bf16.msra.mxu0 %v4260
        %4625 = vmatpush.bf16.msra.mxu0 %v4256
        %4626 = vmatpush.bf16.msra.mxu0 %v4252
        %4627 = vmatmul.bf16.gmra.mxu0 %v1459
        %v4628 = vpop.f32.mrf.mxu0
        %v4629 = vadd.f32 %v4610, %v4628
        %v4630 = vpop.f32.mrf.mxu0
        %v4631 = vadd.f32 %v4612, %v4630
        %4632 = vmatmul.bf16.gmra.mxu0 %v1463
        %v4633 = vpop.f32.mrf.mxu0
        %v4634 = vadd.f32 %v4615, %v4633
        %v4635 = vpop.f32.mrf.mxu0
        %v4636 = vadd.f32 %v4617, %v4635
        %4637 = vdwg.mxu0
        %4638 = vmatpush.bf16.msra.mxu0 %v4185
        %4639 = vmatpush.bf16.msra.mxu0 %v4181
        %4640 = vmatpush.bf16.msra.mxu0 %v4177
        %4641 = vmatpush.bf16.msra.mxu0 %v4173
        %4642 = vmatpush.bf16.msra.mxu0 %v4169
        %4643 = vmatpush.bf16.msra.mxu0 %v4165
        %4644 = vmatpush.bf16.msra.mxu0 %v4161
        %4645 = vmatpush.bf16.msra.mxu0 %v4157
        %4646 = vmatmul.bf16.gmra.mxu0 %v1456
        %v4647 = vpop.f32.mrf.mxu0
        %v4648 = vadd.f32 %v3761, %v4647
        %v4649 = vpop.f32.mrf.mxu0
        %v4650 = vadd.f32 %v3763, %v4649
        %4651 = vmatmul.bf16.gmra.mxu0 %v1460
        %v4652 = vpop.f32.mrf.mxu0
        %v4653 = vadd.f32 %v3766, %v4652
        %v4654 = vpop.f32.mrf.mxu0
        %v4655 = vadd.f32 %v3768, %v4654
        %4656 = vdwg.mxu0
        %4657 = vmatpush.bf16.msra.mxu0 %v4217
        %4658 = vmatpush.bf16.msra.mxu0 %v4213
        %4659 = vmatpush.bf16.msra.mxu0 %v4209
        %4660 = vmatpush.bf16.msra.mxu0 %v4205
        %4661 = vmatpush.bf16.msra.mxu0 %v4201
        %4662 = vmatpush.bf16.msra.mxu0 %v4197
        %4663 = vmatpush.bf16.msra.mxu0 %v4193
        %4664 = vmatpush.bf16.msra.mxu0 %v4189
        %4665 = vmatmul.bf16.gmra.mxu0 %v1457
        %v4666 = vpop.f32.mrf.mxu0
        %v4667 = vadd.f32 %v4648, %v4666
        %v4668 = vpop.f32.mrf.mxu0
        %v4669 = vadd.f32 %v4650, %v4668
        %4670 = vmatmul.bf16.gmra.mxu0 %v1461
        %v4671 = vpop.f32.mrf.mxu0
        %v4672 = vadd.f32 %v4653, %v4671
        %v4673 = vpop.f32.mrf.mxu0
        %v4674 = vadd.f32 %v4655, %v4673
        %4675 = vdwg.mxu0
        %4676 = vmatpush.bf16.msra.mxu0 %v4249
        %4677 = vmatpush.bf16.msra.mxu0 %v4245
        %4678 = vmatpush.bf16.msra.mxu0 %v4241
        %4679 = vmatpush.bf16.msra.mxu0 %v4237
        %4680 = vmatpush.bf16.msra.mxu0 %v4233
        %4681 = vmatpush.bf16.msra.mxu0 %v4229
        %4682 = vmatpush.bf16.msra.mxu0 %v4225
        %4683 = vmatpush.bf16.msra.mxu0 %v4221
        %4684 = vmatmul.bf16.gmra.mxu0 %v1458
        %v4685 = vpop.f32.mrf.mxu0
        %v4686 = vadd.f32 %v4667, %v4685
        %v4687 = vpop.f32.mrf.mxu0
        %v4688 = vadd.f32 %v4669, %v4687
        %4689 = vmatmul.bf16.gmra.mxu0 %v1462
        %v4690 = vpop.f32.mrf.mxu0
        %v4691 = vadd.f32 %v4672, %v4690
        %v4692 = vpop.f32.mrf.mxu0
        %v4693 = vadd.f32 %v4674, %v4692
        %4694 = vdwg.mxu0
        %4695 = vmatpush.bf16.msra.mxu0 %v4281
        %4696 = vmatpush.bf16.msra.mxu0 %v4277
        %4697 = vmatpush.bf16.msra.mxu0 %v4273
        %4698 = vmatpush.bf16.msra.mxu0 %v4269
        %4699 = vmatpush.bf16.msra.mxu0 %v4265
        %4700 = vmatpush.bf16.msra.mxu0 %v4261
        %4701 = vmatpush.bf16.msra.mxu0 %v4257
        %4702 = vmatpush.bf16.msra.mxu0 %v4253
        %4703 = vmatmul.bf16.gmra.mxu0 %v1459
        %v4704 = vpop.f32.mrf.mxu0
        %v4705 = vadd.f32 %v4686, %v4704
        %v4706 = vpop.f32.mrf.mxu0
        %v4707 = vadd.f32 %v4688, %v4706
        %4708 = vmatmul.bf16.gmra.mxu0 %v1463
        %v4709 = vpop.f32.mrf.mxu0
        %v4710 = vadd.f32 %v4691, %v4709
        %v4711 = vpop.f32.mrf.mxu0
        %v4712 = vadd.f32 %v4693, %v4711
        %4713 = vdwg.mxu0
        %v4714 = vld [vmem:[#allocation5 + $0x20] sm:$0xff]
        %v4715 = vld [vmem:[#allocation5 + $0x28] sm:$0xff]
        %v4716 = vld [vmem:[#allocation5 + $0x60] sm:$0xff]
        %v4717 = vld [vmem:[#allocation5 + $0x68] sm:$0xff]
        %v4718 = vld [vmem:[#allocation5 + $0xa0] sm:$0xff]
        %v4719 = vld [vmem:[#allocation5 + $0xa8] sm:$0xff]
        %v4720 = vld [vmem:[#allocation5 + $0xe0] sm:$0xff]
        %v4721 = vld [vmem:[#allocation5 + $0xe8] sm:$0xff]
        %v4722 = vld [vmem:[#allocation5 + $0x120] sm:$0xff]
        %v4723 = vld [vmem:[#allocation5 + $0x128] sm:$0xff]
        %v4724 = vld [vmem:[#allocation5 + $0x160] sm:$0xff]
        %v4725 = vld [vmem:[#allocation5 + $0x168] sm:$0xff]
        %v4726 = vld [vmem:[#allocation5 + $0x1a0] sm:$0xff]
        %v4727 = vld [vmem:[#allocation5 + $0x1a8] sm:$0xff]
        %v4728 = vld [vmem:[#allocation5 + $0x1e0] sm:$0xff]
        %v4729 = vld [vmem:[#allocation5 + $0x1e8] sm:$0xff]
        %v4730 = vld [vmem:[#allocation5 + $0x220] sm:$0xff]
        %v4731 = vld [vmem:[#allocation5 + $0x228] sm:$0xff]
        %v4732 = vld [vmem:[#allocation5 + $0x260] sm:$0xff]
        %v4733 = vld [vmem:[#allocation5 + $0x268] sm:$0xff]
        %v4734 = vld [vmem:[#allocation5 + $0x2a0] sm:$0xff]
        %v4735 = vld [vmem:[#allocation5 + $0x2a8] sm:$0xff]
        %v4736 = vld [vmem:[#allocation5 + $0x2e0] sm:$0xff]
        %v4737 = vld [vmem:[#allocation5 + $0x2e8] sm:$0xff]
        %v4738 = vld [vmem:[#allocation5 + $0x320] sm:$0xff]
        %v4739 = vld [vmem:[#allocation5 + $0x328] sm:$0xff]
        %v4740 = vld [vmem:[#allocation5 + $0x360] sm:$0xff]
        %v4741 = vld [vmem:[#allocation5 + $0x368] sm:$0xff]
        %v4742 = vld [vmem:[#allocation5 + $0x3a0] sm:$0xff]
        %v4743 = vld [vmem:[#allocation5 + $0x3a8] sm:$0xff]
        %v4744 = vld [vmem:[#allocation5 + $0x3e0] sm:$0xff]
        %v4745 = vld [vmem:[#allocation5 + $0x3e8] sm:$0xff]
        %v4746 = vld [vmem:[#allocation5 + $0x420] sm:$0xff]
        %v4747 = vld [vmem:[#allocation5 + $0x428] sm:$0xff]
        %v4748 = vld [vmem:[#allocation5 + $0x460] sm:$0xff]
        %v4749 = vld [vmem:[#allocation5 + $0x468] sm:$0xff]
        %v4750 = vld [vmem:[#allocation5 + $0x4a0] sm:$0xff]
        %v4751 = vld [vmem:[#allocation5 + $0x4a8] sm:$0xff]
        %v4752 = vld [vmem:[#allocation5 + $0x4e0] sm:$0xff]
        %v4753 = vld [vmem:[#allocation5 + $0x4e8] sm:$0xff]
        %v4754 = vld [vmem:[#allocation5 + $0x520] sm:$0xff]
        %v4755 = vld [vmem:[#allocation5 + $0x528] sm:$0xff]
        %v4756 = vld [vmem:[#allocation5 + $0x560] sm:$0xff]
        %v4757 = vld [vmem:[#allocation5 + $0x568] sm:$0xff]
        %v4758 = vld [vmem:[#allocation5 + $0x5a0] sm:$0xff]
        %v4759 = vld [vmem:[#allocation5 + $0x5a8] sm:$0xff]
        %v4760 = vld [vmem:[#allocation5 + $0x5e0] sm:$0xff]
        %v4761 = vld [vmem:[#allocation5 + $0x5e8] sm:$0xff]
        %v4762 = vld [vmem:[#allocation5 + $0x620] sm:$0xff]
        %v4763 = vld [vmem:[#allocation5 + $0x628] sm:$0xff]
        %v4764 = vld [vmem:[#allocation5 + $0x660] sm:$0xff]
        %v4765 = vld [vmem:[#allocation5 + $0x668] sm:$0xff]
        %v4766 = vld [vmem:[#allocation5 + $0x6a0] sm:$0xff]
        %v4767 = vld [vmem:[#allocation5 + $0x6a8] sm:$0xff]
        %v4768 = vld [vmem:[#allocation5 + $0x6e0] sm:$0xff]
        %v4769 = vld [vmem:[#allocation5 + $0x6e8] sm:$0xff]
        %v4770 = vld [vmem:[#allocation5 + $0x720] sm:$0xff]
        %v4771 = vld [vmem:[#allocation5 + $0x728] sm:$0xff]
        %v4772 = vld [vmem:[#allocation5 + $0x760] sm:$0xff]
        %v4773 = vld [vmem:[#allocation5 + $0x768] sm:$0xff]
        %v4774 = vld [vmem:[#allocation5 + $0x7a0] sm:$0xff]
        %v4775 = vld [vmem:[#allocation5 + $0x7a8] sm:$0xff]
        %v4776 = vld [vmem:[#allocation5 + $0x7e0] sm:$0xff]
        %v4777 = vld [vmem:[#allocation5 + $0x7e8] sm:$0xff]
        %v4778 = vld [vmem:[#allocation5 + $0x820] sm:$0xff]
        %v4779 = vld [vmem:[#allocation5 + $0x828] sm:$0xff]
        %v4780 = vld [vmem:[#allocation5 + $0x860] sm:$0xff]
        %v4781 = vld [vmem:[#allocation5 + $0x868] sm:$0xff]
        %v4782 = vld [vmem:[#allocation5 + $0x8a0] sm:$0xff]
        %v4783 = vld [vmem:[#allocation5 + $0x8a8] sm:$0xff]
        %v4784 = vld [vmem:[#allocation5 + $0x8e0] sm:$0xff]
        %v4785 = vld [vmem:[#allocation5 + $0x8e8] sm:$0xff]
        %v4786 = vld [vmem:[#allocation5 + $0x920] sm:$0xff]
        %v4787 = vld [vmem:[#allocation5 + $0x928] sm:$0xff]
        %v4788 = vld [vmem:[#allocation5 + $0x960] sm:$0xff]
        %v4789 = vld [vmem:[#allocation5 + $0x968] sm:$0xff]
        %v4790 = vld [vmem:[#allocation5 + $0x9a0] sm:$0xff]
        %v4791 = vld [vmem:[#allocation5 + $0x9a8] sm:$0xff]
        %v4792 = vld [vmem:[#allocation5 + $0x9e0] sm:$0xff]
        %v4793 = vld [vmem:[#allocation5 + $0x9e8] sm:$0xff]
        %v4794 = vld [vmem:[#allocation5 + $0xa20] sm:$0xff]
        %v4795 = vld [vmem:[#allocation5 + $0xa28] sm:$0xff]
        %v4796 = vld [vmem:[#allocation5 + $0xa60] sm:$0xff]
        %v4797 = vld [vmem:[#allocation5 + $0xa68] sm:$0xff]
        %v4798 = vld [vmem:[#allocation5 + $0xaa0] sm:$0xff]
        %v4799 = vld [vmem:[#allocation5 + $0xaa8] sm:$0xff]
        %v4800 = vld [vmem:[#allocation5 + $0xae0] sm:$0xff]
        %v4801 = vld [vmem:[#allocation5 + $0xae8] sm:$0xff]
        %v4802 = vld [vmem:[#allocation5 + $0xb20] sm:$0xff]
        %v4803 = vld [vmem:[#allocation5 + $0xb28] sm:$0xff]
        %v4804 = vld [vmem:[#allocation5 + $0xb60] sm:$0xff]
        %v4805 = vld [vmem:[#allocation5 + $0xb68] sm:$0xff]
        %v4806 = vld [vmem:[#allocation5 + $0xba0] sm:$0xff]
        %v4807 = vld [vmem:[#allocation5 + $0xba8] sm:$0xff]
        %v4808 = vld [vmem:[#allocation5 + $0xbe0] sm:$0xff]
        %v4809 = vld [vmem:[#allocation5 + $0xbe8] sm:$0xff]
        %v4810 = vld [vmem:[#allocation5 + $0xc20] sm:$0xff]
        %v4811 = vld [vmem:[#allocation5 + $0xc28] sm:$0xff]
        %v4812 = vld [vmem:[#allocation5 + $0xc60] sm:$0xff]
        %v4813 = vld [vmem:[#allocation5 + $0xc68] sm:$0xff]
        %v4814 = vld [vmem:[#allocation5 + $0xca0] sm:$0xff]
        %v4815 = vld [vmem:[#allocation5 + $0xca8] sm:$0xff]
        %v4816 = vld [vmem:[#allocation5 + $0xce0] sm:$0xff]
        %v4817 = vld [vmem:[#allocation5 + $0xce8] sm:$0xff]
        %v4818 = vld [vmem:[#allocation5 + $0xd20] sm:$0xff]
        %v4819 = vld [vmem:[#allocation5 + $0xd28] sm:$0xff]
        %v4820 = vld [vmem:[#allocation5 + $0xd60] sm:$0xff]
        %v4821 = vld [vmem:[#allocation5 + $0xd68] sm:$0xff]
        %v4822 = vld [vmem:[#allocation5 + $0xda0] sm:$0xff]
        %v4823 = vld [vmem:[#allocation5 + $0xda8] sm:$0xff]
        %v4824 = vld [vmem:[#allocation5 + $0xde0] sm:$0xff]
        %v4825 = vld [vmem:[#allocation5 + $0xde8] sm:$0xff]
        %v4826 = vld [vmem:[#allocation5 + $0xe20] sm:$0xff]
        %v4827 = vld [vmem:[#allocation5 + $0xe28] sm:$0xff]
        %v4828 = vld [vmem:[#allocation5 + $0xe60] sm:$0xff]
        %v4829 = vld [vmem:[#allocation5 + $0xe68] sm:$0xff]
        %v4830 = vld [vmem:[#allocation5 + $0xea0] sm:$0xff]
        %v4831 = vld [vmem:[#allocation5 + $0xea8] sm:$0xff]
        %v4832 = vld [vmem:[#allocation5 + $0xee0] sm:$0xff]
        %v4833 = vld [vmem:[#allocation5 + $0xee8] sm:$0xff]
        %v4834 = vld [vmem:[#allocation5 + $0xf20] sm:$0xff]
        %v4835 = vld [vmem:[#allocation5 + $0xf28] sm:$0xff]
        %v4836 = vld [vmem:[#allocation5 + $0xf60] sm:$0xff]
        %v4837 = vld [vmem:[#allocation5 + $0xf68] sm:$0xff]
        %v4838 = vld [vmem:[#allocation5 + $0xfa0] sm:$0xff]
        %v4839 = vld [vmem:[#allocation5 + $0xfa8] sm:$0xff]
        %v4840 = vld [vmem:[#allocation5 + $0xfe0] sm:$0xff]
        %v4841 = vld [vmem:[#allocation5 + $0xfe8] sm:$0xff]
        %v4842 = vld [vmem:[#allocation7 + $0x8] sm:$0xf]
        %v4844 = vperm.slane %v4842, 0
        %v4845 = vperm.slane %v4842, 1
        %v4846 = vperm.slane %v4842, 2
        %v4847 = vperm.slane %v4842, 3
        %v4980 = vunpack.c.l.b16 %v4714
        %v4981 = vunpack.c.h.b16 %v4714
        %v4982 = vunpack.c.l.b16 %v4715
        %v4983 = vunpack.c.h.b16 %v4715
        %v4984 = vunpack.c.l.b16 %v4716
        %v4985 = vunpack.c.h.b16 %v4716
        %v4986 = vunpack.c.l.b16 %v4717
        %v4987 = vunpack.c.h.b16 %v4717
        %v4988 = vunpack.c.l.b16 %v4718
        %v4989 = vunpack.c.h.b16 %v4718
        %v4990 = vunpack.c.l.b16 %v4719
        %v4991 = vunpack.c.h.b16 %v4719
        %v4992 = vunpack.c.l.b16 %v4720
        %v4993 = vunpack.c.h.b16 %v4720
        %v4994 = vunpack.c.l.b16 %v4721
        %v4995 = vunpack.c.h.b16 %v4721
        %v4996 = vunpack.c.l.b16 %v4722
        %v4997 = vunpack.c.h.b16 %v4722
        %v4998 = vunpack.c.l.b16 %v4723
        %v4999 = vunpack.c.h.b16 %v4723
        %v5000 = vunpack.c.l.b16 %v4724
        %v5001 = vunpack.c.h.b16 %v4724
        %v5002 = vunpack.c.l.b16 %v4725
        %v5003 = vunpack.c.h.b16 %v4725
        %v5004 = vunpack.c.l.b16 %v4726
        %v5005 = vunpack.c.h.b16 %v4726
        %v5006 = vunpack.c.l.b16 %v4727
        %v5007 = vunpack.c.h.b16 %v4727
        %v5008 = vunpack.c.l.b16 %v4728
        %v5009 = vunpack.c.h.b16 %v4728
        %v5010 = vunpack.c.l.b16 %v4729
        %v5011 = vunpack.c.h.b16 %v4729
        %v5012 = vunpack.c.l.b16 %v4730
        %v5013 = vunpack.c.h.b16 %v4730
        %v5014 = vunpack.c.l.b16 %v4731
        %v5015 = vunpack.c.h.b16 %v4731
        %v5016 = vunpack.c.l.b16 %v4732
        %v5017 = vunpack.c.h.b16 %v4732
        %v5018 = vunpack.c.l.b16 %v4733
        %v5019 = vunpack.c.h.b16 %v4733
        %v5020 = vunpack.c.l.b16 %v4734
        %v5021 = vunpack.c.h.b16 %v4734
        %v5022 = vunpack.c.l.b16 %v4735
        %v5023 = vunpack.c.h.b16 %v4735
        %v5024 = vunpack.c.l.b16 %v4736
        %v5025 = vunpack.c.h.b16 %v4736
        %v5026 = vunpack.c.l.b16 %v4737
        %v5027 = vunpack.c.h.b16 %v4737
        %v5028 = vunpack.c.l.b16 %v4738
        %v5029 = vunpack.c.h.b16 %v4738
        %v5030 = vunpack.c.l.b16 %v4739
        %v5031 = vunpack.c.h.b16 %v4739
        %v5032 = vunpack.c.l.b16 %v4740
        %v5033 = vunpack.c.h.b16 %v4740
        %v5034 = vunpack.c.l.b16 %v4741
        %v5035 = vunpack.c.h.b16 %v4741
        %v5036 = vunpack.c.l.b16 %v4742
        %v5037 = vunpack.c.h.b16 %v4742
        %v5038 = vunpack.c.l.b16 %v4743
        %v5039 = vunpack.c.h.b16 %v4743
        %v5040 = vunpack.c.l.b16 %v4744
        %v5041 = vunpack.c.h.b16 %v4744
        %v5042 = vunpack.c.l.b16 %v4745
        %v5043 = vunpack.c.h.b16 %v4745
        %v5044 = vunpack.c.l.b16 %v4746
        %v5045 = vunpack.c.h.b16 %v4746
        %v5046 = vunpack.c.l.b16 %v4747
        %v5047 = vunpack.c.h.b16 %v4747
        %v5048 = vunpack.c.l.b16 %v4748
        %v5049 = vunpack.c.h.b16 %v4748
        %v5050 = vunpack.c.l.b16 %v4749
        %v5051 = vunpack.c.h.b16 %v4749
        %v5052 = vunpack.c.l.b16 %v4750
        %v5053 = vunpack.c.h.b16 %v4750
        %v5054 = vunpack.c.l.b16 %v4751
        %v5055 = vunpack.c.h.b16 %v4751
        %v5056 = vunpack.c.l.b16 %v4752
        %v5057 = vunpack.c.h.b16 %v4752
        %v5058 = vunpack.c.l.b16 %v4753
        %v5059 = vunpack.c.h.b16 %v4753
        %v5060 = vunpack.c.l.b16 %v4754
        %v5061 = vunpack.c.h.b16 %v4754
        %v5062 = vunpack.c.l.b16 %v4755
        %v5063 = vunpack.c.h.b16 %v4755
        %v5064 = vunpack.c.l.b16 %v4756
        %v5065 = vunpack.c.h.b16 %v4756
        %v5066 = vunpack.c.l.b16 %v4757
        %v5067 = vunpack.c.h.b16 %v4757
        %v5068 = vunpack.c.l.b16 %v4758
        %v5069 = vunpack.c.h.b16 %v4758
        %v5070 = vunpack.c.l.b16 %v4759
        %v5071 = vunpack.c.h.b16 %v4759
        %v5072 = vunpack.c.l.b16 %v4760
        %v5073 = vunpack.c.h.b16 %v4760
        %v5074 = vunpack.c.l.b16 %v4761
        %v5075 = vunpack.c.h.b16 %v4761
        %v5076 = vunpack.c.l.b16 %v4762
        %v5077 = vunpack.c.h.b16 %v4762
        %v5078 = vunpack.c.l.b16 %v4763
        %v5079 = vunpack.c.h.b16 %v4763
        %v5080 = vunpack.c.l.b16 %v4764
        %v5081 = vunpack.c.h.b16 %v4764
        %v5082 = vunpack.c.l.b16 %v4765
        %v5083 = vunpack.c.h.b16 %v4765
        %v5084 = vunpack.c.l.b16 %v4766
        %v5085 = vunpack.c.h.b16 %v4766
        %v5086 = vunpack.c.l.b16 %v4767
        %v5087 = vunpack.c.h.b16 %v4767
        %v5088 = vunpack.c.l.b16 %v4768
        %v5089 = vunpack.c.h.b16 %v4768
        %v5090 = vunpack.c.l.b16 %v4769
        %v5091 = vunpack.c.h.b16 %v4769
        %v5092 = vunpack.c.l.b16 %v4770
        %v5093 = vunpack.c.h.b16 %v4770
        %v5094 = vunpack.c.l.b16 %v4771
        %v5095 = vunpack.c.h.b16 %v4771
        %v5096 = vunpack.c.l.b16 %v4772
        %v5097 = vunpack.c.h.b16 %v4772
        %v5098 = vunpack.c.l.b16 %v4773
        %v5099 = vunpack.c.h.b16 %v4773
        %v5100 = vunpack.c.l.b16 %v4774
        %v5101 = vunpack.c.h.b16 %v4774
        %v5102 = vunpack.c.l.b16 %v4775
        %v5103 = vunpack.c.h.b16 %v4775
        %v5104 = vunpack.c.l.b16 %v4776
        %v5105 = vunpack.c.h.b16 %v4776
        %v5106 = vunpack.c.l.b16 %v4777
        %v5107 = vunpack.c.h.b16 %v4777
        %v5108 = vunpack.c.l.b16 %v4778
        %v5109 = vunpack.c.h.b16 %v4778
        %v5110 = vunpack.c.l.b16 %v4779
        %v5111 = vunpack.c.h.b16 %v4779
        %v5112 = vunpack.c.l.b16 %v4780
        %v5113 = vunpack.c.h.b16 %v4780
        %v5114 = vunpack.c.l.b16 %v4781
        %v5115 = vunpack.c.h.b16 %v4781
        %v5116 = vunpack.c.l.b16 %v4782
        %v5117 = vunpack.c.h.b16 %v4782
        %v5118 = vunpack.c.l.b16 %v4783
        %v5119 = vunpack.c.h.b16 %v4783
        %v5120 = vunpack.c.l.b16 %v4784
        %v5121 = vunpack.c.h.b16 %v4784
        %v5122 = vunpack.c.l.b16 %v4785
        %v5123 = vunpack.c.h.b16 %v4785
        %v5124 = vunpack.c.l.b16 %v4786
        %v5125 = vunpack.c.h.b16 %v4786
        %v5126 = vunpack.c.l.b16 %v4787
        %v5127 = vunpack.c.h.b16 %v4787
        %v5128 = vunpack.c.l.b16 %v4788
        %v5129 = vunpack.c.h.b16 %v4788
        %v5130 = vunpack.c.l.b16 %v4789
        %v5131 = vunpack.c.h.b16 %v4789
        %v5132 = vunpack.c.l.b16 %v4790
        %v5133 = vunpack.c.h.b16 %v4790
        %v5134 = vunpack.c.l.b16 %v4791
        %v5135 = vunpack.c.h.b16 %v4791
        %v5136 = vunpack.c.l.b16 %v4792
        %v5137 = vunpack.c.h.b16 %v4792
        %v5138 = vunpack.c.l.b16 %v4793
        %v5139 = vunpack.c.h.b16 %v4793
        %v5140 = vunpack.c.l.b16 %v4794
        %v5141 = vunpack.c.h.b16 %v4794
        %v5142 = vunpack.c.l.b16 %v4795
        %v5143 = vunpack.c.h.b16 %v4795
        %v5144 = vunpack.c.l.b16 %v4796
        %v5145 = vunpack.c.h.b16 %v4796
        %v5146 = vunpack.c.l.b16 %v4797
        %v5147 = vunpack.c.h.b16 %v4797
        %v5148 = vunpack.c.l.b16 %v4798
        %v5149 = vunpack.c.h.b16 %v4798
        %v5150 = vunpack.c.l.b16 %v4799
        %v5151 = vunpack.c.h.b16 %v4799
        %v5152 = vunpack.c.l.b16 %v4800
        %v5153 = vunpack.c.h.b16 %v4800
        %v5154 = vunpack.c.l.b16 %v4801
        %v5155 = vunpack.c.h.b16 %v4801
        %v5156 = vunpack.c.l.b16 %v4802
        %v5157 = vunpack.c.h.b16 %v4802
        %v5158 = vunpack.c.l.b16 %v4803
        %v5159 = vunpack.c.h.b16 %v4803
        %v5160 = vunpack.c.l.b16 %v4804
        %v5161 = vunpack.c.h.b16 %v4804
        %v5162 = vunpack.c.l.b16 %v4805
        %v5163 = vunpack.c.h.b16 %v4805
        %v5164 = vunpack.c.l.b16 %v4806
        %v5165 = vunpack.c.h.b16 %v4806
        %v5166 = vunpack.c.l.b16 %v4807
        %v5167 = vunpack.c.h.b16 %v4807
        %v5168 = vunpack.c.l.b16 %v4808
        %v5169 = vunpack.c.h.b16 %v4808
        %v5170 = vunpack.c.l.b16 %v4809
        %v5171 = vunpack.c.h.b16 %v4809
        %v5172 = vunpack.c.l.b16 %v4810
        %v5173 = vunpack.c.h.b16 %v4810
        %v5174 = vunpack.c.l.b16 %v4811
        %v5175 = vunpack.c.h.b16 %v4811
        %v5176 = vunpack.c.l.b16 %v4812
        %v5177 = vunpack.c.h.b16 %v4812
        %v5178 = vunpack.c.l.b16 %v4813
        %v5179 = vunpack.c.h.b16 %v4813
        %v5180 = vunpack.c.l.b16 %v4814
        %v5181 = vunpack.c.h.b16 %v4814
        %v5182 = vunpack.c.l.b16 %v4815
        %v5183 = vunpack.c.h.b16 %v4815
        %v5184 = vunpack.c.l.b16 %v4816
        %v5185 = vunpack.c.h.b16 %v4816
        %v5186 = vunpack.c.l.b16 %v4817
        %v5187 = vunpack.c.h.b16 %v4817
        %v5188 = vunpack.c.l.b16 %v4818
        %v5189 = vunpack.c.h.b16 %v4818
        %v5190 = vunpack.c.l.b16 %v4819
        %v5191 = vunpack.c.h.b16 %v4819
        %v5192 = vunpack.c.l.b16 %v4820
        %v5193 = vunpack.c.h.b16 %v4820
        %v5194 = vunpack.c.l.b16 %v4821
        %v5195 = vunpack.c.h.b16 %v4821
        %v5196 = vunpack.c.l.b16 %v4822
        %v5197 = vunpack.c.h.b16 %v4822
        %v5198 = vunpack.c.l.b16 %v4823
        %v5199 = vunpack.c.h.b16 %v4823
        %v5200 = vunpack.c.l.b16 %v4824
        %v5201 = vunpack.c.h.b16 %v4824
        %v5202 = vunpack.c.l.b16 %v4825
        %v5203 = vunpack.c.h.b16 %v4825
        %v5204 = vunpack.c.l.b16 %v4826
        %v5205 = vunpack.c.h.b16 %v4826
        %v5206 = vunpack.c.l.b16 %v4827
        %v5207 = vunpack.c.h.b16 %v4827
        %v5208 = vunpack.c.l.b16 %v4828
        %v5209 = vunpack.c.h.b16 %v4828
        %v5210 = vunpack.c.l.b16 %v4829
        %v5211 = vunpack.c.h.b16 %v4829
        %v5212 = vunpack.c.l.b16 %v4830
        %v5213 = vunpack.c.h.b16 %v4830
        %v5214 = vunpack.c.l.b16 %v4831
        %v5215 = vunpack.c.h.b16 %v4831
        %v5216 = vunpack.c.l.b16 %v4832
        %v5217 = vunpack.c.h.b16 %v4832
        %v5218 = vunpack.c.l.b16 %v4833
        %v5219 = vunpack.c.h.b16 %v4833
        %v5220 = vunpack.c.l.b16 %v4834
        %v5221 = vunpack.c.h.b16 %v4834
        %v5222 = vunpack.c.l.b16 %v4835
        %v5223 = vunpack.c.h.b16 %v4835
        %v5224 = vunpack.c.l.b16 %v4836
        %v5225 = vunpack.c.h.b16 %v4836
        %v5226 = vunpack.c.l.b16 %v4837
        %v5227 = vunpack.c.h.b16 %v4837
        %v5228 = vunpack.c.l.b16 %v4838
        %v5229 = vunpack.c.h.b16 %v4838
        %v5230 = vunpack.c.l.b16 %v4839
        %v5231 = vunpack.c.h.b16 %v4839
        %v5232 = vunpack.c.l.b16 %v4840
        %v5233 = vunpack.c.h.b16 %v4840
        %v5234 = vunpack.c.l.b16 %v4841
        %v5235 = vunpack.c.h.b16 %v4841
        %v5236 = vpack.c.b16 %v4984, %v4980
        %v5237 = vpack.c.b16 %v4985, %v4981
        %v5238 = vpack.c.b16 %v4986, %v4982
        %v5239 = vpack.c.b16 %v4987, %v4983
        %v5240 = vpack.c.b16 %v4992, %v4988
        %v5241 = vpack.c.b16 %v4993, %v4989
        %v5242 = vpack.c.b16 %v4994, %v4990
        %v5243 = vpack.c.b16 %v4995, %v4991
        %v5244 = vpack.c.b16 %v5000, %v4996
        %v5245 = vpack.c.b16 %v5001, %v4997
        %v5246 = vpack.c.b16 %v5002, %v4998
        %v5247 = vpack.c.b16 %v5003, %v4999
        %v5248 = vpack.c.b16 %v5008, %v5004
        %v5249 = vpack.c.b16 %v5009, %v5005
        %v5250 = vpack.c.b16 %v5010, %v5006
        %v5251 = vpack.c.b16 %v5011, %v5007
        %v5252 = vpack.c.b16 %v5016, %v5012
        %v5253 = vpack.c.b16 %v5017, %v5013
        %v5254 = vpack.c.b16 %v5018, %v5014
        %v5255 = vpack.c.b16 %v5019, %v5015
        %v5256 = vpack.c.b16 %v5024, %v5020
        %v5257 = vpack.c.b16 %v5025, %v5021
        %v5258 = vpack.c.b16 %v5026, %v5022
        %v5259 = vpack.c.b16 %v5027, %v5023
        %v5260 = vpack.c.b16 %v5032, %v5028
        %v5261 = vpack.c.b16 %v5033, %v5029
        %v5262 = vpack.c.b16 %v5034, %v5030
        %v5263 = vpack.c.b16 %v5035, %v5031
        %v5264 = vpack.c.b16 %v5040, %v5036
        %v5265 = vpack.c.b16 %v5041, %v5037
        %v5266 = vpack.c.b16 %v5042, %v5038
        %v5267 = vpack.c.b16 %v5043, %v5039
        %v5268 = vpack.c.b16 %v5048, %v5044
        %v5269 = vpack.c.b16 %v5049, %v5045
        %v5270 = vpack.c.b16 %v5050, %v5046
        %v5271 = vpack.c.b16 %v5051, %v5047
        %v5272 = vpack.c.b16 %v5056, %v5052
        %v5273 = vpack.c.b16 %v5057, %v5053
        %v5274 = vpack.c.b16 %v5058, %v5054
        %v5275 = vpack.c.b16 %v5059, %v5055
        %v5276 = vpack.c.b16 %v5064, %v5060
        %v5277 = vpack.c.b16 %v5065, %v5061
        %v5278 = vpack.c.b16 %v5066, %v5062
        %v5279 = vpack.c.b16 %v5067, %v5063
        %v5280 = vpack.c.b16 %v5072, %v5068
        %v5281 = vpack.c.b16 %v5073, %v5069
        %v5282 = vpack.c.b16 %v5074, %v5070
        %v5283 = vpack.c.b16 %v5075, %v5071
        %v5284 = vpack.c.b16 %v5080, %v5076
        %v5285 = vpack.c.b16 %v5081, %v5077
        %v5286 = vpack.c.b16 %v5082, %v5078
        %v5287 = vpack.c.b16 %v5083, %v5079
        %v5288 = vpack.c.b16 %v5088, %v5084
        %v5289 = vpack.c.b16 %v5089, %v5085
        %v5290 = vpack.c.b16 %v5090, %v5086
        %v5291 = vpack.c.b16 %v5091, %v5087
        %v5292 = vpack.c.b16 %v5096, %v5092
        %v5293 = vpack.c.b16 %v5097, %v5093
        %v5294 = vpack.c.b16 %v5098, %v5094
        %v5295 = vpack.c.b16 %v5099, %v5095
        %v5296 = vpack.c.b16 %v5104, %v5100
        %v5297 = vpack.c.b16 %v5105, %v5101
        %v5298 = vpack.c.b16 %v5106, %v5102
        %v5299 = vpack.c.b16 %v5107, %v5103
        %v5300 = vpack.c.b16 %v5112, %v5108
        %v5301 = vpack.c.b16 %v5113, %v5109
        %v5302 = vpack.c.b16 %v5114, %v5110
        %v5303 = vpack.c.b16 %v5115, %v5111
        %v5304 = vpack.c.b16 %v5120, %v5116
        %v5305 = vpack.c.b16 %v5121, %v5117
        %v5306 = vpack.c.b16 %v5122, %v5118
        %v5307 = vpack.c.b16 %v5123, %v5119
        %v5308 = vpack.c.b16 %v5128, %v5124
        %v5309 = vpack.c.b16 %v5129, %v5125
        %v5310 = vpack.c.b16 %v5130, %v5126
        %v5311 = vpack.c.b16 %v5131, %v5127
        %v5312 = vpack.c.b16 %v5136, %v5132
        %v5313 = vpack.c.b16 %v5137, %v5133
        %v5314 = vpack.c.b16 %v5138, %v5134
        %v5315 = vpack.c.b16 %v5139, %v5135
        %v5316 = vpack.c.b16 %v5144, %v5140
        %v5317 = vpack.c.b16 %v5145, %v5141
        %v5318 = vpack.c.b16 %v5146, %v5142
        %v5319 = vpack.c.b16 %v5147, %v5143
        %v5320 = vpack.c.b16 %v5152, %v5148
        %v5321 = vpack.c.b16 %v5153, %v5149
        %v5322 = vpack.c.b16 %v5154, %v5150
        %v5323 = vpack.c.b16 %v5155, %v5151
        %v5324 = vpack.c.b16 %v5160, %v5156
        %v5325 = vpack.c.b16 %v5161, %v5157
        %v5326 = vpack.c.b16 %v5162, %v5158
        %v5327 = vpack.c.b16 %v5163, %v5159
        %v5328 = vpack.c.b16 %v5168, %v5164
        %v5329 = vpack.c.b16 %v5169, %v5165
        %v5330 = vpack.c.b16 %v5170, %v5166
        %v5331 = vpack.c.b16 %v5171, %v5167
        %v5332 = vpack.c.b16 %v5176, %v5172
        %v5333 = vpack.c.b16 %v5177, %v5173
        %v5334 = vpack.c.b16 %v5178, %v5174
        %v5335 = vpack.c.b16 %v5179, %v5175
        %v5336 = vpack.c.b16 %v5184, %v5180
        %v5337 = vpack.c.b16 %v5185, %v5181
        %v5338 = vpack.c.b16 %v5186, %v5182
        %v5339 = vpack.c.b16 %v5187, %v5183
        %v5340 = vpack.c.b16 %v5192, %v5188
        %v5341 = vpack.c.b16 %v5193, %v5189
        %v5342 = vpack.c.b16 %v5194, %v5190
        %v5343 = vpack.c.b16 %v5195, %v5191
        %v5344 = vpack.c.b16 %v5200, %v5196
        %v5345 = vpack.c.b16 %v5201, %v5197
        %v5346 = vpack.c.b16 %v5202, %v5198
        %v5347 = vpack.c.b16 %v5203, %v5199
        %v5348 = vpack.c.b16 %v5208, %v5204
        %v5349 = vpack.c.b16 %v5209, %v5205
        %v5350 = vpack.c.b16 %v5210, %v5206
        %v5351 = vpack.c.b16 %v5211, %v5207
        %v5352 = vpack.c.b16 %v5216, %v5212
        %v5353 = vpack.c.b16 %v5217, %v5213
        %v5354 = vpack.c.b16 %v5218, %v5214
        %v5355 = vpack.c.b16 %v5219, %v5215
        %v5356 = vpack.c.b16 %v5224, %v5220
        %v5357 = vpack.c.b16 %v5225, %v5221
        %v5358 = vpack.c.b16 %v5226, %v5222
        %v5359 = vpack.c.b16 %v5227, %v5223
        %v5360 = vpack.c.b16 %v5232, %v5228
        %v5361 = vpack.c.b16 %v5233, %v5229
        %v5362 = vpack.c.b16 %v5234, %v5230
        %v5363 = vpack.c.b16 %v5235, %v5231
        %5492 = vmatpush.bf16.msra.mxu0 %v5264
        %5493 = vmatpush.bf16.msra.mxu0 %v5260
        %5494 = vmatpush.bf16.msra.mxu0 %v5256
        %5495 = vmatpush.bf16.msra.mxu0 %v5252
        %5496 = vmatpush.bf16.msra.mxu0 %v5248
        %5497 = vmatpush.bf16.msra.mxu0 %v5244
        %5498 = vmatpush.bf16.msra.mxu0 %v5240
        %5499 = vmatpush.bf16.msra.mxu0 %v5236
        %5500 = vmatmul.bf16.gmra.mxu0 %v480
        %v5501 = vpop.f32.mrf.mxu0
        %v5502 = vadd.f32 %v4844, %v5501
        %v5503 = vpop.f32.mrf.mxu0
        %v5504 = vadd.f32 %v4844, %v5503
        %5505 = vmatmul.bf16.gmra.mxu0 %v484
        %v5506 = vpop.f32.mrf.mxu0
        %v5507 = vadd.f32 %v4844, %v5506
        %v5508 = vpop.f32.mrf.mxu0
        %v5509 = vadd.f32 %v4844, %v5508
        %5510 = vdwg.mxu0
        %5511 = vmatpush.bf16.msra.mxu0 %v5296
        %5512 = vmatpush.bf16.msra.mxu0 %v5292
        %5513 = vmatpush.bf16.msra.mxu0 %v5288
        %5514 = vmatpush.bf16.msra.mxu0 %v5284
        %5515 = vmatpush.bf16.msra.mxu0 %v5280
        %5516 = vmatpush.bf16.msra.mxu0 %v5276
        %5517 = vmatpush.bf16.msra.mxu0 %v5272
        %5518 = vmatpush.bf16.msra.mxu0 %v5268
        %5519 = vmatmul.bf16.gmra.mxu0 %v481
        %v5520 = vpop.f32.mrf.mxu0
        %v5521 = vadd.f32 %v5502, %v5520
        %v5522 = vpop.f32.mrf.mxu0
        %v5523 = vadd.f32 %v5504, %v5522
        %5524 = vmatmul.bf16.gmra.mxu0 %v485
        %v5525 = vpop.f32.mrf.mxu0
        %v5526 = vadd.f32 %v5507, %v5525
        %v5527 = vpop.f32.mrf.mxu0
        %v5528 = vadd.f32 %v5509, %v5527
        %5529 = vdwg.mxu0
        %5530 = vmatpush.bf16.msra.mxu0 %v5328
        %5531 = vmatpush.bf16.msra.mxu0 %v5324
        %5532 = vmatpush.bf16.msra.mxu0 %v5320
        %5533 = vmatpush.bf16.msra.mxu0 %v5316
        %5534 = vmatpush.bf16.msra.mxu0 %v5312
        %5535 = vmatpush.bf16.msra.mxu0 %v5308
        %5536 = vmatpush.bf16.msra.mxu0 %v5304
        %5537 = vmatpush.bf16.msra.mxu0 %v5300
        %5538 = vmatmul.bf16.gmra.mxu0 %v482
        %v5539 = vpop.f32.mrf.mxu0
        %v5540 = vadd.f32 %v5521, %v5539
        %v5541 = vpop.f32.mrf.mxu0
        %v5542 = vadd.f32 %v5523, %v5541
        %5543 = vmatmul.bf16.gmra.mxu0 %v486
        %v5544 = vpop.f32.mrf.mxu0
        %v5545 = vadd.f32 %v5526, %v5544
        %v5546 = vpop.f32.mrf.mxu0
        %v5547 = vadd.f32 %v5528, %v5546
        %5548 = vdwg.mxu0
        %5549 = vmatpush.bf16.msra.mxu0 %v5360
        %5550 = vmatpush.bf16.msra.mxu0 %v5356
        %5551 = vmatpush.bf16.msra.mxu0 %v5352
        %5552 = vmatpush.bf16.msra.mxu0 %v5348
        %5553 = vmatpush.bf16.msra.mxu0 %v5344
        %5554 = vmatpush.bf16.msra.mxu0 %v5340
        %5555 = vmatpush.bf16.msra.mxu0 %v5336
        %5556 = vmatpush.bf16.msra.mxu0 %v5332
        %5557 = vmatmul.bf16.gmra.mxu0 %v483
        %v5558 = vpop.f32.mrf.mxu0
        %v5559 = vadd.f32 %v5540, %v5558
        %v5560 = vpop.f32.mrf.mxu0
        %v5561 = vadd.f32 %v5542, %v5560
        %5562 = vmatmul.bf16.gmra.mxu0 %v487
        %v5563 = vpop.f32.mrf.mxu0
        %v5564 = vadd.f32 %v5545, %v5563
        %v5565 = vpop.f32.mrf.mxu0
        %v5566 = vadd.f32 %v5547, %v5565
        %5567 = vdwg.mxu0
        %5568 = vmatpush.bf16.msra.mxu0 %v5265
        %5569 = vmatpush.bf16.msra.mxu0 %v5261
        %5570 = vmatpush.bf16.msra.mxu0 %v5257
        %5571 = vmatpush.bf16.msra.mxu0 %v5253
        %5572 = vmatpush.bf16.msra.mxu0 %v5249
        %5573 = vmatpush.bf16.msra.mxu0 %v5245
        %5574 = vmatpush.bf16.msra.mxu0 %v5241
        %5575 = vmatpush.bf16.msra.mxu0 %v5237
        %5576 = vmatmul.bf16.gmra.mxu0 %v480
        %v5577 = vpop.f32.mrf.mxu0
        %v5578 = vadd.f32 %v4845, %v5577
        %v5579 = vpop.f32.mrf.mxu0
        %v5580 = vadd.f32 %v4845, %v5579
        %5581 = vmatmul.bf16.gmra.mxu0 %v484
        %v5582 = vpop.f32.mrf.mxu0
        %v5583 = vadd.f32 %v4845, %v5582
        %v5584 = vpop.f32.mrf.mxu0
        %v5585 = vadd.f32 %v4845, %v5584
        %5586 = vdwg.mxu0
        %5587 = vmatpush.bf16.msra.mxu0 %v5297
        %5588 = vmatpush.bf16.msra.mxu0 %v5293
        %5589 = vmatpush.bf16.msra.mxu0 %v5289
        %5590 = vmatpush.bf16.msra.mxu0 %v5285
        %5591 = vmatpush.bf16.msra.mxu0 %v5281
        %5592 = vmatpush.bf16.msra.mxu0 %v5277
        %5593 = vmatpush.bf16.msra.mxu0 %v5273
        %5594 = vmatpush.bf16.msra.mxu0 %v5269
        %5595 = vmatmul.bf16.gmra.mxu0 %v481
        %v5596 = vpop.f32.mrf.mxu0
        %v5597 = vadd.f32 %v5578, %v5596
        %v5598 = vpop.f32.mrf.mxu0
        %v5599 = vadd.f32 %v5580, %v5598
        %5600 = vmatmul.bf16.gmra.mxu0 %v485
        %v5601 = vpop.f32.mrf.mxu0
        %v5602 = vadd.f32 %v5583, %v5601
        %v5603 = vpop.f32.mrf.mxu0
        %v5604 = vadd.f32 %v5585, %v5603
        %5605 = vdwg.mxu0
        %5606 = vmatpush.bf16.msra.mxu0 %v5329
        %5607 = vmatpush.bf16.msra.mxu0 %v5325
        %5608 = vmatpush.bf16.msra.mxu0 %v5321
        %5609 = vmatpush.bf16.msra.mxu0 %v5317
        %5610 = vmatpush.bf16.msra.mxu0 %v5313
        %5611 = vmatpush.bf16.msra.mxu0 %v5309
        %5612 = vmatpush.bf16.msra.mxu0 %v5305
        %5613 = vmatpush.bf16.msra.mxu0 %v5301
        %5614 = vmatmul.bf16.gmra.mxu0 %v482
        %v5615 = vpop.f32.mrf.mxu0
        %v5616 = vadd.f32 %v5597, %v5615
        %v5617 = vpop.f32.mrf.mxu0
        %v5618 = vadd.f32 %v5599, %v5617
        %5619 = vmatmul.bf16.gmra.mxu0 %v486
        %v5620 = vpop.f32.mrf.mxu0
        %v5621 = vadd.f32 %v5602, %v5620
        %v5622 = vpop.f32.mrf.mxu0
        %v5623 = vadd.f32 %v5604, %v5622
        %5624 = vdwg.mxu0
        %5625 = vmatpush.bf16.msra.mxu0 %v5361
        %5626 = vmatpush.bf16.msra.mxu0 %v5357
        %5627 = vmatpush.bf16.msra.mxu0 %v5353
        %5628 = vmatpush.bf16.msra.mxu0 %v5349
        %5629 = vmatpush.bf16.msra.mxu0 %v5345
        %5630 = vmatpush.bf16.msra.mxu0 %v5341
        %5631 = vmatpush.bf16.msra.mxu0 %v5337
        %5632 = vmatpush.bf16.msra.mxu0 %v5333
        %5633 = vmatmul.bf16.gmra.mxu0 %v483
        %v5634 = vpop.f32.mrf.mxu0
        %v5635 = vadd.f32 %v5616, %v5634
        %v5636 = vpop.f32.mrf.mxu0
        %v5637 = vadd.f32 %v5618, %v5636
        %5638 = vmatmul.bf16.gmra.mxu0 %v487
        %v5639 = vpop.f32.mrf.mxu0
        %v5640 = vadd.f32 %v5621, %v5639
        %v5641 = vpop.f32.mrf.mxu0
        %v5642 = vadd.f32 %v5623, %v5641
        %5643 = vdwg.mxu0
        %5644 = vmatpush.bf16.msra.mxu0 %v5266
        %5645 = vmatpush.bf16.msra.mxu0 %v5262
        %5646 = vmatpush.bf16.msra.mxu0 %v5258
        %5647 = vmatpush.bf16.msra.mxu0 %v5254
        %5648 = vmatpush.bf16.msra.mxu0 %v5250
        %5649 = vmatpush.bf16.msra.mxu0 %v5246
        %5650 = vmatpush.bf16.msra.mxu0 %v5242
        %5651 = vmatpush.bf16.msra.mxu0 %v5238
        %5652 = vmatmul.bf16.gmra.mxu0 %v480
        %v5653 = vpop.f32.mrf.mxu0
        %v5654 = vadd.f32 %v4846, %v5653
        %v5655 = vpop.f32.mrf.mxu0
        %v5656 = vadd.f32 %v4846, %v5655
        %5657 = vmatmul.bf16.gmra.mxu0 %v484
        %v5658 = vpop.f32.mrf.mxu0
        %v5659 = vadd.f32 %v4846, %v5658
        %v5660 = vpop.f32.mrf.mxu0
        %v5661 = vadd.f32 %v4846, %v5660
        %5662 = vdwg.mxu0
        %5663 = vmatpush.bf16.msra.mxu0 %v5298
        %5664 = vmatpush.bf16.msra.mxu0 %v5294
        %5665 = vmatpush.bf16.msra.mxu0 %v5290
        %5666 = vmatpush.bf16.msra.mxu0 %v5286
        %5667 = vmatpush.bf16.msra.mxu0 %v5282
        %5668 = vmatpush.bf16.msra.mxu0 %v5278
        %5669 = vmatpush.bf16.msra.mxu0 %v5274
        %5670 = vmatpush.bf16.msra.mxu0 %v5270
        %5671 = vmatmul.bf16.gmra.mxu0 %v481
        %v5672 = vpop.f32.mrf.mxu0
        %v5673 = vadd.f32 %v5654, %v5672
        %v5674 = vpop.f32.mrf.mxu0
        %v5675 = vadd.f32 %v5656, %v5674
        %5676 = vmatmul.bf16.gmra.mxu0 %v485
        %v5677 = vpop.f32.mrf.mxu0
        %v5678 = vadd.f32 %v5659, %v5677
        %v5679 = vpop.f32.mrf.mxu0
        %v5680 = vadd.f32 %v5661, %v5679
        %5681 = vdwg.mxu0
        %5682 = vmatpush.bf16.msra.mxu0 %v5330
        %5683 = vmatpush.bf16.msra.mxu0 %v5326
        %5684 = vmatpush.bf16.msra.mxu0 %v5322
        %5685 = vmatpush.bf16.msra.mxu0 %v5318
        %5686 = vmatpush.bf16.msra.mxu0 %v5314
        %5687 = vmatpush.bf16.msra.mxu0 %v5310
        %5688 = vmatpush.bf16.msra.mxu0 %v5306
        %5689 = vmatpush.bf16.msra.mxu0 %v5302
        %5690 = vmatmul.bf16.gmra.mxu0 %v482
        %v5691 = vpop.f32.mrf.mxu0
        %v5692 = vadd.f32 %v5673, %v5691
        %v5693 = vpop.f32.mrf.mxu0
        %v5694 = vadd.f32 %v5675, %v5693
        %5695 = vmatmul.bf16.gmra.mxu0 %v486
        %v5696 = vpop.f32.mrf.mxu0
        %v5697 = vadd.f32 %v5678, %v5696
        %v5698 = vpop.f32.mrf.mxu0
        %v5699 = vadd.f32 %v5680, %v5698
        %5700 = vdwg.mxu0
        %5701 = vmatpush.bf16.msra.mxu0 %v5362
        %5702 = vmatpush.bf16.msra.mxu0 %v5358
        %5703 = vmatpush.bf16.msra.mxu0 %v5354
        %5704 = vmatpush.bf16.msra.mxu0 %v5350
        %5705 = vmatpush.bf16.msra.mxu0 %v5346
        %5706 = vmatpush.bf16.msra.mxu0 %v5342
        %5707 = vmatpush.bf16.msra.mxu0 %v5338
        %5708 = vmatpush.bf16.msra.mxu0 %v5334
        %5709 = vmatmul.bf16.gmra.mxu0 %v483
        %v5710 = vpop.f32.mrf.mxu0
        %v5711 = vadd.f32 %v5692, %v5710
        %v5712 = vpop.f32.mrf.mxu0
        %v5713 = vadd.f32 %v5694, %v5712
        %5714 = vmatmul.bf16.gmra.mxu0 %v487
        %v5715 = vpop.f32.mrf.mxu0
        %v5716 = vadd.f32 %v5697, %v5715
        %v5717 = vpop.f32.mrf.mxu0
        %v5718 = vadd.f32 %v5699, %v5717
        %5719 = vdwg.mxu0
        %5720 = vmatpush.bf16.msra.mxu0 %v5267
        %5721 = vmatpush.bf16.msra.mxu0 %v5263
        %5722 = vmatpush.bf16.msra.mxu0 %v5259
        %5723 = vmatpush.bf16.msra.mxu0 %v5255
        %5724 = vmatpush.bf16.msra.mxu0 %v5251
        %5725 = vmatpush.bf16.msra.mxu0 %v5247
        %5726 = vmatpush.bf16.msra.mxu0 %v5243
        %5727 = vmatpush.bf16.msra.mxu0 %v5239
        %5728 = vmatmul.bf16.gmra.mxu0 %v480
        %v5729 = vpop.f32.mrf.mxu0
        %v5730 = vadd.f32 %v4847, %v5729
        %v5731 = vpop.f32.mrf.mxu0
        %v5732 = vadd.f32 %v4847, %v5731
        %5733 = vmatmul.bf16.gmra.mxu0 %v484
        %v5734 = vpop.f32.mrf.mxu0
        %v5735 = vadd.f32 %v4847, %v5734
        %v5736 = vpop.f32.mrf.mxu0
        %v5737 = vadd.f32 %v4847, %v5736
        %5738 = vdwg.mxu0
        %5739 = vmatpush.bf16.msra.mxu0 %v5299
        %5740 = vmatpush.bf16.msra.mxu0 %v5295
        %5741 = vmatpush.bf16.msra.mxu0 %v5291
        %5742 = vmatpush.bf16.msra.mxu0 %v5287
        %5743 = vmatpush.bf16.msra.mxu0 %v5283
        %5744 = vmatpush.bf16.msra.mxu0 %v5279
        %5745 = vmatpush.bf16.msra.mxu0 %v5275
        %5746 = vmatpush.bf16.msra.mxu0 %v5271
        %5747 = vmatmul.bf16.gmra.mxu0 %v481
        %v5748 = vpop.f32.mrf.mxu0
        %v5749 = vadd.f32 %v5730, %v5748
        %v5750 = vpop.f32.mrf.mxu0
        %v5751 = vadd.f32 %v5732, %v5750
        %5752 = vmatmul.bf16.gmra.mxu0 %v485
        %v5753 = vpop.f32.mrf.mxu0
        %v5754 = vadd.f32 %v5735, %v5753
        %v5755 = vpop.f32.mrf.mxu0
        %v5756 = vadd.f32 %v5737, %v5755
        %5757 = vdwg.mxu0
        %5758 = vmatpush.bf16.msra.mxu0 %v5331
        %5759 = vmatpush.bf16.msra.mxu0 %v5327
        %5760 = vmatpush.bf16.msra.mxu0 %v5323
        %5761 = vmatpush.bf16.msra.mxu0 %v5319
        %5762 = vmatpush.bf16.msra.mxu0 %v5315
        %5763 = vmatpush.bf16.msra.mxu0 %v5311
        %5764 = vmatpush.bf16.msra.mxu0 %v5307
        %5765 = vmatpush.bf16.msra.mxu0 %v5303
        %5766 = vmatmul.bf16.gmra.mxu0 %v482
        %v5767 = vpop.f32.mrf.mxu0
        %v5768 = vadd.f32 %v5749, %v5767
        %v5769 = vpop.f32.mrf.mxu0
        %v5770 = vadd.f32 %v5751, %v5769
        %5771 = vmatmul.bf16.gmra.mxu0 %v486
        %v5772 = vpop.f32.mrf.mxu0
        %v5773 = vadd.f32 %v5754, %v5772
        %v5774 = vpop.f32.mrf.mxu0
        %v5775 = vadd.f32 %v5756, %v5774
        %5776 = vdwg.mxu0
        %5777 = vmatpush.bf16.msra.mxu0 %v5363
        %5778 = vmatpush.bf16.msra.mxu0 %v5359
        %5779 = vmatpush.bf16.msra.mxu0 %v5355
        %5780 = vmatpush.bf16.msra.mxu0 %v5351
        %5781 = vmatpush.bf16.msra.mxu0 %v5347
        %5782 = vmatpush.bf16.msra.mxu0 %v5343
        %5783 = vmatpush.bf16.msra.mxu0 %v5339
        %5784 = vmatpush.bf16.msra.mxu0 %v5335
        %5785 = vmatmul.bf16.gmra.mxu0 %v483
        %v5786 = vpop.f32.mrf.mxu0
        %v5787 = vadd.f32 %v5768, %v5786
        %v5788 = vpop.f32.mrf.mxu0
        %v5789 = vadd.f32 %v5770, %v5788
        %5790 = vmatmul.bf16.gmra.mxu0 %v487
        %v5791 = vpop.f32.mrf.mxu0
        %v5792 = vadd.f32 %v5773, %v5791
        %v5793 = vpop.f32.mrf.mxu0
        %v5794 = vadd.f32 %v5775, %v5793
        %5795 = vdwg.mxu0
        %v5796 = vmax.f32 %v5559, 0.0
        %v5797 = vmax.f32 %v5635, 0.0
        %v5798 = vmax.f32 %v5711, 0.0
        %v5799 = vmax.f32 %v5787, 0.0
        %v5800 = vmax.f32 %v5561, 0.0
        %v5801 = vmax.f32 %v5637, 0.0
        %v5802 = vmax.f32 %v5713, 0.0
        %v5803 = vmax.f32 %v5789, 0.0
        %v5804 = vmax.f32 %v5564, 0.0
        %v5805 = vmax.f32 %v5640, 0.0
        %v5806 = vmax.f32 %v5716, 0.0
        %v5807 = vmax.f32 %v5792, 0.0
        %v5808 = vmax.f32 %v5566, 0.0
        %v5809 = vmax.f32 %v5642, 0.0
        %v5810 = vmax.f32 %v5718, 0.0
        %v5811 = vmax.f32 %v5794, 0.0
        %v5812 = vpack.c.bf16 %v5800, %v5796
        %v5813 = vpack.c.bf16 %v5801, %v5797
        %v5814 = vpack.c.bf16 %v5802, %v5798
        %v5815 = vpack.c.bf16 %v5803, %v5799
        %v5816 = vpack.c.bf16 %v5808, %v5804
        %v5817 = vpack.c.bf16 %v5809, %v5805
        %v5818 = vpack.c.bf16 %v5810, %v5806
        %v5819 = vpack.c.bf16 %v5811, %v5807
        %v5820 = vld [vmem:[#allocation8 + $0x800] sm:$0xff]
        %v5821 = vld [vmem:[#allocation8 + $0x808] sm:$0xff]
        %v5822 = vld [vmem:[#allocation8 + $0x810] sm:$0xff]
        %v5823 = vld [vmem:[#allocation8 + $0x818] sm:$0xff]
        %v5824 = vld [vmem:[#allocation8 + $0x820] sm:$0xff]
        %v5825 = vld [vmem:[#allocation8 + $0x828] sm:$0xff]
        %v5826 = vld [vmem:[#allocation8 + $0x830] sm:$0xff]
        %v5827 = vld [vmem:[#allocation8 + $0x838] sm:$0xff]
        %v5828 = vld [vmem:[#allocation8 + $0x840] sm:$0xff]
        %v5829 = vld [vmem:[#allocation8 + $0x848] sm:$0xff]
        %v5830 = vld [vmem:[#allocation8 + $0x850] sm:$0xff]
        %v5831 = vld [vmem:[#allocation8 + $0x858] sm:$0xff]
        %v5832 = vld [vmem:[#allocation8 + $0x860] sm:$0xff]
        %v5833 = vld [vmem:[#allocation8 + $0x868] sm:$0xff]
        %v5834 = vld [vmem:[#allocation8 + $0x870] sm:$0xff]
        %v5835 = vld [vmem:[#allocation8 + $0x878] sm:$0xff]
        %v5836 = vld [vmem:[#allocation8 + $0x880] sm:$0xff]
        %v5837 = vld [vmem:[#allocation8 + $0x888] sm:$0xff]
        %v5838 = vld [vmem:[#allocation8 + $0x890] sm:$0xff]
        %v5839 = vld [vmem:[#allocation8 + $0x898] sm:$0xff]
        %v5840 = vld [vmem:[#allocation8 + $0x8a0] sm:$0xff]
        %v5841 = vld [vmem:[#allocation8 + $0x8a8] sm:$0xff]
        %v5842 = vld [vmem:[#allocation8 + $0x8b0] sm:$0xff]
        %v5843 = vld [vmem:[#allocation8 + $0x8b8] sm:$0xff]
        %v5844 = vld [vmem:[#allocation8 + $0x8c0] sm:$0xff]
        %v5845 = vld [vmem:[#allocation8 + $0x8c8] sm:$0xff]
        %v5846 = vld [vmem:[#allocation8 + $0x8d0] sm:$0xff]
        %v5847 = vld [vmem:[#allocation8 + $0x8d8] sm:$0xff]
        %v5848 = vld [vmem:[#allocation8 + $0x8e0] sm:$0xff]
        %v5849 = vld [vmem:[#allocation8 + $0x8e8] sm:$0xff]
        %v5850 = vld [vmem:[#allocation8 + $0x8f0] sm:$0xff]
        %v5851 = vld [vmem:[#allocation8 + $0x8f8] sm:$0xff]
        %v5852 = vld [vmem:[#allocation8 + $0x900] sm:$0xff]
        %v5853 = vld [vmem:[#allocation8 + $0x908] sm:$0xff]
        %v5854 = vld [vmem:[#allocation8 + $0x910] sm:$0xff]
        %v5855 = vld [vmem:[#allocation8 + $0x918] sm:$0xff]
        %v5856 = vld [vmem:[#allocation8 + $0x920] sm:$0xff]
        %v5857 = vld [vmem:[#allocation8 + $0x928] sm:$0xff]
        %v5858 = vld [vmem:[#allocation8 + $0x930] sm:$0xff]
        %v5859 = vld [vmem:[#allocation8 + $0x938] sm:$0xff]
        %v5860 = vld [vmem:[#allocation8 + $0x940] sm:$0xff]
        %v5861 = vld [vmem:[#allocation8 + $0x948] sm:$0xff]
        %v5862 = vld [vmem:[#allocation8 + $0x950] sm:$0xff]
        %v5863 = vld [vmem:[#allocation8 + $0x958] sm:$0xff]
        %v5864 = vld [vmem:[#allocation8 + $0x960] sm:$0xff]
        %v5865 = vld [vmem:[#allocation8 + $0x968] sm:$0xff]
        %v5866 = vld [vmem:[#allocation8 + $0x970] sm:$0xff]
        %v5867 = vld [vmem:[#allocation8 + $0x978] sm:$0xff]
        %v5868 = vld [vmem:[#allocation8 + $0x980] sm:$0xff]
        %v5869 = vld [vmem:[#allocation8 + $0x988] sm:$0xff]
        %v5870 = vld [vmem:[#allocation8 + $0x990] sm:$0xff]
        %v5871 = vld [vmem:[#allocation8 + $0x998] sm:$0xff]
        %v5872 = vld [vmem:[#allocation8 + $0x9a0] sm:$0xff]
        %v5873 = vld [vmem:[#allocation8 + $0x9a8] sm:$0xff]
        %v5874 = vld [vmem:[#allocation8 + $0x9b0] sm:$0xff]
        %v5875 = vld [vmem:[#allocation8 + $0x9b8] sm:$0xff]
        %v5876 = vld [vmem:[#allocation8 + $0x9c0] sm:$0xff]
        %v5877 = vld [vmem:[#allocation8 + $0x9c8] sm:$0xff]
        %v5878 = vld [vmem:[#allocation8 + $0x9d0] sm:$0xff]
        %v5879 = vld [vmem:[#allocation8 + $0x9d8] sm:$0xff]
        %v5880 = vld [vmem:[#allocation8 + $0x9e0] sm:$0xff]
        %v5881 = vld [vmem:[#allocation8 + $0x9e8] sm:$0xff]
        %v5882 = vld [vmem:[#allocation8 + $0x9f0] sm:$0xff]
        %v5883 = vld [vmem:[#allocation8 + $0x9f8] sm:$0xff]
        %v5884 = vld [vmem:[#allocation8 + $0xa00] sm:$0xff]
        %v5885 = vld [vmem:[#allocation8 + $0xa08] sm:$0xff]
        %v5886 = vld [vmem:[#allocation8 + $0xa10] sm:$0xff]
        %v5887 = vld [vmem:[#allocation8 + $0xa18] sm:$0xff]
        %v5888 = vld [vmem:[#allocation8 + $0xa20] sm:$0xff]
        %v5889 = vld [vmem:[#allocation8 + $0xa28] sm:$0xff]
        %v5890 = vld [vmem:[#allocation8 + $0xa30] sm:$0xff]
        %v5891 = vld [vmem:[#allocation8 + $0xa38] sm:$0xff]
        %v5892 = vld [vmem:[#allocation8 + $0xa40] sm:$0xff]
        %v5893 = vld [vmem:[#allocation8 + $0xa48] sm:$0xff]
        %v5894 = vld [vmem:[#allocation8 + $0xa50] sm:$0xff]
        %v5895 = vld [vmem:[#allocation8 + $0xa58] sm:$0xff]
        %v5896 = vld [vmem:[#allocation8 + $0xa60] sm:$0xff]
        %v5897 = vld [vmem:[#allocation8 + $0xa68] sm:$0xff]
        %v5898 = vld [vmem:[#allocation8 + $0xa70] sm:$0xff]
        %v5899 = vld [vmem:[#allocation8 + $0xa78] sm:$0xff]
        %v5900 = vld [vmem:[#allocation8 + $0xa80] sm:$0xff]
        %v5901 = vld [vmem:[#allocation8 + $0xa88] sm:$0xff]
        %v5902 = vld [vmem:[#allocation8 + $0xa90] sm:$0xff]
        %v5903 = vld [vmem:[#allocation8 + $0xa98] sm:$0xff]
        %v5904 = vld [vmem:[#allocation8 + $0xaa0] sm:$0xff]
        %v5905 = vld [vmem:[#allocation8 + $0xaa8] sm:$0xff]
        %v5906 = vld [vmem:[#allocation8 + $0xab0] sm:$0xff]
        %v5907 = vld [vmem:[#allocation8 + $0xab8] sm:$0xff]
        %v5908 = vld [vmem:[#allocation8 + $0xac0] sm:$0xff]
        %v5909 = vld [vmem:[#allocation8 + $0xac8] sm:$0xff]
        %v5910 = vld [vmem:[#allocation8 + $0xad0] sm:$0xff]
        %v5911 = vld [vmem:[#allocation8 + $0xad8] sm:$0xff]
        %v5912 = vld [vmem:[#allocation8 + $0xae0] sm:$0xff]
        %v5913 = vld [vmem:[#allocation8 + $0xae8] sm:$0xff]
        %v5914 = vld [vmem:[#allocation8 + $0xaf0] sm:$0xff]
        %v5915 = vld [vmem:[#allocation8 + $0xaf8] sm:$0xff]
        %v5916 = vld [vmem:[#allocation8 + $0xb00] sm:$0xff]
        %v5917 = vld [vmem:[#allocation8 + $0xb08] sm:$0xff]
        %v5918 = vld [vmem:[#allocation8 + $0xb10] sm:$0xff]
        %v5919 = vld [vmem:[#allocation8 + $0xb18] sm:$0xff]
        %v5920 = vld [vmem:[#allocation8 + $0xb20] sm:$0xff]
        %v5921 = vld [vmem:[#allocation8 + $0xb28] sm:$0xff]
        %v5922 = vld [vmem:[#allocation8 + $0xb30] sm:$0xff]
        %v5923 = vld [vmem:[#allocation8 + $0xb38] sm:$0xff]
        %v5924 = vld [vmem:[#allocation8 + $0xb40] sm:$0xff]
        %v5925 = vld [vmem:[#allocation8 + $0xb48] sm:$0xff]
        %v5926 = vld [vmem:[#allocation8 + $0xb50] sm:$0xff]
        %v5927 = vld [vmem:[#allocation8 + $0xb58] sm:$0xff]
        %v5928 = vld [vmem:[#allocation8 + $0xb60] sm:$0xff]
        %v5929 = vld [vmem:[#allocation8 + $0xb68] sm:$0xff]
        %v5930 = vld [vmem:[#allocation8 + $0xb70] sm:$0xff]
        %v5931 = vld [vmem:[#allocation8 + $0xb78] sm:$0xff]
        %v5932 = vld [vmem:[#allocation8 + $0xb80] sm:$0xff]
        %v5933 = vld [vmem:[#allocation8 + $0xb88] sm:$0xff]
        %v5934 = vld [vmem:[#allocation8 + $0xb90] sm:$0xff]
        %v5935 = vld [vmem:[#allocation8 + $0xb98] sm:$0xff]
        %v5936 = vld [vmem:[#allocation8 + $0xba0] sm:$0xff]
        %v5937 = vld [vmem:[#allocation8 + $0xba8] sm:$0xff]
        %v5938 = vld [vmem:[#allocation8 + $0xbb0] sm:$0xff]
        %v5939 = vld [vmem:[#allocation8 + $0xbb8] sm:$0xff]
        %v5940 = vld [vmem:[#allocation8 + $0xbc0] sm:$0xff]
        %v5941 = vld [vmem:[#allocation8 + $0xbc8] sm:$0xff]
        %v5942 = vld [vmem:[#allocation8 + $0xbd0] sm:$0xff]
        %v5943 = vld [vmem:[#allocation8 + $0xbd8] sm:$0xff]
        %v5944 = vld [vmem:[#allocation8 + $0xbe0] sm:$0xff]
        %v5945 = vld [vmem:[#allocation8 + $0xbe8] sm:$0xff]
        %v5946 = vld [vmem:[#allocation8 + $0xbf0] sm:$0xff]
        %v5947 = vld [vmem:[#allocation8 + $0xbf8] sm:$0xff]
        %v6076 = vunpack.c.l.b16 %v5820
        %v6077 = vunpack.c.h.b16 %v5820
        %v6078 = vunpack.c.l.b16 %v5821
        %v6079 = vunpack.c.h.b16 %v5821
        %v6080 = vunpack.c.l.b16 %v5822
        %v6081 = vunpack.c.h.b16 %v5822
        %v6082 = vunpack.c.l.b16 %v5823
        %v6083 = vunpack.c.h.b16 %v5823
        %v6084 = vunpack.c.l.b16 %v5824
        %v6085 = vunpack.c.h.b16 %v5824
        %v6086 = vunpack.c.l.b16 %v5825
        %v6087 = vunpack.c.h.b16 %v5825
        %v6088 = vunpack.c.l.b16 %v5826
        %v6089 = vunpack.c.h.b16 %v5826
        %v6090 = vunpack.c.l.b16 %v5827
        %v6091 = vunpack.c.h.b16 %v5827
        %v6092 = vunpack.c.l.b16 %v5828
        %v6093 = vunpack.c.h.b16 %v5828
        %v6094 = vunpack.c.l.b16 %v5829
        %v6095 = vunpack.c.h.b16 %v5829
        %v6096 = vunpack.c.l.b16 %v5830
        %v6097 = vunpack.c.h.b16 %v5830
        %v6098 = vunpack.c.l.b16 %v5831
        %v6099 = vunpack.c.h.b16 %v5831
        %v6100 = vunpack.c.l.b16 %v5832
        %v6101 = vunpack.c.h.b16 %v5832
        %v6102 = vunpack.c.l.b16 %v5833
        %v6103 = vunpack.c.h.b16 %v5833
        %v6104 = vunpack.c.l.b16 %v5834
        %v6105 = vunpack.c.h.b16 %v5834
        %v6106 = vunpack.c.l.b16 %v5835
        %v6107 = vunpack.c.h.b16 %v5835
        %v6108 = vunpack.c.l.b16 %v5836
        %v6109 = vunpack.c.h.b16 %v5836
        %v6110 = vunpack.c.l.b16 %v5837
        %v6111 = vunpack.c.h.b16 %v5837
        %v6112 = vunpack.c.l.b16 %v5838
        %v6113 = vunpack.c.h.b16 %v5838
        %v6114 = vunpack.c.l.b16 %v5839
        %v6115 = vunpack.c.h.b16 %v5839
        %v6116 = vunpack.c.l.b16 %v5840
        %v6117 = vunpack.c.h.b16 %v5840
        %v6118 = vunpack.c.l.b16 %v5841
        %v6119 = vunpack.c.h.b16 %v5841
        %v6120 = vunpack.c.l.b16 %v5842
        %v6121 = vunpack.c.h.b16 %v5842
        %v6122 = vunpack.c.l.b16 %v5843
        %v6123 = vunpack.c.h.b16 %v5843
        %v6124 = vunpack.c.l.b16 %v5844
        %v6125 = vunpack.c.h.b16 %v5844
        %v6126 = vunpack.c.l.b16 %v5845
        %v6127 = vunpack.c.h.b16 %v5845
        %v6128 = vunpack.c.l.b16 %v5846
        %v6129 = vunpack.c.h.b16 %v5846
        %v6130 = vunpack.c.l.b16 %v5847
        %v6131 = vunpack.c.h.b16 %v5847
        %v6132 = vunpack.c.l.b16 %v5848
        %v6133 = vunpack.c.h.b16 %v5848
        %v6134 = vunpack.c.l.b16 %v5849
        %v6135 = vunpack.c.h.b16 %v5849
        %v6136 = vunpack.c.l.b16 %v5850
        %v6137 = vunpack.c.h.b16 %v5850
        %v6138 = vunpack.c.l.b16 %v5851
        %v6139 = vunpack.c.h.b16 %v5851
        %v6140 = vunpack.c.l.b16 %v5852
        %v6141 = vunpack.c.h.b16 %v5852
        %v6142 = vunpack.c.l.b16 %v5853
        %v6143 = vunpack.c.h.b16 %v5853
        %v6144 = vunpack.c.l.b16 %v5854
        %v6145 = vunpack.c.h.b16 %v5854
        %v6146 = vunpack.c.l.b16 %v5855
        %v6147 = vunpack.c.h.b16 %v5855
        %v6148 = vunpack.c.l.b16 %v5856
        %v6149 = vunpack.c.h.b16 %v5856
        %v6150 = vunpack.c.l.b16 %v5857
        %v6151 = vunpack.c.h.b16 %v5857
        %v6152 = vunpack.c.l.b16 %v5858
        %v6153 = vunpack.c.h.b16 %v5858
        %v6154 = vunpack.c.l.b16 %v5859
        %v6155 = vunpack.c.h.b16 %v5859
        %v6156 = vunpack.c.l.b16 %v5860
        %v6157 = vunpack.c.h.b16 %v5860
        %v6158 = vunpack.c.l.b16 %v5861
        %v6159 = vunpack.c.h.b16 %v5861
        %v6160 = vunpack.c.l.b16 %v5862
        %v6161 = vunpack.c.h.b16 %v5862
        %v6162 = vunpack.c.l.b16 %v5863
        %v6163 = vunpack.c.h.b16 %v5863
        %v6164 = vunpack.c.l.b16 %v5864
        %v6165 = vunpack.c.h.b16 %v5864
        %v6166 = vunpack.c.l.b16 %v5865
        %v6167 = vunpack.c.h.b16 %v5865
        %v6168 = vunpack.c.l.b16 %v5866
        %v6169 = vunpack.c.h.b16 %v5866
        %v6170 = vunpack.c.l.b16 %v5867
        %v6171 = vunpack.c.h.b16 %v5867
        %v6172 = vunpack.c.l.b16 %v5868
        %v6173 = vunpack.c.h.b16 %v5868
        %v6174 = vunpack.c.l.b16 %v5869
        %v6175 = vunpack.c.h.b16 %v5869
        %v6176 = vunpack.c.l.b16 %v5870
        %v6177 = vunpack.c.h.b16 %v5870
        %v6178 = vunpack.c.l.b16 %v5871
        %v6179 = vunpack.c.h.b16 %v5871
        %v6180 = vunpack.c.l.b16 %v5872
        %v6181 = vunpack.c.h.b16 %v5872
        %v6182 = vunpack.c.l.b16 %v5873
        %v6183 = vunpack.c.h.b16 %v5873
        %v6184 = vunpack.c.l.b16 %v5874
        %v6185 = vunpack.c.h.b16 %v5874
        %v6186 = vunpack.c.l.b16 %v5875
        %v6187 = vunpack.c.h.b16 %v5875
        %v6188 = vunpack.c.l.b16 %v5876
        %v6189 = vunpack.c.h.b16 %v5876
        %v6190 = vunpack.c.l.b16 %v5877
        %v6191 = vunpack.c.h.b16 %v5877
        %v6192 = vunpack.c.l.b16 %v5878
        %v6193 = vunpack.c.h.b16 %v5878
        %v6194 = vunpack.c.l.b16 %v5879
        %v6195 = vunpack.c.h.b16 %v5879
        %v6196 = vunpack.c.l.b16 %v5880
        %v6197 = vunpack.c.h.b16 %v5880
        %v6198 = vunpack.c.l.b16 %v5881
        %v6199 = vunpack.c.h.b16 %v5881
        %v6200 = vunpack.c.l.b16 %v5882
        %v6201 = vunpack.c.h.b16 %v5882
        %v6202 = vunpack.c.l.b16 %v5883
        %v6203 = vunpack.c.h.b16 %v5883
        %v6204 = vunpack.c.l.b16 %v5884
        %v6205 = vunpack.c.h.b16 %v5884
        %v6206 = vunpack.c.l.b16 %v5885
        %v6207 = vunpack.c.h.b16 %v5885
        %v6208 = vunpack.c.l.b16 %v5886
        %v6209 = vunpack.c.h.b16 %v5886
        %v6210 = vunpack.c.l.b16 %v5887
        %v6211 = vunpack.c.h.b16 %v5887
        %v6212 = vunpack.c.l.b16 %v5888
        %v6213 = vunpack.c.h.b16 %v5888
        %v6214 = vunpack.c.l.b16 %v5889
        %v6215 = vunpack.c.h.b16 %v5889
        %v6216 = vunpack.c.l.b16 %v5890
        %v6217 = vunpack.c.h.b16 %v5890
        %v6218 = vunpack.c.l.b16 %v5891
        %v6219 = vunpack.c.h.b16 %v5891
        %v6220 = vunpack.c.l.b16 %v5892
        %v6221 = vunpack.c.h.b16 %v5892
        %v6222 = vunpack.c.l.b16 %v5893
        %v6223 = vunpack.c.h.b16 %v5893
        %v6224 = vunpack.c.l.b16 %v5894
        %v6225 = vunpack.c.h.b16 %v5894
        %v6226 = vunpack.c.l.b16 %v5895
        %v6227 = vunpack.c.h.b16 %v5895
        %v6228 = vunpack.c.l.b16 %v5896
        %v6229 = vunpack.c.h.b16 %v5896
        %v6230 = vunpack.c.l.b16 %v5897
        %v6231 = vunpack.c.h.b16 %v5897
        %v6232 = vunpack.c.l.b16 %v5898
        %v6233 = vunpack.c.h.b16 %v5898
        %v6234 = vunpack.c.l.b16 %v5899
        %v6235 = vunpack.c.h.b16 %v5899
        %v6236 = vunpack.c.l.b16 %v5900
        %v6237 = vunpack.c.h.b16 %v5900
        %v6238 = vunpack.c.l.b16 %v5901
        %v6239 = vunpack.c.h.b16 %v5901
        %v6240 = vunpack.c.l.b16 %v5902
        %v6241 = vunpack.c.h.b16 %v5902
        %v6242 = vunpack.c.l.b16 %v5903
        %v6243 = vunpack.c.h.b16 %v5903
        %v6244 = vunpack.c.l.b16 %v5904
        %v6245 = vunpack.c.h.b16 %v5904
        %v6246 = vunpack.c.l.b16 %v5905
        %v6247 = vunpack.c.h.b16 %v5905
        %v6248 = vunpack.c.l.b16 %v5906
        %v6249 = vunpack.c.h.b16 %v5906
        %v6250 = vunpack.c.l.b16 %v5907
        %v6251 = vunpack.c.h.b16 %v5907
        %v6252 = vunpack.c.l.b16 %v5908
        %v6253 = vunpack.c.h.b16 %v5908
        %v6254 = vunpack.c.l.b16 %v5909
        %v6255 = vunpack.c.h.b16 %v5909
        %v6256 = vunpack.c.l.b16 %v5910
        %v6257 = vunpack.c.h.b16 %v5910
        %v6258 = vunpack.c.l.b16 %v5911
        %v6259 = vunpack.c.h.b16 %v5911
        %v6260 = vunpack.c.l.b16 %v5912
        %v6261 = vunpack.c.h.b16 %v5912
        %v6262 = vunpack.c.l.b16 %v5913
        %v6263 = vunpack.c.h.b16 %v5913
        %v6264 = vunpack.c.l.b16 %v5914
        %v6265 = vunpack.c.h.b16 %v5914
        %v6266 = vunpack.c.l.b16 %v5915
        %v6267 = vunpack.c.h.b16 %v5915
        %v6268 = vunpack.c.l.b16 %v5916
        %v6269 = vunpack.c.h.b16 %v5916
        %v6270 = vunpack.c.l.b16 %v5917
        %v6271 = vunpack.c.h.b16 %v5917
        %v6272 = vunpack.c.l.b16 %v5918
        %v6273 = vunpack.c.h.b16 %v5918
        %v6274 = vunpack.c.l.b16 %v5919
        %v6275 = vunpack.c.h.b16 %v5919
        %v6276 = vunpack.c.l.b16 %v5920
        %v6277 = vunpack.c.h.b16 %v5920
        %v6278 = vunpack.c.l.b16 %v5921
        %v6279 = vunpack.c.h.b16 %v5921
        %v6280 = vunpack.c.l.b16 %v5922
        %v6281 = vunpack.c.h.b16 %v5922
        %v6282 = vunpack.c.l.b16 %v5923
        %v6283 = vunpack.c.h.b16 %v5923
        %v6284 = vunpack.c.l.b16 %v5924
        %v6285 = vunpack.c.h.b16 %v5924
        %v6286 = vunpack.c.l.b16 %v5925
        %v6287 = vunpack.c.h.b16 %v5925
        %v6288 = vunpack.c.l.b16 %v5926
        %v6289 = vunpack.c.h.b16 %v5926
        %v6290 = vunpack.c.l.b16 %v5927
        %v6291 = vunpack.c.h.b16 %v5927
        %v6292 = vunpack.c.l.b16 %v5928
        %v6293 = vunpack.c.h.b16 %v5928
        %v6294 = vunpack.c.l.b16 %v5929
        %v6295 = vunpack.c.h.b16 %v5929
        %v6296 = vunpack.c.l.b16 %v5930
        %v6297 = vunpack.c.h.b16 %v5930
        %v6298 = vunpack.c.l.b16 %v5931
        %v6299 = vunpack.c.h.b16 %v5931
        %v6300 = vunpack.c.l.b16 %v5932
        %v6301 = vunpack.c.h.b16 %v5932
        %v6302 = vunpack.c.l.b16 %v5933
        %v6303 = vunpack.c.h.b16 %v5933
        %v6304 = vunpack.c.l.b16 %v5934
        %v6305 = vunpack.c.h.b16 %v5934
        %v6306 = vunpack.c.l.b16 %v5935
        %v6307 = vunpack.c.h.b16 %v5935
        %v6308 = vunpack.c.l.b16 %v5936
        %v6309 = vunpack.c.h.b16 %v5936
        %v6310 = vunpack.c.l.b16 %v5937
        %v6311 = vunpack.c.h.b16 %v5937
        %v6312 = vunpack.c.l.b16 %v5938
        %v6313 = vunpack.c.h.b16 %v5938
        %v6314 = vunpack.c.l.b16 %v5939
        %v6315 = vunpack.c.h.b16 %v5939
        %v6316 = vunpack.c.l.b16 %v5940
        %v6317 = vunpack.c.h.b16 %v5940
        %v6318 = vunpack.c.l.b16 %v5941
        %v6319 = vunpack.c.h.b16 %v5941
        %v6320 = vunpack.c.l.b16 %v5942
        %v6321 = vunpack.c.h.b16 %v5942
        %v6322 = vunpack.c.l.b16 %v5943
        %v6323 = vunpack.c.h.b16 %v5943
        %v6324 = vunpack.c.l.b16 %v5944
        %v6325 = vunpack.c.h.b16 %v5944
        %v6326 = vunpack.c.l.b16 %v5945
        %v6327 = vunpack.c.h.b16 %v5945
        %v6328 = vunpack.c.l.b16 %v5946
        %v6329 = vunpack.c.h.b16 %v5946
        %v6330 = vunpack.c.l.b16 %v5947
        %v6331 = vunpack.c.h.b16 %v5947
        %v6332 = vpack.c.b16 %v6080, %v6076
        %v6333 = vpack.c.b16 %v6081, %v6077
        %v6334 = vpack.c.b16 %v6082, %v6078
        %v6335 = vpack.c.b16 %v6083, %v6079
        %v6336 = vpack.c.b16 %v6088, %v6084
        %v6337 = vpack.c.b16 %v6089, %v6085
        %v6338 = vpack.c.b16 %v6090, %v6086
        %v6339 = vpack.c.b16 %v6091, %v6087
        %v6340 = vpack.c.b16 %v6096, %v6092
        %v6341 = vpack.c.b16 %v6097, %v6093
        %v6342 = vpack.c.b16 %v6098, %v6094
        %v6343 = vpack.c.b16 %v6099, %v6095
        %v6344 = vpack.c.b16 %v6104, %v6100
        %v6345 = vpack.c.b16 %v6105, %v6101
        %v6346 = vpack.c.b16 %v6106, %v6102
        %v6347 = vpack.c.b16 %v6107, %v6103
        %v6348 = vpack.c.b16 %v6112, %v6108
        %v6349 = vpack.c.b16 %v6113, %v6109
        %v6350 = vpack.c.b16 %v6114, %v6110
        %v6351 = vpack.c.b16 %v6115, %v6111
        %v6352 = vpack.c.b16 %v6120, %v6116
        %v6353 = vpack.c.b16 %v6121, %v6117
        %v6354 = vpack.c.b16 %v6122, %v6118
        %v6355 = vpack.c.b16 %v6123, %v6119
        %v6356 = vpack.c.b16 %v6128, %v6124
        %v6357 = vpack.c.b16 %v6129, %v6125
        %v6358 = vpack.c.b16 %v6130, %v6126
        %v6359 = vpack.c.b16 %v6131, %v6127
        %v6360 = vpack.c.b16 %v6136, %v6132
        %v6361 = vpack.c.b16 %v6137, %v6133
        %v6362 = vpack.c.b16 %v6138, %v6134
        %v6363 = vpack.c.b16 %v6139, %v6135
        %v6364 = vpack.c.b16 %v6144, %v6140
        %v6365 = vpack.c.b16 %v6145, %v6141
        %v6366 = vpack.c.b16 %v6146, %v6142
        %v6367 = vpack.c.b16 %v6147, %v6143
        %v6368 = vpack.c.b16 %v6152, %v6148
        %v6369 = vpack.c.b16 %v6153, %v6149
        %v6370 = vpack.c.b16 %v6154, %v6150
        %v6371 = vpack.c.b16 %v6155, %v6151
        %v6372 = vpack.c.b16 %v6160, %v6156
        %v6373 = vpack.c.b16 %v6161, %v6157
        %v6374 = vpack.c.b16 %v6162, %v6158
        %v6375 = vpack.c.b16 %v6163, %v6159
        %v6376 = vpack.c.b16 %v6168, %v6164
        %v6377 = vpack.c.b16 %v6169, %v6165
        %v6378 = vpack.c.b16 %v6170, %v6166
        %v6379 = vpack.c.b16 %v6171, %v6167
        %v6380 = vpack.c.b16 %v6176, %v6172
        %v6381 = vpack.c.b16 %v6177, %v6173
        %v6382 = vpack.c.b16 %v6178, %v6174
        %v6383 = vpack.c.b16 %v6179, %v6175
        %v6384 = vpack.c.b16 %v6184, %v6180
        %v6385 = vpack.c.b16 %v6185, %v6181
        %v6386 = vpack.c.b16 %v6186, %v6182
        %v6387 = vpack.c.b16 %v6187, %v6183
        %v6388 = vpack.c.b16 %v6192, %v6188
        %v6389 = vpack.c.b16 %v6193, %v6189
        %v6390 = vpack.c.b16 %v6194, %v6190
        %v6391 = vpack.c.b16 %v6195, %v6191
        %v6392 = vpack.c.b16 %v6200, %v6196
        %v6393 = vpack.c.b16 %v6201, %v6197
        %v6394 = vpack.c.b16 %v6202, %v6198
        %v6395 = vpack.c.b16 %v6203, %v6199
        %v6396 = vpack.c.b16 %v6208, %v6204
        %v6397 = vpack.c.b16 %v6209, %v6205
        %v6398 = vpack.c.b16 %v6210, %v6206
        %v6399 = vpack.c.b16 %v6211, %v6207
        %v6400 = vpack.c.b16 %v6216, %v6212
        %v6401 = vpack.c.b16 %v6217, %v6213
        %v6402 = vpack.c.b16 %v6218, %v6214
        %v6403 = vpack.c.b16 %v6219, %v6215
        %v6404 = vpack.c.b16 %v6224, %v6220
        %v6405 = vpack.c.b16 %v6225, %v6221
        %v6406 = vpack.c.b16 %v6226, %v6222
        %v6407 = vpack.c.b16 %v6227, %v6223
        %v6408 = vpack.c.b16 %v6232, %v6228
        %v6409 = vpack.c.b16 %v6233, %v6229
        %v6410 = vpack.c.b16 %v6234, %v6230
        %v6411 = vpack.c.b16 %v6235, %v6231
        %v6412 = vpack.c.b16 %v6240, %v6236
        %v6413 = vpack.c.b16 %v6241, %v6237
        %v6414 = vpack.c.b16 %v6242, %v6238
        %v6415 = vpack.c.b16 %v6243, %v6239
        %v6416 = vpack.c.b16 %v6248, %v6244
        %v6417 = vpack.c.b16 %v6249, %v6245
        %v6418 = vpack.c.b16 %v6250, %v6246
        %v6419 = vpack.c.b16 %v6251, %v6247
        %v6420 = vpack.c.b16 %v6256, %v6252
        %v6421 = vpack.c.b16 %v6257, %v6253
        %v6422 = vpack.c.b16 %v6258, %v6254
        %v6423 = vpack.c.b16 %v6259, %v6255
        %v6424 = vpack.c.b16 %v6264, %v6260
        %v6425 = vpack.c.b16 %v6265, %v6261
        %v6426 = vpack.c.b16 %v6266, %v6262
        %v6427 = vpack.c.b16 %v6267, %v6263
        %v6428 = vpack.c.b16 %v6272, %v6268
        %v6429 = vpack.c.b16 %v6273, %v6269
        %v6430 = vpack.c.b16 %v6274, %v6270
        %v6431 = vpack.c.b16 %v6275, %v6271
        %v6432 = vpack.c.b16 %v6280, %v6276
        %v6433 = vpack.c.b16 %v6281, %v6277
        %v6434 = vpack.c.b16 %v6282, %v6278
        %v6435 = vpack.c.b16 %v6283, %v6279
        %v6436 = vpack.c.b16 %v6288, %v6284
        %v6437 = vpack.c.b16 %v6289, %v6285
        %v6438 = vpack.c.b16 %v6290, %v6286
        %v6439 = vpack.c.b16 %v6291, %v6287
        %v6440 = vpack.c.b16 %v6296, %v6292
        %v6441 = vpack.c.b16 %v6297, %v6293
        %v6442 = vpack.c.b16 %v6298, %v6294
        %v6443 = vpack.c.b16 %v6299, %v6295
        %v6444 = vpack.c.b16 %v6304, %v6300
        %v6445 = vpack.c.b16 %v6305, %v6301
        %v6446 = vpack.c.b16 %v6306, %v6302
        %v6447 = vpack.c.b16 %v6307, %v6303
        %v6448 = vpack.c.b16 %v6312, %v6308
        %v6449 = vpack.c.b16 %v6313, %v6309
        %v6450 = vpack.c.b16 %v6314, %v6310
        %v6451 = vpack.c.b16 %v6315, %v6311
        %v6452 = vpack.c.b16 %v6320, %v6316
        %v6453 = vpack.c.b16 %v6321, %v6317
        %v6454 = vpack.c.b16 %v6322, %v6318
        %v6455 = vpack.c.b16 %v6323, %v6319
        %v6456 = vpack.c.b16 %v6328, %v6324
        %v6457 = vpack.c.b16 %v6329, %v6325
        %v6458 = vpack.c.b16 %v6330, %v6326
        %v6459 = vpack.c.b16 %v6331, %v6327
        %6588 = vmatpush.bf16.msra.mxu0 %v6360
        %6589 = vmatpush.bf16.msra.mxu0 %v6356
        %6590 = vmatpush.bf16.msra.mxu0 %v6352
        %6591 = vmatpush.bf16.msra.mxu0 %v6348
        %6592 = vmatpush.bf16.msra.mxu0 %v6344
        %6593 = vmatpush.bf16.msra.mxu0 %v6340
        %6594 = vmatpush.bf16.msra.mxu0 %v6336
        %6595 = vmatpush.bf16.msra.mxu0 %v6332
        %6596 = vmatmul.bf16.gmra.mxu0 %v5812
        %v6597 = vpop.f32.mrf.mxu0
        %v6598 = vadd.f32 0.0, %v6597
        %v6599 = vpop.f32.mrf.mxu0
        %v6600 = vadd.f32 0.0, %v6599
        %6601 = vmatmul.bf16.gmra.mxu0 %v5816
        %v6602 = vpop.f32.mrf.mxu0
        %v6603 = vadd.f32 0.0, %v6602
        %v6604 = vpop.f32.mrf.mxu0
        %v6605 = vadd.f32 0.0, %v6604
        %6606 = vdwg.mxu0
        %6607 = vmatpush.bf16.msra.mxu0 %v6392
        %6608 = vmatpush.bf16.msra.mxu0 %v6388
        %6609 = vmatpush.bf16.msra.mxu0 %v6384
        %6610 = vmatpush.bf16.msra.mxu0 %v6380
        %6611 = vmatpush.bf16.msra.mxu0 %v6376
        %6612 = vmatpush.bf16.msra.mxu0 %v6372
        %6613 = vmatpush.bf16.msra.mxu0 %v6368
        %6614 = vmatpush.bf16.msra.mxu0 %v6364
        %6615 = vmatmul.bf16.gmra.mxu0 %v5813
        %v6616 = vpop.f32.mrf.mxu0
        %v6617 = vadd.f32 %v6598, %v6616
        %v6618 = vpop.f32.mrf.mxu0
        %v6619 = vadd.f32 %v6600, %v6618
        %6620 = vmatmul.bf16.gmra.mxu0 %v5817
        %v6621 = vpop.f32.mrf.mxu0
        %v6622 = vadd.f32 %v6603, %v6621
        %v6623 = vpop.f32.mrf.mxu0
        %v6624 = vadd.f32 %v6605, %v6623
        %6625 = vdwg.mxu0
        %6626 = vmatpush.bf16.msra.mxu0 %v6424
        %6627 = vmatpush.bf16.msra.mxu0 %v6420
        %6628 = vmatpush.bf16.msra.mxu0 %v6416
        %6629 = vmatpush.bf16.msra.mxu0 %v6412
        %6630 = vmatpush.bf16.msra.mxu0 %v6408
        %6631 = vmatpush.bf16.msra.mxu0 %v6404
        %6632 = vmatpush.bf16.msra.mxu0 %v6400
        %6633 = vmatpush.bf16.msra.mxu0 %v6396
        %6634 = vmatmul.bf16.gmra.mxu0 %v5814
        %v6635 = vpop.f32.mrf.mxu0
        %v6636 = vadd.f32 %v6617, %v6635
        %v6637 = vpop.f32.mrf.mxu0
        %v6638 = vadd.f32 %v6619, %v6637
        %6639 = vmatmul.bf16.gmra.mxu0 %v5818
        %v6640 = vpop.f32.mrf.mxu0
        %v6641 = vadd.f32 %v6622, %v6640
        %v6642 = vpop.f32.mrf.mxu0
        %v6643 = vadd.f32 %v6624, %v6642
        %6644 = vdwg.mxu0
        %6645 = vmatpush.bf16.msra.mxu0 %v6456
        %6646 = vmatpush.bf16.msra.mxu0 %v6452
        %6647 = vmatpush.bf16.msra.mxu0 %v6448
        %6648 = vmatpush.bf16.msra.mxu0 %v6444
        %6649 = vmatpush.bf16.msra.mxu0 %v6440
        %6650 = vmatpush.bf16.msra.mxu0 %v6436
        %6651 = vmatpush.bf16.msra.mxu0 %v6432
        %6652 = vmatpush.bf16.msra.mxu0 %v6428
        %6653 = vmatmul.bf16.gmra.mxu0 %v5815
        %v6654 = vpop.f32.mrf.mxu0
        %v6655 = vadd.f32 %v6636, %v6654
        %v6656 = vpop.f32.mrf.mxu0
        %v6657 = vadd.f32 %v6638, %v6656
        %6658 = vmatmul.bf16.gmra.mxu0 %v5819
        %v6659 = vpop.f32.mrf.mxu0
        %v6660 = vadd.f32 %v6641, %v6659
        %v6661 = vpop.f32.mrf.mxu0
        %v6662 = vadd.f32 %v6643, %v6661
        %6663 = vdwg.mxu0
        %6664 = vmatpush.bf16.msra.mxu0 %v6361
        %6665 = vmatpush.bf16.msra.mxu0 %v6357
        %6666 = vmatpush.bf16.msra.mxu0 %v6353
        %6667 = vmatpush.bf16.msra.mxu0 %v6349
        %6668 = vmatpush.bf16.msra.mxu0 %v6345
        %6669 = vmatpush.bf16.msra.mxu0 %v6341
        %6670 = vmatpush.bf16.msra.mxu0 %v6337
        %6671 = vmatpush.bf16.msra.mxu0 %v6333
        %6672 = vmatmul.bf16.gmra.mxu0 %v5812
        %v6673 = vpop.f32.mrf.mxu0
        %v6674 = vadd.f32 0.0, %v6673
        %v6675 = vpop.f32.mrf.mxu0
        %v6676 = vadd.f32 0.0, %v6675
        %6677 = vmatmul.bf16.gmra.mxu0 %v5816
        %v6678 = vpop.f32.mrf.mxu0
        %v6679 = vadd.f32 0.0, %v6678
        %v6680 = vpop.f32.mrf.mxu0
        %v6681 = vadd.f32 0.0, %v6680
        %6682 = vdwg.mxu0
        %6683 = vmatpush.bf16.msra.mxu0 %v6393
        %6684 = vmatpush.bf16.msra.mxu0 %v6389
        %6685 = vmatpush.bf16.msra.mxu0 %v6385
        %6686 = vmatpush.bf16.msra.mxu0 %v6381
        %6687 = vmatpush.bf16.msra.mxu0 %v6377
        %6688 = vmatpush.bf16.msra.mxu0 %v6373
        %6689 = vmatpush.bf16.msra.mxu0 %v6369
        %6690 = vmatpush.bf16.msra.mxu0 %v6365
        %6691 = vmatmul.bf16.gmra.mxu0 %v5813
        %v6692 = vpop.f32.mrf.mxu0
        %v6693 = vadd.f32 %v6674, %v6692
        %v6694 = vpop.f32.mrf.mxu0
        %v6695 = vadd.f32 %v6676, %v6694
        %6696 = vmatmul.bf16.gmra.mxu0 %v5817
        %v6697 = vpop.f32.mrf.mxu0
        %v6698 = vadd.f32 %v6679, %v6697
        %v6699 = vpop.f32.mrf.mxu0
        %v6700 = vadd.f32 %v6681, %v6699
        %6701 = vdwg.mxu0
        %6702 = vmatpush.bf16.msra.mxu0 %v6425
        %6703 = vmatpush.bf16.msra.mxu0 %v6421
        %6704 = vmatpush.bf16.msra.mxu0 %v6417
        %6705 = vmatpush.bf16.msra.mxu0 %v6413
        %6706 = vmatpush.bf16.msra.mxu0 %v6409
        %6707 = vmatpush.bf16.msra.mxu0 %v6405
        %6708 = vmatpush.bf16.msra.mxu0 %v6401
        %6709 = vmatpush.bf16.msra.mxu0 %v6397
        %6710 = vmatmul.bf16.gmra.mxu0 %v5814
        %v6711 = vpop.f32.mrf.mxu0
        %v6712 = vadd.f32 %v6693, %v6711
        %v6713 = vpop.f32.mrf.mxu0
        %v6714 = vadd.f32 %v6695, %v6713
        %6715 = vmatmul.bf16.gmra.mxu0 %v5818
        %v6716 = vpop.f32.mrf.mxu0
        %v6717 = vadd.f32 %v6698, %v6716
        %v6718 = vpop.f32.mrf.mxu0
        %v6719 = vadd.f32 %v6700, %v6718
        %6720 = vdwg.mxu0
        %6721 = vmatpush.bf16.msra.mxu0 %v6457
        %6722 = vmatpush.bf16.msra.mxu0 %v6453
        %6723 = vmatpush.bf16.msra.mxu0 %v6449
        %6724 = vmatpush.bf16.msra.mxu0 %v6445
        %6725 = vmatpush.bf16.msra.mxu0 %v6441
        %6726 = vmatpush.bf16.msra.mxu0 %v6437
        %6727 = vmatpush.bf16.msra.mxu0 %v6433
        %6728 = vmatpush.bf16.msra.mxu0 %v6429
        %6729 = vmatmul.bf16.gmra.mxu0 %v5815
        %v6730 = vpop.f32.mrf.mxu0
        %v6731 = vadd.f32 %v6712, %v6730
        %v6732 = vpop.f32.mrf.mxu0
        %v6733 = vadd.f32 %v6714, %v6732
        %6734 = vmatmul.bf16.gmra.mxu0 %v5819
        %v6735 = vpop.f32.mrf.mxu0
        %v6736 = vadd.f32 %v6717, %v6735
        %v6737 = vpop.f32.mrf.mxu0
        %v6738 = vadd.f32 %v6719, %v6737
        %6739 = vdwg.mxu0
        %6740 = vmatpush.bf16.msra.mxu0 %v6362
        %6741 = vmatpush.bf16.msra.mxu0 %v6358
        %6742 = vmatpush.bf16.msra.mxu0 %v6354
        %6743 = vmatpush.bf16.msra.mxu0 %v6350
        %6744 = vmatpush.bf16.msra.mxu0 %v6346
        %6745 = vmatpush.bf16.msra.mxu0 %v6342
        %6746 = vmatpush.bf16.msra.mxu0 %v6338
        %6747 = vmatpush.bf16.msra.mxu0 %v6334
        %6748 = vmatmul.bf16.gmra.mxu0 %v5812
        %v6749 = vpop.f32.mrf.mxu0
        %v6750 = vadd.f32 0.0, %v6749
        %v6751 = vpop.f32.mrf.mxu0
        %v6752 = vadd.f32 0.0, %v6751
        %6753 = vmatmul.bf16.gmra.mxu0 %v5816
        %v6754 = vpop.f32.mrf.mxu0
        %v6755 = vadd.f32 0.0, %v6754
        %v6756 = vpop.f32.mrf.mxu0
        %v6757 = vadd.f32 0.0, %v6756
        %6758 = vdwg.mxu0
        %6759 = vmatpush.bf16.msra.mxu0 %v6394
        %6760 = vmatpush.bf16.msra.mxu0 %v6390
        %6761 = vmatpush.bf16.msra.mxu0 %v6386
        %6762 = vmatpush.bf16.msra.mxu0 %v6382
        %6763 = vmatpush.bf16.msra.mxu0 %v6378
        %6764 = vmatpush.bf16.msra.mxu0 %v6374
        %6765 = vmatpush.bf16.msra.mxu0 %v6370
        %6766 = vmatpush.bf16.msra.mxu0 %v6366
        %6767 = vmatmul.bf16.gmra.mxu0 %v5813
        %v6768 = vpop.f32.mrf.mxu0
        %v6769 = vadd.f32 %v6750, %v6768
        %v6770 = vpop.f32.mrf.mxu0
        %v6771 = vadd.f32 %v6752, %v6770
        %6772 = vmatmul.bf16.gmra.mxu0 %v5817
        %v6773 = vpop.f32.mrf.mxu0
        %v6774 = vadd.f32 %v6755, %v6773
        %v6775 = vpop.f32.mrf.mxu0
        %v6776 = vadd.f32 %v6757, %v6775
        %6777 = vdwg.mxu0
        %6778 = vmatpush.bf16.msra.mxu0 %v6426
        %6779 = vmatpush.bf16.msra.mxu0 %v6422
        %6780 = vmatpush.bf16.msra.mxu0 %v6418
        %6781 = vmatpush.bf16.msra.mxu0 %v6414
        %6782 = vmatpush.bf16.msra.mxu0 %v6410
        %6783 = vmatpush.bf16.msra.mxu0 %v6406
        %6784 = vmatpush.bf16.msra.mxu0 %v6402
        %6785 = vmatpush.bf16.msra.mxu0 %v6398
        %6786 = vmatmul.bf16.gmra.mxu0 %v5814
        %v6787 = vpop.f32.mrf.mxu0
        %v6788 = vadd.f32 %v6769, %v6787
        %v6789 = vpop.f32.mrf.mxu0
        %v6790 = vadd.f32 %v6771, %v6789
        %6791 = vmatmul.bf16.gmra.mxu0 %v5818
        %v6792 = vpop.f32.mrf.mxu0
        %v6793 = vadd.f32 %v6774, %v6792
        %v6794 = vpop.f32.mrf.mxu0
        %v6795 = vadd.f32 %v6776, %v6794
        %6796 = vdwg.mxu0
        %6797 = vmatpush.bf16.msra.mxu0 %v6458
        %6798 = vmatpush.bf16.msra.mxu0 %v6454
        %6799 = vmatpush.bf16.msra.mxu0 %v6450
        %6800 = vmatpush.bf16.msra.mxu0 %v6446
        %6801 = vmatpush.bf16.msra.mxu0 %v6442
        %6802 = vmatpush.bf16.msra.mxu0 %v6438
        %6803 = vmatpush.bf16.msra.mxu0 %v6434
        %6804 = vmatpush.bf16.msra.mxu0 %v6430
        %6805 = vmatmul.bf16.gmra.mxu0 %v5815
        %v6806 = vpop.f32.mrf.mxu0
        %v6807 = vadd.f32 %v6788, %v6806
        %v6808 = vpop.f32.mrf.mxu0
        %v6809 = vadd.f32 %v6790, %v6808
        %6810 = vmatmul.bf16.gmra.mxu0 %v5819
        %v6811 = vpop.f32.mrf.mxu0
        %v6812 = vadd.f32 %v6793, %v6811
        %v6813 = vpop.f32.mrf.mxu0
        %v6814 = vadd.f32 %v6795, %v6813
        %6815 = vdwg.mxu0
        %6816 = vmatpush.bf16.msra.mxu0 %v6363
        %6817 = vmatpush.bf16.msra.mxu0 %v6359
        %6818 = vmatpush.bf16.msra.mxu0 %v6355
        %6819 = vmatpush.bf16.msra.mxu0 %v6351
        %6820 = vmatpush.bf16.msra.mxu0 %v6347
        %6821 = vmatpush.bf16.msra.mxu0 %v6343
        %6822 = vmatpush.bf16.msra.mxu0 %v6339
        %6823 = vmatpush.bf16.msra.mxu0 %v6335
        %6824 = vmatmul.bf16.gmra.mxu0 %v5812
        %v6825 = vpop.f32.mrf.mxu0
        %v6826 = vadd.f32 0.0, %v6825
        %v6827 = vpop.f32.mrf.mxu0
        %v6828 = vadd.f32 0.0, %v6827
        %6829 = vmatmul.bf16.gmra.mxu0 %v5816
        %v6830 = vpop.f32.mrf.mxu0
        %v6831 = vadd.f32 0.0, %v6830
        %v6832 = vpop.f32.mrf.mxu0
        %v6833 = vadd.f32 0.0, %v6832
        %6834 = vdwg.mxu0
        %6835 = vmatpush.bf16.msra.mxu0 %v6395
        %6836 = vmatpush.bf16.msra.mxu0 %v6391
        %6837 = vmatpush.bf16.msra.mxu0 %v6387
        %6838 = vmatpush.bf16.msra.mxu0 %v6383
        %6839 = vmatpush.bf16.msra.mxu0 %v6379
        %6840 = vmatpush.bf16.msra.mxu0 %v6375
        %6841 = vmatpush.bf16.msra.mxu0 %v6371
        %6842 = vmatpush.bf16.msra.mxu0 %v6367
        %6843 = vmatmul.bf16.gmra.mxu0 %v5813
        %v6844 = vpop.f32.mrf.mxu0
        %v6845 = vadd.f32 %v6826, %v6844
        %v6846 = vpop.f32.mrf.mxu0
        %v6847 = vadd.f32 %v6828, %v6846
        %6848 = vmatmul.bf16.gmra.mxu0 %v5817
        %v6849 = vpop.f32.mrf.mxu0
        %v6850 = vadd.f32 %v6831, %v6849
        %v6851 = vpop.f32.mrf.mxu0
        %v6852 = vadd.f32 %v6833, %v6851
        %6853 = vdwg.mxu0
        %6854 = vmatpush.bf16.msra.mxu0 %v6427
        %6855 = vmatpush.bf16.msra.mxu0 %v6423
        %6856 = vmatpush.bf16.msra.mxu0 %v6419
        %6857 = vmatpush.bf16.msra.mxu0 %v6415
        %6858 = vmatpush.bf16.msra.mxu0 %v6411
        %6859 = vmatpush.bf16.msra.mxu0 %v6407
        %6860 = vmatpush.bf16.msra.mxu0 %v6403
        %6861 = vmatpush.bf16.msra.mxu0 %v6399
        %6862 = vmatmul.bf16.gmra.mxu0 %v5814
        %v6863 = vpop.f32.mrf.mxu0
        %v6864 = vadd.f32 %v6845, %v6863
        %v6865 = vpop.f32.mrf.mxu0
        %v6866 = vadd.f32 %v6847, %v6865
        %6867 = vmatmul.bf16.gmra.mxu0 %v5818
        %v6868 = vpop.f32.mrf.mxu0
        %v6869 = vadd.f32 %v6850, %v6868
        %v6870 = vpop.f32.mrf.mxu0
        %v6871 = vadd.f32 %v6852, %v6870
        %6872 = vdwg.mxu0
        %6873 = vmatpush.bf16.msra.mxu0 %v6459
        %6874 = vmatpush.bf16.msra.mxu0 %v6455
        %6875 = vmatpush.bf16.msra.mxu0 %v6451
        %6876 = vmatpush.bf16.msra.mxu0 %v6447
        %6877 = vmatpush.bf16.msra.mxu0 %v6443
        %6878 = vmatpush.bf16.msra.mxu0 %v6439
        %6879 = vmatpush.bf16.msra.mxu0 %v6435
        %6880 = vmatpush.bf16.msra.mxu0 %v6431
        %6881 = vmatmul.bf16.gmra.mxu0 %v5815
        %v6882 = vpop.f32.mrf.mxu0
        %v6883 = vadd.f32 %v6864, %v6882
        %v6884 = vpop.f32.mrf.mxu0
        %v6885 = vadd.f32 %v6866, %v6884
        %6886 = vmatmul.bf16.gmra.mxu0 %v5819
        %v6887 = vpop.f32.mrf.mxu0
        %v6888 = vadd.f32 %v6869, %v6887
        %v6889 = vpop.f32.mrf.mxu0
        %v6890 = vadd.f32 %v6871, %v6889
        %6891 = vdwg.mxu0
        %v6892 = vadd.f32 %v4477, %v6655
        %v6893 = vadd.f32 %v4553, %v6731
        %v6894 = vadd.f32 %v4629, %v6807
        %v6895 = vadd.f32 %v4705, %v6883
        %v6896 = vadd.f32 %v4479, %v6657
        %v6897 = vadd.f32 %v4555, %v6733
        %v6898 = vadd.f32 %v4631, %v6809
        %v6899 = vadd.f32 %v4707, %v6885
        %v6900 = vadd.f32 %v4482, %v6660
        %v6901 = vadd.f32 %v4558, %v6736
        %v6902 = vadd.f32 %v4634, %v6812
        %v6903 = vadd.f32 %v4710, %v6888
        %v6904 = vadd.f32 %v4484, %v6662
        %v6905 = vadd.f32 %v4560, %v6738
        %v6906 = vadd.f32 %v4636, %v6814
        %v6907 = vadd.f32 %v4712, %v6890
        %v6908 = vld [vmem:[#allocation5 + $0x30] sm:$0xff]
        %v6909 = vld [vmem:[#allocation5 + $0x38] sm:$0xff]
        %v6910 = vld [vmem:[#allocation5 + $0x70] sm:$0xff]
        %v6911 = vld [vmem:[#allocation5 + $0x78] sm:$0xff]
        %v6912 = vld [vmem:[#allocation5 + $0xb0] sm:$0xff]
        %v6913 = vld [vmem:[#allocation5 + $0xb8] sm:$0xff]
        %v6914 = vld [vmem:[#allocation5 + $0xf0] sm:$0xff]
        %v6915 = vld [vmem:[#allocation5 + $0xf8] sm:$0xff]
        %v6916 = vld [vmem:[#allocation5 + $0x130] sm:$0xff]
        %v6917 = vld [vmem:[#allocation5 + $0x138] sm:$0xff]
        %v6918 = vld [vmem:[#allocation5 + $0x170] sm:$0xff]
        %v6919 = vld [vmem:[#allocation5 + $0x178] sm:$0xff]
        %v6920 = vld [vmem:[#allocation5 + $0x1b0] sm:$0xff]
        %v6921 = vld [vmem:[#allocation5 + $0x1b8] sm:$0xff]
        %v6922 = vld [vmem:[#allocation5 + $0x1f0] sm:$0xff]
        %v6923 = vld [vmem:[#allocation5 + $0x1f8] sm:$0xff]
        %v6924 = vld [vmem:[#allocation5 + $0x230] sm:$0xff]
        %v6925 = vld [vmem:[#allocation5 + $0x238] sm:$0xff]
        %v6926 = vld [vmem:[#allocation5 + $0x270] sm:$0xff]
        %v6927 = vld [vmem:[#allocation5 + $0x278] sm:$0xff]
        %v6928 = vld [vmem:[#allocation5 + $0x2b0] sm:$0xff]
        %v6929 = vld [vmem:[#allocation5 + $0x2b8] sm:$0xff]
        %v6930 = vld [vmem:[#allocation5 + $0x2f0] sm:$0xff]
        %v6931 = vld [vmem:[#allocation5 + $0x2f8] sm:$0xff]
        %v6932 = vld [vmem:[#allocation5 + $0x330] sm:$0xff]
        %v6933 = vld [vmem:[#allocation5 + $0x338] sm:$0xff]
        %v6934 = vld [vmem:[#allocation5 + $0x370] sm:$0xff]
        %v6935 = vld [vmem:[#allocation5 + $0x378] sm:$0xff]
        %v6936 = vld [vmem:[#allocation5 + $0x3b0] sm:$0xff]
        %v6937 = vld [vmem:[#allocation5 + $0x3b8] sm:$0xff]
        %v6938 = vld [vmem:[#allocation5 + $0x3f0] sm:$0xff]
        %v6939 = vld [vmem:[#allocation5 + $0x3f8] sm:$0xff]
        %v6940 = vld [vmem:[#allocation5 + $0x430] sm:$0xff]
        %v6941 = vld [vmem:[#allocation5 + $0x438] sm:$0xff]
        %v6942 = vld [vmem:[#allocation5 + $0x470] sm:$0xff]
        %v6943 = vld [vmem:[#allocation5 + $0x478] sm:$0xff]
        %v6944 = vld [vmem:[#allocation5 + $0x4b0] sm:$0xff]
        %v6945 = vld [vmem:[#allocation5 + $0x4b8] sm:$0xff]
        %v6946 = vld [vmem:[#allocation5 + $0x4f0] sm:$0xff]
        %v6947 = vld [vmem:[#allocation5 + $0x4f8] sm:$0xff]
        %v6948 = vld [vmem:[#allocation5 + $0x530] sm:$0xff]
        %v6949 = vld [vmem:[#allocation5 + $0x538] sm:$0xff]
        %v6950 = vld [vmem:[#allocation5 + $0x570] sm:$0xff]
        %v6951 = vld [vmem:[#allocation5 + $0x578] sm:$0xff]
        %v6952 = vld [vmem:[#allocation5 + $0x5b0] sm:$0xff]
        %v6953 = vld [vmem:[#allocation5 + $0x5b8] sm:$0xff]
        %v6954 = vld [vmem:[#allocation5 + $0x5f0] sm:$0xff]
        %v6955 = vld [vmem:[#allocation5 + $0x5f8] sm:$0xff]
        %v6956 = vld [vmem:[#allocation5 + $0x630] sm:$0xff]
        %v6957 = vld [vmem:[#allocation5 + $0x638] sm:$0xff]
        %v6958 = vld [vmem:[#allocation5 + $0x670] sm:$0xff]
        %v6959 = vld [vmem:[#allocation5 + $0x678] sm:$0xff]
        %v6960 = vld [vmem:[#allocation5 + $0x6b0] sm:$0xff]
        %v6961 = vld [vmem:[#allocation5 + $0x6b8] sm:$0xff]
        %v6962 = vld [vmem:[#allocation5 + $0x6f0] sm:$0xff]
        %v6963 = vld [vmem:[#allocation5 + $0x6f8] sm:$0xff]
        %v6964 = vld [vmem:[#allocation5 + $0x730] sm:$0xff]
        %v6965 = vld [vmem:[#allocation5 + $0x738] sm:$0xff]
        %v6966 = vld [vmem:[#allocation5 + $0x770] sm:$0xff]
        %v6967 = vld [vmem:[#allocation5 + $0x778] sm:$0xff]
        %v6968 = vld [vmem:[#allocation5 + $0x7b0] sm:$0xff]
        %v6969 = vld [vmem:[#allocation5 + $0x7b8] sm:$0xff]
        %v6970 = vld [vmem:[#allocation5 + $0x7f0] sm:$0xff]
        %v6971 = vld [vmem:[#allocation5 + $0x7f8] sm:$0xff]
        %v6972 = vld [vmem:[#allocation5 + $0x830] sm:$0xff]
        %v6973 = vld [vmem:[#allocation5 + $0x838] sm:$0xff]
        %v6974 = vld [vmem:[#allocation5 + $0x870] sm:$0xff]
        %v6975 = vld [vmem:[#allocation5 + $0x878] sm:$0xff]
        %v6976 = vld [vmem:[#allocation5 + $0x8b0] sm:$0xff]
        %v6977 = vld [vmem:[#allocation5 + $0x8b8] sm:$0xff]
        %v6978 = vld [vmem:[#allocation5 + $0x8f0] sm:$0xff]
        %v6979 = vld [vmem:[#allocation5 + $0x8f8] sm:$0xff]
        %v6980 = vld [vmem:[#allocation5 + $0x930] sm:$0xff]
        %v6981 = vld [vmem:[#allocation5 + $0x938] sm:$0xff]
        %v6982 = vld [vmem:[#allocation5 + $0x970] sm:$0xff]
        %v6983 = vld [vmem:[#allocation5 + $0x978] sm:$0xff]
        %v6984 = vld [vmem:[#allocation5 + $0x9b0] sm:$0xff]
        %v6985 = vld [vmem:[#allocation5 + $0x9b8] sm:$0xff]
        %v6986 = vld [vmem:[#allocation5 + $0x9f0] sm:$0xff]
        %v6987 = vld [vmem:[#allocation5 + $0x9f8] sm:$0xff]
        %v6988 = vld [vmem:[#allocation5 + $0xa30] sm:$0xff]
        %v6989 = vld [vmem:[#allocation5 + $0xa38] sm:$0xff]
        %v6990 = vld [vmem:[#allocation5 + $0xa70] sm:$0xff]
        %v6991 = vld [vmem:[#allocation5 + $0xa78] sm:$0xff]
        %v6992 = vld [vmem:[#allocation5 + $0xab0] sm:$0xff]
        %v6993 = vld [vmem:[#allocation5 + $0xab8] sm:$0xff]
        %v6994 = vld [vmem:[#allocation5 + $0xaf0] sm:$0xff]
        %v6995 = vld [vmem:[#allocation5 + $0xaf8] sm:$0xff]
        %v6996 = vld [vmem:[#allocation5 + $0xb30] sm:$0xff]
        %v6997 = vld [vmem:[#allocation5 + $0xb38] sm:$0xff]
        %v6998 = vld [vmem:[#allocation5 + $0xb70] sm:$0xff]
        %v6999 = vld [vmem:[#allocation5 + $0xb78] sm:$0xff]
        %v7000 = vld [vmem:[#allocation5 + $0xbb0] sm:$0xff]
        %v7001 = vld [vmem:[#allocation5 + $0xbb8] sm:$0xff]
        %v7002 = vld [vmem:[#allocation5 + $0xbf0] sm:$0xff]
        %v7003 = vld [vmem:[#allocation5 + $0xbf8] sm:$0xff]
        %v7004 = vld [vmem:[#allocation5 + $0xc30] sm:$0xff]
        %v7005 = vld [vmem:[#allocation5 + $0xc38] sm:$0xff]
        %v7006 = vld [vmem:[#allocation5 + $0xc70] sm:$0xff]
        %v7007 = vld [vmem:[#allocation5 + $0xc78] sm:$0xff]
        %v7008 = vld [vmem:[#allocation5 + $0xcb0] sm:$0xff]
        %v7009 = vld [vmem:[#allocation5 + $0xcb8] sm:$0xff]
        %v7010 = vld [vmem:[#allocation5 + $0xcf0] sm:$0xff]
        %v7011 = vld [vmem:[#allocation5 + $0xcf8] sm:$0xff]
        %v7012 = vld [vmem:[#allocation5 + $0xd30] sm:$0xff]
        %v7013 = vld [vmem:[#allocation5 + $0xd38] sm:$0xff]
        %v7014 = vld [vmem:[#allocation5 + $0xd70] sm:$0xff]
        %v7015 = vld [vmem:[#allocation5 + $0xd78] sm:$0xff]
        %v7016 = vld [vmem:[#allocation5 + $0xdb0] sm:$0xff]
        %v7017 = vld [vmem:[#allocation5 + $0xdb8] sm:$0xff]
        %v7018 = vld [vmem:[#allocation5 + $0xdf0] sm:$0xff]
        %v7019 = vld [vmem:[#allocation5 + $0xdf8] sm:$0xff]
        %v7020 = vld [vmem:[#allocation5 + $0xe30] sm:$0xff]
        %v7021 = vld [vmem:[#allocation5 + $0xe38] sm:$0xff]
        %v7022 = vld [vmem:[#allocation5 + $0xe70] sm:$0xff]
        %v7023 = vld [vmem:[#allocation5 + $0xe78] sm:$0xff]
        %v7024 = vld [vmem:[#allocation5 + $0xeb0] sm:$0xff]
        %v7025 = vld [vmem:[#allocation5 + $0xeb8] sm:$0xff]
        %v7026 = vld [vmem:[#allocation5 + $0xef0] sm:$0xff]
        %v7027 = vld [vmem:[#allocation5 + $0xef8] sm:$0xff]
        %v7028 = vld [vmem:[#allocation5 + $0xf30] sm:$0xff]
        %v7029 = vld [vmem:[#allocation5 + $0xf38] sm:$0xff]
        %v7030 = vld [vmem:[#allocation5 + $0xf70] sm:$0xff]
        %v7031 = vld [vmem:[#allocation5 + $0xf78] sm:$0xff]
        %v7032 = vld [vmem:[#allocation5 + $0xfb0] sm:$0xff]
        %v7033 = vld [vmem:[#allocation5 + $0xfb8] sm:$0xff]
        %v7034 = vld [vmem:[#allocation5 + $0xff0] sm:$0xff]
        %v7035 = vld [vmem:[#allocation5 + $0xff8] sm:$0xff]
        %v7036 = vld [vmem:[#allocation7 + $0xc] sm:$0xf]
        %v7038 = vperm.slane %v7036, 0
        %v7039 = vperm.slane %v7036, 1
        %v7040 = vperm.slane %v7036, 2
        %v7041 = vperm.slane %v7036, 3
        %v7174 = vunpack.c.l.b16 %v6908
        %v7175 = vunpack.c.h.b16 %v6908
        %v7176 = vunpack.c.l.b16 %v6909
        %v7177 = vunpack.c.h.b16 %v6909
        %v7178 = vunpack.c.l.b16 %v6910
        %v7179 = vunpack.c.h.b16 %v6910
        %v7180 = vunpack.c.l.b16 %v6911
        %v7181 = vunpack.c.h.b16 %v6911
        %v7182 = vunpack.c.l.b16 %v6912
        %v7183 = vunpack.c.h.b16 %v6912
        %v7184 = vunpack.c.l.b16 %v6913
        %v7185 = vunpack.c.h.b16 %v6913
        %v7186 = vunpack.c.l.b16 %v6914
        %v7187 = vunpack.c.h.b16 %v6914
        %v7188 = vunpack.c.l.b16 %v6915
        %v7189 = vunpack.c.h.b16 %v6915
        %v7190 = vunpack.c.l.b16 %v6916
        %v7191 = vunpack.c.h.b16 %v6916
        %v7192 = vunpack.c.l.b16 %v6917
        %v7193 = vunpack.c.h.b16 %v6917
        %v7194 = vunpack.c.l.b16 %v6918
        %v7195 = vunpack.c.h.b16 %v6918
        %v7196 = vunpack.c.l.b16 %v6919
        %v7197 = vunpack.c.h.b16 %v6919
        %v7198 = vunpack.c.l.b16 %v6920
        %v7199 = vunpack.c.h.b16 %v6920
        %v7200 = vunpack.c.l.b16 %v6921
        %v7201 = vunpack.c.h.b16 %v6921
        %v7202 = vunpack.c.l.b16 %v6922
        %v7203 = vunpack.c.h.b16 %v6922
        %v7204 = vunpack.c.l.b16 %v6923
        %v7205 = vunpack.c.h.b16 %v6923
        %v7206 = vunpack.c.l.b16 %v6924
        %v7207 = vunpack.c.h.b16 %v6924
        %v7208 = vunpack.c.l.b16 %v6925
        %v7209 = vunpack.c.h.b16 %v6925
        %v7210 = vunpack.c.l.b16 %v6926
        %v7211 = vunpack.c.h.b16 %v6926
        %v7212 = vunpack.c.l.b16 %v6927
        %v7213 = vunpack.c.h.b16 %v6927
        %v7214 = vunpack.c.l.b16 %v6928
        %v7215 = vunpack.c.h.b16 %v6928
        %v7216 = vunpack.c.l.b16 %v6929
        %v7217 = vunpack.c.h.b16 %v6929
        %v7218 = vunpack.c.l.b16 %v6930
        %v7219 = vunpack.c.h.b16 %v6930
        %v7220 = vunpack.c.l.b16 %v6931
        %v7221 = vunpack.c.h.b16 %v6931
        %v7222 = vunpack.c.l.b16 %v6932
        %v7223 = vunpack.c.h.b16 %v6932
        %v7224 = vunpack.c.l.b16 %v6933
        %v7225 = vunpack.c.h.b16 %v6933
        %v7226 = vunpack.c.l.b16 %v6934
        %v7227 = vunpack.c.h.b16 %v6934
        %v7228 = vunpack.c.l.b16 %v6935
        %v7229 = vunpack.c.h.b16 %v6935
        %v7230 = vunpack.c.l.b16 %v6936
        %v7231 = vunpack.c.h.b16 %v6936
        %v7232 = vunpack.c.l.b16 %v6937
        %v7233 = vunpack.c.h.b16 %v6937
        %v7234 = vunpack.c.l.b16 %v6938
        %v7235 = vunpack.c.h.b16 %v6938
        %v7236 = vunpack.c.l.b16 %v6939
        %v7237 = vunpack.c.h.b16 %v6939
        %v7238 = vunpack.c.l.b16 %v6940
        %v7239 = vunpack.c.h.b16 %v6940
        %v7240 = vunpack.c.l.b16 %v6941
        %v7241 = vunpack.c.h.b16 %v6941
        %v7242 = vunpack.c.l.b16 %v6942
        %v7243 = vunpack.c.h.b16 %v6942
        %v7244 = vunpack.c.l.b16 %v6943
        %v7245 = vunpack.c.h.b16 %v6943
        %v7246 = vunpack.c.l.b16 %v6944
        %v7247 = vunpack.c.h.b16 %v6944
        %v7248 = vunpack.c.l.b16 %v6945
        %v7249 = vunpack.c.h.b16 %v6945
        %v7250 = vunpack.c.l.b16 %v6946
        %v7251 = vunpack.c.h.b16 %v6946
        %v7252 = vunpack.c.l.b16 %v6947
        %v7253 = vunpack.c.h.b16 %v6947
        %v7254 = vunpack.c.l.b16 %v6948
        %v7255 = vunpack.c.h.b16 %v6948
        %v7256 = vunpack.c.l.b16 %v6949
        %v7257 = vunpack.c.h.b16 %v6949
        %v7258 = vunpack.c.l.b16 %v6950
        %v7259 = vunpack.c.h.b16 %v6950
        %v7260 = vunpack.c.l.b16 %v6951
        %v7261 = vunpack.c.h.b16 %v6951
        %v7262 = vunpack.c.l.b16 %v6952
        %v7263 = vunpack.c.h.b16 %v6952
        %v7264 = vunpack.c.l.b16 %v6953
        %v7265 = vunpack.c.h.b16 %v6953
        %v7266 = vunpack.c.l.b16 %v6954
        %v7267 = vunpack.c.h.b16 %v6954
        %v7268 = vunpack.c.l.b16 %v6955
        %v7269 = vunpack.c.h.b16 %v6955
        %v7270 = vunpack.c.l.b16 %v6956
        %v7271 = vunpack.c.h.b16 %v6956
        %v7272 = vunpack.c.l.b16 %v6957
        %v7273 = vunpack.c.h.b16 %v6957
        %v7274 = vunpack.c.l.b16 %v6958
        %v7275 = vunpack.c.h.b16 %v6958
        %v7276 = vunpack.c.l.b16 %v6959
        %v7277 = vunpack.c.h.b16 %v6959
        %v7278 = vunpack.c.l.b16 %v6960
        %v7279 = vunpack.c.h.b16 %v6960
        %v7280 = vunpack.c.l.b16 %v6961
        %v7281 = vunpack.c.h.b16 %v6961
        %v7282 = vunpack.c.l.b16 %v6962
        %v7283 = vunpack.c.h.b16 %v6962
        %v7284 = vunpack.c.l.b16 %v6963
        %v7285 = vunpack.c.h.b16 %v6963
        %v7286 = vunpack.c.l.b16 %v6964
        %v7287 = vunpack.c.h.b16 %v6964
        %v7288 = vunpack.c.l.b16 %v6965
        %v7289 = vunpack.c.h.b16 %v6965
        %v7290 = vunpack.c.l.b16 %v6966
        %v7291 = vunpack.c.h.b16 %v6966
        %v7292 = vunpack.c.l.b16 %v6967
        %v7293 = vunpack.c.h.b16 %v6967
        %v7294 = vunpack.c.l.b16 %v6968
        %v7295 = vunpack.c.h.b16 %v6968
        %v7296 = vunpack.c.l.b16 %v6969
        %v7297 = vunpack.c.h.b16 %v6969
        %v7298 = vunpack.c.l.b16 %v6970
        %v7299 = vunpack.c.h.b16 %v6970
        %v7300 = vunpack.c.l.b16 %v6971
        %v7301 = vunpack.c.h.b16 %v6971
        %v7302 = vunpack.c.l.b16 %v6972
        %v7303 = vunpack.c.h.b16 %v6972
        %v7304 = vunpack.c.l.b16 %v6973
        %v7305 = vunpack.c.h.b16 %v6973
        %v7306 = vunpack.c.l.b16 %v6974
        %v7307 = vunpack.c.h.b16 %v6974
        %v7308 = vunpack.c.l.b16 %v6975
        %v7309 = vunpack.c.h.b16 %v6975
        %v7310 = vunpack.c.l.b16 %v6976
        %v7311 = vunpack.c.h.b16 %v6976
        %v7312 = vunpack.c.l.b16 %v6977
        %v7313 = vunpack.c.h.b16 %v6977
        %v7314 = vunpack.c.l.b16 %v6978
        %v7315 = vunpack.c.h.b16 %v6978
        %v7316 = vunpack.c.l.b16 %v6979
        %v7317 = vunpack.c.h.b16 %v6979
        %v7318 = vunpack.c.l.b16 %v6980
        %v7319 = vunpack.c.h.b16 %v6980
        %v7320 = vunpack.c.l.b16 %v6981
        %v7321 = vunpack.c.h.b16 %v6981
        %v7322 = vunpack.c.l.b16 %v6982
        %v7323 = vunpack.c.h.b16 %v6982
        %v7324 = vunpack.c.l.b16 %v6983
        %v7325 = vunpack.c.h.b16 %v6983
        %v7326 = vunpack.c.l.b16 %v6984
        %v7327 = vunpack.c.h.b16 %v6984
        %v7328 = vunpack.c.l.b16 %v6985
        %v7329 = vunpack.c.h.b16 %v6985
        %v7330 = vunpack.c.l.b16 %v6986
        %v7331 = vunpack.c.h.b16 %v6986
        %v7332 = vunpack.c.l.b16 %v6987
        %v7333 = vunpack.c.h.b16 %v6987
        %v7334 = vunpack.c.l.b16 %v6988
        %v7335 = vunpack.c.h.b16 %v6988
        %v7336 = vunpack.c.l.b16 %v6989
        %v7337 = vunpack.c.h.b16 %v6989
        %v7338 = vunpack.c.l.b16 %v6990
        %v7339 = vunpack.c.h.b16 %v6990
        %v7340 = vunpack.c.l.b16 %v6991
        %v7341 = vunpack.c.h.b16 %v6991
        %v7342 = vunpack.c.l.b16 %v6992
        %v7343 = vunpack.c.h.b16 %v6992
        %v7344 = vunpack.c.l.b16 %v6993
        %v7345 = vunpack.c.h.b16 %v6993
        %v7346 = vunpack.c.l.b16 %v6994
        %v7347 = vunpack.c.h.b16 %v6994
        %v7348 = vunpack.c.l.b16 %v6995
        %v7349 = vunpack.c.h.b16 %v6995
        %v7350 = vunpack.c.l.b16 %v6996
        %v7351 = vunpack.c.h.b16 %v6996
        %v7352 = vunpack.c.l.b16 %v6997
        %v7353 = vunpack.c.h.b16 %v6997
        %v7354 = vunpack.c.l.b16 %v6998
        %v7355 = vunpack.c.h.b16 %v6998
        %v7356 = vunpack.c.l.b16 %v6999
        %v7357 = vunpack.c.h.b16 %v6999
        %v7358 = vunpack.c.l.b16 %v7000
        %v7359 = vunpack.c.h.b16 %v7000
        %v7360 = vunpack.c.l.b16 %v7001
        %v7361 = vunpack.c.h.b16 %v7001
        %v7362 = vunpack.c.l.b16 %v7002
        %v7363 = vunpack.c.h.b16 %v7002
        %v7364 = vunpack.c.l.b16 %v7003
        %v7365 = vunpack.c.h.b16 %v7003
        %v7366 = vunpack.c.l.b16 %v7004
        %v7367 = vunpack.c.h.b16 %v7004
        %v7368 = vunpack.c.l.b16 %v7005
        %v7369 = vunpack.c.h.b16 %v7005
        %v7370 = vunpack.c.l.b16 %v7006
        %v7371 = vunpack.c.h.b16 %v7006
        %v7372 = vunpack.c.l.b16 %v7007
        %v7373 = vunpack.c.h.b16 %v7007
        %v7374 = vunpack.c.l.b16 %v7008
        %v7375 = vunpack.c.h.b16 %v7008
        %v7376 = vunpack.c.l.b16 %v7009
        %v7377 = vunpack.c.h.b16 %v7009
        %v7378 = vunpack.c.l.b16 %v7010
        %v7379 = vunpack.c.h.b16 %v7010
        %v7380 = vunpack.c.l.b16 %v7011
        %v7381 = vunpack.c.h.b16 %v7011
        %v7382 = vunpack.c.l.b16 %v7012
        %v7383 = vunpack.c.h.b16 %v7012
        %v7384 = vunpack.c.l.b16 %v7013
        %v7385 = vunpack.c.h.b16 %v7013
        %v7386 = vunpack.c.l.b16 %v7014
        %v7387 = vunpack.c.h.b16 %v7014
        %v7388 = vunpack.c.l.b16 %v7015
        %v7389 = vunpack.c.h.b16 %v7015
        %v7390 = vunpack.c.l.b16 %v7016
        %v7391 = vunpack.c.h.b16 %v7016
        %v7392 = vunpack.c.l.b16 %v7017
        %v7393 = vunpack.c.h.b16 %v7017
        %v7394 = vunpack.c.l.b16 %v7018
        %v7395 = vunpack.c.h.b16 %v7018
        %v7396 = vunpack.c.l.b16 %v7019
        %v7397 = vunpack.c.h.b16 %v7019
        %v7398 = vunpack.c.l.b16 %v7020
        %v7399 = vunpack.c.h.b16 %v7020
        %v7400 = vunpack.c.l.b16 %v7021
        %v7401 = vunpack.c.h.b16 %v7021
        %v7402 = vunpack.c.l.b16 %v7022
        %v7403 = vunpack.c.h.b16 %v7022
        %v7404 = vunpack.c.l.b16 %v7023
        %v7405 = vunpack.c.h.b16 %v7023
        %v7406 = vunpack.c.l.b16 %v7024
        %v7407 = vunpack.c.h.b16 %v7024
        %v7408 = vunpack.c.l.b16 %v7025
        %v7409 = vunpack.c.h.b16 %v7025
        %v7410 = vunpack.c.l.b16 %v7026
        %v7411 = vunpack.c.h.b16 %v7026
        %v7412 = vunpack.c.l.b16 %v7027
        %v7413 = vunpack.c.h.b16 %v7027
        %v7414 = vunpack.c.l.b16 %v7028
        %v7415 = vunpack.c.h.b16 %v7028
        %v7416 = vunpack.c.l.b16 %v7029
        %v7417 = vunpack.c.h.b16 %v7029
        %v7418 = vunpack.c.l.b16 %v7030
        %v7419 = vunpack.c.h.b16 %v7030
        %v7420 = vunpack.c.l.b16 %v7031
        %v7421 = vunpack.c.h.b16 %v7031
        %v7422 = vunpack.c.l.b16 %v7032
        %v7423 = vunpack.c.h.b16 %v7032
        %v7424 = vunpack.c.l.b16 %v7033
        %v7425 = vunpack.c.h.b16 %v7033
        %v7426 = vunpack.c.l.b16 %v7034
        %v7427 = vunpack.c.h.b16 %v7034
        %v7428 = vunpack.c.l.b16 %v7035
        %v7429 = vunpack.c.h.b16 %v7035
        %v7430 = vpack.c.b16 %v7178, %v7174
        %v7431 = vpack.c.b16 %v7179, %v7175
        %v7432 = vpack.c.b16 %v7180, %v7176
        %v7433 = vpack.c.b16 %v7181, %v7177
        %v7434 = vpack.c.b16 %v7186, %v7182
        %v7435 = vpack.c.b16 %v7187, %v7183
        %v7436 = vpack.c.b16 %v7188, %v7184
        %v7437 = vpack.c.b16 %v7189, %v7185
        %v7438 = vpack.c.b16 %v7194, %v7190
        %v7439 = vpack.c.b16 %v7195, %v7191
        %v7440 = vpack.c.b16 %v7196, %v7192
        %v7441 = vpack.c.b16 %v7197, %v7193
        %v7442 = vpack.c.b16 %v7202, %v7198
        %v7443 = vpack.c.b16 %v7203, %v7199
        %v7444 = vpack.c.b16 %v7204, %v7200
        %v7445 = vpack.c.b16 %v7205, %v7201
        %v7446 = vpack.c.b16 %v7210, %v7206
        %v7447 = vpack.c.b16 %v7211, %v7207
        %v7448 = vpack.c.b16 %v7212, %v7208
        %v7449 = vpack.c.b16 %v7213, %v7209
        %v7450 = vpack.c.b16 %v7218, %v7214
        %v7451 = vpack.c.b16 %v7219, %v7215
        %v7452 = vpack.c.b16 %v7220, %v7216
        %v7453 = vpack.c.b16 %v7221, %v7217
        %v7454 = vpack.c.b16 %v7226, %v7222
        %v7455 = vpack.c.b16 %v7227, %v7223
        %v7456 = vpack.c.b16 %v7228, %v7224
        %v7457 = vpack.c.b16 %v7229, %v7225
        %v7458 = vpack.c.b16 %v7234, %v7230
        %v7459 = vpack.c.b16 %v7235, %v7231
        %v7460 = vpack.c.b16 %v7236, %v7232
        %v7461 = vpack.c.b16 %v7237, %v7233
        %v7462 = vpack.c.b16 %v7242, %v7238
        %v7463 = vpack.c.b16 %v7243, %v7239
        %v7464 = vpack.c.b16 %v7244, %v7240
        %v7465 = vpack.c.b16 %v7245, %v7241
        %v7466 = vpack.c.b16 %v7250, %v7246
        %v7467 = vpack.c.b16 %v7251, %v7247
        %v7468 = vpack.c.b16 %v7252, %v7248
        %v7469 = vpack.c.b16 %v7253, %v7249
        %v7470 = vpack.c.b16 %v7258, %v7254
        %v7471 = vpack.c.b16 %v7259, %v7255
        %v7472 = vpack.c.b16 %v7260, %v7256
        %v7473 = vpack.c.b16 %v7261, %v7257
        %v7474 = vpack.c.b16 %v7266, %v7262
        %v7475 = vpack.c.b16 %v7267, %v7263
        %v7476 = vpack.c.b16 %v7268, %v7264
        %v7477 = vpack.c.b16 %v7269, %v7265
        %v7478 = vpack.c.b16 %v7274, %v7270
        %v7479 = vpack.c.b16 %v7275, %v7271
        %v7480 = vpack.c.b16 %v7276, %v7272
        %v7481 = vpack.c.b16 %v7277, %v7273
        %v7482 = vpack.c.b16 %v7282, %v7278
        %v7483 = vpack.c.b16 %v7283, %v7279
        %v7484 = vpack.c.b16 %v7284, %v7280
        %v7485 = vpack.c.b16 %v7285, %v7281
        %v7486 = vpack.c.b16 %v7290, %v7286
        %v7487 = vpack.c.b16 %v7291, %v7287
        %v7488 = vpack.c.b16 %v7292, %v7288
        %v7489 = vpack.c.b16 %v7293, %v7289
        %v7490 = vpack.c.b16 %v7298, %v7294
        %v7491 = vpack.c.b16 %v7299, %v7295
        %v7492 = vpack.c.b16 %v7300, %v7296
        %v7493 = vpack.c.b16 %v7301, %v7297
        %v7494 = vpack.c.b16 %v7306, %v7302
        %v7495 = vpack.c.b16 %v7307, %v7303
        %v7496 = vpack.c.b16 %v7308, %v7304
        %v7497 = vpack.c.b16 %v7309, %v7305
        %v7498 = vpack.c.b16 %v7314, %v7310
        %v7499 = vpack.c.b16 %v7315, %v7311
        %v7500 = vpack.c.b16 %v7316, %v7312
        %v7501 = vpack.c.b16 %v7317, %v7313
        %v7502 = vpack.c.b16 %v7322, %v7318
        %v7503 = vpack.c.b16 %v7323, %v7319
        %v7504 = vpack.c.b16 %v7324, %v7320
        %v7505 = vpack.c.b16 %v7325, %v7321
        %v7506 = vpack.c.b16 %v7330, %v7326
        %v7507 = vpack.c.b16 %v7331, %v7327
        %v7508 = vpack.c.b16 %v7332, %v7328
        %v7509 = vpack.c.b16 %v7333, %v7329
        %v7510 = vpack.c.b16 %v7338, %v7334
        %v7511 = vpack.c.b16 %v7339, %v7335
        %v7512 = vpack.c.b16 %v7340, %v7336
        %v7513 = vpack.c.b16 %v7341, %v7337
        %v7514 = vpack.c.b16 %v7346, %v7342
        %v7515 = vpack.c.b16 %v7347, %v7343
        %v7516 = vpack.c.b16 %v7348, %v7344
        %v7517 = vpack.c.b16 %v7349, %v7345
        %v7518 = vpack.c.b16 %v7354, %v7350
        %v7519 = vpack.c.b16 %v7355, %v7351
        %v7520 = vpack.c.b16 %v7356, %v7352
        %v7521 = vpack.c.b16 %v7357, %v7353
        %v7522 = vpack.c.b16 %v7362, %v7358
        %v7523 = vpack.c.b16 %v7363, %v7359
        %v7524 = vpack.c.b16 %v7364, %v7360
        %v7525 = vpack.c.b16 %v7365, %v7361
        %v7526 = vpack.c.b16 %v7370, %v7366
        %v7527 = vpack.c.b16 %v7371, %v7367
        %v7528 = vpack.c.b16 %v7372, %v7368
        %v7529 = vpack.c.b16 %v7373, %v7369
        %v7530 = vpack.c.b16 %v7378, %v7374
        %v7531 = vpack.c.b16 %v7379, %v7375
        %v7532 = vpack.c.b16 %v7380, %v7376
        %v7533 = vpack.c.b16 %v7381, %v7377
        %v7534 = vpack.c.b16 %v7386, %v7382
        %v7535 = vpack.c.b16 %v7387, %v7383
        %v7536 = vpack.c.b16 %v7388, %v7384
        %v7537 = vpack.c.b16 %v7389, %v7385
        %v7538 = vpack.c.b16 %v7394, %v7390
        %v7539 = vpack.c.b16 %v7395, %v7391
        %v7540 = vpack.c.b16 %v7396, %v7392
        %v7541 = vpack.c.b16 %v7397, %v7393
        %v7542 = vpack.c.b16 %v7402, %v7398
        %v7543 = vpack.c.b16 %v7403, %v7399
        %v7544 = vpack.c.b16 %v7404, %v7400
        %v7545 = vpack.c.b16 %v7405, %v7401
        %v7546 = vpack.c.b16 %v7410, %v7406
        %v7547 = vpack.c.b16 %v7411, %v7407
        %v7548 = vpack.c.b16 %v7412, %v7408
        %v7549 = vpack.c.b16 %v7413, %v7409
        %v7550 = vpack.c.b16 %v7418, %v7414
        %v7551 = vpack.c.b16 %v7419, %v7415
        %v7552 = vpack.c.b16 %v7420, %v7416
        %v7553 = vpack.c.b16 %v7421, %v7417
        %v7554 = vpack.c.b16 %v7426, %v7422
        %v7555 = vpack.c.b16 %v7427, %v7423
        %v7556 = vpack.c.b16 %v7428, %v7424
        %v7557 = vpack.c.b16 %v7429, %v7425
        %7686 = vmatpush.bf16.msra.mxu0 %v7458
        %7687 = vmatpush.bf16.msra.mxu0 %v7454
        %7688 = vmatpush.bf16.msra.mxu0 %v7450
        %7689 = vmatpush.bf16.msra.mxu0 %v7446
        %7690 = vmatpush.bf16.msra.mxu0 %v7442
        %7691 = vmatpush.bf16.msra.mxu0 %v7438
        %7692 = vmatpush.bf16.msra.mxu0 %v7434
        %7693 = vmatpush.bf16.msra.mxu0 %v7430
        %7694 = vmatmul.bf16.gmra.mxu0 %v480
        %v7695 = vpop.f32.mrf.mxu0
        %v7696 = vadd.f32 %v7038, %v7695
        %v7697 = vpop.f32.mrf.mxu0
        %v7698 = vadd.f32 %v7038, %v7697
        %7699 = vmatmul.bf16.gmra.mxu0 %v484
        %v7700 = vpop.f32.mrf.mxu0
        %v7701 = vadd.f32 %v7038, %v7700
        %v7702 = vpop.f32.mrf.mxu0
        %v7703 = vadd.f32 %v7038, %v7702
        %7704 = vdwg.mxu0
        %7705 = vmatpush.bf16.msra.mxu0 %v7490
        %7706 = vmatpush.bf16.msra.mxu0 %v7486
        %7707 = vmatpush.bf16.msra.mxu0 %v7482
        %7708 = vmatpush.bf16.msra.mxu0 %v7478
        %7709 = vmatpush.bf16.msra.mxu0 %v7474
        %7710 = vmatpush.bf16.msra.mxu0 %v7470
        %7711 = vmatpush.bf16.msra.mxu0 %v7466
        %7712 = vmatpush.bf16.msra.mxu0 %v7462
        %7713 = vmatmul.bf16.gmra.mxu0 %v481
        %v7714 = vpop.f32.mrf.mxu0
        %v7715 = vadd.f32 %v7696, %v7714
        %v7716 = vpop.f32.mrf.mxu0
        %v7717 = vadd.f32 %v7698, %v7716
        %7718 = vmatmul.bf16.gmra.mxu0 %v485
        %v7719 = vpop.f32.mrf.mxu0
        %v7720 = vadd.f32 %v7701, %v7719
        %v7721 = vpop.f32.mrf.mxu0
        %v7722 = vadd.f32 %v7703, %v7721
        %7723 = vdwg.mxu0
        %7724 = vmatpush.bf16.msra.mxu0 %v7522
        %7725 = vmatpush.bf16.msra.mxu0 %v7518
        %7726 = vmatpush.bf16.msra.mxu0 %v7514
        %7727 = vmatpush.bf16.msra.mxu0 %v7510
        %7728 = vmatpush.bf16.msra.mxu0 %v7506
        %7729 = vmatpush.bf16.msra.mxu0 %v7502
        %7730 = vmatpush.bf16.msra.mxu0 %v7498
        %7731 = vmatpush.bf16.msra.mxu0 %v7494
        %7732 = vmatmul.bf16.gmra.mxu0 %v482
        %v7733 = vpop.f32.mrf.mxu0
        %v7734 = vadd.f32 %v7715, %v7733
        %v7735 = vpop.f32.mrf.mxu0
        %v7736 = vadd.f32 %v7717, %v7735
        %7737 = vmatmul.bf16.gmra.mxu0 %v486
        %v7738 = vpop.f32.mrf.mxu0
        %v7739 = vadd.f32 %v7720, %v7738
        %v7740 = vpop.f32.mrf.mxu0
        %v7741 = vadd.f32 %v7722, %v7740
        %7742 = vdwg.mxu0
        %7743 = vmatpush.bf16.msra.mxu0 %v7554
        %7744 = vmatpush.bf16.msra.mxu0 %v7550
        %7745 = vmatpush.bf16.msra.mxu0 %v7546
        %7746 = vmatpush.bf16.msra.mxu0 %v7542
        %7747 = vmatpush.bf16.msra.mxu0 %v7538
        %7748 = vmatpush.bf16.msra.mxu0 %v7534
        %7749 = vmatpush.bf16.msra.mxu0 %v7530
        %7750 = vmatpush.bf16.msra.mxu0 %v7526
        %7751 = vmatmul.bf16.gmra.mxu0 %v483
        %v7752 = vpop.f32.mrf.mxu0
        %v7753 = vadd.f32 %v7734, %v7752
        %v7754 = vpop.f32.mrf.mxu0
        %v7755 = vadd.f32 %v7736, %v7754
        %7756 = vmatmul.bf16.gmra.mxu0 %v487
        %v7757 = vpop.f32.mrf.mxu0
        %v7758 = vadd.f32 %v7739, %v7757
        %v7759 = vpop.f32.mrf.mxu0
        %v7760 = vadd.f32 %v7741, %v7759
        %7761 = vdwg.mxu0
        %7762 = vmatpush.bf16.msra.mxu0 %v7459
        %7763 = vmatpush.bf16.msra.mxu0 %v7455
        %7764 = vmatpush.bf16.msra.mxu0 %v7451
        %7765 = vmatpush.bf16.msra.mxu0 %v7447
        %7766 = vmatpush.bf16.msra.mxu0 %v7443
        %7767 = vmatpush.bf16.msra.mxu0 %v7439
        %7768 = vmatpush.bf16.msra.mxu0 %v7435
        %7769 = vmatpush.bf16.msra.mxu0 %v7431
        %7770 = vmatmul.bf16.gmra.mxu0 %v480
        %v7771 = vpop.f32.mrf.mxu0
        %v7772 = vadd.f32 %v7039, %v7771
        %v7773 = vpop.f32.mrf.mxu0
        %v7774 = vadd.f32 %v7039, %v7773
        %7775 = vmatmul.bf16.gmra.mxu0 %v484
        %v7776 = vpop.f32.mrf.mxu0
        %v7777 = vadd.f32 %v7039, %v7776
        %v7778 = vpop.f32.mrf.mxu0
        %v7779 = vadd.f32 %v7039, %v7778
        %7780 = vdwg.mxu0
        %7781 = vmatpush.bf16.msra.mxu0 %v7491
        %7782 = vmatpush.bf16.msra.mxu0 %v7487
        %7783 = vmatpush.bf16.msra.mxu0 %v7483
        %7784 = vmatpush.bf16.msra.mxu0 %v7479
        %7785 = vmatpush.bf16.msra.mxu0 %v7475
        %7786 = vmatpush.bf16.msra.mxu0 %v7471
        %7787 = vmatpush.bf16.msra.mxu0 %v7467
        %7788 = vmatpush.bf16.msra.mxu0 %v7463
        %7789 = vmatmul.bf16.gmra.mxu0 %v481
        %v7790 = vpop.f32.mrf.mxu0
        %v7791 = vadd.f32 %v7772, %v7790
        %v7792 = vpop.f32.mrf.mxu0
        %v7793 = vadd.f32 %v7774, %v7792
        %7794 = vmatmul.bf16.gmra.mxu0 %v485
        %v7795 = vpop.f32.mrf.mxu0
        %v7796 = vadd.f32 %v7777, %v7795
        %v7797 = vpop.f32.mrf.mxu0
        %v7798 = vadd.f32 %v7779, %v7797
        %7799 = vdwg.mxu0
        %7800 = vmatpush.bf16.msra.mxu0 %v7523
        %7801 = vmatpush.bf16.msra.mxu0 %v7519
        %7802 = vmatpush.bf16.msra.mxu0 %v7515
        %7803 = vmatpush.bf16.msra.mxu0 %v7511
        %7804 = vmatpush.bf16.msra.mxu0 %v7507
        %7805 = vmatpush.bf16.msra.mxu0 %v7503
        %7806 = vmatpush.bf16.msra.mxu0 %v7499
        %7807 = vmatpush.bf16.msra.mxu0 %v7495
        %7808 = vmatmul.bf16.gmra.mxu0 %v482
        %v7809 = vpop.f32.mrf.mxu0
        %v7810 = vadd.f32 %v7791, %v7809
        %v7811 = vpop.f32.mrf.mxu0
        %v7812 = vadd.f32 %v7793, %v7811
        %7813 = vmatmul.bf16.gmra.mxu0 %v486
        %v7814 = vpop.f32.mrf.mxu0
        %v7815 = vadd.f32 %v7796, %v7814
        %v7816 = vpop.f32.mrf.mxu0
        %v7817 = vadd.f32 %v7798, %v7816
        %7818 = vdwg.mxu0
        %7819 = vmatpush.bf16.msra.mxu0 %v7555
        %7820 = vmatpush.bf16.msra.mxu0 %v7551
        %7821 = vmatpush.bf16.msra.mxu0 %v7547
        %7822 = vmatpush.bf16.msra.mxu0 %v7543
        %7823 = vmatpush.bf16.msra.mxu0 %v7539
        %7824 = vmatpush.bf16.msra.mxu0 %v7535
        %7825 = vmatpush.bf16.msra.mxu0 %v7531
        %7826 = vmatpush.bf16.msra.mxu0 %v7527
        %7827 = vmatmul.bf16.gmra.mxu0 %v483
        %v7828 = vpop.f32.mrf.mxu0
        %v7829 = vadd.f32 %v7810, %v7828
        %v7830 = vpop.f32.mrf.mxu0
        %v7831 = vadd.f32 %v7812, %v7830
        %7832 = vmatmul.bf16.gmra.mxu0 %v487
        %v7833 = vpop.f32.mrf.mxu0
        %v7834 = vadd.f32 %v7815, %v7833
        %v7835 = vpop.f32.mrf.mxu0
        %v7836 = vadd.f32 %v7817, %v7835
        %7837 = vdwg.mxu0
        %7838 = vmatpush.bf16.msra.mxu0 %v7460
        %7839 = vmatpush.bf16.msra.mxu0 %v7456
        %7840 = vmatpush.bf16.msra.mxu0 %v7452
        %7841 = vmatpush.bf16.msra.mxu0 %v7448
        %7842 = vmatpush.bf16.msra.mxu0 %v7444
        %7843 = vmatpush.bf16.msra.mxu0 %v7440
        %7844 = vmatpush.bf16.msra.mxu0 %v7436
        %7845 = vmatpush.bf16.msra.mxu0 %v7432
        %7846 = vmatmul.bf16.gmra.mxu0 %v480
        %v7847 = vpop.f32.mrf.mxu0
        %v7848 = vadd.f32 %v7040, %v7847
        %v7849 = vpop.f32.mrf.mxu0
        %v7850 = vadd.f32 %v7040, %v7849
        %7851 = vmatmul.bf16.gmra.mxu0 %v484
        %v7852 = vpop.f32.mrf.mxu0
        %v7853 = vadd.f32 %v7040, %v7852
        %v7854 = vpop.f32.mrf.mxu0
        %v7855 = vadd.f32 %v7040, %v7854
        %7856 = vdwg.mxu0
        %7857 = vmatpush.bf16.msra.mxu0 %v7492
        %7858 = vmatpush.bf16.msra.mxu0 %v7488
        %7859 = vmatpush.bf16.msra.mxu0 %v7484
        %7860 = vmatpush.bf16.msra.mxu0 %v7480
        %7861 = vmatpush.bf16.msra.mxu0 %v7476
        %7862 = vmatpush.bf16.msra.mxu0 %v7472
        %7863 = vmatpush.bf16.msra.mxu0 %v7468
        %7864 = vmatpush.bf16.msra.mxu0 %v7464
        %7865 = vmatmul.bf16.gmra.mxu0 %v481
        %v7866 = vpop.f32.mrf.mxu0
        %v7867 = vadd.f32 %v7848, %v7866
        %v7868 = vpop.f32.mrf.mxu0
        %v7869 = vadd.f32 %v7850, %v7868
        %7870 = vmatmul.bf16.gmra.mxu0 %v485
        %v7871 = vpop.f32.mrf.mxu0
        %v7872 = vadd.f32 %v7853, %v7871
        %v7873 = vpop.f32.mrf.mxu0
        %v7874 = vadd.f32 %v7855, %v7873
        %7875 = vdwg.mxu0
        %7876 = vmatpush.bf16.msra.mxu0 %v7524
        %7877 = vmatpush.bf16.msra.mxu0 %v7520
        %7878 = vmatpush.bf16.msra.mxu0 %v7516
        %7879 = vmatpush.bf16.msra.mxu0 %v7512
        %7880 = vmatpush.bf16.msra.mxu0 %v7508
        %7881 = vmatpush.bf16.msra.mxu0 %v7504
        %7882 = vmatpush.bf16.msra.mxu0 %v7500
        %7883 = vmatpush.bf16.msra.mxu0 %v7496
        %7884 = vmatmul.bf16.gmra.mxu0 %v482
        %v7885 = vpop.f32.mrf.mxu0
        %v7886 = vadd.f32 %v7867, %v7885
        %v7887 = vpop.f32.mrf.mxu0
        %v7888 = vadd.f32 %v7869, %v7887
        %7889 = vmatmul.bf16.gmra.mxu0 %v486
        %v7890 = vpop.f32.mrf.mxu0
        %v7891 = vadd.f32 %v7872, %v7890
        %v7892 = vpop.f32.mrf.mxu0
        %v7893 = vadd.f32 %v7874, %v7892
        %7894 = vdwg.mxu0
        %7895 = vmatpush.bf16.msra.mxu0 %v7556
        %7896 = vmatpush.bf16.msra.mxu0 %v7552
        %7897 = vmatpush.bf16.msra.mxu0 %v7548
        %7898 = vmatpush.bf16.msra.mxu0 %v7544
        %7899 = vmatpush.bf16.msra.mxu0 %v7540
        %7900 = vmatpush.bf16.msra.mxu0 %v7536
        %7901 = vmatpush.bf16.msra.mxu0 %v7532
        %7902 = vmatpush.bf16.msra.mxu0 %v7528
        %7903 = vmatmul.bf16.gmra.mxu0 %v483
        %v7904 = vpop.f32.mrf.mxu0
        %v7905 = vadd.f32 %v7886, %v7904
        %v7906 = vpop.f32.mrf.mxu0
        %v7907 = vadd.f32 %v7888, %v7906
        %7908 = vmatmul.bf16.gmra.mxu0 %v487
        %v7909 = vpop.f32.mrf.mxu0
        %v7910 = vadd.f32 %v7891, %v7909
        %v7911 = vpop.f32.mrf.mxu0
        %v7912 = vadd.f32 %v7893, %v7911
        %7913 = vdwg.mxu0
        %7914 = vmatpush.bf16.msra.mxu0 %v7461
        %7915 = vmatpush.bf16.msra.mxu0 %v7457
        %7916 = vmatpush.bf16.msra.mxu0 %v7453
        %7917 = vmatpush.bf16.msra.mxu0 %v7449
        %7918 = vmatpush.bf16.msra.mxu0 %v7445
        %7919 = vmatpush.bf16.msra.mxu0 %v7441
        %7920 = vmatpush.bf16.msra.mxu0 %v7437
        %7921 = vmatpush.bf16.msra.mxu0 %v7433
        %7922 = vmatmul.bf16.gmra.mxu0 %v480
        %v7923 = vpop.f32.mrf.mxu0
        %v7924 = vadd.f32 %v7041, %v7923
        %v7925 = vpop.f32.mrf.mxu0
        %v7926 = vadd.f32 %v7041, %v7925
        %7927 = vmatmul.bf16.gmra.mxu0 %v484
        %v7928 = vpop.f32.mrf.mxu0
        %v7929 = vadd.f32 %v7041, %v7928
        %v7930 = vpop.f32.mrf.mxu0
        %v7931 = vadd.f32 %v7041, %v7930
        %7932 = vdwg.mxu0
        %7933 = vmatpush.bf16.msra.mxu0 %v7493
        %7934 = vmatpush.bf16.msra.mxu0 %v7489
        %7935 = vmatpush.bf16.msra.mxu0 %v7485
        %7936 = vmatpush.bf16.msra.mxu0 %v7481
        %7937 = vmatpush.bf16.msra.mxu0 %v7477
        %7938 = vmatpush.bf16.msra.mxu0 %v7473
        %7939 = vmatpush.bf16.msra.mxu0 %v7469
        %7940 = vmatpush.bf16.msra.mxu0 %v7465
        %7941 = vmatmul.bf16.gmra.mxu0 %v481
        %v7942 = vpop.f32.mrf.mxu0
        %v7943 = vadd.f32 %v7924, %v7942
        %v7944 = vpop.f32.mrf.mxu0
        %v7945 = vadd.f32 %v7926, %v7944
        %7946 = vmatmul.bf16.gmra.mxu0 %v485
        %v7947 = vpop.f32.mrf.mxu0
        %v7948 = vadd.f32 %v7929, %v7947
        %v7949 = vpop.f32.mrf.mxu0
        %v7950 = vadd.f32 %v7931, %v7949
        %7951 = vdwg.mxu0
        %7952 = vmatpush.bf16.msra.mxu0 %v7525
        %7953 = vmatpush.bf16.msra.mxu0 %v7521
        %7954 = vmatpush.bf16.msra.mxu0 %v7517
        %7955 = vmatpush.bf16.msra.mxu0 %v7513
        %7956 = vmatpush.bf16.msra.mxu0 %v7509
        %7957 = vmatpush.bf16.msra.mxu0 %v7505
        %7958 = vmatpush.bf16.msra.mxu0 %v7501
        %7959 = vmatpush.bf16.msra.mxu0 %v7497
        %7960 = vmatmul.bf16.gmra.mxu0 %v482
        %v7961 = vpop.f32.mrf.mxu0
        %v7962 = vadd.f32 %v7943, %v7961
        %v7963 = vpop.f32.mrf.mxu0
        %v7964 = vadd.f32 %v7945, %v7963
        %7965 = vmatmul.bf16.gmra.mxu0 %v486
        %v7966 = vpop.f32.mrf.mxu0
        %v7967 = vadd.f32 %v7948, %v7966
        %v7968 = vpop.f32.mrf.mxu0
        %v7969 = vadd.f32 %v7950, %v7968
        %7970 = vdwg.mxu0
        %7971 = vmatpush.bf16.msra.mxu0 %v7557
        %7972 = vmatpush.bf16.msra.mxu0 %v7553
        %7973 = vmatpush.bf16.msra.mxu0 %v7549
        %7974 = vmatpush.bf16.msra.mxu0 %v7545
        %7975 = vmatpush.bf16.msra.mxu0 %v7541
        %7976 = vmatpush.bf16.msra.mxu0 %v7537
        %7977 = vmatpush.bf16.msra.mxu0 %v7533
        %7978 = vmatpush.bf16.msra.mxu0 %v7529
        %7979 = vmatmul.bf16.gmra.mxu0 %v483
        %v7980 = vpop.f32.mrf.mxu0
        %v7981 = vadd.f32 %v7962, %v7980
        %v7982 = vpop.f32.mrf.mxu0
        %v7983 = vadd.f32 %v7964, %v7982
        %7984 = vmatmul.bf16.gmra.mxu0 %v487
        %v7985 = vpop.f32.mrf.mxu0
        %v7986 = vadd.f32 %v7967, %v7985
        %v7987 = vpop.f32.mrf.mxu0
        %v7988 = vadd.f32 %v7969, %v7987
        %7989 = vdwg.mxu0
        %v7990 = vmax.f32 %v7753, 0.0
        %v7991 = vmax.f32 %v7829, 0.0
        %v7992 = vmax.f32 %v7905, 0.0
        %v7993 = vmax.f32 %v7981, 0.0
        %v7994 = vmax.f32 %v7755, 0.0
        %v7995 = vmax.f32 %v7831, 0.0
        %v7996 = vmax.f32 %v7907, 0.0
        %v7997 = vmax.f32 %v7983, 0.0
        %v7998 = vmax.f32 %v7758, 0.0
        %v7999 = vmax.f32 %v7834, 0.0
        %v8000 = vmax.f32 %v7910, 0.0
        %v8001 = vmax.f32 %v7986, 0.0
        %v8002 = vmax.f32 %v7760, 0.0
        %v8003 = vmax.f32 %v7836, 0.0
        %v8004 = vmax.f32 %v7912, 0.0
        %v8005 = vmax.f32 %v7988, 0.0
        %v8006 = vpack.c.bf16 %v7994, %v7990
        %v8007 = vpack.c.bf16 %v7995, %v7991
        %v8008 = vpack.c.bf16 %v7996, %v7992
        %v8009 = vpack.c.bf16 %v7997, %v7993
        %v8010 = vpack.c.bf16 %v8002, %v7998
        %v8011 = vpack.c.bf16 %v8003, %v7999
        %v8012 = vpack.c.bf16 %v8004, %v8000
        %v8013 = vpack.c.bf16 %v8005, %v8001
        %v8014 = vld [vmem:[#allocation8 + $0xc00] sm:$0xff]
        %v8015 = vld [vmem:[#allocation8 + $0xc08] sm:$0xff]
        %v8016 = vld [vmem:[#allocation8 + $0xc10] sm:$0xff]
        %v8017 = vld [vmem:[#allocation8 + $0xc18] sm:$0xff]
        %v8018 = vld [vmem:[#allocation8 + $0xc20] sm:$0xff]
        %v8019 = vld [vmem:[#allocation8 + $0xc28] sm:$0xff]
        %v8020 = vld [vmem:[#allocation8 + $0xc30] sm:$0xff]
        %v8021 = vld [vmem:[#allocation8 + $0xc38] sm:$0xff]
        %v8022 = vld [vmem:[#allocation8 + $0xc40] sm:$0xff]
        %v8023 = vld [vmem:[#allocation8 + $0xc48] sm:$0xff]
        %v8024 = vld [vmem:[#allocation8 + $0xc50] sm:$0xff]
        %v8025 = vld [vmem:[#allocation8 + $0xc58] sm:$0xff]
        %v8026 = vld [vmem:[#allocation8 + $0xc60] sm:$0xff]
        %v8027 = vld [vmem:[#allocation8 + $0xc68] sm:$0xff]
        %v8028 = vld [vmem:[#allocation8 + $0xc70] sm:$0xff]
        %v8029 = vld [vmem:[#allocation8 + $0xc78] sm:$0xff]
        %v8030 = vld [vmem:[#allocation8 + $0xc80] sm:$0xff]
        %v8031 = vld [vmem:[#allocation8 + $0xc88] sm:$0xff]
        %v8032 = vld [vmem:[#allocation8 + $0xc90] sm:$0xff]
        %v8033 = vld [vmem:[#allocation8 + $0xc98] sm:$0xff]
        %v8034 = vld [vmem:[#allocation8 + $0xca0] sm:$0xff]
        %v8035 = vld [vmem:[#allocation8 + $0xca8] sm:$0xff]
        %v8036 = vld [vmem:[#allocation8 + $0xcb0] sm:$0xff]
        %v8037 = vld [vmem:[#allocation8 + $0xcb8] sm:$0xff]
        %v8038 = vld [vmem:[#allocation8 + $0xcc0] sm:$0xff]
        %v8039 = vld [vmem:[#allocation8 + $0xcc8] sm:$0xff]
        %v8040 = vld [vmem:[#allocation8 + $0xcd0] sm:$0xff]
        %v8041 = vld [vmem:[#allocation8 + $0xcd8] sm:$0xff]
        %v8042 = vld [vmem:[#allocation8 + $0xce0] sm:$0xff]
        %v8043 = vld [vmem:[#allocation8 + $0xce8] sm:$0xff]
        %v8044 = vld [vmem:[#allocation8 + $0xcf0] sm:$0xff]
        %v8045 = vld [vmem:[#allocation8 + $0xcf8] sm:$0xff]
        %v8046 = vld [vmem:[#allocation8 + $0xd00] sm:$0xff]
        %v8047 = vld [vmem:[#allocation8 + $0xd08] sm:$0xff]
        %v8048 = vld [vmem:[#allocation8 + $0xd10] sm:$0xff]
        %v8049 = vld [vmem:[#allocation8 + $0xd18] sm:$0xff]
        %v8050 = vld [vmem:[#allocation8 + $0xd20] sm:$0xff]
        %v8051 = vld [vmem:[#allocation8 + $0xd28] sm:$0xff]
        %v8052 = vld [vmem:[#allocation8 + $0xd30] sm:$0xff]
        %v8053 = vld [vmem:[#allocation8 + $0xd38] sm:$0xff]
        %v8054 = vld [vmem:[#allocation8 + $0xd40] sm:$0xff]
        %v8055 = vld [vmem:[#allocation8 + $0xd48] sm:$0xff]
        %v8056 = vld [vmem:[#allocation8 + $0xd50] sm:$0xff]
        %v8057 = vld [vmem:[#allocation8 + $0xd58] sm:$0xff]
        %v8058 = vld [vmem:[#allocation8 + $0xd60] sm:$0xff]
        %v8059 = vld [vmem:[#allocation8 + $0xd68] sm:$0xff]
        %v8060 = vld [vmem:[#allocation8 + $0xd70] sm:$0xff]
        %v8061 = vld [vmem:[#allocation8 + $0xd78] sm:$0xff]
        %v8062 = vld [vmem:[#allocation8 + $0xd80] sm:$0xff]
        %v8063 = vld [vmem:[#allocation8 + $0xd88] sm:$0xff]
        %v8064 = vld [vmem:[#allocation8 + $0xd90] sm:$0xff]
        %v8065 = vld [vmem:[#allocation8 + $0xd98] sm:$0xff]
        %v8066 = vld [vmem:[#allocation8 + $0xda0] sm:$0xff]
        %v8067 = vld [vmem:[#allocation8 + $0xda8] sm:$0xff]
        %v8068 = vld [vmem:[#allocation8 + $0xdb0] sm:$0xff]
        %v8069 = vld [vmem:[#allocation8 + $0xdb8] sm:$0xff]
        %v8070 = vld [vmem:[#allocation8 + $0xdc0] sm:$0xff]
        %v8071 = vld [vmem:[#allocation8 + $0xdc8] sm:$0xff]
        %v8072 = vld [vmem:[#allocation8 + $0xdd0] sm:$0xff]
        %v8073 = vld [vmem:[#allocation8 + $0xdd8] sm:$0xff]
        %v8074 = vld [vmem:[#allocation8 + $0xde0] sm:$0xff]
        %v8075 = vld [vmem:[#allocation8 + $0xde8] sm:$0xff]
        %v8076 = vld [vmem:[#allocation8 + $0xdf0] sm:$0xff]
        %v8077 = vld [vmem:[#allocation8 + $0xdf8] sm:$0xff]
        %v8078 = vld [vmem:[#allocation8 + $0xe00] sm:$0xff]
        %v8079 = vld [vmem:[#allocation8 + $0xe08] sm:$0xff]
        %v8080 = vld [vmem:[#allocation8 + $0xe10] sm:$0xff]
        %v8081 = vld [vmem:[#allocation8 + $0xe18] sm:$0xff]
        %v8082 = vld [vmem:[#allocation8 + $0xe20] sm:$0xff]
        %v8083 = vld [vmem:[#allocation8 + $0xe28] sm:$0xff]
        %v8084 = vld [vmem:[#allocation8 + $0xe30] sm:$0xff]
        %v8085 = vld [vmem:[#allocation8 + $0xe38] sm:$0xff]
        %v8086 = vld [vmem:[#allocation8 + $0xe40] sm:$0xff]
        %v8087 = vld [vmem:[#allocation8 + $0xe48] sm:$0xff]
        %v8088 = vld [vmem:[#allocation8 + $0xe50] sm:$0xff]
        %v8089 = vld [vmem:[#allocation8 + $0xe58] sm:$0xff]
        %v8090 = vld [vmem:[#allocation8 + $0xe60] sm:$0xff]
        %v8091 = vld [vmem:[#allocation8 + $0xe68] sm:$0xff]
        %v8092 = vld [vmem:[#allocation8 + $0xe70] sm:$0xff]
        %v8093 = vld [vmem:[#allocation8 + $0xe78] sm:$0xff]
        %v8094 = vld [vmem:[#allocation8 + $0xe80] sm:$0xff]
        %v8095 = vld [vmem:[#allocation8 + $0xe88] sm:$0xff]
        %v8096 = vld [vmem:[#allocation8 + $0xe90] sm:$0xff]
        %v8097 = vld [vmem:[#allocation8 + $0xe98] sm:$0xff]
        %v8098 = vld [vmem:[#allocation8 + $0xea0] sm:$0xff]
        %v8099 = vld [vmem:[#allocation8 + $0xea8] sm:$0xff]
        %v8100 = vld [vmem:[#allocation8 + $0xeb0] sm:$0xff]
        %v8101 = vld [vmem:[#allocation8 + $0xeb8] sm:$0xff]
        %v8102 = vld [vmem:[#allocation8 + $0xec0] sm:$0xff]
        %v8103 = vld [vmem:[#allocation8 + $0xec8] sm:$0xff]
        %v8104 = vld [vmem:[#allocation8 + $0xed0] sm:$0xff]
        %v8105 = vld [vmem:[#allocation8 + $0xed8] sm:$0xff]
        %v8106 = vld [vmem:[#allocation8 + $0xee0] sm:$0xff]
        %v8107 = vld [vmem:[#allocation8 + $0xee8] sm:$0xff]
        %v8108 = vld [vmem:[#allocation8 + $0xef0] sm:$0xff]
        %v8109 = vld [vmem:[#allocation8 + $0xef8] sm:$0xff]
        %v8110 = vld [vmem:[#allocation8 + $0xf00] sm:$0xff]
        %v8111 = vld [vmem:[#allocation8 + $0xf08] sm:$0xff]
        %v8112 = vld [vmem:[#allocation8 + $0xf10] sm:$0xff]
        %v8113 = vld [vmem:[#allocation8 + $0xf18] sm:$0xff]
        %v8114 = vld [vmem:[#allocation8 + $0xf20] sm:$0xff]
        %v8115 = vld [vmem:[#allocation8 + $0xf28] sm:$0xff]
        %v8116 = vld [vmem:[#allocation8 + $0xf30] sm:$0xff]
        %v8117 = vld [vmem:[#allocation8 + $0xf38] sm:$0xff]
        %v8118 = vld [vmem:[#allocation8 + $0xf40] sm:$0xff]
        %v8119 = vld [vmem:[#allocation8 + $0xf48] sm:$0xff]
        %v8120 = vld [vmem:[#allocation8 + $0xf50] sm:$0xff]
        %v8121 = vld [vmem:[#allocation8 + $0xf58] sm:$0xff]
        %v8122 = vld [vmem:[#allocation8 + $0xf60] sm:$0xff]
        %v8123 = vld [vmem:[#allocation8 + $0xf68] sm:$0xff]
        %v8124 = vld [vmem:[#allocation8 + $0xf70] sm:$0xff]
        %v8125 = vld [vmem:[#allocation8 + $0xf78] sm:$0xff]
        %v8126 = vld [vmem:[#allocation8 + $0xf80] sm:$0xff]
        %v8127 = vld [vmem:[#allocation8 + $0xf88] sm:$0xff]
        %v8128 = vld [vmem:[#allocation8 + $0xf90] sm:$0xff]
        %v8129 = vld [vmem:[#allocation8 + $0xf98] sm:$0xff]
        %v8130 = vld [vmem:[#allocation8 + $0xfa0] sm:$0xff]
        %v8131 = vld [vmem:[#allocation8 + $0xfa8] sm:$0xff]
        %v8132 = vld [vmem:[#allocation8 + $0xfb0] sm:$0xff]
        %v8133 = vld [vmem:[#allocation8 + $0xfb8] sm:$0xff]
        %v8134 = vld [vmem:[#allocation8 + $0xfc0] sm:$0xff]
        %v8135 = vld [vmem:[#allocation8 + $0xfc8] sm:$0xff]
        %v8136 = vld [vmem:[#allocation8 + $0xfd0] sm:$0xff]
        %v8137 = vld [vmem:[#allocation8 + $0xfd8] sm:$0xff]
        %v8138 = vld [vmem:[#allocation8 + $0xfe0] sm:$0xff]
        %v8139 = vld [vmem:[#allocation8 + $0xfe8] sm:$0xff]
        %v8140 = vld [vmem:[#allocation8 + $0xff0] sm:$0xff]
        %v8141 = vld [vmem:[#allocation8 + $0xff8] sm:$0xff]
        %v8270 = vunpack.c.l.b16 %v8014
        %v8271 = vunpack.c.h.b16 %v8014
        %v8272 = vunpack.c.l.b16 %v8015
        %v8273 = vunpack.c.h.b16 %v8015
        %v8274 = vunpack.c.l.b16 %v8016
        %v8275 = vunpack.c.h.b16 %v8016
        %v8276 = vunpack.c.l.b16 %v8017
        %v8277 = vunpack.c.h.b16 %v8017
        %v8278 = vunpack.c.l.b16 %v8018
        %v8279 = vunpack.c.h.b16 %v8018
        %v8280 = vunpack.c.l.b16 %v8019
        %v8281 = vunpack.c.h.b16 %v8019
        %v8282 = vunpack.c.l.b16 %v8020
        %v8283 = vunpack.c.h.b16 %v8020
        %v8284 = vunpack.c.l.b16 %v8021
        %v8285 = vunpack.c.h.b16 %v8021
        %v8286 = vunpack.c.l.b16 %v8022
        %v8287 = vunpack.c.h.b16 %v8022
        %v8288 = vunpack.c.l.b16 %v8023
        %v8289 = vunpack.c.h.b16 %v8023
        %v8290 = vunpack.c.l.b16 %v8024
        %v8291 = vunpack.c.h.b16 %v8024
        %v8292 = vunpack.c.l.b16 %v8025
        %v8293 = vunpack.c.h.b16 %v8025
        %v8294 = vunpack.c.l.b16 %v8026
        %v8295 = vunpack.c.h.b16 %v8026
        %v8296 = vunpack.c.l.b16 %v8027
        %v8297 = vunpack.c.h.b16 %v8027
        %v8298 = vunpack.c.l.b16 %v8028
        %v8299 = vunpack.c.h.b16 %v8028
        %v8300 = vunpack.c.l.b16 %v8029
        %v8301 = vunpack.c.h.b16 %v8029
        %v8302 = vunpack.c.l.b16 %v8030
        %v8303 = vunpack.c.h.b16 %v8030
        %v8304 = vunpack.c.l.b16 %v8031
        %v8305 = vunpack.c.h.b16 %v8031
        %v8306 = vunpack.c.l.b16 %v8032
        %v8307 = vunpack.c.h.b16 %v8032
        %v8308 = vunpack.c.l.b16 %v8033
        %v8309 = vunpack.c.h.b16 %v8033
        %v8310 = vunpack.c.l.b16 %v8034
        %v8311 = vunpack.c.h.b16 %v8034
        %v8312 = vunpack.c.l.b16 %v8035
        %v8313 = vunpack.c.h.b16 %v8035
        %v8314 = vunpack.c.l.b16 %v8036
        %v8315 = vunpack.c.h.b16 %v8036
        %v8316 = vunpack.c.l.b16 %v8037
        %v8317 = vunpack.c.h.b16 %v8037
        %v8318 = vunpack.c.l.b16 %v8038
        %v8319 = vunpack.c.h.b16 %v8038
        %v8320 = vunpack.c.l.b16 %v8039
        %v8321 = vunpack.c.h.b16 %v8039
        %v8322 = vunpack.c.l.b16 %v8040
        %v8323 = vunpack.c.h.b16 %v8040
        %v8324 = vunpack.c.l.b16 %v8041
        %v8325 = vunpack.c.h.b16 %v8041
        %v8326 = vunpack.c.l.b16 %v8042
        %v8327 = vunpack.c.h.b16 %v8042
        %v8328 = vunpack.c.l.b16 %v8043
        %v8329 = vunpack.c.h.b16 %v8043
        %v8330 = vunpack.c.l.b16 %v8044
        %v8331 = vunpack.c.h.b16 %v8044
        %v8332 = vunpack.c.l.b16 %v8045
        %v8333 = vunpack.c.h.b16 %v8045
        %v8334 = vunpack.c.l.b16 %v8046
        %v8335 = vunpack.c.h.b16 %v8046
        %v8336 = vunpack.c.l.b16 %v8047
        %v8337 = vunpack.c.h.b16 %v8047
        %v8338 = vunpack.c.l.b16 %v8048
        %v8339 = vunpack.c.h.b16 %v8048
        %v8340 = vunpack.c.l.b16 %v8049
        %v8341 = vunpack.c.h.b16 %v8049
        %v8342 = vunpack.c.l.b16 %v8050
        %v8343 = vunpack.c.h.b16 %v8050
        %v8344 = vunpack.c.l.b16 %v8051
        %v8345 = vunpack.c.h.b16 %v8051
        %v8346 = vunpack.c.l.b16 %v8052
        %v8347 = vunpack.c.h.b16 %v8052
        %v8348 = vunpack.c.l.b16 %v8053
        %v8349 = vunpack.c.h.b16 %v8053
        %v8350 = vunpack.c.l.b16 %v8054
        %v8351 = vunpack.c.h.b16 %v8054
        %v8352 = vunpack.c.l.b16 %v8055
        %v8353 = vunpack.c.h.b16 %v8055
        %v8354 = vunpack.c.l.b16 %v8056
        %v8355 = vunpack.c.h.b16 %v8056
        %v8356 = vunpack.c.l.b16 %v8057
        %v8357 = vunpack.c.h.b16 %v8057
        %v8358 = vunpack.c.l.b16 %v8058
        %v8359 = vunpack.c.h.b16 %v8058
        %v8360 = vunpack.c.l.b16 %v8059
        %v8361 = vunpack.c.h.b16 %v8059
        %v8362 = vunpack.c.l.b16 %v8060
        %v8363 = vunpack.c.h.b16 %v8060
        %v8364 = vunpack.c.l.b16 %v8061
        %v8365 = vunpack.c.h.b16 %v8061
        %v8366 = vunpack.c.l.b16 %v8062
        %v8367 = vunpack.c.h.b16 %v8062
        %v8368 = vunpack.c.l.b16 %v8063
        %v8369 = vunpack.c.h.b16 %v8063
        %v8370 = vunpack.c.l.b16 %v8064
        %v8371 = vunpack.c.h.b16 %v8064
        %v8372 = vunpack.c.l.b16 %v8065
        %v8373 = vunpack.c.h.b16 %v8065
        %v8374 = vunpack.c.l.b16 %v8066
        %v8375 = vunpack.c.h.b16 %v8066
        %v8376 = vunpack.c.l.b16 %v8067
        %v8377 = vunpack.c.h.b16 %v8067
        %v8378 = vunpack.c.l.b16 %v8068
        %v8379 = vunpack.c.h.b16 %v8068
        %v8380 = vunpack.c.l.b16 %v8069
        %v8381 = vunpack.c.h.b16 %v8069
        %v8382 = vunpack.c.l.b16 %v8070
        %v8383 = vunpack.c.h.b16 %v8070
        %v8384 = vunpack.c.l.b16 %v8071
        %v8385 = vunpack.c.h.b16 %v8071
        %v8386 = vunpack.c.l.b16 %v8072
        %v8387 = vunpack.c.h.b16 %v8072
        %v8388 = vunpack.c.l.b16 %v8073
        %v8389 = vunpack.c.h.b16 %v8073
        %v8390 = vunpack.c.l.b16 %v8074
        %v8391 = vunpack.c.h.b16 %v8074
        %v8392 = vunpack.c.l.b16 %v8075
        %v8393 = vunpack.c.h.b16 %v8075
        %v8394 = vunpack.c.l.b16 %v8076
        %v8395 = vunpack.c.h.b16 %v8076
        %v8396 = vunpack.c.l.b16 %v8077
        %v8397 = vunpack.c.h.b16 %v8077
        %v8398 = vunpack.c.l.b16 %v8078
        %v8399 = vunpack.c.h.b16 %v8078
        %v8400 = vunpack.c.l.b16 %v8079
        %v8401 = vunpack.c.h.b16 %v8079
        %v8402 = vunpack.c.l.b16 %v8080
        %v8403 = vunpack.c.h.b16 %v8080
        %v8404 = vunpack.c.l.b16 %v8081
        %v8405 = vunpack.c.h.b16 %v8081
        %v8406 = vunpack.c.l.b16 %v8082
        %v8407 = vunpack.c.h.b16 %v8082
        %v8408 = vunpack.c.l.b16 %v8083
        %v8409 = vunpack.c.h.b16 %v8083
        %v8410 = vunpack.c.l.b16 %v8084
        %v8411 = vunpack.c.h.b16 %v8084
        %v8412 = vunpack.c.l.b16 %v8085
        %v8413 = vunpack.c.h.b16 %v8085
        %v8414 = vunpack.c.l.b16 %v8086
        %v8415 = vunpack.c.h.b16 %v8086
        %v8416 = vunpack.c.l.b16 %v8087
        %v8417 = vunpack.c.h.b16 %v8087
        %v8418 = vunpack.c.l.b16 %v8088
        %v8419 = vunpack.c.h.b16 %v8088
        %v8420 = vunpack.c.l.b16 %v8089
        %v8421 = vunpack.c.h.b16 %v8089
        %v8422 = vunpack.c.l.b16 %v8090
        %v8423 = vunpack.c.h.b16 %v8090
        %v8424 = vunpack.c.l.b16 %v8091
        %v8425 = vunpack.c.h.b16 %v8091
        %v8426 = vunpack.c.l.b16 %v8092
        %v8427 = vunpack.c.h.b16 %v8092
        %v8428 = vunpack.c.l.b16 %v8093
        %v8429 = vunpack.c.h.b16 %v8093
        %v8430 = vunpack.c.l.b16 %v8094
        %v8431 = vunpack.c.h.b16 %v8094
        %v8432 = vunpack.c.l.b16 %v8095
        %v8433 = vunpack.c.h.b16 %v8095
        %v8434 = vunpack.c.l.b16 %v8096
        %v8435 = vunpack.c.h.b16 %v8096
        %v8436 = vunpack.c.l.b16 %v8097
        %v8437 = vunpack.c.h.b16 %v8097
        %v8438 = vunpack.c.l.b16 %v8098
        %v8439 = vunpack.c.h.b16 %v8098
        %v8440 = vunpack.c.l.b16 %v8099
        %v8441 = vunpack.c.h.b16 %v8099
        %v8442 = vunpack.c.l.b16 %v8100
        %v8443 = vunpack.c.h.b16 %v8100
        %v8444 = vunpack.c.l.b16 %v8101
        %v8445 = vunpack.c.h.b16 %v8101
        %v8446 = vunpack.c.l.b16 %v8102
        %v8447 = vunpack.c.h.b16 %v8102
        %v8448 = vunpack.c.l.b16 %v8103
        %v8449 = vunpack.c.h.b16 %v8103
        %v8450 = vunpack.c.l.b16 %v8104
        %v8451 = vunpack.c.h.b16 %v8104
        %v8452 = vunpack.c.l.b16 %v8105
        %v8453 = vunpack.c.h.b16 %v8105
        %v8454 = vunpack.c.l.b16 %v8106
        %v8455 = vunpack.c.h.b16 %v8106
        %v8456 = vunpack.c.l.b16 %v8107
        %v8457 = vunpack.c.h.b16 %v8107
        %v8458 = vunpack.c.l.b16 %v8108
        %v8459 = vunpack.c.h.b16 %v8108
        %v8460 = vunpack.c.l.b16 %v8109
        %v8461 = vunpack.c.h.b16 %v8109
        %v8462 = vunpack.c.l.b16 %v8110
        %v8463 = vunpack.c.h.b16 %v8110
        %v8464 = vunpack.c.l.b16 %v8111
        %v8465 = vunpack.c.h.b16 %v8111
        %v8466 = vunpack.c.l.b16 %v8112
        %v8467 = vunpack.c.h.b16 %v8112
        %v8468 = vunpack.c.l.b16 %v8113
        %v8469 = vunpack.c.h.b16 %v8113
        %v8470 = vunpack.c.l.b16 %v8114
        %v8471 = vunpack.c.h.b16 %v8114
        %v8472 = vunpack.c.l.b16 %v8115
        %v8473 = vunpack.c.h.b16 %v8115
        %v8474 = vunpack.c.l.b16 %v8116
        %v8475 = vunpack.c.h.b16 %v8116
        %v8476 = vunpack.c.l.b16 %v8117
        %v8477 = vunpack.c.h.b16 %v8117
        %v8478 = vunpack.c.l.b16 %v8118
        %v8479 = vunpack.c.h.b16 %v8118
        %v8480 = vunpack.c.l.b16 %v8119
        %v8481 = vunpack.c.h.b16 %v8119
        %v8482 = vunpack.c.l.b16 %v8120
        %v8483 = vunpack.c.h.b16 %v8120
        %v8484 = vunpack.c.l.b16 %v8121
        %v8485 = vunpack.c.h.b16 %v8121
        %v8486 = vunpack.c.l.b16 %v8122
        %v8487 = vunpack.c.h.b16 %v8122
        %v8488 = vunpack.c.l.b16 %v8123
        %v8489 = vunpack.c.h.b16 %v8123
        %v8490 = vunpack.c.l.b16 %v8124
        %v8491 = vunpack.c.h.b16 %v8124
        %v8492 = vunpack.c.l.b16 %v8125
        %v8493 = vunpack.c.h.b16 %v8125
        %v8494 = vunpack.c.l.b16 %v8126
        %v8495 = vunpack.c.h.b16 %v8126
        %v8496 = vunpack.c.l.b16 %v8127
        %v8497 = vunpack.c.h.b16 %v8127
        %v8498 = vunpack.c.l.b16 %v8128
        %v8499 = vunpack.c.h.b16 %v8128
        %v8500 = vunpack.c.l.b16 %v8129
        %v8501 = vunpack.c.h.b16 %v8129
        %v8502 = vunpack.c.l.b16 %v8130
        %v8503 = vunpack.c.h.b16 %v8130
        %v8504 = vunpack.c.l.b16 %v8131
        %v8505 = vunpack.c.h.b16 %v8131
        %v8506 = vunpack.c.l.b16 %v8132
        %v8507 = vunpack.c.h.b16 %v8132
        %v8508 = vunpack.c.l.b16 %v8133
        %v8509 = vunpack.c.h.b16 %v8133
        %v8510 = vunpack.c.l.b16 %v8134
        %v8511 = vunpack.c.h.b16 %v8134
        %v8512 = vunpack.c.l.b16 %v8135
        %v8513 = vunpack.c.h.b16 %v8135
        %v8514 = vunpack.c.l.b16 %v8136
        %v8515 = vunpack.c.h.b16 %v8136
        %v8516 = vunpack.c.l.b16 %v8137
        %v8517 = vunpack.c.h.b16 %v8137
        %v8518 = vunpack.c.l.b16 %v8138
        %v8519 = vunpack.c.h.b16 %v8138
        %v8520 = vunpack.c.l.b16 %v8139
        %v8521 = vunpack.c.h.b16 %v8139
        %v8522 = vunpack.c.l.b16 %v8140
        %v8523 = vunpack.c.h.b16 %v8140
        %v8524 = vunpack.c.l.b16 %v8141
        %v8525 = vunpack.c.h.b16 %v8141
        %v8526 = vpack.c.b16 %v8274, %v8270
        %v8527 = vpack.c.b16 %v8275, %v8271
        %v8528 = vpack.c.b16 %v8276, %v8272
        %v8529 = vpack.c.b16 %v8277, %v8273
        %v8530 = vpack.c.b16 %v8282, %v8278
        %v8531 = vpack.c.b16 %v8283, %v8279
        %v8532 = vpack.c.b16 %v8284, %v8280
        %v8533 = vpack.c.b16 %v8285, %v8281
        %v8534 = vpack.c.b16 %v8290, %v8286
        %v8535 = vpack.c.b16 %v8291, %v8287
        %v8536 = vpack.c.b16 %v8292, %v8288
        %v8537 = vpack.c.b16 %v8293, %v8289
        %v8538 = vpack.c.b16 %v8298, %v8294
        %v8539 = vpack.c.b16 %v8299, %v8295
        %v8540 = vpack.c.b16 %v8300, %v8296
        %v8541 = vpack.c.b16 %v8301, %v8297
        %v8542 = vpack.c.b16 %v8306, %v8302
        %v8543 = vpack.c.b16 %v8307, %v8303
        %v8544 = vpack.c.b16 %v8308, %v8304
        %v8545 = vpack.c.b16 %v8309, %v8305
        %v8546 = vpack.c.b16 %v8314, %v8310
        %v8547 = vpack.c.b16 %v8315, %v8311
        %v8548 = vpack.c.b16 %v8316, %v8312
        %v8549 = vpack.c.b16 %v8317, %v8313
        %v8550 = vpack.c.b16 %v8322, %v8318
        %v8551 = vpack.c.b16 %v8323, %v8319
        %v8552 = vpack.c.b16 %v8324, %v8320
        %v8553 = vpack.c.b16 %v8325, %v8321
        %v8554 = vpack.c.b16 %v8330, %v8326
        %v8555 = vpack.c.b16 %v8331, %v8327
        %v8556 = vpack.c.b16 %v8332, %v8328
        %v8557 = vpack.c.b16 %v8333, %v8329
        %v8558 = vpack.c.b16 %v8338, %v8334
        %v8559 = vpack.c.b16 %v8339, %v8335
        %v8560 = vpack.c.b16 %v8340, %v8336
        %v8561 = vpack.c.b16 %v8341, %v8337
        %v8562 = vpack.c.b16 %v8346, %v8342
        %v8563 = vpack.c.b16 %v8347, %v8343
        %v8564 = vpack.c.b16 %v8348, %v8344
        %v8565 = vpack.c.b16 %v8349, %v8345
        %v8566 = vpack.c.b16 %v8354, %v8350
        %v8567 = vpack.c.b16 %v8355, %v8351
        %v8568 = vpack.c.b16 %v8356, %v8352
        %v8569 = vpack.c.b16 %v8357, %v8353
        %v8570 = vpack.c.b16 %v8362, %v8358
        %v8571 = vpack.c.b16 %v8363, %v8359
        %v8572 = vpack.c.b16 %v8364, %v8360
        %v8573 = vpack.c.b16 %v8365, %v8361
        %v8574 = vpack.c.b16 %v8370, %v8366
        %v8575 = vpack.c.b16 %v8371, %v8367
        %v8576 = vpack.c.b16 %v8372, %v8368
        %v8577 = vpack.c.b16 %v8373, %v8369
        %v8578 = vpack.c.b16 %v8378, %v8374
        %v8579 = vpack.c.b16 %v8379, %v8375
        %v8580 = vpack.c.b16 %v8380, %v8376
        %v8581 = vpack.c.b16 %v8381, %v8377
        %v8582 = vpack.c.b16 %v8386, %v8382
        %v8583 = vpack.c.b16 %v8387, %v8383
        %v8584 = vpack.c.b16 %v8388, %v8384
        %v8585 = vpack.c.b16 %v8389, %v8385
        %v8586 = vpack.c.b16 %v8394, %v8390
        %v8587 = vpack.c.b16 %v8395, %v8391
        %v8588 = vpack.c.b16 %v8396, %v8392
        %v8589 = vpack.c.b16 %v8397, %v8393
        %v8590 = vpack.c.b16 %v8402, %v8398
        %v8591 = vpack.c.b16 %v8403, %v8399
        %v8592 = vpack.c.b16 %v8404, %v8400
        %v8593 = vpack.c.b16 %v8405, %v8401
        %v8594 = vpack.c.b16 %v8410, %v8406
        %v8595 = vpack.c.b16 %v8411, %v8407
        %v8596 = vpack.c.b16 %v8412, %v8408
        %v8597 = vpack.c.b16 %v8413, %v8409
        %v8598 = vpack.c.b16 %v8418, %v8414
        %v8599 = vpack.c.b16 %v8419, %v8415
        %v8600 = vpack.c.b16 %v8420, %v8416
        %v8601 = vpack.c.b16 %v8421, %v8417
        %v8602 = vpack.c.b16 %v8426, %v8422
        %v8603 = vpack.c.b16 %v8427, %v8423
        %v8604 = vpack.c.b16 %v8428, %v8424
        %v8605 = vpack.c.b16 %v8429, %v8425
        %v8606 = vpack.c.b16 %v8434, %v8430
        %v8607 = vpack.c.b16 %v8435, %v8431
        %v8608 = vpack.c.b16 %v8436, %v8432
        %v8609 = vpack.c.b16 %v8437, %v8433
        %v8610 = vpack.c.b16 %v8442, %v8438
        %v8611 = vpack.c.b16 %v8443, %v8439
        %v8612 = vpack.c.b16 %v8444, %v8440
        %v8613 = vpack.c.b16 %v8445, %v8441
        %v8614 = vpack.c.b16 %v8450, %v8446
        %v8615 = vpack.c.b16 %v8451, %v8447
        %v8616 = vpack.c.b16 %v8452, %v8448
        %v8617 = vpack.c.b16 %v8453, %v8449
        %v8618 = vpack.c.b16 %v8458, %v8454
        %v8619 = vpack.c.b16 %v8459, %v8455
        %v8620 = vpack.c.b16 %v8460, %v8456
        %v8621 = vpack.c.b16 %v8461, %v8457
        %v8622 = vpack.c.b16 %v8466, %v8462
        %v8623 = vpack.c.b16 %v8467, %v8463
        %v8624 = vpack.c.b16 %v8468, %v8464
        %v8625 = vpack.c.b16 %v8469, %v8465
        %v8626 = vpack.c.b16 %v8474, %v8470
        %v8627 = vpack.c.b16 %v8475, %v8471
        %v8628 = vpack.c.b16 %v8476, %v8472
        %v8629 = vpack.c.b16 %v8477, %v8473
        %v8630 = vpack.c.b16 %v8482, %v8478
        %v8631 = vpack.c.b16 %v8483, %v8479
        %v8632 = vpack.c.b16 %v8484, %v8480
        %v8633 = vpack.c.b16 %v8485, %v8481
        %v8634 = vpack.c.b16 %v8490, %v8486
        %v8635 = vpack.c.b16 %v8491, %v8487
        %v8636 = vpack.c.b16 %v8492, %v8488
        %v8637 = vpack.c.b16 %v8493, %v8489
        %v8638 = vpack.c.b16 %v8498, %v8494
        %v8639 = vpack.c.b16 %v8499, %v8495
        %v8640 = vpack.c.b16 %v8500, %v8496
        %v8641 = vpack.c.b16 %v8501, %v8497
        %v8642 = vpack.c.b16 %v8506, %v8502
        %v8643 = vpack.c.b16 %v8507, %v8503
        %v8644 = vpack.c.b16 %v8508, %v8504
        %v8645 = vpack.c.b16 %v8509, %v8505
        %v8646 = vpack.c.b16 %v8514, %v8510
        %v8647 = vpack.c.b16 %v8515, %v8511
        %v8648 = vpack.c.b16 %v8516, %v8512
        %v8649 = vpack.c.b16 %v8517, %v8513
        %v8650 = vpack.c.b16 %v8522, %v8518
        %v8651 = vpack.c.b16 %v8523, %v8519
        %v8652 = vpack.c.b16 %v8524, %v8520
        %v8653 = vpack.c.b16 %v8525, %v8521
        %8782 = vmatpush.bf16.msra.mxu0 %v8554
        %8783 = vmatpush.bf16.msra.mxu0 %v8550
        %8784 = vmatpush.bf16.msra.mxu0 %v8546
        %8785 = vmatpush.bf16.msra.mxu0 %v8542
        %8786 = vmatpush.bf16.msra.mxu0 %v8538
        %8787 = vmatpush.bf16.msra.mxu0 %v8534
        %8788 = vmatpush.bf16.msra.mxu0 %v8530
        %8789 = vmatpush.bf16.msra.mxu0 %v8526
        %8790 = vmatmul.bf16.gmra.mxu0 %v8006
        %v8791 = vpop.f32.mrf.mxu0
        %v8792 = vadd.f32 0.0, %v8791
        %v8793 = vpop.f32.mrf.mxu0
        %v8794 = vadd.f32 0.0, %v8793
        %8795 = vmatmul.bf16.gmra.mxu0 %v8010
        %v8796 = vpop.f32.mrf.mxu0
        %v8797 = vadd.f32 0.0, %v8796
        %v8798 = vpop.f32.mrf.mxu0
        %v8799 = vadd.f32 0.0, %v8798
        %8800 = vdwg.mxu0
        %8801 = vmatpush.bf16.msra.mxu0 %v8586
        %8802 = vmatpush.bf16.msra.mxu0 %v8582
        %8803 = vmatpush.bf16.msra.mxu0 %v8578
        %8804 = vmatpush.bf16.msra.mxu0 %v8574
        %8805 = vmatpush.bf16.msra.mxu0 %v8570
        %8806 = vmatpush.bf16.msra.mxu0 %v8566
        %8807 = vmatpush.bf16.msra.mxu0 %v8562
        %8808 = vmatpush.bf16.msra.mxu0 %v8558
        %8809 = vmatmul.bf16.gmra.mxu0 %v8007
        %v8810 = vpop.f32.mrf.mxu0
        %v8811 = vadd.f32 %v8792, %v8810
        %v8812 = vpop.f32.mrf.mxu0
        %v8813 = vadd.f32 %v8794, %v8812
        %8814 = vmatmul.bf16.gmra.mxu0 %v8011
        %v8815 = vpop.f32.mrf.mxu0
        %v8816 = vadd.f32 %v8797, %v8815
        %v8817 = vpop.f32.mrf.mxu0
        %v8818 = vadd.f32 %v8799, %v8817
        %8819 = vdwg.mxu0
        %8820 = vmatpush.bf16.msra.mxu0 %v8618
        %8821 = vmatpush.bf16.msra.mxu0 %v8614
        %8822 = vmatpush.bf16.msra.mxu0 %v8610
        %8823 = vmatpush.bf16.msra.mxu0 %v8606
        %8824 = vmatpush.bf16.msra.mxu0 %v8602
        %8825 = vmatpush.bf16.msra.mxu0 %v8598
        %8826 = vmatpush.bf16.msra.mxu0 %v8594
        %8827 = vmatpush.bf16.msra.mxu0 %v8590
        %8828 = vmatmul.bf16.gmra.mxu0 %v8008
        %v8829 = vpop.f32.mrf.mxu0
        %v8830 = vadd.f32 %v8811, %v8829
        %v8831 = vpop.f32.mrf.mxu0
        %v8832 = vadd.f32 %v8813, %v8831
        %8833 = vmatmul.bf16.gmra.mxu0 %v8012
        %v8834 = vpop.f32.mrf.mxu0
        %v8835 = vadd.f32 %v8816, %v8834
        %v8836 = vpop.f32.mrf.mxu0
        %v8837 = vadd.f32 %v8818, %v8836
        %8838 = vdwg.mxu0
        %8839 = vmatpush.bf16.msra.mxu0 %v8650
        %8840 = vmatpush.bf16.msra.mxu0 %v8646
        %8841 = vmatpush.bf16.msra.mxu0 %v8642
        %8842 = vmatpush.bf16.msra.mxu0 %v8638
        %8843 = vmatpush.bf16.msra.mxu0 %v8634
        %8844 = vmatpush.bf16.msra.mxu0 %v8630
        %8845 = vmatpush.bf16.msra.mxu0 %v8626
        %8846 = vmatpush.bf16.msra.mxu0 %v8622
        %8847 = vmatmul.bf16.gmra.mxu0 %v8009
        %v8848 = vpop.f32.mrf.mxu0
        %v8849 = vadd.f32 %v8830, %v8848
        %v8850 = vpop.f32.mrf.mxu0
        %v8851 = vadd.f32 %v8832, %v8850
        %8852 = vmatmul.bf16.gmra.mxu0 %v8013
        %v8853 = vpop.f32.mrf.mxu0
        %v8854 = vadd.f32 %v8835, %v8853
        %v8855 = vpop.f32.mrf.mxu0
        %v8856 = vadd.f32 %v8837, %v8855
        %8857 = vdwg.mxu0
        %8858 = vmatpush.bf16.msra.mxu0 %v8555
        %8859 = vmatpush.bf16.msra.mxu0 %v8551
        %8860 = vmatpush.bf16.msra.mxu0 %v8547
        %8861 = vmatpush.bf16.msra.mxu0 %v8543
        %8862 = vmatpush.bf16.msra.mxu0 %v8539
        %8863 = vmatpush.bf16.msra.mxu0 %v8535
        %8864 = vmatpush.bf16.msra.mxu0 %v8531
        %8865 = vmatpush.bf16.msra.mxu0 %v8527
        %8866 = vmatmul.bf16.gmra.mxu0 %v8006
        %v8867 = vpop.f32.mrf.mxu0
        %v8868 = vadd.f32 0.0, %v8867
        %v8869 = vpop.f32.mrf.mxu0
        %v8870 = vadd.f32 0.0, %v8869
        %8871 = vmatmul.bf16.gmra.mxu0 %v8010
        %v8872 = vpop.f32.mrf.mxu0
        %v8873 = vadd.f32 0.0, %v8872
        %v8874 = vpop.f32.mrf.mxu0
        %v8875 = vadd.f32 0.0, %v8874
        %8876 = vdwg.mxu0
        %8877 = vmatpush.bf16.msra.mxu0 %v8587
        %8878 = vmatpush.bf16.msra.mxu0 %v8583
        %8879 = vmatpush.bf16.msra.mxu0 %v8579
        %8880 = vmatpush.bf16.msra.mxu0 %v8575
        %8881 = vmatpush.bf16.msra.mxu0 %v8571
        %8882 = vmatpush.bf16.msra.mxu0 %v8567
        %8883 = vmatpush.bf16.msra.mxu0 %v8563
        %8884 = vmatpush.bf16.msra.mxu0 %v8559
        %8885 = vmatmul.bf16.gmra.mxu0 %v8007
        %v8886 = vpop.f32.mrf.mxu0
        %v8887 = vadd.f32 %v8868, %v8886
        %v8888 = vpop.f32.mrf.mxu0
        %v8889 = vadd.f32 %v8870, %v8888
        %8890 = vmatmul.bf16.gmra.mxu0 %v8011
        %v8891 = vpop.f32.mrf.mxu0
        %v8892 = vadd.f32 %v8873, %v8891
        %v8893 = vpop.f32.mrf.mxu0
        %v8894 = vadd.f32 %v8875, %v8893
        %8895 = vdwg.mxu0
        %8896 = vmatpush.bf16.msra.mxu0 %v8619
        %8897 = vmatpush.bf16.msra.mxu0 %v8615
        %8898 = vmatpush.bf16.msra.mxu0 %v8611
        %8899 = vmatpush.bf16.msra.mxu0 %v8607
        %8900 = vmatpush.bf16.msra.mxu0 %v8603
        %8901 = vmatpush.bf16.msra.mxu0 %v8599
        %8902 = vmatpush.bf16.msra.mxu0 %v8595
        %8903 = vmatpush.bf16.msra.mxu0 %v8591
        %8904 = vmatmul.bf16.gmra.mxu0 %v8008
        %v8905 = vpop.f32.mrf.mxu0
        %v8906 = vadd.f32 %v8887, %v8905
        %v8907 = vpop.f32.mrf.mxu0
        %v8908 = vadd.f32 %v8889, %v8907
        %8909 = vmatmul.bf16.gmra.mxu0 %v8012
        %v8910 = vpop.f32.mrf.mxu0
        %v8911 = vadd.f32 %v8892, %v8910
        %v8912 = vpop.f32.mrf.mxu0
        %v8913 = vadd.f32 %v8894, %v8912
        %8914 = vdwg.mxu0
        %8915 = vmatpush.bf16.msra.mxu0 %v8651
        %8916 = vmatpush.bf16.msra.mxu0 %v8647
        %8917 = vmatpush.bf16.msra.mxu0 %v8643
        %8918 = vmatpush.bf16.msra.mxu0 %v8639
        %8919 = vmatpush.bf16.msra.mxu0 %v8635
        %8920 = vmatpush.bf16.msra.mxu0 %v8631
        %8921 = vmatpush.bf16.msra.mxu0 %v8627
        %8922 = vmatpush.bf16.msra.mxu0 %v8623
        %8923 = vmatmul.bf16.gmra.mxu0 %v8009
        %v8924 = vpop.f32.mrf.mxu0
        %v8925 = vadd.f32 %v8906, %v8924
        %v8926 = vpop.f32.mrf.mxu0
        %v8927 = vadd.f32 %v8908, %v8926
        %8928 = vmatmul.bf16.gmra.mxu0 %v8013
        %v8929 = vpop.f32.mrf.mxu0
        %v8930 = vadd.f32 %v8911, %v8929
        %v8931 = vpop.f32.mrf.mxu0
        %v8932 = vadd.f32 %v8913, %v8931
        %8933 = vdwg.mxu0
        %8934 = vmatpush.bf16.msra.mxu0 %v8556
        %8935 = vmatpush.bf16.msra.mxu0 %v8552
        %8936 = vmatpush.bf16.msra.mxu0 %v8548
        %8937 = vmatpush.bf16.msra.mxu0 %v8544
        %8938 = vmatpush.bf16.msra.mxu0 %v8540
        %8939 = vmatpush.bf16.msra.mxu0 %v8536
        %8940 = vmatpush.bf16.msra.mxu0 %v8532
        %8941 = vmatpush.bf16.msra.mxu0 %v8528
        %8942 = vmatmul.bf16.gmra.mxu0 %v8006
        %v8943 = vpop.f32.mrf.mxu0
        %v8944 = vadd.f32 0.0, %v8943
        %v8945 = vpop.f32.mrf.mxu0
        %v8946 = vadd.f32 0.0, %v8945
        %8947 = vmatmul.bf16.gmra.mxu0 %v8010
        %v8948 = vpop.f32.mrf.mxu0
        %v8949 = vadd.f32 0.0, %v8948
        %v8950 = vpop.f32.mrf.mxu0
        %v8951 = vadd.f32 0.0, %v8950
        %8952 = vdwg.mxu0
        %8953 = vmatpush.bf16.msra.mxu0 %v8588
        %8954 = vmatpush.bf16.msra.mxu0 %v8584
        %8955 = vmatpush.bf16.msra.mxu0 %v8580
        %8956 = vmatpush.bf16.msra.mxu0 %v8576
        %8957 = vmatpush.bf16.msra.mxu0 %v8572
        %8958 = vmatpush.bf16.msra.mxu0 %v8568
        %8959 = vmatpush.bf16.msra.mxu0 %v8564
        %8960 = vmatpush.bf16.msra.mxu0 %v8560
        %8961 = vmatmul.bf16.gmra.mxu0 %v8007
        %v8962 = vpop.f32.mrf.mxu0
        %v8963 = vadd.f32 %v8944, %v8962
        %v8964 = vpop.f32.mrf.mxu0
        %v8965 = vadd.f32 %v8946, %v8964
        %8966 = vmatmul.bf16.gmra.mxu0 %v8011
        %v8967 = vpop.f32.mrf.mxu0
        %v8968 = vadd.f32 %v8949, %v8967
        %v8969 = vpop.f32.mrf.mxu0
        %v8970 = vadd.f32 %v8951, %v8969
        %8971 = vdwg.mxu0
        %8972 = vmatpush.bf16.msra.mxu0 %v8620
        %8973 = vmatpush.bf16.msra.mxu0 %v8616
        %8974 = vmatpush.bf16.msra.mxu0 %v8612
        %8975 = vmatpush.bf16.msra.mxu0 %v8608
        %8976 = vmatpush.bf16.msra.mxu0 %v8604
        %8977 = vmatpush.bf16.msra.mxu0 %v8600
        %8978 = vmatpush.bf16.msra.mxu0 %v8596
        %8979 = vmatpush.bf16.msra.mxu0 %v8592
        %8980 = vmatmul.bf16.gmra.mxu0 %v8008
        %v8981 = vpop.f32.mrf.mxu0
        %v8982 = vadd.f32 %v8963, %v8981
        %v8983 = vpop.f32.mrf.mxu0
        %v8984 = vadd.f32 %v8965, %v8983
        %8985 = vmatmul.bf16.gmra.mxu0 %v8012
        %v8986 = vpop.f32.mrf.mxu0
        %v8987 = vadd.f32 %v8968, %v8986
        %v8988 = vpop.f32.mrf.mxu0
        %v8989 = vadd.f32 %v8970, %v8988
        %8990 = vdwg.mxu0
        %8991 = vmatpush.bf16.msra.mxu0 %v8652
        %8992 = vmatpush.bf16.msra.mxu0 %v8648
        %8993 = vmatpush.bf16.msra.mxu0 %v8644
        %8994 = vmatpush.bf16.msra.mxu0 %v8640
        %8995 = vmatpush.bf16.msra.mxu0 %v8636
        %8996 = vmatpush.bf16.msra.mxu0 %v8632
        %8997 = vmatpush.bf16.msra.mxu0 %v8628
        %8998 = vmatpush.bf16.msra.mxu0 %v8624
        %8999 = vmatmul.bf16.gmra.mxu0 %v8009
        %v9000 = vpop.f32.mrf.mxu0
        %v9001 = vadd.f32 %v8982, %v9000
        %v9002 = vpop.f32.mrf.mxu0
        %v9003 = vadd.f32 %v8984, %v9002
        %9004 = vmatmul.bf16.gmra.mxu0 %v8013
        %v9005 = vpop.f32.mrf.mxu0
        %v9006 = vadd.f32 %v8987, %v9005
        %v9007 = vpop.f32.mrf.mxu0
        %v9008 = vadd.f32 %v8989, %v9007
        %9009 = vdwg.mxu0
        %9010 = vmatpush.bf16.msra.mxu0 %v8557
        %9011 = vmatpush.bf16.msra.mxu0 %v8553
        %9012 = vmatpush.bf16.msra.mxu0 %v8549
        %9013 = vmatpush.bf16.msra.mxu0 %v8545
        %9014 = vmatpush.bf16.msra.mxu0 %v8541
        %9015 = vmatpush.bf16.msra.mxu0 %v8537
        %9016 = vmatpush.bf16.msra.mxu0 %v8533
        %9017 = vmatpush.bf16.msra.mxu0 %v8529
        %9018 = vmatmul.bf16.gmra.mxu0 %v8006
        %v9019 = vpop.f32.mrf.mxu0
        %v9020 = vadd.f32 0.0, %v9019
        %v9021 = vpop.f32.mrf.mxu0
        %v9022 = vadd.f32 0.0, %v9021
        %9023 = vmatmul.bf16.gmra.mxu0 %v8010
        %v9024 = vpop.f32.mrf.mxu0
        %v9025 = vadd.f32 0.0, %v9024
        %v9026 = vpop.f32.mrf.mxu0
        %v9027 = vadd.f32 0.0, %v9026
        %9028 = vdwg.mxu0
        %9029 = vmatpush.bf16.msra.mxu0 %v8589
        %9030 = vmatpush.bf16.msra.mxu0 %v8585
        %9031 = vmatpush.bf16.msra.mxu0 %v8581
        %9032 = vmatpush.bf16.msra.mxu0 %v8577
        %9033 = vmatpush.bf16.msra.mxu0 %v8573
        %9034 = vmatpush.bf16.msra.mxu0 %v8569
        %9035 = vmatpush.bf16.msra.mxu0 %v8565
        %9036 = vmatpush.bf16.msra.mxu0 %v8561
        %9037 = vmatmul.bf16.gmra.mxu0 %v8007
        %v9038 = vpop.f32.mrf.mxu0
        %v9039 = vadd.f32 %v9020, %v9038
        %v9040 = vpop.f32.mrf.mxu0
        %v9041 = vadd.f32 %v9022, %v9040
        %9042 = vmatmul.bf16.gmra.mxu0 %v8011
        %v9043 = vpop.f32.mrf.mxu0
        %v9044 = vadd.f32 %v9025, %v9043
        %v9045 = vpop.f32.mrf.mxu0
        %v9046 = vadd.f32 %v9027, %v9045
        %9047 = vdwg.mxu0
        %9048 = vmatpush.bf16.msra.mxu0 %v8621
        %9049 = vmatpush.bf16.msra.mxu0 %v8617
        %9050 = vmatpush.bf16.msra.mxu0 %v8613
        %9051 = vmatpush.bf16.msra.mxu0 %v8609
        %9052 = vmatpush.bf16.msra.mxu0 %v8605
        %9053 = vmatpush.bf16.msra.mxu0 %v8601
        %9054 = vmatpush.bf16.msra.mxu0 %v8597
        %9055 = vmatpush.bf16.msra.mxu0 %v8593
        %9056 = vmatmul.bf16.gmra.mxu0 %v8008
        %v9057 = vpop.f32.mrf.mxu0
        %v9058 = vadd.f32 %v9039, %v9057
        %v9059 = vpop.f32.mrf.mxu0
        %v9060 = vadd.f32 %v9041, %v9059
        %9061 = vmatmul.bf16.gmra.mxu0 %v8012
        %v9062 = vpop.f32.mrf.mxu0
        %v9063 = vadd.f32 %v9044, %v9062
        %v9064 = vpop.f32.mrf.mxu0
        %v9065 = vadd.f32 %v9046, %v9064
        %9066 = vdwg.mxu0
        %9067 = vmatpush.bf16.msra.mxu0 %v8653
        %9068 = vmatpush.bf16.msra.mxu0 %v8649
        %9069 = vmatpush.bf16.msra.mxu0 %v8645
        %9070 = vmatpush.bf16.msra.mxu0 %v8641
        %9071 = vmatpush.bf16.msra.mxu0 %v8637
        %9072 = vmatpush.bf16.msra.mxu0 %v8633
        %9073 = vmatpush.bf16.msra.mxu0 %v8629
        %9074 = vmatpush.bf16.msra.mxu0 %v8625
        %9075 = vmatmul.bf16.gmra.mxu0 %v8009
        %v9076 = vpop.f32.mrf.mxu0
        %v9077 = vadd.f32 %v9058, %v9076
        %v9078 = vpop.f32.mrf.mxu0
        %v9079 = vadd.f32 %v9060, %v9078
        %9080 = vmatmul.bf16.gmra.mxu0 %v8013
        %v9081 = vpop.f32.mrf.mxu0
        %v9082 = vadd.f32 %v9063, %v9081
        %v9083 = vpop.f32.mrf.mxu0
        %v9084 = vadd.f32 %v9065, %v9083
        %9085 = vdwg.mxu0
        %v9086 = vadd.f32 %v6892, %v8849
        %v9087 = vadd.f32 %v6893, %v8925
        %v9088 = vadd.f32 %v6894, %v9001
        %v9089 = vadd.f32 %v6895, %v9077
        %v9090 = vadd.f32 %v6896, %v8851
        %v9091 = vadd.f32 %v6897, %v8927
        %v9092 = vadd.f32 %v6898, %v9003
        %v9093 = vadd.f32 %v6899, %v9079
        %v9094 = vadd.f32 %v6900, %v8854
        %v9095 = vadd.f32 %v6901, %v8930
        %v9096 = vadd.f32 %v6902, %v9006
        %v9097 = vadd.f32 %v6903, %v9082
        %v9098 = vadd.f32 %v6904, %v8856
        %v9099 = vadd.f32 %v6905, %v8932
        %v9100 = vadd.f32 %v6906, %v9008
        %v9101 = vadd.f32 %v6907, %v9084
        %v9102 = vld [vmem:[#allocation10] sm:$0xf]
        %v9104 = vperm.slane %v9102, 0
        %v9105 = vperm.slane %v9102, 1
        %v9106 = vperm.slane %v9102, 2
        %v9107 = vperm.slane %v9102, 3
        %v9112 = vadd.f32 %v9086, %v9104
        %v9113 = vadd.f32 %v9087, %v9105
        %v9114 = vadd.f32 %v9088, %v9106
        %v9115 = vadd.f32 %v9089, %v9107
        %v9116 = vadd.f32 %v9090, %v9104
        %v9117 = vadd.f32 %v9091, %v9105
        %v9118 = vadd.f32 %v9092, %v9106
        %v9119 = vadd.f32 %v9093, %v9107
        %v9120 = vadd.f32 %v9094, %v9104
        %v9121 = vadd.f32 %v9095, %v9105
        %v9122 = vadd.f32 %v9096, %v9106
        %v9123 = vadd.f32 %v9097, %v9107
        %v9124 = vadd.f32 %v9098, %v9104
        %v9125 = vadd.f32 %v9099, %v9105
        %v9126 = vadd.f32 %v9100, %v9106
        %v9127 = vadd.f32 %v9101, %v9107
        %9128 = vst [vmem:[%s307] sm:$0xff] %v9112
        %9129 = vst [vmem:[%s307 + $0x8] sm:$0xff] %v9113
        %9130 = vst [vmem:[%s307 + $0x10] sm:$0xff] %v9114
        %9131 = vst [vmem:[%s307 + $0x18] sm:$0xff] %v9115
        %9132 = vst [vmem:[%s307 + $0x20] sm:$0xff] %v9116
        %9133 = vst [vmem:[%s307 + $0x28] sm:$0xff] %v9117
        %9134 = vst [vmem:[%s307 + $0x30] sm:$0xff] %v9118
        %9135 = vst [vmem:[%s307 + $0x38] sm:$0xff] %v9119
        %9136 = vst [vmem:[%s307 + $0x40] sm:$0xff] %v9120
        %9137 = vst [vmem:[%s307 + $0x48] sm:$0xff] %v9121
        %9138 = vst [vmem:[%s307 + $0x50] sm:$0xff] %v9122
        %9139 = vst [vmem:[%s307 + $0x58] sm:$0xff] %v9123
        %9140 = vst [vmem:[%s307 + $0x60] sm:$0xff] %v9124
        %9141 = vst [vmem:[%s307 + $0x68] sm:$0xff] %v9125
        %9142 = vst [vmem:[%s307 + $0x70] sm:$0xff] %v9126
        %9143 = vst [vmem:[%s307 + $0x78] sm:$0xff] %v9127
        %s9144 = sand.u32 %s142, 1
        %s9145 = scalar_lea.sflag [#allocation4], %s9144
        %s9146 = sand.u32 %s142, 1
        %s9147 = smul.addr %s9146, 128
        %s9148 = scalar_lea.vmem [#allocation11], %s9147
        // Predicated region
        $region61: #{tpu_custom_call.1} parent=39 // pred_check
          %p9149 = pneg %p152
        $region62: #{tpu_custom_call.1} parent=39 // pred_check_branch
          %9151 = sbr.rel (%p9149) target = $region64
        $region63: #{tpu_custom_call.1} parent=39 // pred_region
          %s9152 = smul.u32 4, %s24
          %9154 = vsyncadd %s9145, 0
          %s9155 = smul.addr %s9152, 4
          %s9156 = smul.addr %s9155, 8
          %s9157 = scalar_lea.hbm %s5, %s9156
          %s9158 = sshll.u32 %s9148, 4
          %s9159 = int_to_ptr.vmem [resolvable:$true] %s9158
          %s9160 = sshll.u32 %s9157, 4
          %s9161 = int_to_ptr.hbm [resolvable:$true] %s9160
          %9166 = dma.vmem_to_hbm [thread:$0]  %s9159, 2048, %s9161, %s9145, 512, 512, 32
        $region64: #{tpu_custom_call.1} parent=39 // pred_fallthru
          _
      $region40: #{tpu_custom_call.1} parent=5 // pred_fallthru
        _
      %p9167 = scmp.le.s32.totalorder 2, %s19
      // Predicated region
      $region65: #{tpu_custom_call.1} parent=5 // pred_check
        %p9168 = pneg %p9167
      $region66: #{tpu_custom_call.1} parent=5 // pred_check_branch
        %9170 = sbr.rel (%p9168) target = $region68
      $region67: #{tpu_custom_call.1} parent=5 // pred_region
        %s9171 = ssub.s32 %s19, 2
        // Predicated region
        $region69: #{tpu_custom_call.1} parent=67 // pred_check
          %p9172 = pneg %p158
        $region70: #{tpu_custom_call.1} parent=67 // pred_check_branch
          %9174 = sbr.rel (%p9172) target = $region72
        $region71: #{tpu_custom_call.1} parent=67 // pred_region
          %s9175 = sand.u32 %s143, 1
          %s9176 = scalar_lea.sflag [#allocation4], %s9175
          %s9177 = sand.u32 %s143, 1
          %s9178 = smul.addr %s9177, 128
          %s9179 = scalar_lea.vmem [#allocation11], %s9178
          %9181 = dma.done %s9176, 2048
        $region72: #{tpu_custom_call.1} parent=67 // pred_fallthru
          _
      $region68: #{tpu_custom_call.1} parent=5 // pred_fallthru
        _
    $region6: #{tpu_custom_call.1} parent=1 // loop_footer
      %s23 = sadd.s32 1, %s19
    $region7: #{tpu_custom_call.1} parent=1 // loop_footer_branch
      %18 = sbr.rel target = $region3
    $region8: #{tpu_custom_call.1} parent=1 // loop_exit
      _
    %9182 = vsyncpa [#allocation3], 1
    %s9183 = scalar_lea.sflag [#allocation3], 1
    %9184 = vsyncpa %s9183, 1
    %9185 = vsyncpa [#allocation6], 1
    %9186 = vsyncpa [#allocation9], 1
    %9187 = vsyncpa [#allocation4], 1
    %s9188 = scalar_lea.sflag [#allocation4], 1
    %9189 = vsyncpa %s9188, 1

</llo_original>
